<compile_context>
chip_gen: v7x
topology: tpu7x:2x2x1
jax: 0.10.0
libtpu: 0.0.40
codegen_flags: <defaults>
</compile_context>

<pallas_src>
import functools
import numpy as np

import jax
import jax.numpy as jnp
from jax.experimental import pallas as pl
from jax.experimental.pallas import tpu as pltpu

# ----------------------------- configuration ("args") -----------------------------
NETWIDTH = 32          # args.netwidth
N_HEADS = 4            # ray transformer heads
TRANS_DEPTH = 2        # args.trans_depth (even layer: plain FFN, odd layer: MoE FFN)
IN_FEAT_CH = 32        # in_feat_ch
FF_HID = NETWIDTH * 4  # feed-forward hidden
NUM_FREQS = 10
POSENC_DIM = 3 + 3 * 2 * NUM_FREQS     # 63 (Embedder out_dim)
VIEWENC_DIM = POSENC_DIM               # 63
EMB_PAD = 128                          # pts(63)+view(63) padded to a lane-dense 128
MOE_EXPERTS = 4        # moe_experts (small for the synthetic test)
MOE_TOP_K = 2          # moe_top_k
MOE_MLP_RATIO = 2      # moe_mlp_ratio
MOE_HID = NETWIDTH * MOE_MLP_RATIO     # 64  -> stacked expert width E*MOE_HID = 256

RAYS_PER_BLOCK = 64    # rays per grid step (block sized well under v7x's 64 MiB VMEM)

_INV_SQRT2 = 0.7071067811865476


# ----------------------------- small in-kernel helpers -----------------------------
def _layernorm(x, g, b, eps):
    mu = jnp.mean(x, axis=-1, keepdims=True)
    xc = x - mu
    var = jnp.mean(xc * xc, axis=-1, keepdims=True)
    return xc * jax.lax.rsqrt(var + eps) * g + b


def _gelu(x):
    # exact (erf) GELU, torch default
    return 0.5 * x * (1.0 + jax.lax.erf(x * _INV_SQRT2))


def _dot(a, b):
    return jnp.dot(a, b, preferred_element_type=jnp.float32)


def _full_spec(arr):
    nd = arr.ndim
    return pl.BlockSpec(arr.shape, lambda *args, _nd=nd: (0,) * _nd)


# ----------------------------- weight name ordering (static) -----------------------------
_VIEW_COMMON = ('v_ag', 'v_ab', 'v_wq', 'v_wk', 'v_wv',
                'v_pw1', 'v_pb1', 'v_pw2', 'v_pb2',
                'v_aw1', 'v_ab1', 'v_aw2', 'v_ab2',
                'v_ow', 'v_ob', 'v_fg', 'v_fb')
_VIEW_FF = ('v_fw1', 'v_fb1', 'v_fw2', 'v_fb2')
_VIEW_MOE = ('v_gw', 'v_gx', 'v_ew1', 'v_eb1', 'v_ew2', 'v_eb2')
_QFC = ('qf_w1q', 'qf_w1e', 'qf_b1', 'qf_w2', 'qf_b2')
_RAY = ('r_ag', 'r_ab', 'r_wqkv', 'r_ow', 'r_ob',
        'r_fg', 'r_fb', 'r_fw1', 'r_fb1', 'r_fw2', 'r_fb2')
EVEN_WNAMES = _VIEW_COMMON + _VIEW_FF + _QFC + _RAY
ODD_WNAMES = _VIEW_COMMON + _VIEW_MOE + _RAY


# ----------------------------- fused block math (runs inside kernels) -----------------------------
def _moe_ffn(xn, w):
    """Dense mixture-of-experts FFN with eval-mode top-k softmax gate, all in VMEM."""
    lg = _dot(xn, w['v_gw'])                                     # (NB, E)
    # top-k over clean logits (NoisyGate eval path). Ties resolved by value, not index.
    m1 = jnp.max(lg, axis=-1, keepdims=True)
    thr = m1
    cur = lg
    for _ in range(MOE_TOP_K - 1):
        cur = jnp.where(cur >= thr, -jnp.inf, cur)
        thr = jnp.max(cur, axis=-1, keepdims=True)
    keep = lg >= thr
    e = jnp.where(keep, jnp.exp(lg - m1), 0.0)
    gw = e / jnp.sum(e, axis=-1, keepdims=True)                  # (NB, E), zero outside top-k
    # stacked experts: one (NB,D)x(D,E*H) and one (NB,E*H)x(E*H,D) lane-dense matmul
    h = _gelu(_dot(xn, w['v_ew1']) + w['v_eb1'])                 # (NB, E*H)
    gx = _dot(gw, w['v_gx'])                                     # (NB, E*H) per-expert gate broadcast
    y = _dot(h * gx, w['v_ew2']) + _dot(gw, w['v_eb2'])          # (NB, D)
    return y


def _view_block(q2d, rgb3, rd3, mask3, w, moe):
    """Transformer2D block: cross-view attention + (FFN | MoE FFN), residuals included."""
    V, NB, D = rgb3.shape
    residue = q2d
    xn = _layernorm(q2d, w['v_ag'], w['v_ab'], 1e-6)
    qp = _dot(xn, w['v_wq'])                                     # (NB, D)

    rgb2 = rgb3.reshape(V * NB, D)                               # all views as one slab
    kp = _dot(rgb2, w['v_wk'])                                   # (V*NB, D)
    # NOTE: the reference applies v_fc to the already k-projected features
    #       (`k = self.k_fc(k); v = self.v_fc(k)`), so vp projects kp, not rgb.
    vp = _dot(kp, w['v_wv'])                                     # (V*NB, D)

    rd2 = rd3.reshape(V * NB, rd3.shape[-1])
    pe = _dot(jnp.maximum(_dot(rd2, w['v_pw1']) + w['v_pb1'], 0.0),
              w['v_pw2']) + w['v_pb2']                           # (V*NB, D)

    a3 = (kp + pe).reshape(V, NB, D) - qp[None, :, :]            # k - q + pos
    h = jnp.maximum(_dot(a3.reshape(V * NB, D), w['v_aw1']) + w['v_ab1'], 0.0)
    lg = (_dot(h, w['v_aw2']) + w['v_ab2']).reshape(V, NB, D)
    # masked_fill(mask == 0, -1e9), matching the reference semantics exactly
    lg = jnp.where(mask3 == 0.0, -1e9, lg)

    vpe = (vp + pe).reshape(V, NB, D)
    # per-channel softmax over the view axis (static V loop; matmuls above are batched)
    m = lg[0]
    for v in range(1, V):
        m = jnp.maximum(m, lg[v])
    den = jnp.zeros((NB, D), jnp.float32)
    num = jnp.zeros((NB, D), jnp.float32)
    for v in range(V):
        e = jnp.exp(lg[v] - m)
        den = den + e
        num = num + vpe[v] * e
    x = num * pl.reciprocal(den, approx=True)

    x = _dot(x, w['v_ow']) + w['v_ob'] + residue

    residue = x
    xn = _layernorm(x, w['v_fg'], w['v_fb'], 1e-6)
    if moe:
        ff = _moe_ffn(xn, w)
    else:
        ff = _dot(jnp.maximum(_dot(xn, w['v_fw1']) + w['v_fb1'], 0.0),
                  w['v_fw2']) + w['v_fb2']
    return ff + residue


def _ray_block(x, w, n_samples, n_heads):
    """Ray (1-D) transformer block: fused-QKV multi-head self-attention + FFN."""
    NB, D = x.shape
    rb = NB // n_samples
    dh = D // n_heads
    scale = 1.0 / float(np.sqrt(dh))

    residue = x
    xn = _layernorm(x, w['r_ag'], w['r_ab'], 1e-6)
    qkv = _dot(xn, w['r_wqkv'])                                  # (NB, 3D) single matmul
    qkv3 = qkv.reshape(rb, n_samples, 3 * D)

    heads = []
    for hd in range(n_heads):
        qh = qkv3[:, :, hd * dh:(hd + 1) * dh]                   # (rb, S, dh)
        kh = qkv3[:, :, D + hd * dh:D + (hd + 1) * dh]
        vh = qkv3[:, :, 2 * D + hd * dh:2 * D + (hd + 1) * dh]
        s = jnp.einsum('rsd,rtd->rst', qh, kh,
                       preferred_element_type=jnp.float32) * scale
        s = s - jnp.max(s, axis=-1, keepdims=True)
        e = jnp.exp(s)
        p = e * pl.reciprocal(jnp.sum(e, axis=-1, keepdims=True), approx=True)
        heads.append(jnp.einsum('rst,rtd->rsd', p, vh,
                                preferred_element_type=jnp.float32))
    o = jnp.concatenate(heads, axis=-1).reshape(NB, D)
    x = _dot(o, w['r_ow']) + w['r_ob'] + residue

    residue = x
    xn = _layernorm(x, w['r_fg'], w['r_fb'], 1e-6)
    ff = _dot(jnp.maximum(_dot(xn, w['r_fw1']) + w['r_fb1'], 0.0),
              w['r_fw2']) + w['r_fb2']
    return ff + residue


# ----------------------------- kernels -----------------------------
def _prologue_kernel(rgbv_ref, w1_ref, b1_ref, w2_ref, b2_ref, rgb_out_ref, q_out_ref):
    V, NB, C = rgbv_ref.shape
    D = w2_ref.shape[1]
    x = rgbv_ref[...].reshape(V * NB, C)
    h = jnp.maximum(_dot(x, w1_ref[...]) + b1_ref[...], 0.0)
    rgb = _dot(h, w2_ref[...]) + b2_ref[...]
    rgb3 = rgb.reshape(V, NB, D)
    rgb_out_ref[...] = rgb3
    q = rgb3[0]
    for v in range(1, V):
        q = jnp.maximum(q, rgb3[v])
    q_out_ref[...] = q


def _even_layer_kernel(q_ref, rgb_ref, rd_ref, mask_ref, emb_ref, *rest,
                       wnames, n_samples, n_heads):
    out_ref = rest[-1]
    w = {n: r[...] for n, r in zip(wnames, rest[:-1])}
    x = _view_block(q_ref[...], rgb_ref[...], rd_ref[...], mask_ref[...], w, moe=False)
    # concat(q, input_pts, input_views) + q_fc, folded into two matmuls on split weights
    h = jnp.maximum(_dot(x, w['qf_w1q']) + _dot(emb_ref[...], w['qf_w1e']) + w['qf_b1'], 0.0)
    x = _dot(h, w['qf_w2']) + w['qf_b2']
    x = _ray_block(x, w, n_samples, n_heads)
    out_ref[...] = x


def _odd_layer_kernel(q_ref, rgb_ref, rd_ref, mask_ref, *rest,
                      wnames, n_samples, n_heads):
    out_ref = rest[-1]
    w = {n: r[...] for n, r in zip(wnames, rest[:-1])}
    x = _view_block(q_ref[...], rgb_ref[...], rd_ref[...], mask_ref[...], w, moe=True)
    x = _ray_block(x, w, n_samples, n_heads)
    out_ref[...] = x


def _epilogue_kernel(q_ref, g_ref, b_ref, w_ref, bias_ref, out_ref, *, n_samples):
    NB, D = q_ref.shape
    rb = NB // n_samples
    h = _layernorm(q_ref[...], g_ref[...], b_ref[...], 1e-5)
    pooled = jnp.mean(h.reshape(rb, n_samples, D), axis=1)       # (rb, D)
    out_ref[...] = _dot(pooled, w_ref[...]) + bias_ref[...]


# ----------------------------- pallas_call wrappers -----------------------------
_PARALLEL = pltpu.CompilerParams(dimension_semantics=("parallel",))


def _call_prologue(rgbf_v, rf, grid, Rb, S, V, D):
    _, N, C = rgbf_v.shape
    NB = Rb * S
    warrs = [rf['w1'], rf['b1'], rf['w2'], rf['b2']]
    return pl.pallas_call(
        _prologue_kernel,
        out_shape=(jax.ShapeDtypeStruct((V, N, D), jnp.float32),
                   jax.ShapeDtypeStruct((N, D), jnp.float32)),
        grid=grid,
        in_specs=[pl.BlockSpec((V, NB, C), lambda i: (0, i, 0))] + [_full_spec(a) for a in warrs],
        out_specs=(pl.BlockSpec((V, NB, D), lambda i: (0, i, 0)),
                   pl.BlockSpec((NB, D), lambda i: (i, 0))),
        compiler_params=_PARALLEL,
    )(rgbf_v, *warrs)


def _call_even_layer(q, rgb_v, rd_v, mask_v, emb, L, grid, Rb, S, V, n_heads):
    N, D = q.shape
    NB = Rb * S
    warrs = [L[n] for n in EVEN_WNAMES]
    kern = functools.partial(_even_layer_kernel, wnames=EVEN_WNAMES,
                             n_samples=S, n_heads=n_heads)
    in_specs = [
        pl.BlockSpec((NB, D), lambda i: (i, 0)),
        pl.BlockSpec((V, NB, D), lambda i: (0, i, 0)),
        pl.BlockSpec((V, NB, 4), lambda i: (0, i, 0)),
        pl.BlockSpec((V, NB, 1), lambda i: (0, i, 0)),
        pl.BlockSpec((NB, EMB_PAD), lambda i: (i, 0)),
    ] + [_full_spec(a) for a in warrs]
    return pl.pallas_call(
        kern,
        out_shape=jax.ShapeDtypeStruct((N, D), jnp.float32),
        grid=grid,
        in_specs=in_specs,
        out_specs=pl.BlockSpec((NB, D), lambda i: (i, 0)),
        compiler_params=_PARALLEL,
    )(q, rgb_v, rd_v, mask_v, emb, *warrs)


def _call_odd_layer(q, rgb_v, rd_v, mask_v, L, grid, Rb, S, V, n_heads):
    N, D = q.shape
    NB = Rb * S
    warrs = [L[n] for n in ODD_WNAMES]
    kern = functools.partial(_odd_layer_kernel, wnames=ODD_WNAMES,
                             n_samples=S, n_heads=n_heads)
    in_specs = [
        pl.BlockSpec((NB, D), lambda i: (i, 0)),
        pl.BlockSpec((V, NB, D), lambda i: (0, i, 0)),
        pl.BlockSpec((V, NB, 4), lambda i: (0, i, 0)),
        pl.BlockSpec((V, NB, 1), lambda i: (0, i, 0)),
    ] + [_full_spec(a) for a in warrs]
    return pl.pallas_call(
        kern,
        out_shape=jax.ShapeDtypeStruct((N, D), jnp.float32),
        grid=grid,
        in_specs=in_specs,
        out_specs=pl.BlockSpec((NB, D), lambda i: (i, 0)),
        compiler_params=_PARALLEL,
    )(q, rgb_v, rd_v, mask_v, *warrs)


def _call_epilogue(q, norm_g, norm_b, rgb_w, rgb_b, grid, Rb, S):
    N, D = q.shape
    Rp = N // S
    NB = Rb * S
    kern = functools.partial(_epilogue_kernel, n_samples=S)
    warrs = [norm_g, norm_b, rgb_w, rgb_b]
    return pl.pallas_call(
        kern,
        out_shape=jax.ShapeDtypeStruct((Rp, 3), jnp.float32),
        grid=grid,
        in_specs=[pl.BlockSpec((NB, D), lambda i: (i, 0))] + [_full_spec(a) for a in warrs],
        out_specs=pl.BlockSpec((Rb, 3), lambda i: (i, 0)),
        compiler_params=_PARALLEL,
    )(q, *warrs)


# ----------------------------- positional embedder (tiny, plain JAX, run once) -----------------------------
def _embed_jax(x):
    # out = cat([x, sin(2^0 x), cos(2^0 x), ..., sin(2^9 x), cos(2^9 x)], -1)  -> 63 wide
    parts = [x]
    for f in (2.0 ** np.arange(NUM_FREQS)):
        f = float(f)
        parts.append(jnp.sin(x * f))
        parts.append(jnp.cos(x * f))
    return jnp.concatenate(parts, axis=-1)


# ----------------------------- full GNTMoE forward -----------------------------
def gnt_moe_forward(packed, rgb_feat, ray_diff, mask, pts, ray_d):
    R, S, V, C = rgb_feat.shape
    D = NETWIDTH
    Rb = R if R <= RAYS_PER_BLOCK else RAYS_PER_BLOCK
    Rp = ((R + Rb - 1) // Rb) * Rb
    if Rp != R:
        pad = Rp - R
        pad4 = ((0, pad), (0, 0), (0, 0), (0, 0))
        rgb_feat = jnp.pad(rgb_feat, pad4, mode='edge')
        ray_diff = jnp.pad(ray_diff, pad4, mode='edge')
        mask = jnp.pad(mask, pad4, mode='edge')
        pts = jnp.pad(pts, ((0, pad), (0, 0), (0, 0)), mode='edge')
        ray_d = jnp.pad(ray_d, ((0, pad), (0, 0)), mode='edge')
    N = Rp * S
    grid = (Rp // Rb,)

    # One-time layout transforms: view axis leading, (ray, sample) flattened.
    rgbf_v = jnp.transpose(rgb_feat, (2, 0, 1, 3)).reshape(V, N, C)
    rd_v = jnp.transpose(ray_diff, (2, 0, 1, 3)).reshape(V, N, 4)
    mask_v = jnp.transpose(mask, (2, 0, 1, 3)).reshape(V, N, 1)

    # positional / view-direction embeddings, padded to a lane-dense 128 columns
    viewdirs = ray_d / jnp.linalg.norm(ray_d, axis=-1, keepdims=True)
    vd_e = _embed_jax(viewdirs.reshape(-1, 3).astype(jnp.float32))                    # (Rp, 63)
    pts_e = _embed_jax(pts.reshape(-1, 3).astype(jnp.float32)).reshape(Rp, S, POSENC_DIM)
    emb = jnp.concatenate(
        [pts_e,
         jnp.broadcast_to(vd_e[:, None, :], (Rp, S, VIEWENC_DIM)),
         jnp.zeros((Rp, S, EMB_PAD - POSENC_DIM - VIEWENC_DIM), jnp.float32)],
        axis=-1).reshape(N, EMB_PAD)

    # rgbfeat_fc + max-pool over views (fused prologue kernel)
    rgb_v, q = _call_prologue(rgbf_v, packed['rgbfeat'], grid, Rb, S, V, D)

    for i, L in enumerate(packed['layers']):
        if i % 2 == 0:
            q = _call_even_layer(q, rgb_v, rd_v, mask_v, emb, L, grid, Rb, S, V, N_HEADS)
        else:
            q = _call_odd_layer(q, rgb_v, rd_v, mask_v, L, grid, Rb, S, V, N_HEADS)

    out = _call_epilogue(q, packed['norm_g'], packed['norm_b'],
                         packed['rgb_w'], packed['rgb_b'], grid, Rb, S)
    return out[:R]


# ----------------------------- deterministic parameter init (torch [out, in] layout) -----------------------------
def init_params(key):
    keys = iter(jax.random.split(key, 256))
    scale = 0.05

    def nrm(shape):
        return jax.random.normal(next(keys), shape, jnp.float32) * scale

    def lin(out_d, in_d):
        return (nrm((out_d, in_d)), nrm((out_d,)))

    def lin_nb(out_d, in_d):
        return nrm((out_d, in_d))

    def ln(d):
        return (jnp.ones((d,), jnp.float32), jnp.zeros((d,), jnp.float32))

    D = NETWIDTH
    p = {'rgbfeat': (lin(D, IN_FEAT_CH + 3), lin(D, D))}
    layers = []
    for i in range(TRANS_DEPTH):
        vt = {
            'attn_norm': ln(D), 'ff_norm': ln(D),
            'Wq': lin_nb(D, D), 'Wk': lin_nb(D, D), 'Wv': lin_nb(D, D),
            'pos_fc': (lin(D // 8, 4), lin(D, D // 8)),
            'attn_fc': (lin(D // 8, D), lin(D, D // 8)),
            'out_fc': lin(D, D),
        }
        if i % 2 == 0:
            vt['ff'] = (lin(FF_HID, D), lin(D, FF_HID))
        else:
            vt['gate_w'] = nrm((MOE_EXPERTS, D))
            vt['experts'] = {                       # expert weight layout: (E, in, out)
                'W1': nrm((MOE_EXPERTS, D, MOE_HID)),
                'b1': nrm((MOE_EXPERTS, 1, MOE_HID)),
                'W2': nrm((MOE_EXPERTS, MOE_HID, D)),
                'b2': nrm((MOE_EXPERTS, 1, D)),
            }
        rt = {
            'attn_norm': ln(D), 'ff_norm': ln(D),
            'Wq': lin_nb(D, D), 'Wk': lin_nb(D, D), 'Wv': lin_nb(D, D),
            'out_fc': lin(D, D),
            'ff': (lin(FF_HID, D), lin(D, FF_HID)),
        }
        qfc = (lin(D, D + POSENC_DIM + VIEWENC_DIM), lin(D, D)) if i % 2 == 0 else None
        layers.append({'view': vt, 'ray': rt, 'qfc': qfc})
    p['layers'] = layers
    p['norm'] = ln(D)
    p['rgb_fc'] = lin(3, D)
    return p


# ----------------------------- one-time weight packing for the kernels -----------------------------
def pack_params(p):
    """Transpose to (in,out), reshape biases to (1,out), fuse ray QKV, stack experts and
    split q_fc -- done ONCE so no per-call transposes/reshapes happen inside jit."""
    D = NETWIDTH

    def t(W):
        return W.T

    def b(v):
        return v.reshape(1, -1)

    packed = {}
    (w1, b1), (w2, b2) = p['rgbfeat']
    packed['rgbfeat'] = {'w1': t(w1), 'b1': b(b1), 'w2': t(w2), 'b2': b(b2)}

    layers = []
    for i, lp in enumerate(p['layers']):
        vt, rt, qfc = lp['view'], lp['ray'], lp['qfc']
        L = {}
        # --- view transformer (Transformer2D) ---
        L['v_ag'], L['v_ab'] = b(vt['attn_norm'][0]), b(vt['attn_norm'][1])
        L['v_wq'], L['v_wk'], L['v_wv'] = t(vt['Wq']), t(vt['Wk']), t(vt['Wv'])
        (pw1, pb1), (pw2, pb2) = vt['pos_fc']
        L['v_pw1'], L['v_pb1'], L['v_pw2'], L['v_pb2'] = t(pw1), b(pb1), t(pw2), b(pb2)
        (aw1, ab1), (aw2, ab2) = vt['attn_fc']
        L['v_aw1'], L['v_ab1'], L['v_aw2'], L['v_ab2'] = t(aw1), b(ab1), t(aw2), b(ab2)
        ow, ob = vt['out_fc']
        L['v_ow'], L['v_ob'] = t(ow), b(ob)
        L['v_fg'], L['v_fb'] = b(vt['ff_norm'][0]), b(vt['ff_norm'][1])
        if i % 2 == 0:
            (fw1, fb1), (fw2, fb2) = vt['ff']
            L['v_fw1'], L['v_fb1'], L['v_fw2'], L['v_fb2'] = t(fw1), b(fb1), t(fw2), b(fb2)
        else:
            L['v_gw'] = t(vt['gate_w'])                                   # (D, E)
            ex = vt['experts']
            E, Dd, H = ex['W1'].shape
            L['v_ew1'] = jnp.transpose(ex['W1'], (1, 0, 2)).reshape(Dd, E * H)   # (D, E*H)
            L['v_eb1'] = ex['b1'].reshape(1, E * H)
            L['v_ew2'] = ex['W2'].reshape(E * H, Dd)                              # (E*H, D)
            L['v_eb2'] = ex['b2'].reshape(E, Dd)                                  # (E, D)
            L['v_gx'] = jnp.asarray(np.kron(np.eye(E, dtype=np.float32),
                                            np.ones((1, H), np.float32)))         # (E, E*H)
        # --- concat + q_fc (even layers only): split W1 into q-part and (padded) embed-part ---
        if i % 2 == 0:
            (qw1, qb1), (qw2, qb2) = qfc
            W1t = t(qw1)                                                  # (D+126, D)
            L['qf_w1q'] = W1t[:D]
            w1e = W1t[D:]                                                 # (126, D)
            L['qf_w1e'] = jnp.concatenate(
                [w1e, jnp.zeros((EMB_PAD - w1e.shape[0], D), jnp.float32)], axis=0)  # (128, D)
            L['qf_b1'] = b(qb1)
            L['qf_w2'], L['qf_b2'] = t(qw2), b(qb2)
        # --- ray transformer ---
        L['r_ag'], L['r_ab'] = b(rt['attn_norm'][0]), b(rt['attn_norm'][1])
        L['r_wqkv'] = jnp.concatenate([t(rt['Wq']), t(rt['Wk']), t(rt['Wv'])], axis=1)  # (D, 3D)
        row, rob = rt['out_fc']
        L['r_ow'], L['r_ob'] = t(row), b(rob)
        L['r_fg'], L['r_fb'] = b(rt['ff_norm'][0]), b(rt['ff_norm'][1])
        (rfw1, rfb1), (rfw2, rfb2) = rt['ff']
        L['r_fw1'], L['r_fb1'], L['r_fw2'], L['r_fb2'] = t(rfw1), b(rfb1), t(rfw2), b(rfb2)
        layers.append(L)

    packed['layers'] = layers
    packed['norm_g'], packed['norm_b'] = b(p['norm'][0]), b(p['norm'][1])
    packed['rgb_w'], packed['rgb_b'] = t(p['rgb_fc'][0]), b(p['rgb_fc'][1])
    return packed


# ----------------------------- main -----------------------------
if __name__ == "__main__":
    key = jax.random.PRNGKey(0)
    kp_, k1, k2, k3, k4, k5 = jax.random.split(key, 6)
    params = init_params(kp_)
    packed = pack_params(params)      # one-time packing (no per-call weight transposes)

    R, S, V = 2, 8, 4
    rgb_feat = jax.random.normal(k1, (R, S, V, IN_FEAT_CH + 3), jnp.float32)
    ray_diff = jax.random.normal(k2, (R, S, V, 4), jnp.float32) * 0.1
    mask = (jax.random.uniform(k3, (R, S, V, 1)) > 0.1).astype(jnp.float32)
    pts = jax.random.normal(k4, (R, S, 3), jnp.float32)
    ray_d = jax.random.normal(k5, (R, 3), jnp.float32)

    out = jax.jit(gnt_moe_forward)(packed, rgb_feat, ray_diff, mask, pts, ray_d)
    out = jax.block_until_ready(out)
    assert out.shape == (R, 3), out.shape
    assert bool(jnp.all(jnp.isfinite(out)))
    print("KERNEL_OK")
</pallas_src>

<mosaic_0001>
module attributes {stable_mosaic.version = 11 : i64} {
  func.func @_prologue_kernel(%arg0: i32, %arg1: memref<4x16x35xf32, #tpu.memory_space<vmem>>, %arg2: memref<35x32xf32, #tpu.memory_space<vmem>>, %arg3: memref<1x32xf32, #tpu.memory_space<vmem>>, %arg4: memref<32x32xf32, #tpu.memory_space<vmem>>, %arg5: memref<1x32xf32, #tpu.memory_space<vmem>>, %arg6: memref<4x16x32xf32, #tpu.memory_space<vmem>>, %arg7: memref<16x32xf32, #tpu.memory_space<vmem>>) attributes {dimension_semantics = [#tpu.dimension_semantics<parallel>], iteration_bounds = array<i64: 1>, scalar_prefetch = 0 : i64, scratch_operands = 0 : i64, tpu.core_type = #tpu.core_type<tc>, window_params = [{transform_indices = @transform_0, window_bounds = array<i64: 4, 16, 35>}, {pipeline_mode = #tpu.pipeline_mode<synchronous>, transform_indices = @transform_1, window_bounds = array<i64: 35, 32>}, {pipeline_mode = #tpu.pipeline_mode<synchronous>, transform_indices = @transform_2, window_bounds = array<i64: 1, 32>}, {pipeline_mode = #tpu.pipeline_mode<synchronous>, transform_indices = @transform_3, window_bounds = array<i64: 32, 32>}, {pipeline_mode = #tpu.pipeline_mode<synchronous>, transform_indices = @transform_4, window_bounds = array<i64: 1, 32>}, {transform_indices = @transform_5, window_bounds = array<i64: 4, 16, 32>}, {transform_indices = @transform_6, window_bounds = array<i64: 16, 32>}]} {
    %c0 = arith.constant 0 : index
    %c0_0 = arith.constant 0 : index
    %c0_1 = arith.constant 0 : index
    %0 = vector.load %arg1[%c0, %c0_0, %c0_1] : memref<4x16x35xf32, #tpu.memory_space<vmem>>, vector<4x16x35xf32>
    %1 = vector.shape_cast %0 : vector<4x16x35xf32> to vector<64x35xf32>
    %c0_2 = arith.constant 0 : index
    %c0_3 = arith.constant 0 : index
    %2 = vector.load %arg2[%c0_2, %c0_3] : memref<35x32xf32, #tpu.memory_space<vmem>>, vector<35x32xf32>
    %cst = arith.constant dense<0.000000e+00> : vector<64x32xf32>
    %3 = tpu.matmul %1, %2, %cst {dimension_numbers = #tpu.dot_dimension_numbers<[1], [0], [0], [1], [0, 0, 1, 1], [], []>} : vector<64x35xf32>, vector<35x32xf32>, vector<64x32xf32> -> vector<64x32xf32>
    %c0_4 = arith.constant 0 : index
    %c0_5 = arith.constant 0 : index
    %4 = vector.load %arg3[%c0_4, %c0_5] : memref<1x32xf32, #tpu.memory_space<vmem>>, vector<1x32xf32>
    %5 = vector.broadcast %4 : vector<1x32xf32> to vector<64x32xf32>
    %6 = arith.addf %3, %5 : vector<64x32xf32>
    %cst_6 = arith.constant 0.000000e+00 : f32
    %7 = vector.broadcast %cst_6 : f32 to vector<64x32xf32>
    %8 = arith.maximumf %6, %7 : vector<64x32xf32>
    %c0_7 = arith.constant 0 : index
    %c0_8 = arith.constant 0 : index
    %9 = vector.load %arg4[%c0_7, %c0_8] : memref<32x32xf32, #tpu.memory_space<vmem>>, vector<32x32xf32>
    %cst_9 = arith.constant dense<0.000000e+00> : vector<64x32xf32>
    %10 = tpu.matmul %8, %9, %cst_9 {dimension_numbers = #tpu.dot_dimension_numbers<[1], [0], [0], [1], [0, 0, 1, 1], [], []>} : vector<64x32xf32>, vector<32x32xf32>, vector<64x32xf32> -> vector<64x32xf32>
    %c0_10 = arith.constant 0 : index
    %c0_11 = arith.constant 0 : index
    %11 = vector.load %arg5[%c0_10, %c0_11] : memref<1x32xf32, #tpu.memory_space<vmem>>, vector<1x32xf32>
    %12 = vector.broadcast %11 : vector<1x32xf32> to vector<64x32xf32>
    %13 = arith.addf %10, %12 : vector<64x32xf32>
    %14 = vector.shape_cast %13 : vector<64x32xf32> to vector<4x16x32xf32>
    %c0_12 = arith.constant 0 : index
    %c0_13 = arith.constant 0 : index
    %c0_14 = arith.constant 0 : index
    %15 = vector.load %arg6[%c0_12, %c0_13, %c0_14] : memref<4x16x32xf32, #tpu.memory_space<vmem>>, vector<4x16x32xf32>
    tpu.vector_store %arg6[%c0_12, %c0_13, %c0_14], %14 {strides = array<i32>} : memref<4x16x32xf32, #tpu.memory_space<vmem>>, vector<4x16x32xf32>,
    %16 = vector.extract_strided_slice %14 {offsets = [0, 0, 0], sizes = [1, 16, 32], strides = [1, 1, 1]} : vector<4x16x32xf32> to vector<1x16x32xf32>
    %17 = vector.shape_cast %16 : vector<1x16x32xf32> to vector<16x32xf32>
    %18 = vector.extract_strided_slice %14 {offsets = [1, 0, 0], sizes = [1, 16, 32], strides = [1, 1, 1]} : vector<4x16x32xf32> to vector<1x16x32xf32>
    %19 = vector.shape_cast %18 : vector<1x16x32xf32> to vector<16x32xf32>
    %20 = arith.maximumf %17, %19 : vector<16x32xf32>
    %21 = vector.extract_strided_slice %14 {offsets = [2, 0, 0], sizes = [1, 16, 32], strides = [1, 1, 1]} : vector<4x16x32xf32> to vector<1x16x32xf32>
    %22 = vector.shape_cast %21 : vector<1x16x32xf32> to vector<16x32xf32>
    %23 = arith.maximumf %20, %22 : vector<16x32xf32>
    %24 = vector.extract_strided_slice %14 {offsets = [3, 0, 0], sizes = [1, 16, 32], strides = [1, 1, 1]} : vector<4x16x32xf32> to vector<1x16x32xf32>
    %25 = vector.shape_cast %24 : vector<1x16x32xf32> to vector<16x32xf32>
    %26 = arith.maximumf %23, %25 : vector<16x32xf32>
    %c0_15 = arith.constant 0 : index
    %c0_16 = arith.constant 0 : index
    %27 = vector.load %arg7[%c0_15, %c0_16] : memref<16x32xf32, #tpu.memory_space<vmem>>, vector<16x32xf32>
    tpu.vector_store %arg7[%c0_15, %c0_16], %26 {strides = array<i32>} : memref<16x32xf32, #tpu.memory_space<vmem>>, vector<16x32xf32>,
    return
  }
  func.func @transform_0(%arg0: i32) -> (i32, i32, i32) {
    %c0_i32 = arith.constant 0 : i32
    %c0_i32_0 = arith.constant 0 : i32
    %c0_i32_1 = arith.constant 0 : i32
    return %c0_i32, %arg0, %c0_i32_0 : i32, i32, i32
  }
  func.func @transform_1(%arg0: i32) -> (i32, i32) {
    %c0_i32 = arith.constant 0 : i32
    %c0_i32_0 = arith.constant 0 : i32
    %c0_i32_1 = arith.constant 0 : i32
    return %c0_i32, %c0_i32_0 : i32, i32
  }
  func.func @transform_2(%arg0: i32) -> (i32, i32) {
    %c0_i32 = arith.constant 0 : i32
    %c0_i32_0 = arith.constant 0 : i32
    %c0_i32_1 = arith.constant 0 : i32
    return %c0_i32, %c0_i32_0 : i32, i32
  }
  func.func @transform_3(%arg0: i32) -> (i32, i32) {
    %c0_i32 = arith.constant 0 : i32
    %c0_i32_0 = arith.constant 0 : i32
    %c0_i32_1 = arith.constant 0 : i32
    return %c0_i32, %c0_i32_0 : i32, i32
  }
  func.func @transform_4(%arg0: i32) -> (i32, i32) {
    %c0_i32 = arith.constant 0 : i32
    %c0_i32_0 = arith.constant 0 : i32
    %c0_i32_1 = arith.constant 0 : i32
    return %c0_i32, %c0_i32_0 : i32, i32
  }
  func.func @transform_5(%arg0: i32) -> (i32, i32, i32) {
    %c0_i32 = arith.constant 0 : i32
    %c0_i32_0 = arith.constant 0 : i32
    %c0_i32_1 = arith.constant 0 : i32
    return %c0_i32, %arg0, %c0_i32_0 : i32, i32, i32
  }
  func.func @transform_6(%arg0: i32) -> (i32, i32) {
    %c0_i32 = arith.constant 0 : i32
    %c0_i32_0 = arith.constant 0 : i32
    return %arg0, %c0_i32 : i32, i32
  }
}

module attributes {stable_mosaic.version = 11 : i64} {
  func.func @_even_layer_kernel(%arg0: i32, %arg1: memref<16x32xf32, #tpu.memory_space<vmem>>, %arg2: memref<4x16x32xf32, #tpu.memory_space<vmem>>, %arg3: memref<4x16x4xf32, #tpu.memory_space<vmem>>, %arg4: memref<4x16x1xf32, #tpu.memory_space<vmem>>, %arg5: memref<16x128xf32, #tpu.memory_space<vmem>>, %arg6: memref<1x32xf32, #tpu.memory_space<vmem>>, %arg7: memref<1x32xf32, #tpu.memory_space<vmem>>, %arg8: memref<32x32xf32, #tpu.memory_space<vmem>>, %arg9: memref<32x32xf32, #tpu.memory_space<vmem>>, %arg10: memref<32x32xf32, #tpu.memory_space<vmem>>, %arg11: memref<4x4xf32, #tpu.memory_space<vmem>>, %arg12: memref<1x4xf32, #tpu.memory_space<vmem>>, %arg13: memref<4x32xf32, #tpu.memory_space<vmem>>, %arg14: memref<1x32xf32, #tpu.memory_space<vmem>>, %arg15: memref<32x4xf32, #tpu.memory_space<vmem>>, %arg16: memref<1x4xf32, #tpu.memory_space<vmem>>, %arg17: memref<4x32xf32, #tpu.memory_space<vmem>>, %arg18: memref<1x32xf32, #tpu.memory_space<vmem>>, %arg19: memref<32x32xf32, #tpu.memory_space<vmem>>, %arg20: memref<1x32xf32, #tpu.memory_space<vmem>>, %arg21: memref<1x32xf32, #tpu.memory_space<vmem>>, %arg22: memref<1x32xf32, #tpu.memory_space<vmem>>, %arg23: memref<32x128xf32, #tpu.memory_space<vmem>>, %arg24: memref<1x128xf32, #tpu.memory_space<vmem>>, %arg25: memref<128x32xf32, #tpu.memory_space<vmem>>, %arg26: memref<1x32xf32, #tpu.memory_space<vmem>>, %arg27: memref<32x32xf32, #tpu.memory_space<vmem>>, %arg28: memref<128x32xf32, #tpu.memory_space<vmem>>, %arg29: memref<1x32xf32, #tpu.memory_space<vmem>>, %arg30: memref<32x32xf32, #tpu.memory_space<vmem>>, %arg31: memref<1x32xf32, #tpu.memory_space<vmem>>, %arg32: memref<1x32xf32, #tpu.memory_space<vmem>>, %arg33: memref<1x32xf32, #tpu.memory_space<vmem>>, %arg34: memref<32x96xf32, #tpu.memory_space<vmem>>, %arg35: memref<32x32xf32, #tpu.memory_space<vmem>>, %arg36: memref<1x32xf32, #tpu.memory_space<vmem>>, %arg37: memref<1x32xf32, #tpu.memory_space<vmem>>, %arg38: memref<1x32xf32, #tpu.memory_space<vmem>>, %arg39: memref<32x128xf32, #tpu.memory_space<vmem>>, %arg40: memref<1x128xf32, #tpu.memory_space<vmem>>, %arg41: memref<128x32xf32, #tpu.memory_space<vmem>>, %arg42: memref<1x32xf32, #tpu.memory_space<vmem>>, %arg43: memref<16x32xf32, #tpu.memory_space<vmem>>) attributes {dimension_semantics = [#tpu.dimension_semantics<parallel>], iteration_bounds = array<i64: 1>, scalar_prefetch = 0 : i64, scratch_operands = 0 : i64, tpu.core_type = #tpu.core_type<tc>, window_params = [{transform_indices = @transform_0, window_bounds = array<i64: 16, 32>}, {transform_indices = @transform_1, window_bounds = array<i64: 4, 16, 32>}, {transform_indices = @transform_2, window_bounds = array<i64: 4, 16, 4>}, {transform_indices = @transform_3, window_bounds = array<i64: 4, 16, 1>}, {transform_indices = @transform_4, window_bounds = array<i64: 16, 128>}, {pipeline_mode = #tpu.pipeline_mode<synchronous>, transform_indices = @transform_5, window_bounds = array<i64: 1, 32>}, {pipeline_mode = #tpu.pipeline_mode<synchronous>, transform_indices = @transform_6, window_bounds = array<i64: 1, 32>}, {pipeline_mode = #tpu.pipeline_mode<synchronous>, transform_indices = @transform_7, window_bounds = array<i64: 32, 32>}, {pipeline_mode = #tpu.pipeline_mode<synchronous>, transform_indices = @transform_8, window_bounds = array<i64: 32, 32>}, {pipeline_mode = #tpu.pipeline_mode<synchronous>, transform_indices = @transform_9, window_bounds = array<i64: 32, 32>}, {pipeline_mode = #tpu.pipeline_mode<synchronous>, transform_indices = @transform_10, window_bounds = array<i64: 4, 4>}, {pipeline_mode = #tpu.pipeline_mode<synchronous>, transform_indices = @transform_11, window_bounds = array<i64: 1, 4>}, {pipeline_mode = #tpu.pipeline_mode<synchronous>, transform_indices = @transform_12, window_bounds = array<i64: 4, 32>}, {pipeline_mode = #tpu.pipeline_mode<synchronous>, transform_indices = @transform_13, window_bounds = array<i64: 1, 32>}, {pipeline_mode = #tpu.pipeline_mode<synchronous>, transform_indices = @transform_14, window_bounds = array<i64: 32, 4>}, {pipeline_mode = #tpu.pipeline_mode<synchronous>, transform_indices = @transform_15, window_bounds = array<i64: 1, 4>}, {pipeline_mode = #tpu.pipeline_mode<synchronous>, transform_indices = @transform_16, window_bounds = array<i64: 4, 32>}, {pipeline_mode = #tpu.pipeline_mode<synchronous>, transform_indices = @transform_17, window_bounds = array<i64: 1, 32>}, {pipeline_mode = #tpu.pipeline_mode<synchronous>, transform_indices = @transform_18, window_bounds = array<i64: 32, 32>}, {pipeline_mode = #tpu.pipeline_mode<synchronous>, transform_indices = @transform_19, window_bounds = array<i64: 1, 32>}, {pipeline_mode = #tpu.pipeline_mode<synchronous>, transform_indices = @transform_20, window_bounds = array<i64: 1, 32>}, {pipeline_mode = #tpu.pipeline_mode<synchronous>, transform_indices = @transform_21, window_bounds = array<i64: 1, 32>}, {pipeline_mode = #tpu.pipeline_mode<synchronous>, transform_indices = @transform_22, window_bounds = array<i64: 32, 128>}, {pipeline_mode = #tpu.pipeline_mode<synchronous>, transform_indices = @transform_23, window_bounds = array<i64: 1, 128>}, {pipeline_mode = #tpu.pipeline_mode<synchronous>, transform_indices = @transform_24, window_bounds = array<i64: 128, 32>}, {pipeline_mode = #tpu.pipeline_mode<synchronous>, transform_indices = @transform_25, window_bounds = array<i64: 1, 32>}, {pipeline_mode = #tpu.pipeline_mode<synchronous>, transform_indices = @transform_26, window_bounds = array<i64: 32, 32>}, {pipeline_mode = #tpu.pipeline_mode<synchronous>, transform_indices = @transform_27, window_bounds = array<i64: 128, 32>}, {pipeline_mode = #tpu.pipeline_mode<synchronous>, transform_indices = @transform_28, window_bounds = array<i64: 1, 32>}, {pipeline_mode = #tpu.pipeline_mode<synchronous>, transform_indices = @transform_29, window_bounds = array<i64: 32, 32>}, {pipeline_mode = #tpu.pipeline_mode<synchronous>, transform_indices = @transform_30, window_bounds = array<i64: 1, 32>}, {pipeline_mode = #tpu.pipeline_mode<synchronous>, transform_indices = @transform_31, window_bounds = array<i64: 1, 32>}, {pipeline_mode = #tpu.pipeline_mode<synchronous>, transform_indices = @transform_32, window_bounds = array<i64: 1, 32>}, {pipeline_mode = #tpu.pipeline_mode<synchronous>, transform_indices = @transform_33, window_bounds = array<i64: 32, 96>}, {pipeline_mode = #tpu.pipeline_mode<synchronous>, transform_indices = @transform_34, window_bounds = array<i64: 32, 32>}, {pipeline_mode = #tpu.pipeline_mode<synchronous>, transform_indices = @transform_35, window_bounds = array<i64: 1, 32>}, {pipeline_mode = #tpu.pipeline_mode<synchronous>, transform_indices = @transform_36, window_bounds = array<i64: 1, 32>}, {pipeline_mode = #tpu.pipeline_mode<synchronous>, transform_indices = @transform_37, window_bounds = array<i64: 1, 32>}, {pipeline_mode = #tpu.pipeline_mode<synchronous>, transform_indices = @transform_38, window_bounds = array<i64: 32, 128>}, {pipeline_mode = #tpu.pipeline_mode<synchronous>, transform_indices = @transform_39, window_bounds = array<i64: 1, 128>}, {pipeline_mode = #tpu.pipeline_mode<synchronous>, transform_indices = @transform_40, window_bounds = array<i64: 128, 32>}, {pipeline_mode = #tpu.pipeline_mode<synchronous>, transform_indices = @transform_41, window_bounds = array<i64: 1, 32>}, {transform_indices = @transform_42, window_bounds = array<i64: 16, 32>}]} {
    %c0 = arith.constant 0 : index
    %c0_0 = arith.constant 0 : index
    %0 = vector.load %arg6[%c0, %c0_0] : memref<1x32xf32, #tpu.memory_space<vmem>>, vector<1x32xf32>
    %c0_1 = arith.constant 0 : index
    %c0_2 = arith.constant 0 : index
    %1 = vector.load %arg7[%c0_1, %c0_2] : memref<1x32xf32, #tpu.memory_space<vmem>>, vector<1x32xf32>
    %c0_3 = arith.constant 0 : index
    %c0_4 = arith.constant 0 : index
    %2 = vector.load %arg8[%c0_3, %c0_4] : memref<32x32xf32, #tpu.memory_space<vmem>>, vector<32x32xf32>
    %c0_5 = arith.constant 0 : index
    %c0_6 = arith.constant 0 : index
    %3 = vector.load %arg9[%c0_5, %c0_6] : memref<32x32xf32, #tpu.memory_space<vmem>>, vector<32x32xf32>
    %c0_7 = arith.constant 0 : index
    %c0_8 = arith.constant 0 : index
    %4 = vector.load %arg10[%c0_7, %c0_8] : memref<32x32xf32, #tpu.memory_space<vmem>>, vector<32x32xf32>
    %c0_9 = arith.constant 0 : index
    %c0_10 = arith.constant 0 : index
    %5 = vector.load %arg11[%c0_9, %c0_10] : memref<4x4xf32, #tpu.memory_space<vmem>>, vector<4x4xf32>
    %c0_11 = arith.constant 0 : index
    %c0_12 = arith.constant 0 : index
    %6 = vector.load %arg12[%c0_11, %c0_12] : memref<1x4xf32, #tpu.memory_space<vmem>>, vector<1x4xf32>
    %c0_13 = arith.constant 0 : index
    %c0_14 = arith.constant 0 : index
    %7 = vector.load %arg13[%c0_13, %c0_14] : memref<4x32xf32, #tpu.memory_space<vmem>>, vector<4x32xf32>
    %c0_15 = arith.constant 0 : index
    %c0_16 = arith.constant 0 : index
    %8 = vector.load %arg14[%c0_15, %c0_16] : memref<1x32xf32, #tpu.memory_space<vmem>>, vector<1x32xf32>
    %c0_17 = arith.constant 0 : index
    %c0_18 = arith.constant 0 : index
    %9 = vector.load %arg15[%c0_17, %c0_18] : memref<32x4xf32, #tpu.memory_space<vmem>>, vector<32x4xf32>
    %c0_19 = arith.constant 0 : index
    %c0_20 = arith.constant 0 : index
    %10 = vector.load %arg16[%c0_19, %c0_20] : memref<1x4xf32, #tpu.memory_space<vmem>>, vector<1x4xf32>
    %c0_21 = arith.constant 0 : index
    %c0_22 = arith.constant 0 : index
    %11 = vector.load %arg17[%c0_21, %c0_22] : memref<4x32xf32, #tpu.memory_space<vmem>>, vector<4x32xf32>
    %c0_23 = arith.constant 0 : index
    %c0_24 = arith.constant 0 : index
    %12 = vector.load %arg18[%c0_23, %c0_24] : memref<1x32xf32, #tpu.memory_space<vmem>>, vector<1x32xf32>
    %c0_25 = arith.constant 0 : index
    %c0_26 = arith.constant 0 : index
    %13 = vector.load %arg19[%c0_25, %c0_26] : memref<32x32xf32, #tpu.memory_space<vmem>>, vector<32x32xf32>
    %c0_27 = arith.constant 0 : index
    %c0_28 = arith.constant 0 : index
    %14 = vector.load %arg20[%c0_27, %c0_28] : memref<1x32xf32, #tpu.memory_space<vmem>>, vector<1x32xf32>
    %c0_29 = arith.constant 0 : index
    %c0_30 = arith.constant 0 : index
    %15 = vector.load %arg21[%c0_29, %c0_30] : memref<1x32xf32, #tpu.memory_space<vmem>>, vector<1x32xf32>
    %c0_31 = arith.constant 0 : index
    %c0_32 = arith.constant 0 : index
    %16 = vector.load %arg22[%c0_31, %c0_32] : memref<1x32xf32, #tpu.memory_space<vmem>>, vector<1x32xf32>
    %c0_33 = arith.constant 0 : index
    %c0_34 = arith.constant 0 : index
    %17 = vector.load %arg23[%c0_33, %c0_34] : memref<32x128xf32, #tpu.memory_space<vmem>>, vector<32x128xf32>
    %c0_35 = arith.constant 0 : index
    %c0_36 = arith.constant 0 : index
    %18 = vector.load %arg24[%c0_35, %c0_36] : memref<1x128xf32, #tpu.memory_space<vmem>>, vector<1x128xf32>
    %c0_37 = arith.constant 0 : index
    %c0_38 = arith.constant 0 : index
    %19 = vector.load %arg25[%c0_37, %c0_38] : memref<128x32xf32, #tpu.memory_space<vmem>>, vector<128x32xf32>
    %c0_39 = arith.constant 0 : index
    %c0_40 = arith.constant 0 : index
    %20 = vector.load %arg26[%c0_39, %c0_40] : memref<1x32xf32, #tpu.memory_space<vmem>>, vector<1x32xf32>
    %c0_41 = arith.constant 0 : index
    %c0_42 = arith.constant 0 : index
    %21 = vector.load %arg27[%c0_41, %c0_42] : memref<32x32xf32, #tpu.memory_space<vmem>>, vector<32x32xf32>
    %c0_43 = arith.constant 0 : index
    %c0_44 = arith.constant 0 : index
    %22 = vector.load %arg28[%c0_43, %c0_44] : memref<128x32xf32, #tpu.memory_space<vmem>>, vector<128x32xf32>
    %c0_45 = arith.constant 0 : index
    %c0_46 = arith.constant 0 : index
    %23 = vector.load %arg29[%c0_45, %c0_46] : memref<1x32xf32, #tpu.memory_space<vmem>>, vector<1x32xf32>
    %c0_47 = arith.constant 0 : index
    %c0_48 = arith.constant 0 : index
    %24 = vector.load %arg30[%c0_47, %c0_48] : memref<32x32xf32, #tpu.memory_space<vmem>>, vector<32x32xf32>
    %c0_49 = arith.constant 0 : index
    %c0_50 = arith.constant 0 : index
    %25 = vector.load %arg31[%c0_49, %c0_50] : memref<1x32xf32, #tpu.memory_space<vmem>>, vector<1x32xf32>
    %c0_51 = arith.constant 0 : index
    %c0_52 = arith.constant 0 : index
    %26 = vector.load %arg32[%c0_51, %c0_52] : memref<1x32xf32, #tpu.memory_space<vmem>>, vector<1x32xf32>
    %c0_53 = arith.constant 0 : index
    %c0_54 = arith.constant 0 : index
    %27 = vector.load %arg33[%c0_53, %c0_54] : memref<1x32xf32, #tpu.memory_space<vmem>>, vector<1x32xf32>
    %c0_55 = arith.constant 0 : index
    %c0_56 = arith.constant 0 : index
    %28 = vector.load %arg34[%c0_55, %c0_56] : memref<32x96xf32, #tpu.memory_space<vmem>>, vector<32x96xf32>
    %c0_57 = arith.constant 0 : index
    %c0_58 = arith.constant 0 : index
    %29 = vector.load %arg35[%c0_57, %c0_58] : memref<32x32xf32, #tpu.memory_space<vmem>>, vector<32x32xf32>
    %c0_59 = arith.constant 0 : index
    %c0_60 = arith.constant 0 : index
    %30 = vector.load %arg36[%c0_59, %c0_60] : memref<1x32xf32, #tpu.memory_space<vmem>>, vector<1x32xf32>
    %c0_61 = arith.constant 0 : index
    %c0_62 = arith.constant 0 : index
    %31 = vector.load %arg37[%c0_61, %c0_62] : memref<1x32xf32, #tpu.memory_space<vmem>>, vector<1x32xf32>
    %c0_63 = arith.constant 0 : index
    %c0_64 = arith.constant 0 : index
    %32 = vector.load %arg38[%c0_63, %c0_64] : memref<1x32xf32, #tpu.memory_space<vmem>>, vector<1x32xf32>
    %c0_65 = arith.constant 0 : index
    %c0_66 = arith.constant 0 : index
    %33 = vector.load %arg39[%c0_65, %c0_66] : memref<32x128xf32, #tpu.memory_space<vmem>>, vector<32x128xf32>
    %c0_67 = arith.constant 0 : index
    %c0_68 = arith.constant 0 : index
    %34 = vector.load %arg40[%c0_67, %c0_68] : memref<1x128xf32, #tpu.memory_space<vmem>>, vector<1x128xf32>
    %c0_69 = arith.constant 0 : index
    %c0_70 = arith.constant 0 : index
    %35 = vector.load %arg41[%c0_69, %c0_70] : memref<128x32xf32, #tpu.memory_space<vmem>>, vector<128x32xf32>
    %c0_71 = arith.constant 0 : index
    %c0_72 = arith.constant 0 : index
    %36 = vector.load %arg42[%c0_71, %c0_72] : memref<1x32xf32, #tpu.memory_space<vmem>>, vector<1x32xf32>
    %c0_73 = arith.constant 0 : index
    %c0_74 = arith.constant 0 : index
    %37 = vector.load %arg1[%c0_73, %c0_74] : memref<16x32xf32, #tpu.memory_space<vmem>>, vector<16x32xf32>
    %c0_75 = arith.constant 0 : index
    %c0_76 = arith.constant 0 : index
    %c0_77 = arith.constant 0 : index
    %38 = vector.load %arg2[%c0_75, %c0_76, %c0_77] : memref<4x16x32xf32, #tpu.memory_space<vmem>>, vector<4x16x32xf32>
    %c0_78 = arith.constant 0 : index
    %c0_79 = arith.constant 0 : index
    %c0_80 = arith.constant 0 : index
    %39 = vector.load %arg3[%c0_78, %c0_79, %c0_80] : memref<4x16x4xf32, #tpu.memory_space<vmem>>, vector<4x16x4xf32>
    %c0_81 = arith.constant 0 : index
    %c0_82 = arith.constant 0 : index
    %c0_83 = arith.constant 0 : index
    %40 = vector.load %arg4[%c0_81, %c0_82, %c0_83] : memref<4x16x1xf32, #tpu.memory_space<vmem>>, vector<4x16x1xf32>
    %cst = arith.constant dense<0.000000e+00> : vector<16xf32>
    %41 = vector.multi_reduction <add>, %37, %cst [1] : vector<16x32xf32> to vector<16xf32>
    %42 = vector.shape_cast %41 : vector<16xf32> to vector<16x1xf32>
    %cst_84 = arith.constant 3.200000e+01 : f32
    %43 = vector.broadcast %cst_84 : f32 to vector<16x1xf32>
    %44 = arith.divf %42, %43 : vector<16x1xf32>
    %45 = vector.broadcast %44 : vector<16x1xf32> to vector<16x32xf32>
    %46 = arith.subf %37, %45 : vector<16x32xf32>
    %47 = arith.mulf %46, %46 : vector<16x32xf32>
    %cst_85 = arith.constant dense<0.000000e+00> : vector<16xf32>
    %48 = vector.multi_reduction <add>, %47, %cst_85 [1] : vector<16x32xf32> to vector<16xf32>
    %49 = vector.shape_cast %48 : vector<16xf32> to vector<16x1xf32>
    %cst_86 = arith.constant 3.200000e+01 : f32
    %50 = vector.broadcast %cst_86 : f32 to vector<16x1xf32>
    %51 = arith.divf %49, %50 : vector<16x1xf32>
    %cst_87 = arith.constant 9.99999997E-7 : f32
    %52 = vector.broadcast %cst_87 : f32 to vector<16x1xf32>
    %53 = arith.addf %51, %52 : vector<16x1xf32>
    %54 = math.rsqrt %53 : vector<16x1xf32>
    %55 = vector.broadcast %54 : vector<16x1xf32> to vector<16x32xf32>
    %56 = arith.mulf %46, %55 : vector<16x32xf32>
    %57 = vector.broadcast %0 : vector<1x32xf32> to vector<16x32xf32>
    %58 = arith.mulf %56, %57 : vector<16x32xf32>
    %59 = vector.broadcast %1 : vector<1x32xf32> to vector<16x32xf32>
    %60 = arith.addf %58, %59 : vector<16x32xf32>
    %cst_88 = arith.constant dense<0.000000e+00> : vector<16x32xf32>
    %61 = tpu.matmul %60, %2, %cst_88 {dimension_numbers = #tpu.dot_dimension_numbers<[1], [0], [0], [1], [0, 0, 1, 1], [], []>} : vector<16x32xf32>, vector<32x32xf32>, vector<16x32xf32> -> vector<16x32xf32>
    %62 = vector.shape_cast %38 : vector<4x16x32xf32> to vector<64x32xf32>
    %cst_89 = arith.constant dense<0.000000e+00> : vector<64x32xf32>
    %63 = tpu.matmul %62, %3, %cst_89 {dimension_numbers = #tpu.dot_dimension_numbers<[1], [0], [0], [1], [0, 0, 1, 1], [], []>} : vector<64x32xf32>, vector<32x32xf32>, vector<64x32xf32> -> vector<64x32xf32>
    %cst_90 = arith.constant dense<0.000000e+00> : vector<64x32xf32>
    %64 = tpu.matmul %63, %4, %cst_90 {dimension_numbers = #tpu.dot_dimension_numbers<[1], [0], [0], [1], [0, 0, 1, 1], [], []>} : vector<64x32xf32>, vector<32x32xf32>, vector<64x32xf32> -> vector<64x32xf32>
    %65 = vector.shape_cast %39 : vector<4x16x4xf32> to vector<64x4xf32>
    %cst_91 = arith.constant dense<0.000000e+00> : vector<64x4xf32>
    %66 = tpu.matmul %65, %5, %cst_91 {dimension_numbers = #tpu.dot_dimension_numbers<[1], [0], [0], [1], [0, 0, 1, 1], [], []>} : vector<64x4xf32>, vector<4x4xf32>, vector<64x4xf32> -> vector<64x4xf32>
    %67 = vector.broadcast %6 : vector<1x4xf32> to vector<64x4xf32>
    %68 = arith.addf %66, %67 : vector<64x4xf32>
    %cst_92 = arith.constant 0.000000e+00 : f32
    %69 = vector.broadcast %cst_92 : f32 to vector<64x4xf32>
    %70 = arith.maximumf %68, %69 : vector<64x4xf32>
    %cst_93 = arith.constant dense<0.000000e+00> : vector<64x32xf32>
    %71 = tpu.matmul %70, %7, %cst_93 {dimension_numbers = #tpu.dot_dimension_numbers<[1], [0], [0], [1], [0, 0, 1, 1], [], []>} : vector<64x4xf32>, vector<4x32xf32>, vector<64x32xf32> -> vector<64x32xf32>
    %72 = vector.broadcast %8 : vector<1x32xf32> to vector<64x32xf32>
    %73 = arith.addf %71, %72 : vector<64x32xf32>
    %74 = arith.addf %63, %73 : vector<64x32xf32>
    %75 = vector.shape_cast %74 : vector<64x32xf32> to vector<4x16x32xf32>
    %76 = vector.shape_cast %61 : vector<16x32xf32> to vector<1x16x32xf32>
    %77 = vector.broadcast %76 : vector<1x16x32xf32> to vector<4x16x32xf32>
    %78 = arith.subf %75, %77 : vector<4x16x32xf32>
    %79 = vector.shape_cast %78 : vector<4x16x32xf32> to vector<64x32xf32>
    %cst_94 = arith.constant dense<0.000000e+00> : vector<64x4xf32>
    %80 = tpu.matmul %79, %9, %cst_94 {dimension_numbers = #tpu.dot_dimension_numbers<[1], [0], [0], [1], [0, 0, 1, 1], [], []>} : vector<64x32xf32>, vector<32x4xf32>, vector<64x4xf32> -> vector<64x4xf32>
    %81 = vector.broadcast %10 : vector<1x4xf32> to vector<64x4xf32>
    %82 = arith.addf %80, %81 : vector<64x4xf32>
    %cst_95 = arith.constant 0.000000e+00 : f32
    %83 = vector.broadcast %cst_95 : f32 to vector<64x4xf32>
    %84 = arith.maximumf %82, %83 : vector<64x4xf32>
    %cst_96 = arith.constant dense<0.000000e+00> : vector<64x32xf32>
    %85 = tpu.matmul %84, %11, %cst_96 {dimension_numbers = #tpu.dot_dimension_numbers<[1], [0], [0], [1], [0, 0, 1, 1], [], []>} : vector<64x4xf32>, vector<4x32xf32>, vector<64x32xf32> -> vector<64x32xf32>
    %86 = vector.broadcast %12 : vector<1x32xf32> to vector<64x32xf32>
    %87 = arith.addf %85, %86 : vector<64x32xf32>
    %88 = vector.shape_cast %87 : vector<64x32xf32> to vector<4x16x32xf32>
    %cst_97 = arith.constant 0.000000e+00 : f32
    %89 = vector.broadcast %cst_97 : f32 to vector<4x16x1xf32>
    %90 = arith.cmpf oeq, %40, %89 : vector<4x16x1xf32>
    %cst_98 = arith.constant -1.000000e+09 : f32
    %91 = vector.shape_cast %90 : vector<4x16x1xi1> to vector<4x16x1xi1>
    %92 = vector.broadcast %91 : vector<4x16x1xi1> to vector<4x16x32xi1>
    %93 = vector.broadcast %cst_98 : f32 to vector<4x16x32xf32>
    %94 = arith.select %92, %93, %88 : vector<4x16x32xi1>, vector<4x16x32xf32>
    %95 = arith.addf %64, %73 : vector<64x32xf32>
    %96 = vector.shape_cast %95 : vector<64x32xf32> to vector<4x16x32xf32>
    %97 = vector.extract_strided_slice %94 {offsets = [0, 0, 0], sizes = [1, 16, 32], strides = [1, 1, 1]} : vector<4x16x32xf32> to vector<1x16x32xf32>
    %98 = vector.shape_cast %97 : vector<1x16x32xf32> to vector<16x32xf32>
    %99 = vector.extract_strided_slice %94 {offsets = [1, 0, 0], sizes = [1, 16, 32], strides = [1, 1, 1]} : vector<4x16x32xf32> to vector<1x16x32xf32>
    %100 = vector.shape_cast %99 : vector<1x16x32xf32> to vector<16x32xf32>
    %101 = arith.maximumf %98, %100 : vector<16x32xf32>
    %102 = vector.extract_strided_slice %94 {offsets = [2, 0, 0], sizes = [1, 16, 32], strides = [1, 1, 1]} : vector<4x16x32xf32> to vector<1x16x32xf32>
    %103 = vector.shape_cast %102 : vector<1x16x32xf32> to vector<16x32xf32>
    %104 = arith.maximumf %101, %103 : vector<16x32xf32>
    %105 = vector.extract_strided_slice %94 {offsets = [3, 0, 0], sizes = [1, 16, 32], strides = [1, 1, 1]} : vector<4x16x32xf32> to vector<1x16x32xf32>
    %106 = vector.shape_cast %105 : vector<1x16x32xf32> to vector<16x32xf32>
    %107 = arith.maximumf %104, %106 : vector<16x32xf32>
    %cst_99 = arith.constant 0.000000e+00 : f32
    %108 = vector.broadcast %cst_99 : f32 to vector<16x32xf32>
    %cst_100 = arith.constant 0.000000e+00 : f32
    %109 = vector.broadcast %cst_100 : f32 to vector<16x32xf32>
    %110 = vector.extract_strided_slice %94 {offsets = [0, 0, 0], sizes = [1, 16, 32], strides = [1, 1, 1]} : vector<4x16x32xf32> to vector<1x16x32xf32>
    %111 = vector.shape_cast %110 : vector<1x16x32xf32> to vector<16x32xf32>
    %112 = arith.subf %111, %107 : vector<16x32xf32>
    %113 = math.exp %112 : vector<16x32xf32>
    %114 = arith.addf %108, %113 : vector<16x32xf32>
    %115 = vector.extract_strided_slice %96 {offsets = [0, 0, 0], sizes = [1, 16, 32], strides = [1, 1, 1]} : vector<4x16x32xf32> to vector<1x16x32xf32>
    %116 = vector.shape_cast %115 : vector<1x16x32xf32> to vector<16x32xf32>
    %117 = arith.mulf %116, %113 : vector<16x32xf32>
    %118 = arith.addf %109, %117 : vector<16x32xf32>
    %119 = vector.extract_strided_slice %94 {offsets = [1, 0, 0], sizes = [1, 16, 32], strides = [1, 1, 1]} : vector<4x16x32xf32> to vector<1x16x32xf32>
    %120 = vector.shape_cast %119 : vector<1x16x32xf32> to vector<16x32xf32>
    %121 = arith.subf %120, %107 : vector<16x32xf32>
    %122 = math.exp %121 : vector<16x32xf32>
    %123 = arith.addf %114, %122 : vector<16x32xf32>
    %124 = vector.extract_strided_slice %96 {offsets = [1, 0, 0], sizes = [1, 16, 32], strides = [1, 1, 1]} : vector<4x16x32xf32> to vector<1x16x32xf32>
    %125 = vector.shape_cast %124 : vector<1x16x32xf32> to vector<16x32xf32>
    %126 = arith.mulf %125, %122 : vector<16x32xf32>
    %127 = arith.addf %118, %126 : vector<16x32xf32>
    %128 = vector.extract_strided_slice %94 {offsets = [2, 0, 0], sizes = [1, 16, 32], strides = [1, 1, 1]} : vector<4x16x32xf32> to vector<1x16x32xf32>
    %129 = vector.shape_cast %128 : vector<1x16x32xf32> to vector<16x32xf32>
    %130 = arith.subf %129, %107 : vector<16x32xf32>
    %131 = math.exp %130 : vector<16x32xf32>
    %132 = arith.addf %123, %131 : vector<16x32xf32>
    %133 = vector.extract_strided_slice %96 {offsets = [2, 0, 0], sizes = [1, 16, 32], strides = [1, 1, 1]} : vector<4x16x32xf32> to vector<1x16x32xf32>
    %134 = vector.shape_cast %133 : vector<1x16x32xf32> to vector<16x32xf32>
    %135 = arith.mulf %134, %131 : vector<16x32xf32>
    %136 = arith.addf %127, %135 : vector<16x32xf32>
    %137 = vector.extract_strided_slice %94 {offsets = [3, 0, 0], sizes = [1, 16, 32], strides = [1, 1, 1]} : vector<4x16x32xf32> to vector<1x16x32xf32>
    %138 = vector.shape_cast %137 : vector<1x16x32xf32> to vector<16x32xf32>
    %139 = arith.subf %138, %107 : vector<16x32xf32>
    %140 = math.exp %139 : vector<16x32xf32>
    %141 = arith.addf %132, %140 : vector<16x32xf32>
    %142 = vector.extract_strided_slice %96 {offsets = [3, 0, 0], sizes = [1, 16, 32], strides = [1, 1, 1]} : vector<4x16x32xf32> to vector<1x16x32xf32>
    %143 = vector.shape_cast %142 : vector<1x16x32xf32> to vector<16x32xf32>
    %144 = arith.mulf %143, %140 : vector<16x32xf32>
    %145 = arith.addf %136, %144 : vector<16x32xf32>
    %146 = tpu.reciprocal %141 {approx = true} : vector<16x32xf32> -> vector<16x32xf32>
    %147 = arith.mulf %145, %146 : vector<16x32xf32>
    %cst_101 = arith.constant dense<0.000000e+00> : vector<16x32xf32>
    %148 = tpu.matmul %147, %13, %cst_101 {dimension_numbers = #tpu.dot_dimension_numbers<[1], [0], [0], [1], [0, 0, 1, 1], [], []>} : vector<16x32xf32>, vector<32x32xf32>, vector<16x32xf32> -> vector<16x32xf32>
    %149 = vector.broadcast %14 : vector<1x32xf32> to vector<16x32xf32>
    %150 = arith.addf %148, %149 : vector<16x32xf32>
    %151 = arith.addf %150, %37 : vector<16x32xf32>
    %cst_102 = arith.constant dense<0.000000e+00> : vector<16xf32>
    %152 = vector.multi_reduction <add>, %151, %cst_102 [1] : vector<16x32xf32> to vector<16xf32>
    %153 = vector.shape_cast %152 : vector<16xf32> to vector<16x1xf32>
    %cst_103 = arith.constant 3.200000e+01 : f32
    %154 = vector.broadcast %cst_103 : f32 to vector<16x1xf32>
    %155 = arith.divf %153, %154 : vector<16x1xf32>
    %156 = vector.broadcast %155 : vector<16x1xf32> to vector<16x32xf32>
    %157 = arith.subf %151, %156 : vector<16x32xf32>
    %158 = arith.mulf %157, %157 : vector<16x32xf32>
    %cst_104 = arith.constant dense<0.000000e+00> : vector<16xf32>
    %159 = vector.multi_reduction <add>, %158, %cst_104 [1] : vector<16x32xf32> to vector<16xf32>
    %160 = vector.shape_cast %159 : vector<16xf32> to vector<16x1xf32>
    %cst_105 = arith.constant 3.200000e+01 : f32
    %161 = vector.broadcast %cst_105 : f32 to vector<16x1xf32>
    %162 = arith.divf %160, %161 : vector<16x1xf32>
    %cst_106 = arith.constant 9.99999997E-7 : f32
    %163 = vector.broadcast %cst_106 : f32 to vector<16x1xf32>
    %164 = arith.addf %162, %163 : vector<16x1xf32>
    %165 = math.rsqrt %164 : vector<16x1xf32>
    %166 = vector.broadcast %165 : vector<16x1xf32> to vector<16x32xf32>
    %167 = arith.mulf %157, %166 : vector<16x32xf32>
    %168 = vector.broadcast %15 : vector<1x32xf32> to vector<16x32xf32>
    %169 = arith.mulf %167, %168 : vector<16x32xf32>
    %170 = vector.broadcast %16 : vector<1x32xf32> to vector<16x32xf32>
    %171 = arith.addf %169, %170 : vector<16x32xf32>
    %cst_107 = arith.constant dense<0.000000e+00> : vector<16x128xf32>
    %172 = tpu.matmul %171, %17, %cst_107 {dimension_numbers = #tpu.dot_dimension_numbers<[1], [0], [0], [1], [0, 0, 1, 1], [], []>} : vector<16x32xf32>, vector<32x128xf32>, vector<16x128xf32> -> vector<16x128xf32>
    %173 = vector.broadcast %18 : vector<1x128xf32> to vector<16x128xf32>
    %174 = arith.addf %172, %173 : vector<16x128xf32>
    %cst_108 = arith.constant 0.000000e+00 : f32
    %175 = vector.broadcast %cst_108 : f32 to vector<16x128xf32>
    %176 = arith.maximumf %174, %175 : vector<16x128xf32>
    %cst_109 = arith.constant dense<0.000000e+00> : vector<16x32xf32>
    %177 = tpu.matmul %176, %19, %cst_109 {dimension_numbers = #tpu.dot_dimension_numbers<[1], [0], [0], [1], [0, 0, 1, 1], [], []>} : vector<16x128xf32>, vector<128x32xf32>, vector<16x32xf32> -> vector<16x32xf32>
    %178 = vector.broadcast %20 : vector<1x32xf32> to vector<16x32xf32>
    %179 = arith.addf %177, %178 : vector<16x32xf32>
    %180 = arith.addf %179, %151 : vector<16x32xf32>
    %cst_110 = arith.constant dense<0.000000e+00> : vector<16x32xf32>
    %181 = tpu.matmul %180, %21, %cst_110 {dimension_numbers = #tpu.dot_dimension_numbers<[1], [0], [0], [1], [0, 0, 1, 1], [], []>} : vector<16x32xf32>, vector<32x32xf32>, vector<16x32xf32> -> vector<16x32xf32>
    %c0_111 = arith.constant 0 : index
    %c0_112 = arith.constant 0 : index
    %182 = vector.load %arg5[%c0_111, %c0_112] : memref<16x128xf32, #tpu.memory_space<vmem>>, vector<16x128xf32>
    %cst_113 = arith.constant dense<0.000000e+00> : vector<16x32xf32>
    %183 = tpu.matmul %182, %22, %cst_113 {dimension_numbers = #tpu.dot_dimension_numbers<[1], [0], [0], [1], [0, 0, 1, 1], [], []>} : vector<16x128xf32>, vector<128x32xf32>, vector<16x32xf32> -> vector<16x32xf32>
    %184 = arith.addf %181, %183 : vector<16x32xf32>
    %185 = vector.broadcast %23 : vector<1x32xf32> to vector<16x32xf32>
    %186 = arith.addf %184, %185 : vector<16x32xf32>
    %cst_114 = arith.constant 0.000000e+00 : f32
    %187 = vector.broadcast %cst_114 : f32 to vector<16x32xf32>
    %188 = arith.maximumf %186, %187 : vector<16x32xf32>
    %cst_115 = arith.constant dense<0.000000e+00> : vector<16x32xf32>
    %189 = tpu.matmul %188, %24, %cst_115 {dimension_numbers = #tpu.dot_dimension_numbers<[1], [0], [0], [1], [0, 0, 1, 1], [], []>} : vector<16x32xf32>, vector<32x32xf32>, vector<16x32xf32> -> vector<16x32xf32>
    %190 = vector.broadcast %25 : vector<1x32xf32> to vector<16x32xf32>
    %191 = arith.addf %189, %190 : vector<16x32xf32>
    %cst_116 = arith.constant dense<0.000000e+00> : vector<16xf32>
    %192 = vector.multi_reduction <add>, %191, %cst_116 [1] : vector<16x32xf32> to vector<16xf32>
    %193 = vector.shape_cast %192 : vector<16xf32> to vector<16x1xf32>
    %cst_117 = arith.constant 3.200000e+01 : f32
    %194 = vector.broadcast %cst_117 : f32 to vector<16x1xf32>
    %195 = arith.divf %193, %194 : vector<16x1xf32>
    %196 = vector.broadcast %195 : vector<16x1xf32> to vector<16x32xf32>
    %197 = arith.subf %191, %196 : vector<16x32xf32>
    %198 = arith.mulf %197, %197 : vector<16x32xf32>
    %cst_118 = arith.constant dense<0.000000e+00> : vector<16xf32>
    %199 = vector.multi_reduction <add>, %198, %cst_118 [1] : vector<16x32xf32> to vector<16xf32>
    %200 = vector.shape_cast %199 : vector<16xf32> to vector<16x1xf32>
    %cst_119 = arith.constant 3.200000e+01 : f32
    %201 = vector.broadcast %cst_119 : f32 to vector<16x1xf32>
    %202 = arith.divf %200, %201 : vector<16x1xf32>
    %cst_120 = arith.constant 9.99999997E-7 : f32
    %203 = vector.broadcast %cst_120 : f32 to vector<16x1xf32>
    %204 = arith.addf %202, %203 : vector<16x1xf32>
    %205 = math.rsqrt %204 : vector<16x1xf32>
    %206 = vector.broadcast %205 : vector<16x1xf32> to vector<16x32xf32>
    %207 = arith.mulf %197, %206 : vector<16x32xf32>
    %208 = vector.broadcast %26 : vector<1x32xf32> to vector<16x32xf32>
    %209 = arith.mulf %207, %208 : vector<16x32xf32>
    %210 = vector.broadcast %27 : vector<1x32xf32> to vector<16x32xf32>
    %211 = arith.addf %209, %210 : vector<16x32xf32>
    %cst_121 = arith.constant dense<0.000000e+00> : vector<16x96xf32>
    %212 = tpu.matmul %211, %28, %cst_121 {dimension_numbers = #tpu.dot_dimension_numbers<[1], [0], [0], [1], [0, 0, 1, 1], [], []>} : vector<16x32xf32>, vector<32x96xf32>, vector<16x96xf32> -> vector<16x96xf32>
    %213 = vector.shape_cast %212 : vector<16x96xf32> to vector<2x8x96xf32>
    %214 = vector.extract_strided_slice %213 {offsets = [0, 0, 0], sizes = [2, 8, 8], strides = [1, 1, 1]} : vector<2x8x96xf32> to vector<2x8x8xf32>
    %215 = vector.extract_strided_slice %213 {offsets = [0, 0, 32], sizes = [2, 8, 8], strides = [1, 1, 1]} : vector<2x8x96xf32> to vector<2x8x8xf32>
    %216 = vector.extract_strided_slice %213 {offsets = [0, 0, 64], sizes = [2, 8, 8], strides = [1, 1, 1]} : vector<2x8x96xf32> to vector<2x8x8xf32>
    "tpu.trace_start"() <{level = 10 : i32, message = "rsd,rtd->rst"}> : () -> ()
    %cst_122 = arith.constant dense<0.000000e+00> : vector<2x8x8xf32>
    %217 = tpu.matmul %214, %215, %cst_122 {dimension_numbers = #tpu.dot_dimension_numbers<[2], [2], [1], [1], [0, 0, 0, 1, 1, 1], [0], [0]>} : vector<2x8x8xf32>, vector<2x8x8xf32>, vector<2x8x8xf32> -> vector<2x8x8xf32>
    "tpu.trace_stop"() : () -> ()
    %cst_123 = arith.constant 0.353553385 : f32
    %218 = vector.broadcast %cst_123 : f32 to vector<2x8x8xf32>
    %219 = arith.mulf %217, %218 : vector<2x8x8xf32>
    %cst_124 = arith.constant dense<0xFF800000> : vector<2x8xf32>
    %220 = vector.multi_reduction <maximumf>, %219, %cst_124 [2] : vector<2x8x8xf32> to vector<2x8xf32>
    %221 = vector.shape_cast %220 : vector<2x8xf32> to vector<2x8x1xf32>
    %222 = vector.broadcast %221 : vector<2x8x1xf32> to vector<2x8x8xf32>
    %223 = arith.subf %219, %222 : vector<2x8x8xf32>
    %224 = math.exp %223 : vector<2x8x8xf32>
    %cst_125 = arith.constant dense<0.000000e+00> : vector<2x8xf32>
    %225 = vector.multi_reduction <add>, %224, %cst_125 [2] : vector<2x8x8xf32> to vector<2x8xf32>
    %226 = vector.shape_cast %225 : vector<2x8xf32> to vector<2x8x1xf32>
    %227 = tpu.reciprocal %226 {approx = true} : vector<2x8x1xf32> -> vector<2x8x1xf32>
    %228 = vector.broadcast %227 : vector<2x8x1xf32> to vector<2x8x8xf32>
    %229 = arith.mulf %224, %228 : vector<2x8x8xf32>
    "tpu.trace_start"() <{level = 10 : i32, message = "rst,rtd->rsd"}> : () -> ()
    %cst_126 = arith.constant dense<0.000000e+00> : vector<2x8x8xf32>
    %230 = tpu.matmul %229, %216, %cst_126 {dimension_numbers = #tpu.dot_dimension_numbers<[2], [1], [1], [2], [0, 0, 0, 1, 1, 2], [0], [0]>} : vector<2x8x8xf32>, vector<2x8x8xf32>, vector<2x8x8xf32> -> vector<2x8x8xf32>
    "tpu.trace_stop"() : () -> ()
    %231 = vector.extract_strided_slice %213 {offsets = [0, 0, 8], sizes = [2, 8, 8], strides = [1, 1, 1]} : vector<2x8x96xf32> to vector<2x8x8xf32>
    %232 = vector.extract_strided_slice %213 {offsets = [0, 0, 40], sizes = [2, 8, 8], strides = [1, 1, 1]} : vector<2x8x96xf32> to vector<2x8x8xf32>
    %233 = vector.extract_strided_slice %213 {offsets = [0, 0, 72], sizes = [2, 8, 8], strides = [1, 1, 1]} : vector<2x8x96xf32> to vector<2x8x8xf32>
    "tpu.trace_start"() <{level = 10 : i32, message = "rsd,rtd->rst"}> : () -> ()
    %cst_127 = arith.constant dense<0.000000e+00> : vector<2x8x8xf32>
    %234 = tpu.matmul %231, %232, %cst_127 {dimension_numbers = #tpu.dot_dimension_numbers<[2], [2], [1], [1], [0, 0, 0, 1, 1, 1], [0], [0]>} : vector<2x8x8xf32>, vector<2x8x8xf32>, vector<2x8x8xf32> -> vector<2x8x8xf32>
    "tpu.trace_stop"() : () -> ()
    %cst_128 = arith.constant 0.353553385 : f32
    %235 = vector.broadcast %cst_128 : f32 to vector<2x8x8xf32>
    %236 = arith.mulf %234, %235 : vector<2x8x8xf32>
    %cst_129 = arith.constant dense<0xFF800000> : vector<2x8xf32>
    %237 = vector.multi_reduction <maximumf>, %236, %cst_129 [2] : vector<2x8x8xf32> to vector<2x8xf32>
    %238 = vector.shape_cast %237 : vector<2x8xf32> to vector<2x8x1xf32>
    %239 = vector.broadcast %238 : vector<2x8x1xf32> to vector<2x8x8xf32>
    %240 = arith.subf %236, %239 : vector<2x8x8xf32>
    %241 = math.exp %240 : vector<2x8x8xf32>
    %cst_130 = arith.constant dense<0.000000e+00> : vector<2x8xf32>
    %242 = vector.multi_reduction <add>, %241, %cst_130 [2] : vector<2x8x8xf32> to vector<2x8xf32>
    %243 = vector.shape_cast %242 : vector<2x8xf32> to vector<2x8x1xf32>
    %244 = tpu.reciprocal %243 {approx = true} : vector<2x8x1xf32> -> vector<2x8x1xf32>
    %245 = vector.broadcast %244 : vector<2x8x1xf32> to vector<2x8x8xf32>
    %246 = arith.mulf %241, %245 : vector<2x8x8xf32>
    "tpu.trace_start"() <{level = 10 : i32, message = "rst,rtd->rsd"}> : () -> ()
    %cst_131 = arith.constant dense<0.000000e+00> : vector<2x8x8xf32>
    %247 = tpu.matmul %246, %233, %cst_131 {dimension_numbers = #tpu.dot_dimension_numbers<[2], [1], [1], [2], [0, 0, 0, 1, 1, 2], [0], [0]>} : vector<2x8x8xf32>, vector<2x8x8xf32>, vector<2x8x8xf32> -> vector<2x8x8xf32>
    "tpu.trace_stop"() : () -> ()
    %248 = vector.extract_strided_slice %213 {offsets = [0, 0, 16], sizes = [2, 8, 8], strides = [1, 1, 1]} : vector<2x8x96xf32> to vector<2x8x8xf32>
    %249 = vector.extract_strided_slice %213 {offsets = [0, 0, 48], sizes = [2, 8, 8], strides = [1, 1, 1]} : vector<2x8x96xf32> to vector<2x8x8xf32>
    %250 = vector.extract_strided_slice %213 {offsets = [0, 0, 80], sizes = [2, 8, 8], strides = [1, 1, 1]} : vector<2x8x96xf32> to vector<2x8x8xf32>
    "tpu.trace_start"() <{level = 10 : i32, message = "rsd,rtd->rst"}> : () -> ()
    %cst_132 = arith.constant dense<0.000000e+00> : vector<2x8x8xf32>
    %251 = tpu.matmul %248, %249, %cst_132 {dimension_numbers = #tpu.dot_dimension_numbers<[2], [2], [1], [1], [0, 0, 0, 1, 1, 1], [0], [0]>} : vector<2x8x8xf32>, vector<2x8x8xf32>, vector<2x8x8xf32> -> vector<2x8x8xf32>
    "tpu.trace_stop"() : () -> ()
    %cst_133 = arith.constant 0.353553385 : f32
    %252 = vector.broadcast %cst_133 : f32 to vector<2x8x8xf32>
    %253 = arith.mulf %251, %252 : vector<2x8x8xf32>
    %cst_134 = arith.constant dense<0xFF800000> : vector<2x8xf32>
    %254 = vector.multi_reduction <maximumf>, %253, %cst_134 [2] : vector<2x8x8xf32> to vector<2x8xf32>
    %255 = vector.shape_cast %254 : vector<2x8xf32> to vector<2x8x1xf32>
    %256 = vector.broadcast %255 : vector<2x8x1xf32> to vector<2x8x8xf32>
    %257 = arith.subf %253, %256 : vector<2x8x8xf32>
    %258 = math.exp %257 : vector<2x8x8xf32>
    %cst_135 = arith.constant dense<0.000000e+00> : vector<2x8xf32>
    %259 = vector.multi_reduction <add>, %258, %cst_135 [2] : vector<2x8x8xf32> to vector<2x8xf32>
    %260 = vector.shape_cast %259 : vector<2x8xf32> to vector<2x8x1xf32>
    %261 = tpu.reciprocal %260 {approx = true} : vector<2x8x1xf32> -> vector<2x8x1xf32>
    %262 = vector.broadcast %261 : vector<2x8x1xf32> to vector<2x8x8xf32>
    %263 = arith.mulf %258, %262 : vector<2x8x8xf32>
    "tpu.trace_start"() <{level = 10 : i32, message = "rst,rtd->rsd"}> : () -> ()
    %cst_136 = arith.constant dense<0.000000e+00> : vector<2x8x8xf32>
    %264 = tpu.matmul %263, %250, %cst_136 {dimension_numbers = #tpu.dot_dimension_numbers<[2], [1], [1], [2], [0, 0, 0, 1, 1, 2], [0], [0]>} : vector<2x8x8xf32>, vector<2x8x8xf32>, vector<2x8x8xf32> -> vector<2x8x8xf32>
    "tpu.trace_stop"() : () -> ()
    %265 = vector.extract_strided_slice %213 {offsets = [0, 0, 24], sizes = [2, 8, 8], strides = [1, 1, 1]} : vector<2x8x96xf32> to vector<2x8x8xf32>
    %266 = vector.extract_strided_slice %213 {offsets = [0, 0, 56], sizes = [2, 8, 8], strides = [1, 1, 1]} : vector<2x8x96xf32> to vector<2x8x8xf32>
    %267 = vector.extract_strided_slice %213 {offsets = [0, 0, 88], sizes = [2, 8, 8], strides = [1, 1, 1]} : vector<2x8x96xf32> to vector<2x8x8xf32>
    "tpu.trace_start"() <{level = 10 : i32, message = "rsd,rtd->rst"}> : () -> ()
    %cst_137 = arith.constant dense<0.000000e+00> : vector<2x8x8xf32>
    %268 = tpu.matmul %265, %266, %cst_137 {dimension_numbers = #tpu.dot_dimension_numbers<[2], [2], [1], [1], [0, 0, 0, 1, 1, 1], [0], [0]>} : vector<2x8x8xf32>, vector<2x8x8xf32>, vector<2x8x8xf32> -> vector<2x8x8xf32>
    "tpu.trace_stop"() : () -> ()
    %cst_138 = arith.constant 0.353553385 : f32
    %269 = vector.broadcast %cst_138 : f32 to vector<2x8x8xf32>
    %270 = arith.mulf %268, %269 : vector<2x8x8xf32>
    %cst_139 = arith.constant dense<0xFF800000> : vector<2x8xf32>
    %271 = vector.multi_reduction <maximumf>, %270, %cst_139 [2] : vector<2x8x8xf32> to vector<2x8xf32>
    %272 = vector.shape_cast %271 : vector<2x8xf32> to vector<2x8x1xf32>
    %273 = vector.broadcast %272 : vector<2x8x1xf32> to vector<2x8x8xf32>
    %274 = arith.subf %270, %273 : vector<2x8x8xf32>
    %275 = math.exp %274 : vector<2x8x8xf32>
    %cst_140 = arith.constant dense<0.000000e+00> : vector<2x8xf32>
    %276 = vector.multi_reduction <add>, %275, %cst_140 [2] : vector<2x8x8xf32> to vector<2x8xf32>
    %277 = vector.shape_cast %276 : vector<2x8xf32> to vector<2x8x1xf32>
    %278 = tpu.reciprocal %277 {approx = true} : vector<2x8x1xf32> -> vector<2x8x1xf32>
    %279 = vector.broadcast %278 : vector<2x8x1xf32> to vector<2x8x8xf32>
    %280 = arith.mulf %275, %279 : vector<2x8x8xf32>
    "tpu.trace_start"() <{level = 10 : i32, message = "rst,rtd->rsd"}> : () -> ()
    %cst_141 = arith.constant dense<0.000000e+00> : vector<2x8x8xf32>
    %281 = tpu.matmul %280, %267, %cst_141 {dimension_numbers = #tpu.dot_dimension_numbers<[2], [1], [1], [2], [0, 0, 0, 1, 1, 2], [0], [0]>} : vector<2x8x8xf32>, vector<2x8x8xf32>, vector<2x8x8xf32> -> vector<2x8x8xf32>
    "tpu.trace_stop"() : () -> ()
    %282 = tpu.concatenate %230, %247, %264, %281 in 2 : vector<2x8x8xf32>, vector<2x8x8xf32>, vector<2x8x8xf32>, vector<2x8x8xf32> -> vector<2x8x32xf32>
    %283 = vector.shape_cast %282 : vector<2x8x32xf32> to vector<16x32xf32>
    %cst_142 = arith.constant dense<0.000000e+00> : vector<16x32xf32>
    %284 = tpu.matmul %283, %29, %cst_142 {dimension_numbers = #tpu.dot_dimension_numbers<[1], [0], [0], [1], [0, 0, 1, 1], [], []>} : vector<16x32xf32>, vector<32x32xf32>, vector<16x32xf32> -> vector<16x32xf32>
    %285 = vector.broadcast %30 : vector<1x32xf32> to vector<16x32xf32>
    %286 = arith.addf %284, %285 : vector<16x32xf32>
    %287 = arith.addf %286, %191 : vector<16x32xf32>
    %cst_143 = arith.constant dense<0.000000e+00> : vector<16xf32>
    %288 = vector.multi_reduction <add>, %287, %cst_143 [1] : vector<16x32xf32> to vector<16xf32>
    %289 = vector.shape_cast %288 : vector<16xf32> to vector<16x1xf32>
    %cst_144 = arith.constant 3.200000e+01 : f32
    %290 = vector.broadcast %cst_144 : f32 to vector<16x1xf32>
    %291 = arith.divf %289, %290 : vector<16x1xf32>
    %292 = vector.broadcast %291 : vector<16x1xf32> to vector<16x32xf32>
    %293 = arith.subf %287, %292 : vector<16x32xf32>
    %294 = arith.mulf %293, %293 : vector<16x32xf32>
    %cst_145 = arith.constant dense<0.000000e+00> : vector<16xf32>
    %295 = vector.multi_reduction <add>, %294, %cst_145 [1] : vector<16x32xf32> to vector<16xf32>
    %296 = vector.shape_cast %295 : vector<16xf32> to vector<16x1xf32>
    %cst_146 = arith.constant 3.200000e+01 : f32
    %297 = vector.broadcast %cst_146 : f32 to vector<16x1xf32>
    %298 = arith.divf %296, %297 : vector<16x1xf32>
    %cst_147 = arith.constant 9.99999997E-7 : f32
    %299 = vector.broadcast %cst_147 : f32 to vector<16x1xf32>
    %300 = arith.addf %298, %299 : vector<16x1xf32>
    %301 = math.rsqrt %300 : vector<16x1xf32>
    %302 = vector.broadcast %301 : vector<16x1xf32> to vector<16x32xf32>
    %303 = arith.mulf %293, %302 : vector<16x32xf32>
    %304 = vector.broadcast %31 : vector<1x32xf32> to vector<16x32xf32>
    %305 = arith.mulf %303, %304 : vector<16x32xf32>
    %306 = vector.broadcast %32 : vector<1x32xf32> to vector<16x32xf32>
    %307 = arith.addf %305, %306 : vector<16x32xf32>
    %cst_148 = arith.constant dense<0.000000e+00> : vector<16x128xf32>
    %308 = tpu.matmul %307, %33, %cst_148 {dimension_numbers = #tpu.dot_dimension_numbers<[1], [0], [0], [1], [0, 0, 1, 1], [], []>} : vector<16x32xf32>, vector<32x128xf32>, vector<16x128xf32> -> vector<16x128xf32>
    %309 = vector.broadcast %34 : vector<1x128xf32> to vector<16x128xf32>
    %310 = arith.addf %308, %309 : vector<16x128xf32>
    %cst_149 = arith.constant 0.000000e+00 : f32
    %311 = vector.broadcast %cst_149 : f32 to vector<16x128xf32>
    %312 = arith.maximumf %310, %311 : vector<16x128xf32>
    %cst_150 = arith.constant dense<0.000000e+00> : vector<16x32xf32>
    %313 = tpu.matmul %312, %35, %cst_150 {dimension_numbers = #tpu.dot_dimension_numbers<[1], [0], [0], [1], [0, 0, 1, 1], [], []>} : vector<16x128xf32>, vector<128x32xf32>, vector<16x32xf32> -> vector<16x32xf32>
    %314 = vector.broadcast %36 : vector<1x32xf32> to vector<16x32xf32>
    %315 = arith.addf %313, %314 : vector<16x32xf32>
    %316 = arith.addf %315, %287 : vector<16x32xf32>
    %c0_151 = arith.constant 0 : index
    %c0_152 = arith.constant 0 : index
    %317 = vector.load %arg43[%c0_151, %c0_152] : memref<16x32xf32, #tpu.memory_space<vmem>>, vector<16x32xf32>
    tpu.vector_store %arg43[%c0_151, %c0_152], %316 {strides = array<i32>} : memref<16x32xf32, #tpu.memory_space<vmem>>, vector<16x32xf32>,
    return
  }
  func.func @transform_0(%arg0: i32) -> (i32, i32) {
    %c0_i32 = arith.constant 0 : i32
    %c0_i32_0 = arith.constant 0 : i32
    return %arg0, %c0_i32 : i32, i32
  }
  func.func @transform_1(%arg0: i32) -> (i32, i32, i32) {
    %c0_i32 = arith.constant 0 : i32
    %c0_i32_0 = arith.constant 0 : i32
    %c0_i32_1 = arith.constant 0 : i32
    return %c0_i32, %arg0, %c0_i32_0 : i32, i32, i32
  }
  func.func @transform_2(%arg0: i32) -> (i32, i32, i32) {
    %c0_i32 = arith.constant 0 : i32
    %c0_i32_0 = arith.constant 0 : i32
    %c0_i32_1 = arith.constant 0 : i32
    return %c0_i32, %arg0, %c0_i32_0 : i32, i32, i32
  }
  func.func @transform_3(%arg0: i32) -> (i32, i32, i32) {
    %c0_i32 = arith.constant 0 : i32
    %c0_i32_0 = arith.constant 0 : i32
    %c0_i32_1 = arith.constant 0 : i32
    return %c0_i32, %arg0, %c0_i32_0 : i32, i32, i32
  }
  func.func @transform_4(%arg0: i32) -> (i32, i32) {
    %c0_i32 = arith.constant 0 : i32
    %c0_i32_0 = arith.constant 0 : i32
    return %arg0, %c0_i32 : i32, i32
  }
  func.func @transform_5(%arg0: i32) -> (i32, i32) {
    %c0_i32 = arith.constant 0 : i32
    %c0_i32_0 = arith.constant 0 : i32
    %c0_i32_1 = arith.constant 0 : i32
    return %c0_i32, %c0_i32_0 : i32, i32
  }
  func.func @transform_6(%arg0: i32) -> (i32, i32) {
    %c0_i32 = arith.constant 0 : i32
    %c0_i32_0 = arith.constant 0 : i32
    %c0_i32_1 = arith.constant 0 : i32
    return %c0_i32, %c0_i32_0 : i32, i32
  }
  func.func @transform_7(%arg0: i32) -> (i32, i32) {
    %c0_i32 = arith.constant 0 : i32
    %c0_i32_0 = arith.constant 0 : i32
    %c0_i32_1 = arith.constant 0 : i32
    return %c0_i32, %c0_i32_0 : i32, i32
  }
  func.func @transform_8(%arg0: i32) -> (i32, i32) {
    %c0_i32 = arith.constant 0 : i32
    %c0_i32_0 = arith.constant 0 : i32
    %c0_i32_1 = arith.constant 0 : i32
    return %c0_i32, %c0_i32_0 : i32, i32
  }
  func.func @transform_9(%arg0: i32) -> (i32, i32) {
    %c0_i32 = arith.constant 0 : i32
    %c0_i32_0 = arith.constant 0 : i32
    %c0_i32_1 = arith.constant 0 : i32
    return %c0_i32, %c0_i32_0 : i32, i32
  }
  func.func @transform_10(%arg0: i32) -> (i32, i32) {
    %c0_i32 = arith.constant 0 : i32
    %c0_i32_0 = arith.constant 0 : i32
    %c0_i32_1 = arith.constant 0 : i32
    return %c0_i32, %c0_i32_0 : i32, i32
  }
  func.func @transform_11(%arg0: i32) -> (i32, i32) {
    %c0_i32 = arith.constant 0 : i32
    %c0_i32_0 = arith.constant 0 : i32
    %c0_i32_1 = arith.constant 0 : i32
    return %c0_i32, %c0_i32_0 : i32, i32
  }
  func.func @transform_12(%arg0: i32) -> (i32, i32) {
    %c0_i32 = arith.constant 0 : i32
    %c0_i32_0 = arith.constant 0 : i32
    %c0_i32_1 = arith.constant 0 : i32
    return %c0_i32, %c0_i32_0 : i32, i32
  }
  func.func @transform_13(%arg0: i32) -> (i32, i32) {
    %c0_i32 = arith.constant 0 : i32
    %c0_i32_0 = arith.constant 0 : i32
    %c0_i32_1 = arith.constant 0 : i32
    return %c0_i32, %c0_i32_0 : i32, i32
  }
  func.func @transform_14(%arg0: i32) -> (i32, i32) {
    %c0_i32 = arith.constant 0 : i32
    %c0_i32_0 = arith.constant 0 : i32
    %c0_i32_1 = arith.constant 0 : i32
    return %c0_i32, %c0_i32_0 : i32, i32
  }
  func.func @transform_15(%arg0: i32) -> (i32, i32) {
    %c0_i32 = arith.constant 0 : i32
    %c0_i32_0 = arith.constant 0 : i32
    %c0_i32_1 = arith.constant 0 : i32
    return %c0_i32, %c0_i32_0 : i32, i32
  }
  func.func @transform_16(%arg0: i32) -> (i32, i32) {
    %c0_i32 = arith.constant 0 : i32
    %c0_i32_0 = arith.constant 0 : i32
    %c0_i32_1 = arith.constant 0 : i32
    return %c0_i32, %c0_i32_0 : i32, i32
  }
  func.func @transform_17(%arg0: i32) -> (i32, i32) {
    %c0_i32 = arith.constant 0 : i32
    %c0_i32_0 = arith.constant 0 : i32
    %c0_i32_1 = arith.constant 0 : i32
    return %c0_i32, %c0_i32_0 : i32, i32
  }
  func.func @transform_18(%arg0: i32) -> (i32, i32) {
    %c0_i32 = arith.constant 0 : i32
    %c0_i32_0 = arith.constant 0 : i32
    %c0_i32_1 = arith.constant 0 : i32
    return %c0_i32, %c0_i32_0 : i32, i32
  }
  func.func @transform_19(%arg0: i32) -> (i32, i32) {
    %c0_i32 = arith.constant 0 : i32
    %c0_i32_0 = arith.constant 0 : i32
    %c0_i32_1 = arith.constant 0 : i32
    return %c0_i32, %c0_i32_0 : i32, i32
  }
  func.func @transform_20(%arg0: i32) -> (i32, i32) {
    %c0_i32 = arith.constant 0 : i32
    %c0_i32_0 = arith.constant 0 : i32
    %c0_i32_1 = arith.constant 0 : i32
    return %c0_i32, %c0_i32_0 : i32, i32
  }
  func.func @transform_21(%arg0: i32) -> (i32, i32) {
    %c0_i32 = arith.constant 0 : i32
    %c0_i32_0 = arith.constant 0 : i32
    %c0_i32_1 = arith.constant 0 : i32
    return %c0_i32, %c0_i32_0 : i32, i32
  }
  func.func @transform_22(%arg0: i32) -> (i32, i32) {
    %c0_i32 = arith.constant 0 : i32
    %c0_i32_0 = arith.constant 0 : i32
    %c0_i32_1 = arith.constant 0 : i32
    return %c0_i32, %c0_i32_0 : i32, i32
  }
  func.func @transform_23(%arg0: i32) -> (i32, i32) {
    %c0_i32 = arith.constant 0 : i32
    %c0_i32_0 = arith.constant 0 : i32
    %c0_i32_1 = arith.constant 0 : i32
    return %c0_i32, %c0_i32_0 : i32, i32
  }
  func.func @transform_24(%arg0: i32) -> (i32, i32) {
    %c0_i32 = arith.constant 0 : i32
    %c0_i32_0 = arith.constant 0 : i32
    %c0_i32_1 = arith.constant 0 : i32
    return %c0_i32, %c0_i32_0 : i32, i32
  }
  func.func @transform_25(%arg0: i32) -> (i32, i32) {
    %c0_i32 = arith.constant 0 : i32
    %c0_i32_0 = arith.constant 0 : i32
    %c0_i32_1 = arith.constant 0 : i32
    return %c0_i32, %c0_i32_0 : i32, i32
  }
  func.func @transform_26(%arg0: i32) -> (i32, i32) {
    %c0_i32 = arith.constant 0 : i32
    %c0_i32_0 = arith.constant 0 : i32
    %c0_i32_1 = arith.constant 0 : i32
    return %c0_i32, %c0_i32_0 : i32, i32
  }
  func.func @transform_27(%arg0: i32) -> (i32, i32) {
    %c0_i32 = arith.constant 0 : i32
    %c0_i32_0 = arith.constant 0 : i32
    %c0_i32_1 = arith.constant 0 : i32
    return %c0_i32, %c0_i32_0 : i32, i32
  }
  func.func @transform_28(%arg0: i32) -> (i32, i32) {
    %c0_i32 = arith.constant 0 : i32
    %c0_i32_0 = arith.constant 0 : i32
    %c0_i32_1 = arith.constant 0 : i32
    return %c0_i32, %c0_i32_0 : i32, i32
  }
  func.func @transform_29(%arg0: i32) -> (i32, i32) {
    %c0_i32 = arith.constant 0 : i32
    %c0_i32_0 = arith.constant 0 : i32
    %c0_i32_1 = arith.constant 0 : i32
    return %c0_i32, %c0_i32_0 : i32, i32
  }
  func.func @transform_30(%arg0: i32) -> (i32, i32) {
    %c0_i32 = arith.constant 0 : i32
    %c0_i32_0 = arith.constant 0 : i32
    %c0_i32_1 = arith.constant 0 : i32
    return %c0_i32, %c0_i32_0 : i32, i32
  }
  func.func @transform_31(%arg0: i32) -> (i32, i32) {
    %c0_i32 = arith.constant 0 : i32
    %c0_i32_0 = arith.constant 0 : i32
    %c0_i32_1 = arith.constant 0 : i32
    return %c0_i32, %c0_i32_0 : i32, i32
  }
  func.func @transform_32(%arg0: i32) -> (i32, i32) {
    %c0_i32 = arith.constant 0 : i32
    %c0_i32_0 = arith.constant 0 : i32
    %c0_i32_1 = arith.constant 0 : i32
    return %c0_i32, %c0_i32_0 : i32, i32
  }
  func.func @transform_33(%arg0: i32) -> (i32, i32) {
    %c0_i32 = arith.constant 0 : i32
    %c0_i32_0 = arith.constant 0 : i32
    %c0_i32_1 = arith.constant 0 : i32
    return %c0_i32, %c0_i32_0 : i32, i32
  }
  func.func @transform_34(%arg0: i32) -> (i32, i32) {
    %c0_i32 = arith.constant 0 : i32
    %c0_i32_0 = arith.constant 0 : i32
    %c0_i32_1 = arith.constant 0 : i32
    return %c0_i32, %c0_i32_0 : i32, i32
  }
  func.func @transform_35(%arg0: i32) -> (i32, i32) {
    %c0_i32 = arith.constant 0 : i32
    %c0_i32_0 = arith.constant 0 : i32
    %c0_i32_1 = arith.constant 0 : i32
    return %c0_i32, %c0_i32_0 : i32, i32
  }
  func.func @transform_36(%arg0: i32) -> (i32, i32) {
    %c0_i32 = arith.constant 0 : i32
    %c0_i32_0 = arith.constant 0 : i32
    %c0_i32_1 = arith.constant 0 : i32
    return %c0_i32, %c0_i32_0 : i32, i32
  }
  func.func @transform_37(%arg0: i32) -> (i32, i32) {
    %c0_i32 = arith.constant 0 : i32
    %c0_i32_0 = arith.constant 0 : i32
    %c0_i32_1 = arith.constant 0 : i32
    return %c0_i32, %c0_i32_0 : i32, i32
  }
  func.func @transform_38(%arg0: i32) -> (i32, i32) {
    %c0_i32 = arith.constant 0 : i32
    %c0_i32_0 = arith.constant 0 : i32
    %c0_i32_1 = arith.constant 0 : i32
    return %c0_i32, %c0_i32_0 : i32, i32
  }
  func.func @transform_39(%arg0: i32) -> (i32, i32) {
    %c0_i32 = arith.constant 0 : i32
    %c0_i32_0 = arith.constant 0 : i32
    %c0_i32_1 = arith.constant 0 : i32
    return %c0_i32, %c0_i32_0 : i32, i32
  }
  func.func @transform_40(%arg0: i32) -> (i32, i32) {
    %c0_i32 = arith.constant 0 : i32
    %c0_i32_0 = arith.constant 0 : i32
    %c0_i32_1 = arith.constant 0 : i32
    return %c0_i32, %c0_i32_0 : i32, i32
  }
  func.func @transform_41(%arg0: i32) -> (i32, i32) {
    %c0_i32 = arith.constant 0 : i32
    %c0_i32_0 = arith.constant 0 : i32
    %c0_i32_1 = arith.constant 0 : i32
    return %c0_i32, %c0_i32_0 : i32, i32
  }
  func.func @transform_42(%arg0: i32) -> (i32, i32) {
    %c0_i32 = arith.constant 0 : i32
    %c0_i32_0 = arith.constant 0 : i32
    return %arg0, %c0_i32 : i32, i32
  }
}

module attributes {stable_mosaic.version = 11 : i64} {
  func.func @_odd_layer_kernel(%arg0: i32, %arg1: memref<16x32xf32, #tpu.memory_space<vmem>>, %arg2: memref<4x16x32xf32, #tpu.memory_space<vmem>>, %arg3: memref<4x16x4xf32, #tpu.memory_space<vmem>>, %arg4: memref<4x16x1xf32, #tpu.memory_space<vmem>>, %arg5: memref<1x32xf32, #tpu.memory_space<vmem>>, %arg6: memref<1x32xf32, #tpu.memory_space<vmem>>, %arg7: memref<32x32xf32, #tpu.memory_space<vmem>>, %arg8: memref<32x32xf32, #tpu.memory_space<vmem>>, %arg9: memref<32x32xf32, #tpu.memory_space<vmem>>, %arg10: memref<4x4xf32, #tpu.memory_space<vmem>>, %arg11: memref<1x4xf32, #tpu.memory_space<vmem>>, %arg12: memref<4x32xf32, #tpu.memory_space<vmem>>, %arg13: memref<1x32xf32, #tpu.memory_space<vmem>>, %arg14: memref<32x4xf32, #tpu.memory_space<vmem>>, %arg15: memref<1x4xf32, #tpu.memory_space<vmem>>, %arg16: memref<4x32xf32, #tpu.memory_space<vmem>>, %arg17: memref<1x32xf32, #tpu.memory_space<vmem>>, %arg18: memref<32x32xf32, #tpu.memory_space<vmem>>, %arg19: memref<1x32xf32, #tpu.memory_space<vmem>>, %arg20: memref<1x32xf32, #tpu.memory_space<vmem>>, %arg21: memref<1x32xf32, #tpu.memory_space<vmem>>, %arg22: memref<32x4xf32, #tpu.memory_space<vmem>>, %arg23: memref<4x256xf32, #tpu.memory_space<vmem>>, %arg24: memref<32x256xf32, #tpu.memory_space<vmem>>, %arg25: memref<1x256xf32, #tpu.memory_space<vmem>>, %arg26: memref<256x32xf32, #tpu.memory_space<vmem>>, %arg27: memref<4x32xf32, #tpu.memory_space<vmem>>, %arg28: memref<1x32xf32, #tpu.memory_space<vmem>>, %arg29: memref<1x32xf32, #tpu.memory_space<vmem>>, %arg30: memref<32x96xf32, #tpu.memory_space<vmem>>, %arg31: memref<32x32xf32, #tpu.memory_space<vmem>>, %arg32: memref<1x32xf32, #tpu.memory_space<vmem>>, %arg33: memref<1x32xf32, #tpu.memory_space<vmem>>, %arg34: memref<1x32xf32, #tpu.memory_space<vmem>>, %arg35: memref<32x128xf32, #tpu.memory_space<vmem>>, %arg36: memref<1x128xf32, #tpu.memory_space<vmem>>, %arg37: memref<128x32xf32, #tpu.memory_space<vmem>>, %arg38: memref<1x32xf32, #tpu.memory_space<vmem>>, %arg39: memref<16x32xf32, #tpu.memory_space<vmem>>) attributes {dimension_semantics = [#tpu.dimension_semantics<parallel>], iteration_bounds = array<i64: 1>, scalar_prefetch = 0 : i64, scratch_operands = 0 : i64, tpu.core_type = #tpu.core_type<tc>, window_params = [{transform_indices = @transform_0, window_bounds = array<i64: 16, 32>}, {transform_indices = @transform_1, window_bounds = array<i64: 4, 16, 32>}, {transform_indices = @transform_2, window_bounds = array<i64: 4, 16, 4>}, {transform_indices = @transform_3, window_bounds = array<i64: 4, 16, 1>}, {pipeline_mode = #tpu.pipeline_mode<synchronous>, transform_indices = @transform_4, window_bounds = array<i64: 1, 32>}, {pipeline_mode = #tpu.pipeline_mode<synchronous>, transform_indices = @transform_5, window_bounds = array<i64: 1, 32>}, {pipeline_mode = #tpu.pipeline_mode<synchronous>, transform_indices = @transform_6, window_bounds = array<i64: 32, 32>}, {pipeline_mode = #tpu.pipeline_mode<synchronous>, transform_indices = @transform_7, window_bounds = array<i64: 32, 32>}, {pipeline_mode = #tpu.pipeline_mode<synchronous>, transform_indices = @transform_8, window_bounds = array<i64: 32, 32>}, {pipeline_mode = #tpu.pipeline_mode<synchronous>, transform_indices = @transform_9, window_bounds = array<i64: 4, 4>}, {pipeline_mode = #tpu.pipeline_mode<synchronous>, transform_indices = @transform_10, window_bounds = array<i64: 1, 4>}, {pipeline_mode = #tpu.pipeline_mode<synchronous>, transform_indices = @transform_11, window_bounds = array<i64: 4, 32>}, {pipeline_mode = #tpu.pipeline_mode<synchronous>, transform_indices = @transform_12, window_bounds = array<i64: 1, 32>}, {pipeline_mode = #tpu.pipeline_mode<synchronous>, transform_indices = @transform_13, window_bounds = array<i64: 32, 4>}, {pipeline_mode = #tpu.pipeline_mode<synchronous>, transform_indices = @transform_14, window_bounds = array<i64: 1, 4>}, {pipeline_mode = #tpu.pipeline_mode<synchronous>, transform_indices = @transform_15, window_bounds = array<i64: 4, 32>}, {pipeline_mode = #tpu.pipeline_mode<synchronous>, transform_indices = @transform_16, window_bounds = array<i64: 1, 32>}, {pipeline_mode = #tpu.pipeline_mode<synchronous>, transform_indices = @transform_17, window_bounds = array<i64: 32, 32>}, {pipeline_mode = #tpu.pipeline_mode<synchronous>, transform_indices = @transform_18, window_bounds = array<i64: 1, 32>}, {pipeline_mode = #tpu.pipeline_mode<synchronous>, transform_indices = @transform_19, window_bounds = array<i64: 1, 32>}, {pipeline_mode = #tpu.pipeline_mode<synchronous>, transform_indices = @transform_20, window_bounds = array<i64: 1, 32>}, {pipeline_mode = #tpu.pipeline_mode<synchronous>, transform_indices = @transform_21, window_bounds = array<i64: 32, 4>}, {pipeline_mode = #tpu.pipeline_mode<synchronous>, transform_indices = @transform_22, window_bounds = array<i64: 4, 256>}, {pipeline_mode = #tpu.pipeline_mode<synchronous>, transform_indices = @transform_23, window_bounds = array<i64: 32, 256>}, {pipeline_mode = #tpu.pipeline_mode<synchronous>, transform_indices = @transform_24, window_bounds = array<i64: 1, 256>}, {pipeline_mode = #tpu.pipeline_mode<synchronous>, transform_indices = @transform_25, window_bounds = array<i64: 256, 32>}, {pipeline_mode = #tpu.pipeline_mode<synchronous>, transform_indices = @transform_26, window_bounds = array<i64: 4, 32>}, {pipeline_mode = #tpu.pipeline_mode<synchronous>, transform_indices = @transform_27, window_bounds = array<i64: 1, 32>}, {pipeline_mode = #tpu.pipeline_mode<synchronous>, transform_indices = @transform_28, window_bounds = array<i64: 1, 32>}, {pipeline_mode = #tpu.pipeline_mode<synchronous>, transform_indices = @transform_29, window_bounds = array<i64: 32, 96>}, {pipeline_mode = #tpu.pipeline_mode<synchronous>, transform_indices = @transform_30, window_bounds = array<i64: 32, 32>}, {pipeline_mode = #tpu.pipeline_mode<synchronous>, transform_indices = @transform_31, window_bounds = array<i64: 1, 32>}, {pipeline_mode = #tpu.pipeline_mode<synchronous>, transform_indices = @transform_32, window_bounds = array<i64: 1, 32>}, {pipeline_mode = #tpu.pipeline_mode<synchronous>, transform_indices = @transform_33, window_bounds = array<i64: 1, 32>}, {pipeline_mode = #tpu.pipeline_mode<synchronous>, transform_indices = @transform_34, window_bounds = array<i64: 32, 128>}, {pipeline_mode = #tpu.pipeline_mode<synchronous>, transform_indices = @transform_35, window_bounds = array<i64: 1, 128>}, {pipeline_mode = #tpu.pipeline_mode<synchronous>, transform_indices = @transform_36, window_bounds = array<i64: 128, 32>}, {pipeline_mode = #tpu.pipeline_mode<synchronous>, transform_indices = @transform_37, window_bounds = array<i64: 1, 32>}, {transform_indices = @transform_38, window_bounds = array<i64: 16, 32>}]} {
    %c0 = arith.constant 0 : index
    %c0_0 = arith.constant 0 : index
    %0 = vector.load %arg5[%c0, %c0_0] : memref<1x32xf32, #tpu.memory_space<vmem>>, vector<1x32xf32>
    %c0_1 = arith.constant 0 : index
    %c0_2 = arith.constant 0 : index
    %1 = vector.load %arg6[%c0_1, %c0_2] : memref<1x32xf32, #tpu.memory_space<vmem>>, vector<1x32xf32>
    %c0_3 = arith.constant 0 : index
    %c0_4 = arith.constant 0 : index
    %2 = vector.load %arg7[%c0_3, %c0_4] : memref<32x32xf32, #tpu.memory_space<vmem>>, vector<32x32xf32>
    %c0_5 = arith.constant 0 : index
    %c0_6 = arith.constant 0 : index
    %3 = vector.load %arg8[%c0_5, %c0_6] : memref<32x32xf32, #tpu.memory_space<vmem>>, vector<32x32xf32>
    %c0_7 = arith.constant 0 : index
    %c0_8 = arith.constant 0 : index
    %4 = vector.load %arg9[%c0_7, %c0_8] : memref<32x32xf32, #tpu.memory_space<vmem>>, vector<32x32xf32>
    %c0_9 = arith.constant 0 : index
    %c0_10 = arith.constant 0 : index
    %5 = vector.load %arg10[%c0_9, %c0_10] : memref<4x4xf32, #tpu.memory_space<vmem>>, vector<4x4xf32>
    %c0_11 = arith.constant 0 : index
    %c0_12 = arith.constant 0 : index
    %6 = vector.load %arg11[%c0_11, %c0_12] : memref<1x4xf32, #tpu.memory_space<vmem>>, vector<1x4xf32>
    %c0_13 = arith.constant 0 : index
    %c0_14 = arith.constant 0 : index
    %7 = vector.load %arg12[%c0_13, %c0_14] : memref<4x32xf32, #tpu.memory_space<vmem>>, vector<4x32xf32>
    %c0_15 = arith.constant 0 : index
    %c0_16 = arith.constant 0 : index
    %8 = vector.load %arg13[%c0_15, %c0_16] : memref<1x32xf32, #tpu.memory_space<vmem>>, vector<1x32xf32>
    %c0_17 = arith.constant 0 : index
    %c0_18 = arith.constant 0 : index
    %9 = vector.load %arg14[%c0_17, %c0_18] : memref<32x4xf32, #tpu.memory_space<vmem>>, vector<32x4xf32>
    %c0_19 = arith.constant 0 : index
    %c0_20 = arith.constant 0 : index
    %10 = vector.load %arg15[%c0_19, %c0_20] : memref<1x4xf32, #tpu.memory_space<vmem>>, vector<1x4xf32>
    %c0_21 = arith.constant 0 : index
    %c0_22 = arith.constant 0 : index
    %11 = vector.load %arg16[%c0_21, %c0_22] : memref<4x32xf32, #tpu.memory_space<vmem>>, vector<4x32xf32>
    %c0_23 = arith.constant 0 : index
    %c0_24 = arith.constant 0 : index
    %12 = vector.load %arg17[%c0_23, %c0_24] : memref<1x32xf32, #tpu.memory_space<vmem>>, vector<1x32xf32>
    %c0_25 = arith.constant 0 : index
    %c0_26 = arith.constant 0 : index
    %13 = vector.load %arg18[%c0_25, %c0_26] : memref<32x32xf32, #tpu.memory_space<vmem>>, vector<32x32xf32>
    %c0_27 = arith.constant 0 : index
    %c0_28 = arith.constant 0 : index
    %14 = vector.load %arg19[%c0_27, %c0_28] : memref<1x32xf32, #tpu.memory_space<vmem>>, vector<1x32xf32>
    %c0_29 = arith.constant 0 : index
    %c0_30 = arith.constant 0 : index
    %15 = vector.load %arg20[%c0_29, %c0_30] : memref<1x32xf32, #tpu.memory_space<vmem>>, vector<1x32xf32>
    %c0_31 = arith.constant 0 : index
    %c0_32 = arith.constant 0 : index
    %16 = vector.load %arg21[%c0_31, %c0_32] : memref<1x32xf32, #tpu.memory_space<vmem>>, vector<1x32xf32>
    %c0_33 = arith.constant 0 : index
    %c0_34 = arith.constant 0 : index
    %17 = vector.load %arg22[%c0_33, %c0_34] : memref<32x4xf32, #tpu.memory_space<vmem>>, vector<32x4xf32>
    %c0_35 = arith.constant 0 : index
    %c0_36 = arith.constant 0 : index
    %18 = vector.load %arg23[%c0_35, %c0_36] : memref<4x256xf32, #tpu.memory_space<vmem>>, vector<4x256xf32>
    %c0_37 = arith.constant 0 : index
    %c0_38 = arith.constant 0 : index
    %19 = vector.load %arg24[%c0_37, %c0_38] : memref<32x256xf32, #tpu.memory_space<vmem>>, vector<32x256xf32>
    %c0_39 = arith.constant 0 : index
    %c0_40 = arith.constant 0 : index
    %20 = vector.load %arg25[%c0_39, %c0_40] : memref<1x256xf32, #tpu.memory_space<vmem>>, vector<1x256xf32>
    %c0_41 = arith.constant 0 : index
    %c0_42 = arith.constant 0 : index
    %21 = vector.load %arg26[%c0_41, %c0_42] : memref<256x32xf32, #tpu.memory_space<vmem>>, vector<256x32xf32>
    %c0_43 = arith.constant 0 : index
    %c0_44 = arith.constant 0 : index
    %22 = vector.load %arg27[%c0_43, %c0_44] : memref<4x32xf32, #tpu.memory_space<vmem>>, vector<4x32xf32>
    %c0_45 = arith.constant 0 : index
    %c0_46 = arith.constant 0 : index
    %23 = vector.load %arg28[%c0_45, %c0_46] : memref<1x32xf32, #tpu.memory_space<vmem>>, vector<1x32xf32>
    %c0_47 = arith.constant 0 : index
    %c0_48 = arith.constant 0 : index
    %24 = vector.load %arg29[%c0_47, %c0_48] : memref<1x32xf32, #tpu.memory_space<vmem>>, vector<1x32xf32>
    %c0_49 = arith.constant 0 : index
    %c0_50 = arith.constant 0 : index
    %25 = vector.load %arg30[%c0_49, %c0_50] : memref<32x96xf32, #tpu.memory_space<vmem>>, vector<32x96xf32>
    %c0_51 = arith.constant 0 : index
    %c0_52 = arith.constant 0 : index
    %26 = vector.load %arg31[%c0_51, %c0_52] : memref<32x32xf32, #tpu.memory_space<vmem>>, vector<32x32xf32>
    %c0_53 = arith.constant 0 : index
    %c0_54 = arith.constant 0 : index
    %27 = vector.load %arg32[%c0_53, %c0_54] : memref<1x32xf32, #tpu.memory_space<vmem>>, vector<1x32xf32>
    %c0_55 = arith.constant 0 : index
    %c0_56 = arith.constant 0 : index
    %28 = vector.load %arg33[%c0_55, %c0_56] : memref<1x32xf32, #tpu.memory_space<vmem>>, vector<1x32xf32>
    %c0_57 = arith.constant 0 : index
    %c0_58 = arith.constant 0 : index
    %29 = vector.load %arg34[%c0_57, %c0_58] : memref<1x32xf32, #tpu.memory_space<vmem>>, vector<1x32xf32>
    %c0_59 = arith.constant 0 : index
    %c0_60 = arith.constant 0 : index
    %30 = vector.load %arg35[%c0_59, %c0_60] : memref<32x128xf32, #tpu.memory_space<vmem>>, vector<32x128xf32>
    %c0_61 = arith.constant 0 : index
    %c0_62 = arith.constant 0 : index
    %31 = vector.load %arg36[%c0_61, %c0_62] : memref<1x128xf32, #tpu.memory_space<vmem>>, vector<1x128xf32>
    %c0_63 = arith.constant 0 : index
    %c0_64 = arith.constant 0 : index
    %32 = vector.load %arg37[%c0_63, %c0_64] : memref<128x32xf32, #tpu.memory_space<vmem>>, vector<128x32xf32>
    %c0_65 = arith.constant 0 : index
    %c0_66 = arith.constant 0 : index
    %33 = vector.load %arg38[%c0_65, %c0_66] : memref<1x32xf32, #tpu.memory_space<vmem>>, vector<1x32xf32>
    %c0_67 = arith.constant 0 : index
    %c0_68 = arith.constant 0 : index
    %34 = vector.load %arg1[%c0_67, %c0_68] : memref<16x32xf32, #tpu.memory_space<vmem>>, vector<16x32xf32>
    %c0_69 = arith.constant 0 : index
    %c0_70 = arith.constant 0 : index
    %c0_71 = arith.constant 0 : index
    %35 = vector.load %arg2[%c0_69, %c0_70, %c0_71] : memref<4x16x32xf32, #tpu.memory_space<vmem>>, vector<4x16x32xf32>
    %c0_72 = arith.constant 0 : index
    %c0_73 = arith.constant 0 : index
    %c0_74 = arith.constant 0 : index
    %36 = vector.load %arg3[%c0_72, %c0_73, %c0_74] : memref<4x16x4xf32, #tpu.memory_space<vmem>>, vector<4x16x4xf32>
    %c0_75 = arith.constant 0 : index
    %c0_76 = arith.constant 0 : index
    %c0_77 = arith.constant 0 : index
    %37 = vector.load %arg4[%c0_75, %c0_76, %c0_77] : memref<4x16x1xf32, #tpu.memory_space<vmem>>, vector<4x16x1xf32>
    %cst = arith.constant dense<0.000000e+00> : vector<16xf32>
    %38 = vector.multi_reduction <add>, %34, %cst [1] : vector<16x32xf32> to vector<16xf32>
    %39 = vector.shape_cast %38 : vector<16xf32> to vector<16x1xf32>
    %cst_78 = arith.constant 3.200000e+01 : f32
    %40 = vector.broadcast %cst_78 : f32 to vector<16x1xf32>
    %41 = arith.divf %39, %40 : vector<16x1xf32>
    %42 = vector.broadcast %41 : vector<16x1xf32> to vector<16x32xf32>
    %43 = arith.subf %34, %42 : vector<16x32xf32>
    %44 = arith.mulf %43, %43 : vector<16x32xf32>
    %cst_79 = arith.constant dense<0.000000e+00> : vector<16xf32>
    %45 = vector.multi_reduction <add>, %44, %cst_79 [1] : vector<16x32xf32> to vector<16xf32>
    %46 = vector.shape_cast %45 : vector<16xf32> to vector<16x1xf32>
    %cst_80 = arith.constant 3.200000e+01 : f32
    %47 = vector.broadcast %cst_80 : f32 to vector<16x1xf32>
    %48 = arith.divf %46, %47 : vector<16x1xf32>
    %cst_81 = arith.constant 9.99999997E-7 : f32
    %49 = vector.broadcast %cst_81 : f32 to vector<16x1xf32>
    %50 = arith.addf %48, %49 : vector<16x1xf32>
    %51 = math.rsqrt %50 : vector<16x1xf32>
    %52 = vector.broadcast %51 : vector<16x1xf32> to vector<16x32xf32>
    %53 = arith.mulf %43, %52 : vector<16x32xf32>
    %54 = vector.broadcast %0 : vector<1x32xf32> to vector<16x32xf32>
    %55 = arith.mulf %53, %54 : vector<16x32xf32>
    %56 = vector.broadcast %1 : vector<1x32xf32> to vector<16x32xf32>
    %57 = arith.addf %55, %56 : vector<16x32xf32>
    %cst_82 = arith.constant dense<0.000000e+00> : vector<16x32xf32>
    %58 = tpu.matmul %57, %2, %cst_82 {dimension_numbers = #tpu.dot_dimension_numbers<[1], [0], [0], [1], [0, 0, 1, 1], [], []>} : vector<16x32xf32>, vector<32x32xf32>, vector<16x32xf32> -> vector<16x32xf32>
    %59 = vector.shape_cast %35 : vector<4x16x32xf32> to vector<64x32xf32>
    %cst_83 = arith.constant dense<0.000000e+00> : vector<64x32xf32>
    %60 = tpu.matmul %59, %3, %cst_83 {dimension_numbers = #tpu.dot_dimension_numbers<[1], [0], [0], [1], [0, 0, 1, 1], [], []>} : vector<64x32xf32>, vector<32x32xf32>, vector<64x32xf32> -> vector<64x32xf32>
    %cst_84 = arith.constant dense<0.000000e+00> : vector<64x32xf32>
    %61 = tpu.matmul %60, %4, %cst_84 {dimension_numbers = #tpu.dot_dimension_numbers<[1], [0], [0], [1], [0, 0, 1, 1], [], []>} : vector<64x32xf32>, vector<32x32xf32>, vector<64x32xf32> -> vector<64x32xf32>
    %62 = vector.shape_cast %36 : vector<4x16x4xf32> to vector<64x4xf32>
    %cst_85 = arith.constant dense<0.000000e+00> : vector<64x4xf32>
    %63 = tpu.matmul %62, %5, %cst_85 {dimension_numbers = #tpu.dot_dimension_numbers<[1], [0], [0], [1], [0, 0, 1, 1], [], []>} : vector<64x4xf32>, vector<4x4xf32>, vector<64x4xf32> -> vector<64x4xf32>
    %64 = vector.broadcast %6 : vector<1x4xf32> to vector<64x4xf32>
    %65 = arith.addf %63, %64 : vector<64x4xf32>
    %cst_86 = arith.constant 0.000000e+00 : f32
    %66 = vector.broadcast %cst_86 : f32 to vector<64x4xf32>
    %67 = arith.maximumf %65, %66 : vector<64x4xf32>
    %cst_87 = arith.constant dense<0.000000e+00> : vector<64x32xf32>
    %68 = tpu.matmul %67, %7, %cst_87 {dimension_numbers = #tpu.dot_dimension_numbers<[1], [0], [0], [1], [0, 0, 1, 1], [], []>} : vector<64x4xf32>, vector<4x32xf32>, vector<64x32xf32> -> vector<64x32xf32>
    %69 = vector.broadcast %8 : vector<1x32xf32> to vector<64x32xf32>
    %70 = arith.addf %68, %69 : vector<64x32xf32>
    %71 = arith.addf %60, %70 : vector<64x32xf32>
    %72 = vector.shape_cast %71 : vector<64x32xf32> to vector<4x16x32xf32>
    %73 = vector.shape_cast %58 : vector<16x32xf32> to vector<1x16x32xf32>
    %74 = vector.broadcast %73 : vector<1x16x32xf32> to vector<4x16x32xf32>
    %75 = arith.subf %72, %74 : vector<4x16x32xf32>
    %76 = vector.shape_cast %75 : vector<4x16x32xf32> to vector<64x32xf32>
    %cst_88 = arith.constant dense<0.000000e+00> : vector<64x4xf32>
    %77 = tpu.matmul %76, %9, %cst_88 {dimension_numbers = #tpu.dot_dimension_numbers<[1], [0], [0], [1], [0, 0, 1, 1], [], []>} : vector<64x32xf32>, vector<32x4xf32>, vector<64x4xf32> -> vector<64x4xf32>
    %78 = vector.broadcast %10 : vector<1x4xf32> to vector<64x4xf32>
    %79 = arith.addf %77, %78 : vector<64x4xf32>
    %cst_89 = arith.constant 0.000000e+00 : f32
    %80 = vector.broadcast %cst_89 : f32 to vector<64x4xf32>
    %81 = arith.maximumf %79, %80 : vector<64x4xf32>
    %cst_90 = arith.constant dense<0.000000e+00> : vector<64x32xf32>
    %82 = tpu.matmul %81, %11, %cst_90 {dimension_numbers = #tpu.dot_dimension_numbers<[1], [0], [0], [1], [0, 0, 1, 1], [], []>} : vector<64x4xf32>, vector<4x32xf32>, vector<64x32xf32> -> vector<64x32xf32>
    %83 = vector.broadcast %12 : vector<1x32xf32> to vector<64x32xf32>
    %84 = arith.addf %82, %83 : vector<64x32xf32>
    %85 = vector.shape_cast %84 : vector<64x32xf32> to vector<4x16x32xf32>
    %cst_91 = arith.constant 0.000000e+00 : f32
    %86 = vector.broadcast %cst_91 : f32 to vector<4x16x1xf32>
    %87 = arith.cmpf oeq, %37, %86 : vector<4x16x1xf32>
    %cst_92 = arith.constant -1.000000e+09 : f32
    %88 = vector.shape_cast %87 : vector<4x16x1xi1> to vector<4x16x1xi1>
    %89 = vector.broadcast %88 : vector<4x16x1xi1> to vector<4x16x32xi1>
    %90 = vector.broadcast %cst_92 : f32 to vector<4x16x32xf32>
    %91 = arith.select %89, %90, %85 : vector<4x16x32xi1>, vector<4x16x32xf32>
    %92 = arith.addf %61, %70 : vector<64x32xf32>
    %93 = vector.shape_cast %92 : vector<64x32xf32> to vector<4x16x32xf32>
    %94 = vector.extract_strided_slice %91 {offsets = [0, 0, 0], sizes = [1, 16, 32], strides = [1, 1, 1]} : vector<4x16x32xf32> to vector<1x16x32xf32>
    %95 = vector.shape_cast %94 : vector<1x16x32xf32> to vector<16x32xf32>
    %96 = vector.extract_strided_slice %91 {offsets = [1, 0, 0], sizes = [1, 16, 32], strides = [1, 1, 1]} : vector<4x16x32xf32> to vector<1x16x32xf32>
    %97 = vector.shape_cast %96 : vector<1x16x32xf32> to vector<16x32xf32>
    %98 = arith.maximumf %95, %97 : vector<16x32xf32>
    %99 = vector.extract_strided_slice %91 {offsets = [2, 0, 0], sizes = [1, 16, 32], strides = [1, 1, 1]} : vector<4x16x32xf32> to vector<1x16x32xf32>
    %100 = vector.shape_cast %99 : vector<1x16x32xf32> to vector<16x32xf32>
    %101 = arith.maximumf %98, %100 : vector<16x32xf32>
    %102 = vector.extract_strided_slice %91 {offsets = [3, 0, 0], sizes = [1, 16, 32], strides = [1, 1, 1]} : vector<4x16x32xf32> to vector<1x16x32xf32>
    %103 = vector.shape_cast %102 : vector<1x16x32xf32> to vector<16x32xf32>
    %104 = arith.maximumf %101, %103 : vector<16x32xf32>
    %cst_93 = arith.constant 0.000000e+00 : f32
    %105 = vector.broadcast %cst_93 : f32 to vector<16x32xf32>
    %cst_94 = arith.constant 0.000000e+00 : f32
    %106 = vector.broadcast %cst_94 : f32 to vector<16x32xf32>
    %107 = vector.extract_strided_slice %91 {offsets = [0, 0, 0], sizes = [1, 16, 32], strides = [1, 1, 1]} : vector<4x16x32xf32> to vector<1x16x32xf32>
    %108 = vector.shape_cast %107 : vector<1x16x32xf32> to vector<16x32xf32>
    %109 = arith.subf %108, %104 : vector<16x32xf32>
    %110 = math.exp %109 : vector<16x32xf32>
    %111 = arith.addf %105, %110 : vector<16x32xf32>
    %112 = vector.extract_strided_slice %93 {offsets = [0, 0, 0], sizes = [1, 16, 32], strides = [1, 1, 1]} : vector<4x16x32xf32> to vector<1x16x32xf32>
    %113 = vector.shape_cast %112 : vector<1x16x32xf32> to vector<16x32xf32>
    %114 = arith.mulf %113, %110 : vector<16x32xf32>
    %115 = arith.addf %106, %114 : vector<16x32xf32>
    %116 = vector.extract_strided_slice %91 {offsets = [1, 0, 0], sizes = [1, 16, 32], strides = [1, 1, 1]} : vector<4x16x32xf32> to vector<1x16x32xf32>
    %117 = vector.shape_cast %116 : vector<1x16x32xf32> to vector<16x32xf32>
    %118 = arith.subf %117, %104 : vector<16x32xf32>
    %119 = math.exp %118 : vector<16x32xf32>
    %120 = arith.addf %111, %119 : vector<16x32xf32>
    %121 = vector.extract_strided_slice %93 {offsets = [1, 0, 0], sizes = [1, 16, 32], strides = [1, 1, 1]} : vector<4x16x32xf32> to vector<1x16x32xf32>
    %122 = vector.shape_cast %121 : vector<1x16x32xf32> to vector<16x32xf32>
    %123 = arith.mulf %122, %119 : vector<16x32xf32>
    %124 = arith.addf %115, %123 : vector<16x32xf32>
    %125 = vector.extract_strided_slice %91 {offsets = [2, 0, 0], sizes = [1, 16, 32], strides = [1, 1, 1]} : vector<4x16x32xf32> to vector<1x16x32xf32>
    %126 = vector.shape_cast %125 : vector<1x16x32xf32> to vector<16x32xf32>
    %127 = arith.subf %126, %104 : vector<16x32xf32>
    %128 = math.exp %127 : vector<16x32xf32>
    %129 = arith.addf %120, %128 : vector<16x32xf32>
    %130 = vector.extract_strided_slice %93 {offsets = [2, 0, 0], sizes = [1, 16, 32], strides = [1, 1, 1]} : vector<4x16x32xf32> to vector<1x16x32xf32>
    %131 = vector.shape_cast %130 : vector<1x16x32xf32> to vector<16x32xf32>
    %132 = arith.mulf %131, %128 : vector<16x32xf32>
    %133 = arith.addf %124, %132 : vector<16x32xf32>
    %134 = vector.extract_strided_slice %91 {offsets = [3, 0, 0], sizes = [1, 16, 32], strides = [1, 1, 1]} : vector<4x16x32xf32> to vector<1x16x32xf32>
    %135 = vector.shape_cast %134 : vector<1x16x32xf32> to vector<16x32xf32>
    %136 = arith.subf %135, %104 : vector<16x32xf32>
    %137 = math.exp %136 : vector<16x32xf32>
    %138 = arith.addf %129, %137 : vector<16x32xf32>
    %139 = vector.extract_strided_slice %93 {offsets = [3, 0, 0], sizes = [1, 16, 32], strides = [1, 1, 1]} : vector<4x16x32xf32> to vector<1x16x32xf32>
    %140 = vector.shape_cast %139 : vector<1x16x32xf32> to vector<16x32xf32>
    %141 = arith.mulf %140, %137 : vector<16x32xf32>
    %142 = arith.addf %133, %141 : vector<16x32xf32>
    %143 = tpu.reciprocal %138 {approx = true} : vector<16x32xf32> -> vector<16x32xf32>
    %144 = arith.mulf %142, %143 : vector<16x32xf32>
    %cst_95 = arith.constant dense<0.000000e+00> : vector<16x32xf32>
    %145 = tpu.matmul %144, %13, %cst_95 {dimension_numbers = #tpu.dot_dimension_numbers<[1], [0], [0], [1], [0, 0, 1, 1], [], []>} : vector<16x32xf32>, vector<32x32xf32>, vector<16x32xf32> -> vector<16x32xf32>
    %146 = vector.broadcast %14 : vector<1x32xf32> to vector<16x32xf32>
    %147 = arith.addf %145, %146 : vector<16x32xf32>
    %148 = arith.addf %147, %34 : vector<16x32xf32>
    %cst_96 = arith.constant dense<0.000000e+00> : vector<16xf32>
    %149 = vector.multi_reduction <add>, %148, %cst_96 [1] : vector<16x32xf32> to vector<16xf32>
    %150 = vector.shape_cast %149 : vector<16xf32> to vector<16x1xf32>
    %cst_97 = arith.constant 3.200000e+01 : f32
    %151 = vector.broadcast %cst_97 : f32 to vector<16x1xf32>
    %152 = arith.divf %150, %151 : vector<16x1xf32>
    %153 = vector.broadcast %152 : vector<16x1xf32> to vector<16x32xf32>
    %154 = arith.subf %148, %153 : vector<16x32xf32>
    %155 = arith.mulf %154, %154 : vector<16x32xf32>
    %cst_98 = arith.constant dense<0.000000e+00> : vector<16xf32>
    %156 = vector.multi_reduction <add>, %155, %cst_98 [1] : vector<16x32xf32> to vector<16xf32>
    %157 = vector.shape_cast %156 : vector<16xf32> to vector<16x1xf32>
    %cst_99 = arith.constant 3.200000e+01 : f32
    %158 = vector.broadcast %cst_99 : f32 to vector<16x1xf32>
    %159 = arith.divf %157, %158 : vector<16x1xf32>
    %cst_100 = arith.constant 9.99999997E-7 : f32
    %160 = vector.broadcast %cst_100 : f32 to vector<16x1xf32>
    %161 = arith.addf %159, %160 : vector<16x1xf32>
    %162 = math.rsqrt %161 : vector<16x1xf32>
    %163 = vector.broadcast %162 : vector<16x1xf32> to vector<16x32xf32>
    %164 = arith.mulf %154, %163 : vector<16x32xf32>
    %165 = vector.broadcast %15 : vector<1x32xf32> to vector<16x32xf32>
    %166 = arith.mulf %164, %165 : vector<16x32xf32>
    %167 = vector.broadcast %16 : vector<1x32xf32> to vector<16x32xf32>
    %168 = arith.addf %166, %167 : vector<16x32xf32>
    %cst_101 = arith.constant dense<0.000000e+00> : vector<16x4xf32>
    %169 = tpu.matmul %168, %17, %cst_101 {dimension_numbers = #tpu.dot_dimension_numbers<[1], [0], [0], [1], [0, 0, 1, 1], [], []>} : vector<16x32xf32>, vector<32x4xf32>, vector<16x4xf32> -> vector<16x4xf32>
    %cst_102 = arith.constant dense<0xFF800000> : vector<16xf32>
    %170 = vector.multi_reduction <maximumf>, %169, %cst_102 [1] : vector<16x4xf32> to vector<16xf32>
    %171 = vector.shape_cast %170 : vector<16xf32> to vector<16x1xf32>
    %172 = vector.broadcast %171 : vector<16x1xf32> to vector<16x4xf32>
    %173 = arith.cmpf oge, %169, %172 : vector<16x4xf32>
    %cst_103 = arith.constant 0xFF800000 : f32
    %174 = vector.broadcast %cst_103 : f32 to vector<16x4xf32>
    %175 = arith.select %173, %174, %169 : vector<16x4xi1>, vector<16x4xf32>
    %cst_104 = arith.constant dense<0xFF800000> : vector<16xf32>
    %176 = vector.multi_reduction <maximumf>, %175, %cst_104 [1] : vector<16x4xf32> to vector<16xf32>
    %177 = vector.shape_cast %176 : vector<16xf32> to vector<16x1xf32>
    %178 = vector.broadcast %177 : vector<16x1xf32> to vector<16x4xf32>
    %179 = arith.cmpf oge, %169, %178 : vector<16x4xf32>
    %180 = vector.broadcast %171 : vector<16x1xf32> to vector<16x4xf32>
    %181 = arith.subf %169, %180 : vector<16x4xf32>
    %182 = math.exp %181 : vector<16x4xf32>
    %cst_105 = arith.constant 0.000000e+00 : f32
    %183 = vector.broadcast %cst_105 : f32 to vector<16x4xf32>
    %184 = arith.select %179, %182, %183 : vector<16x4xi1>, vector<16x4xf32>
    %cst_106 = arith.constant dense<0.000000e+00> : vector<16xf32>
    %185 = vector.multi_reduction <add>, %184, %cst_106 [1] : vector<16x4xf32> to vector<16xf32>
    %186 = vector.shape_cast %185 : vector<16xf32> to vector<16x1xf32>
    %187 = vector.broadcast %186 : vector<16x1xf32> to vector<16x4xf32>
    %188 = arith.divf %184, %187 : vector<16x4xf32>
    %cst_107 = arith.constant dense<0.000000e+00> : vector<16x256xf32>
    %189 = tpu.matmul %168, %19, %cst_107 {dimension_numbers = #tpu.dot_dimension_numbers<[1], [0], [0], [1], [0, 0, 1, 1], [], []>} : vector<16x32xf32>, vector<32x256xf32>, vector<16x256xf32> -> vector<16x256xf32>
    %190 = vector.broadcast %20 : vector<1x256xf32> to vector<16x256xf32>
    %191 = arith.addf %189, %190 : vector<16x256xf32>
    %cst_108 = arith.constant 5.000000e-01 : f32
    %192 = vector.broadcast %cst_108 : f32 to vector<16x256xf32>
    %193 = arith.mulf %192, %191 : vector<16x256xf32>
    %cst_109 = arith.constant 0.707106769 : f32
    %194 = vector.broadcast %cst_109 : f32 to vector<16x256xf32>
    %195 = arith.mulf %191, %194 : vector<16x256xf32>
    %196 = math.erf %195 : vector<16x256xf32>
    %cst_110 = arith.constant 1.000000e+00 : f32
    %197 = vector.broadcast %cst_110 : f32 to vector<16x256xf32>
    %198 = arith.addf %197, %196 : vector<16x256xf32>
    %199 = arith.mulf %193, %198 : vector<16x256xf32>
    %cst_111 = arith.constant dense<0.000000e+00> : vector<16x256xf32>
    %200 = tpu.matmul %188, %18, %cst_111 {dimension_numbers = #tpu.dot_dimension_numbers<[1], [0], [0], [1], [0, 0, 1, 1], [], []>} : vector<16x4xf32>, vector<4x256xf32>, vector<16x256xf32> -> vector<16x256xf32>
    %201 = arith.mulf %199, %200 : vector<16x256xf32>
    %cst_112 = arith.constant dense<0.000000e+00> : vector<16x32xf32>
    %202 = tpu.matmul %201, %21, %cst_112 {dimension_numbers = #tpu.dot_dimension_numbers<[1], [0], [0], [1], [0, 0, 1, 1], [], []>} : vector<16x256xf32>, vector<256x32xf32>, vector<16x32xf32> -> vector<16x32xf32>
    %cst_113 = arith.constant dense<0.000000e+00> : vector<16x32xf32>
    %203 = tpu.matmul %188, %22, %cst_113 {dimension_numbers = #tpu.dot_dimension_numbers<[1], [0], [0], [1], [0, 0, 1, 1], [], []>} : vector<16x4xf32>, vector<4x32xf32>, vector<16x32xf32> -> vector<16x32xf32>
    %204 = arith.addf %202, %203 : vector<16x32xf32>
    %205 = arith.addf %204, %148 : vector<16x32xf32>
    %cst_114 = arith.constant dense<0.000000e+00> : vector<16xf32>
    %206 = vector.multi_reduction <add>, %205, %cst_114 [1] : vector<16x32xf32> to vector<16xf32>
    %207 = vector.shape_cast %206 : vector<16xf32> to vector<16x1xf32>
    %cst_115 = arith.constant 3.200000e+01 : f32
    %208 = vector.broadcast %cst_115 : f32 to vector<16x1xf32>
    %209 = arith.divf %207, %208 : vector<16x1xf32>
    %210 = vector.broadcast %209 : vector<16x1xf32> to vector<16x32xf32>
    %211 = arith.subf %205, %210 : vector<16x32xf32>
    %212 = arith.mulf %211, %211 : vector<16x32xf32>
    %cst_116 = arith.constant dense<0.000000e+00> : vector<16xf32>
    %213 = vector.multi_reduction <add>, %212, %cst_116 [1] : vector<16x32xf32> to vector<16xf32>
    %214 = vector.shape_cast %213 : vector<16xf32> to vector<16x1xf32>
    %cst_117 = arith.constant 3.200000e+01 : f32
    %215 = vector.broadcast %cst_117 : f32 to vector<16x1xf32>
    %216 = arith.divf %214, %215 : vector<16x1xf32>
    %cst_118 = arith.constant 9.99999997E-7 : f32
    %217 = vector.broadcast %cst_118 : f32 to vector<16x1xf32>
    %218 = arith.addf %216, %217 : vector<16x1xf32>
    %219 = math.rsqrt %218 : vector<16x1xf32>
    %220 = vector.broadcast %219 : vector<16x1xf32> to vector<16x32xf32>
    %221 = arith.mulf %211, %220 : vector<16x32xf32>
    %222 = vector.broadcast %23 : vector<1x32xf32> to vector<16x32xf32>
    %223 = arith.mulf %221, %222 : vector<16x32xf32>
    %224 = vector.broadcast %24 : vector<1x32xf32> to vector<16x32xf32>
    %225 = arith.addf %223, %224 : vector<16x32xf32>
    %cst_119 = arith.constant dense<0.000000e+00> : vector<16x96xf32>
    %226 = tpu.matmul %225, %25, %cst_119 {dimension_numbers = #tpu.dot_dimension_numbers<[1], [0], [0], [1], [0, 0, 1, 1], [], []>} : vector<16x32xf32>, vector<32x96xf32>, vector<16x96xf32> -> vector<16x96xf32>
    %227 = vector.shape_cast %226 : vector<16x96xf32> to vector<2x8x96xf32>
    %228 = vector.extract_strided_slice %227 {offsets = [0, 0, 0], sizes = [2, 8, 8], strides = [1, 1, 1]} : vector<2x8x96xf32> to vector<2x8x8xf32>
    %229 = vector.extract_strided_slice %227 {offsets = [0, 0, 32], sizes = [2, 8, 8], strides = [1, 1, 1]} : vector<2x8x96xf32> to vector<2x8x8xf32>
    %230 = vector.extract_strided_slice %227 {offsets = [0, 0, 64], sizes = [2, 8, 8], strides = [1, 1, 1]} : vector<2x8x96xf32> to vector<2x8x8xf32>
    "tpu.trace_start"() <{level = 10 : i32, message = "rsd,rtd->rst"}> : () -> ()
    %cst_120 = arith.constant dense<0.000000e+00> : vector<2x8x8xf32>
    %231 = tpu.matmul %228, %229, %cst_120 {dimension_numbers = #tpu.dot_dimension_numbers<[2], [2], [1], [1], [0, 0, 0, 1, 1, 1], [0], [0]>} : vector<2x8x8xf32>, vector<2x8x8xf32>, vector<2x8x8xf32> -> vector<2x8x8xf32>
    "tpu.trace_stop"() : () -> ()
    %cst_121 = arith.constant 0.353553385 : f32
    %232 = vector.broadcast %cst_121 : f32 to vector<2x8x8xf32>
    %233 = arith.mulf %231, %232 : vector<2x8x8xf32>
    %cst_122 = arith.constant dense<0xFF800000> : vector<2x8xf32>
    %234 = vector.multi_reduction <maximumf>, %233, %cst_122 [2] : vector<2x8x8xf32> to vector<2x8xf32>
    %235 = vector.shape_cast %234 : vector<2x8xf32> to vector<2x8x1xf32>
    %236 = vector.broadcast %235 : vector<2x8x1xf32> to vector<2x8x8xf32>
    %237 = arith.subf %233, %236 : vector<2x8x8xf32>
    %238 = math.exp %237 : vector<2x8x8xf32>
    %cst_123 = arith.constant dense<0.000000e+00> : vector<2x8xf32>
    %239 = vector.multi_reduction <add>, %238, %cst_123 [2] : vector<2x8x8xf32> to vector<2x8xf32>
    %240 = vector.shape_cast %239 : vector<2x8xf32> to vector<2x8x1xf32>
    %241 = tpu.reciprocal %240 {approx = true} : vector<2x8x1xf32> -> vector<2x8x1xf32>
    %242 = vector.broadcast %241 : vector<2x8x1xf32> to vector<2x8x8xf32>
    %243 = arith.mulf %238, %242 : vector<2x8x8xf32>
    "tpu.trace_start"() <{level = 10 : i32, message = "rst,rtd->rsd"}> : () -> ()
    %cst_124 = arith.constant dense<0.000000e+00> : vector<2x8x8xf32>
    %244 = tpu.matmul %243, %230, %cst_124 {dimension_numbers = #tpu.dot_dimension_numbers<[2], [1], [1], [2], [0, 0, 0, 1, 1, 2], [0], [0]>} : vector<2x8x8xf32>, vector<2x8x8xf32>, vector<2x8x8xf32> -> vector<2x8x8xf32>
    "tpu.trace_stop"() : () -> ()
    %245 = vector.extract_strided_slice %227 {offsets = [0, 0, 8], sizes = [2, 8, 8], strides = [1, 1, 1]} : vector<2x8x96xf32> to vector<2x8x8xf32>
    %246 = vector.extract_strided_slice %227 {offsets = [0, 0, 40], sizes = [2, 8, 8], strides = [1, 1, 1]} : vector<2x8x96xf32> to vector<2x8x8xf32>
    %247 = vector.extract_strided_slice %227 {offsets = [0, 0, 72], sizes = [2, 8, 8], strides = [1, 1, 1]} : vector<2x8x96xf32> to vector<2x8x8xf32>
    "tpu.trace_start"() <{level = 10 : i32, message = "rsd,rtd->rst"}> : () -> ()
    %cst_125 = arith.constant dense<0.000000e+00> : vector<2x8x8xf32>
    %248 = tpu.matmul %245, %246, %cst_125 {dimension_numbers = #tpu.dot_dimension_numbers<[2], [2], [1], [1], [0, 0, 0, 1, 1, 1], [0], [0]>} : vector<2x8x8xf32>, vector<2x8x8xf32>, vector<2x8x8xf32> -> vector<2x8x8xf32>
    "tpu.trace_stop"() : () -> ()
    %cst_126 = arith.constant 0.353553385 : f32
    %249 = vector.broadcast %cst_126 : f32 to vector<2x8x8xf32>
    %250 = arith.mulf %248, %249 : vector<2x8x8xf32>
    %cst_127 = arith.constant dense<0xFF800000> : vector<2x8xf32>
    %251 = vector.multi_reduction <maximumf>, %250, %cst_127 [2] : vector<2x8x8xf32> to vector<2x8xf32>
    %252 = vector.shape_cast %251 : vector<2x8xf32> to vector<2x8x1xf32>
    %253 = vector.broadcast %252 : vector<2x8x1xf32> to vector<2x8x8xf32>
    %254 = arith.subf %250, %253 : vector<2x8x8xf32>
    %255 = math.exp %254 : vector<2x8x8xf32>
    %cst_128 = arith.constant dense<0.000000e+00> : vector<2x8xf32>
    %256 = vector.multi_reduction <add>, %255, %cst_128 [2] : vector<2x8x8xf32> to vector<2x8xf32>
    %257 = vector.shape_cast %256 : vector<2x8xf32> to vector<2x8x1xf32>
    %258 = tpu.reciprocal %257 {approx = true} : vector<2x8x1xf32> -> vector<2x8x1xf32>
    %259 = vector.broadcast %258 : vector<2x8x1xf32> to vector<2x8x8xf32>
    %260 = arith.mulf %255, %259 : vector<2x8x8xf32>
    "tpu.trace_start"() <{level = 10 : i32, message = "rst,rtd->rsd"}> : () -> ()
    %cst_129 = arith.constant dense<0.000000e+00> : vector<2x8x8xf32>
    %261 = tpu.matmul %260, %247, %cst_129 {dimension_numbers = #tpu.dot_dimension_numbers<[2], [1], [1], [2], [0, 0, 0, 1, 1, 2], [0], [0]>} : vector<2x8x8xf32>, vector<2x8x8xf32>, vector<2x8x8xf32> -> vector<2x8x8xf32>
    "tpu.trace_stop"() : () -> ()
    %262 = vector.extract_strided_slice %227 {offsets = [0, 0, 16], sizes = [2, 8, 8], strides = [1, 1, 1]} : vector<2x8x96xf32> to vector<2x8x8xf32>
    %263 = vector.extract_strided_slice %227 {offsets = [0, 0, 48], sizes = [2, 8, 8], strides = [1, 1, 1]} : vector<2x8x96xf32> to vector<2x8x8xf32>
    %264 = vector.extract_strided_slice %227 {offsets = [0, 0, 80], sizes = [2, 8, 8], strides = [1, 1, 1]} : vector<2x8x96xf32> to vector<2x8x8xf32>
    "tpu.trace_start"() <{level = 10 : i32, message = "rsd,rtd->rst"}> : () -> ()
    %cst_130 = arith.constant dense<0.000000e+00> : vector<2x8x8xf32>
    %265 = tpu.matmul %262, %263, %cst_130 {dimension_numbers = #tpu.dot_dimension_numbers<[2], [2], [1], [1], [0, 0, 0, 1, 1, 1], [0], [0]>} : vector<2x8x8xf32>, vector<2x8x8xf32>, vector<2x8x8xf32> -> vector<2x8x8xf32>
    "tpu.trace_stop"() : () -> ()
    %cst_131 = arith.constant 0.353553385 : f32
    %266 = vector.broadcast %cst_131 : f32 to vector<2x8x8xf32>
    %267 = arith.mulf %265, %266 : vector<2x8x8xf32>
    %cst_132 = arith.constant dense<0xFF800000> : vector<2x8xf32>
    %268 = vector.multi_reduction <maximumf>, %267, %cst_132 [2] : vector<2x8x8xf32> to vector<2x8xf32>
    %269 = vector.shape_cast %268 : vector<2x8xf32> to vector<2x8x1xf32>
    %270 = vector.broadcast %269 : vector<2x8x1xf32> to vector<2x8x8xf32>
    %271 = arith.subf %267, %270 : vector<2x8x8xf32>
    %272 = math.exp %271 : vector<2x8x8xf32>
    %cst_133 = arith.constant dense<0.000000e+00> : vector<2x8xf32>
    %273 = vector.multi_reduction <add>, %272, %cst_133 [2] : vector<2x8x8xf32> to vector<2x8xf32>
    %274 = vector.shape_cast %273 : vector<2x8xf32> to vector<2x8x1xf32>
    %275 = tpu.reciprocal %274 {approx = true} : vector<2x8x1xf32> -> vector<2x8x1xf32>
    %276 = vector.broadcast %275 : vector<2x8x1xf32> to vector<2x8x8xf32>
    %277 = arith.mulf %272, %276 : vector<2x8x8xf32>
    "tpu.trace_start"() <{level = 10 : i32, message = "rst,rtd->rsd"}> : () -> ()
    %cst_134 = arith.constant dense<0.000000e+00> : vector<2x8x8xf32>
    %278 = tpu.matmul %277, %264, %cst_134 {dimension_numbers = #tpu.dot_dimension_numbers<[2], [1], [1], [2], [0, 0, 0, 1, 1, 2], [0], [0]>} : vector<2x8x8xf32>, vector<2x8x8xf32>, vector<2x8x8xf32> -> vector<2x8x8xf32>
    "tpu.trace_stop"() : () -> ()
    %279 = vector.extract_strided_slice %227 {offsets = [0, 0, 24], sizes = [2, 8, 8], strides = [1, 1, 1]} : vector<2x8x96xf32> to vector<2x8x8xf32>
    %280 = vector.extract_strided_slice %227 {offsets = [0, 0, 56], sizes = [2, 8, 8], strides = [1, 1, 1]} : vector<2x8x96xf32> to vector<2x8x8xf32>
    %281 = vector.extract_strided_slice %227 {offsets = [0, 0, 88], sizes = [2, 8, 8], strides = [1, 1, 1]} : vector<2x8x96xf32> to vector<2x8x8xf32>
    "tpu.trace_start"() <{level = 10 : i32, message = "rsd,rtd->rst"}> : () -> ()
    %cst_135 = arith.constant dense<0.000000e+00> : vector<2x8x8xf32>
    %282 = tpu.matmul %279, %280, %cst_135 {dimension_numbers = #tpu.dot_dimension_numbers<[2], [2], [1], [1], [0, 0, 0, 1, 1, 1], [0], [0]>} : vector<2x8x8xf32>, vector<2x8x8xf32>, vector<2x8x8xf32> -> vector<2x8x8xf32>
    "tpu.trace_stop"() : () -> ()
    %cst_136 = arith.constant 0.353553385 : f32
    %283 = vector.broadcast %cst_136 : f32 to vector<2x8x8xf32>
    %284 = arith.mulf %282, %283 : vector<2x8x8xf32>
    %cst_137 = arith.constant dense<0xFF800000> : vector<2x8xf32>
    %285 = vector.multi_reduction <maximumf>, %284, %cst_137 [2] : vector<2x8x8xf32> to vector<2x8xf32>
    %286 = vector.shape_cast %285 : vector<2x8xf32> to vector<2x8x1xf32>
    %287 = vector.broadcast %286 : vector<2x8x1xf32> to vector<2x8x8xf32>
    %288 = arith.subf %284, %287 : vector<2x8x8xf32>
    %289 = math.exp %288 : vector<2x8x8xf32>
    %cst_138 = arith.constant dense<0.000000e+00> : vector<2x8xf32>
    %290 = vector.multi_reduction <add>, %289, %cst_138 [2] : vector<2x8x8xf32> to vector<2x8xf32>
    %291 = vector.shape_cast %290 : vector<2x8xf32> to vector<2x8x1xf32>
    %292 = tpu.reciprocal %291 {approx = true} : vector<2x8x1xf32> -> vector<2x8x1xf32>
    %293 = vector.broadcast %292 : vector<2x8x1xf32> to vector<2x8x8xf32>
    %294 = arith.mulf %289, %293 : vector<2x8x8xf32>
    "tpu.trace_start"() <{level = 10 : i32, message = "rst,rtd->rsd"}> : () -> ()
    %cst_139 = arith.constant dense<0.000000e+00> : vector<2x8x8xf32>
    %295 = tpu.matmul %294, %281, %cst_139 {dimension_numbers = #tpu.dot_dimension_numbers<[2], [1], [1], [2], [0, 0, 0, 1, 1, 2], [0], [0]>} : vector<2x8x8xf32>, vector<2x8x8xf32>, vector<2x8x8xf32> -> vector<2x8x8xf32>
    "tpu.trace_stop"() : () -> ()
    %296 = tpu.concatenate %244, %261, %278, %295 in 2 : vector<2x8x8xf32>, vector<2x8x8xf32>, vector<2x8x8xf32>, vector<2x8x8xf32> -> vector<2x8x32xf32>
    %297 = vector.shape_cast %296 : vector<2x8x32xf32> to vector<16x32xf32>
    %cst_140 = arith.constant dense<0.000000e+00> : vector<16x32xf32>
    %298 = tpu.matmul %297, %26, %cst_140 {dimension_numbers = #tpu.dot_dimension_numbers<[1], [0], [0], [1], [0, 0, 1, 1], [], []>} : vector<16x32xf32>, vector<32x32xf32>, vector<16x32xf32> -> vector<16x32xf32>
    %299 = vector.broadcast %27 : vector<1x32xf32> to vector<16x32xf32>
    %300 = arith.addf %298, %299 : vector<16x32xf32>
    %301 = arith.addf %300, %205 : vector<16x32xf32>
    %cst_141 = arith.constant dense<0.000000e+00> : vector<16xf32>
    %302 = vector.multi_reduction <add>, %301, %cst_141 [1] : vector<16x32xf32> to vector<16xf32>
    %303 = vector.shape_cast %302 : vector<16xf32> to vector<16x1xf32>
    %cst_142 = arith.constant 3.200000e+01 : f32
    %304 = vector.broadcast %cst_142 : f32 to vector<16x1xf32>
    %305 = arith.divf %303, %304 : vector<16x1xf32>
    %306 = vector.broadcast %305 : vector<16x1xf32> to vector<16x32xf32>
    %307 = arith.subf %301, %306 : vector<16x32xf32>
    %308 = arith.mulf %307, %307 : vector<16x32xf32>
    %cst_143 = arith.constant dense<0.000000e+00> : vector<16xf32>
    %309 = vector.multi_reduction <add>, %308, %cst_143 [1] : vector<16x32xf32> to vector<16xf32>
    %310 = vector.shape_cast %309 : vector<16xf32> to vector<16x1xf32>
    %cst_144 = arith.constant 3.200000e+01 : f32
    %311 = vector.broadcast %cst_144 : f32 to vector<16x1xf32>
    %312 = arith.divf %310, %311 : vector<16x1xf32>
    %cst_145 = arith.constant 9.99999997E-7 : f32
    %313 = vector.broadcast %cst_145 : f32 to vector<16x1xf32>
    %314 = arith.addf %312, %313 : vector<16x1xf32>
    %315 = math.rsqrt %314 : vector<16x1xf32>
    %316 = vector.broadcast %315 : vector<16x1xf32> to vector<16x32xf32>
    %317 = arith.mulf %307, %316 : vector<16x32xf32>
    %318 = vector.broadcast %28 : vector<1x32xf32> to vector<16x32xf32>
    %319 = arith.mulf %317, %318 : vector<16x32xf32>
    %320 = vector.broadcast %29 : vector<1x32xf32> to vector<16x32xf32>
    %321 = arith.addf %319, %320 : vector<16x32xf32>
    %cst_146 = arith.constant dense<0.000000e+00> : vector<16x128xf32>
    %322 = tpu.matmul %321, %30, %cst_146 {dimension_numbers = #tpu.dot_dimension_numbers<[1], [0], [0], [1], [0, 0, 1, 1], [], []>} : vector<16x32xf32>, vector<32x128xf32>, vector<16x128xf32> -> vector<16x128xf32>
    %323 = vector.broadcast %31 : vector<1x128xf32> to vector<16x128xf32>
    %324 = arith.addf %322, %323 : vector<16x128xf32>
    %cst_147 = arith.constant 0.000000e+00 : f32
    %325 = vector.broadcast %cst_147 : f32 to vector<16x128xf32>
    %326 = arith.maximumf %324, %325 : vector<16x128xf32>
    %cst_148 = arith.constant dense<0.000000e+00> : vector<16x32xf32>
    %327 = tpu.matmul %326, %32, %cst_148 {dimension_numbers = #tpu.dot_dimension_numbers<[1], [0], [0], [1], [0, 0, 1, 1], [], []>} : vector<16x128xf32>, vector<128x32xf32>, vector<16x32xf32> -> vector<16x32xf32>
    %328 = vector.broadcast %33 : vector<1x32xf32> to vector<16x32xf32>
    %329 = arith.addf %327, %328 : vector<16x32xf32>
    %330 = arith.addf %329, %301 : vector<16x32xf32>
    %c0_149 = arith.constant 0 : index
    %c0_150 = arith.constant 0 : index
    %331 = vector.load %arg39[%c0_149, %c0_150] : memref<16x32xf32, #tpu.memory_space<vmem>>, vector<16x32xf32>
    tpu.vector_store %arg39[%c0_149, %c0_150], %330 {strides = array<i32>} : memref<16x32xf32, #tpu.memory_space<vmem>>, vector<16x32xf32>,
    return
  }
  func.func @transform_0(%arg0: i32) -> (i32, i32) {
    %c0_i32 = arith.constant 0 : i32
    %c0_i32_0 = arith.constant 0 : i32
    return %arg0, %c0_i32 : i32, i32
  }
  func.func @transform_1(%arg0: i32) -> (i32, i32, i32) {
    %c0_i32 = arith.constant 0 : i32
    %c0_i32_0 = arith.constant 0 : i32
    %c0_i32_1 = arith.constant 0 : i32
    return %c0_i32, %arg0, %c0_i32_0 : i32, i32, i32
  }
  func.func @transform_2(%arg0: i32) -> (i32, i32, i32) {
    %c0_i32 = arith.constant 0 : i32
    %c0_i32_0 = arith.constant 0 : i32
    %c0_i32_1 = arith.constant 0 : i32
    return %c0_i32, %arg0, %c0_i32_0 : i32, i32, i32
  }
  func.func @transform_3(%arg0: i32) -> (i32, i32, i32) {
    %c0_i32 = arith.constant 0 : i32
    %c0_i32_0 = arith.constant 0 : i32
    %c0_i32_1 = arith.constant 0 : i32
    return %c0_i32, %arg0, %c0_i32_0 : i32, i32, i32
  }
  func.func @transform_4(%arg0: i32) -> (i32, i32) {
    %c0_i32 = arith.constant 0 : i32
    %c0_i32_0 = arith.constant 0 : i32
    %c0_i32_1 = arith.constant 0 : i32
    return %c0_i32, %c0_i32_0 : i32, i32
  }
  func.func @transform_5(%arg0: i32) -> (i32, i32) {
    %c0_i32 = arith.constant 0 : i32
    %c0_i32_0 = arith.constant 0 : i32
    %c0_i32_1 = arith.constant 0 : i32
    return %c0_i32, %c0_i32_0 : i32, i32
  }
  func.func @transform_6(%arg0: i32) -> (i32, i32) {
    %c0_i32 = arith.constant 0 : i32
    %c0_i32_0 = arith.constant 0 : i32
    %c0_i32_1 = arith.constant 0 : i32
    return %c0_i32, %c0_i32_0 : i32, i32
  }
  func.func @transform_7(%arg0: i32) -> (i32, i32) {
    %c0_i32 = arith.constant 0 : i32
    %c0_i32_0 = arith.constant 0 : i32
    %c0_i32_1 = arith.constant 0 : i32
    return %c0_i32, %c0_i32_0 : i32, i32
  }
  func.func @transform_8(%arg0: i32) -> (i32, i32) {
    %c0_i32 = arith.constant 0 : i32
    %c0_i32_0 = arith.constant 0 : i32
    %c0_i32_1 = arith.constant 0 : i32
    return %c0_i32, %c0_i32_0 : i32, i32
  }
  func.func @transform_9(%arg0: i32) -> (i32, i32) {
    %c0_i32 = arith.constant 0 : i32
    %c0_i32_0 = arith.constant 0 : i32
    %c0_i32_1 = arith.constant 0 : i32
    return %c0_i32, %c0_i32_0 : i32, i32
  }
  func.func @transform_10(%arg0: i32) -> (i32, i32) {
    %c0_i32 = arith.constant 0 : i32
    %c0_i32_0 = arith.constant 0 : i32
    %c0_i32_1 = arith.constant 0 : i32
    return %c0_i32, %c0_i32_0 : i32, i32
  }
  func.func @transform_11(%arg0: i32) -> (i32, i32) {
    %c0_i32 = arith.constant 0 : i32
    %c0_i32_0 = arith.constant 0 : i32
    %c0_i32_1 = arith.constant 0 : i32
    return %c0_i32, %c0_i32_0 : i32, i32
  }
  func.func @transform_12(%arg0: i32) -> (i32, i32) {
    %c0_i32 = arith.constant 0 : i32
    %c0_i32_0 = arith.constant 0 : i32
    %c0_i32_1 = arith.constant 0 : i32
    return %c0_i32, %c0_i32_0 : i32, i32
  }
  func.func @transform_13(%arg0: i32) -> (i32, i32) {
    %c0_i32 = arith.constant 0 : i32
    %c0_i32_0 = arith.constant 0 : i32
    %c0_i32_1 = arith.constant 0 : i32
    return %c0_i32, %c0_i32_0 : i32, i32
  }
  func.func @transform_14(%arg0: i32) -> (i32, i32) {
    %c0_i32 = arith.constant 0 : i32
    %c0_i32_0 = arith.constant 0 : i32
    %c0_i32_1 = arith.constant 0 : i32
    return %c0_i32, %c0_i32_0 : i32, i32
  }
  func.func @transform_15(%arg0: i32) -> (i32, i32) {
    %c0_i32 = arith.constant 0 : i32
    %c0_i32_0 = arith.constant 0 : i32
    %c0_i32_1 = arith.constant 0 : i32
    return %c0_i32, %c0_i32_0 : i32, i32
  }
  func.func @transform_16(%arg0: i32) -> (i32, i32) {
    %c0_i32 = arith.constant 0 : i32
    %c0_i32_0 = arith.constant 0 : i32
    %c0_i32_1 = arith.constant 0 : i32
    return %c0_i32, %c0_i32_0 : i32, i32
  }
  func.func @transform_17(%arg0: i32) -> (i32, i32) {
    %c0_i32 = arith.constant 0 : i32
    %c0_i32_0 = arith.constant 0 : i32
    %c0_i32_1 = arith.constant 0 : i32
    return %c0_i32, %c0_i32_0 : i32, i32
  }
  func.func @transform_18(%arg0: i32) -> (i32, i32) {
    %c0_i32 = arith.constant 0 : i32
    %c0_i32_0 = arith.constant 0 : i32
    %c0_i32_1 = arith.constant 0 : i32
    return %c0_i32, %c0_i32_0 : i32, i32
  }
  func.func @transform_19(%arg0: i32) -> (i32, i32) {
    %c0_i32 = arith.constant 0 : i32
    %c0_i32_0 = arith.constant 0 : i32
    %c0_i32_1 = arith.constant 0 : i32
    return %c0_i32, %c0_i32_0 : i32, i32
  }
  func.func @transform_20(%arg0: i32) -> (i32, i32) {
    %c0_i32 = arith.constant 0 : i32
    %c0_i32_0 = arith.constant 0 : i32
    %c0_i32_1 = arith.constant 0 : i32
    return %c0_i32, %c0_i32_0 : i32, i32
  }
  func.func @transform_21(%arg0: i32) -> (i32, i32) {
    %c0_i32 = arith.constant 0 : i32
    %c0_i32_0 = arith.constant 0 : i32
    %c0_i32_1 = arith.constant 0 : i32
    return %c0_i32, %c0_i32_0 : i32, i32
  }
  func.func @transform_22(%arg0: i32) -> (i32, i32) {
    %c0_i32 = arith.constant 0 : i32
    %c0_i32_0 = arith.constant 0 : i32
    %c0_i32_1 = arith.constant 0 : i32
    return %c0_i32, %c0_i32_0 : i32, i32
  }
  func.func @transform_23(%arg0: i32) -> (i32, i32) {
    %c0_i32 = arith.constant 0 : i32
    %c0_i32_0 = arith.constant 0 : i32
    %c0_i32_1 = arith.constant 0 : i32
    return %c0_i32, %c0_i32_0 : i32, i32
  }
  func.func @transform_24(%arg0: i32) -> (i32, i32) {
    %c0_i32 = arith.constant 0 : i32
    %c0_i32_0 = arith.constant 0 : i32
    %c0_i32_1 = arith.constant 0 : i32
    return %c0_i32, %c0_i32_0 : i32, i32
  }
  func.func @transform_25(%arg0: i32) -> (i32, i32) {
    %c0_i32 = arith.constant 0 : i32
    %c0_i32_0 = arith.constant 0 : i32
    %c0_i32_1 = arith.constant 0 : i32
    return %c0_i32, %c0_i32_0 : i32, i32
  }
  func.func @transform_26(%arg0: i32) -> (i32, i32) {
    %c0_i32 = arith.constant 0 : i32
    %c0_i32_0 = arith.constant 0 : i32
    %c0_i32_1 = arith.constant 0 : i32
    return %c0_i32, %c0_i32_0 : i32, i32
  }
  func.func @transform_27(%arg0: i32) -> (i32, i32) {
    %c0_i32 = arith.constant 0 : i32
    %c0_i32_0 = arith.constant 0 : i32
    %c0_i32_1 = arith.constant 0 : i32
    return %c0_i32, %c0_i32_0 : i32, i32
  }
  func.func @transform_28(%arg0: i32) -> (i32, i32) {
    %c0_i32 = arith.constant 0 : i32
    %c0_i32_0 = arith.constant 0 : i32
    %c0_i32_1 = arith.constant 0 : i32
    return %c0_i32, %c0_i32_0 : i32, i32
  }
  func.func @transform_29(%arg0: i32) -> (i32, i32) {
    %c0_i32 = arith.constant 0 : i32
    %c0_i32_0 = arith.constant 0 : i32
    %c0_i32_1 = arith.constant 0 : i32
    return %c0_i32, %c0_i32_0 : i32, i32
  }
  func.func @transform_30(%arg0: i32) -> (i32, i32) {
    %c0_i32 = arith.constant 0 : i32
    %c0_i32_0 = arith.constant 0 : i32
    %c0_i32_1 = arith.constant 0 : i32
    return %c0_i32, %c0_i32_0 : i32, i32
  }
  func.func @transform_31(%arg0: i32) -> (i32, i32) {
    %c0_i32 = arith.constant 0 : i32
    %c0_i32_0 = arith.constant 0 : i32
    %c0_i32_1 = arith.constant 0 : i32
    return %c0_i32, %c0_i32_0 : i32, i32
  }
  func.func @transform_32(%arg0: i32) -> (i32, i32) {
    %c0_i32 = arith.constant 0 : i32
    %c0_i32_0 = arith.constant 0 : i32
    %c0_i32_1 = arith.constant 0 : i32
    return %c0_i32, %c0_i32_0 : i32, i32
  }
  func.func @transform_33(%arg0: i32) -> (i32, i32) {
    %c0_i32 = arith.constant 0 : i32
    %c0_i32_0 = arith.constant 0 : i32
    %c0_i32_1 = arith.constant 0 : i32
    return %c0_i32, %c0_i32_0 : i32, i32
  }
  func.func @transform_34(%arg0: i32) -> (i32, i32) {
    %c0_i32 = arith.constant 0 : i32
    %c0_i32_0 = arith.constant 0 : i32
    %c0_i32_1 = arith.constant 0 : i32
    return %c0_i32, %c0_i32_0 : i32, i32
  }
  func.func @transform_35(%arg0: i32) -> (i32, i32) {
    %c0_i32 = arith.constant 0 : i32
    %c0_i32_0 = arith.constant 0 : i32
    %c0_i32_1 = arith.constant 0 : i32
    return %c0_i32, %c0_i32_0 : i32, i32
  }
  func.func @transform_36(%arg0: i32) -> (i32, i32) {
    %c0_i32 = arith.constant 0 : i32
    %c0_i32_0 = arith.constant 0 : i32
    %c0_i32_1 = arith.constant 0 : i32
    return %c0_i32, %c0_i32_0 : i32, i32
  }
  func.func @transform_37(%arg0: i32) -> (i32, i32) {
    %c0_i32 = arith.constant 0 : i32
    %c0_i32_0 = arith.constant 0 : i32
    %c0_i32_1 = arith.constant 0 : i32
    return %c0_i32, %c0_i32_0 : i32, i32
  }
  func.func @transform_38(%arg0: i32) -> (i32, i32) {
    %c0_i32 = arith.constant 0 : i32
    %c0_i32_0 = arith.constant 0 : i32
    return %arg0, %c0_i32 : i32, i32
  }
}

module attributes {stable_mosaic.version = 11 : i64} {
  func.func @_epilogue_kernel(%arg0: i32, %arg1: memref<16x32xf32, #tpu.memory_space<vmem>>, %arg2: memref<1x32xf32, #tpu.memory_space<vmem>>, %arg3: memref<1x32xf32, #tpu.memory_space<vmem>>, %arg4: memref<32x3xf32, #tpu.memory_space<vmem>>, %arg5: memref<1x3xf32, #tpu.memory_space<vmem>>, %arg6: memref<2x3xf32, #tpu.memory_space<vmem>>) attributes {dimension_semantics = [#tpu.dimension_semantics<parallel>], iteration_bounds = array<i64: 1>, scalar_prefetch = 0 : i64, scratch_operands = 0 : i64, tpu.core_type = #tpu.core_type<tc>, window_params = [{transform_indices = @transform_0, window_bounds = array<i64: 16, 32>}, {pipeline_mode = #tpu.pipeline_mode<synchronous>, transform_indices = @transform_1, window_bounds = array<i64: 1, 32>}, {pipeline_mode = #tpu.pipeline_mode<synchronous>, transform_indices = @transform_2, window_bounds = array<i64: 1, 32>}, {pipeline_mode = #tpu.pipeline_mode<synchronous>, transform_indices = @transform_3, window_bounds = array<i64: 32, 3>}, {pipeline_mode = #tpu.pipeline_mode<synchronous>, transform_indices = @transform_4, window_bounds = array<i64: 1, 3>}, {transform_indices = @transform_5, window_bounds = array<i64: 2, 3>}]} {
    %c0 = arith.constant 0 : index
    %c0_0 = arith.constant 0 : index
    %0 = vector.load %arg1[%c0, %c0_0] : memref<16x32xf32, #tpu.memory_space<vmem>>, vector<16x32xf32>
    %c0_1 = arith.constant 0 : index
    %c0_2 = arith.constant 0 : index
    %1 = vector.load %arg2[%c0_1, %c0_2] : memref<1x32xf32, #tpu.memory_space<vmem>>, vector<1x32xf32>
    %c0_3 = arith.constant 0 : index
    %c0_4 = arith.constant 0 : index
    %2 = vector.load %arg3[%c0_3, %c0_4] : memref<1x32xf32, #tpu.memory_space<vmem>>, vector<1x32xf32>
    %cst = arith.constant dense<0.000000e+00> : vector<16xf32>
    %3 = vector.multi_reduction <add>, %0, %cst [1] : vector<16x32xf32> to vector<16xf32>
    %4 = vector.shape_cast %3 : vector<16xf32> to vector<16x1xf32>
    %cst_5 = arith.constant 3.200000e+01 : f32
    %5 = vector.broadcast %cst_5 : f32 to vector<16x1xf32>
    %6 = arith.divf %4, %5 : vector<16x1xf32>
    %7 = vector.broadcast %6 : vector<16x1xf32> to vector<16x32xf32>
    %8 = arith.subf %0, %7 : vector<16x32xf32>
    %9 = arith.mulf %8, %8 : vector<16x32xf32>
    %cst_6 = arith.constant dense<0.000000e+00> : vector<16xf32>
    %10 = vector.multi_reduction <add>, %9, %cst_6 [1] : vector<16x32xf32> to vector<16xf32>
    %11 = vector.shape_cast %10 : vector<16xf32> to vector<16x1xf32>
    %cst_7 = arith.constant 3.200000e+01 : f32
    %12 = vector.broadcast %cst_7 : f32 to vector<16x1xf32>
    %13 = arith.divf %11, %12 : vector<16x1xf32>
    %cst_8 = arith.constant 9.99999974E-6 : f32
    %14 = vector.broadcast %cst_8 : f32 to vector<16x1xf32>
    %15 = arith.addf %13, %14 : vector<16x1xf32>
    %16 = math.rsqrt %15 : vector<16x1xf32>
    %17 = vector.broadcast %16 : vector<16x1xf32> to vector<16x32xf32>
    %18 = arith.mulf %8, %17 : vector<16x32xf32>
    %19 = vector.broadcast %1 : vector<1x32xf32> to vector<16x32xf32>
    %20 = arith.mulf %18, %19 : vector<16x32xf32>
    %21 = vector.broadcast %2 : vector<1x32xf32> to vector<16x32xf32>
    %22 = arith.addf %20, %21 : vector<16x32xf32>
    %23 = vector.shape_cast %22 : vector<16x32xf32> to vector<2x8x32xf32>
    %cst_9 = arith.constant dense<0.000000e+00> : vector<2x32xf32>
    %24 = vector.multi_reduction <add>, %23, %cst_9 [1] : vector<2x8x32xf32> to vector<2x32xf32>
    %cst_10 = arith.constant 8.000000e+00 : f32
    %25 = vector.broadcast %cst_10 : f32 to vector<2x32xf32>
    %26 = arith.divf %24, %25 : vector<2x32xf32>
    %c0_11 = arith.constant 0 : index
    %c0_12 = arith.constant 0 : index
    %27 = vector.load %arg4[%c0_11, %c0_12] : memref<32x3xf32, #tpu.memory_space<vmem>>, vector<32x3xf32>
    %cst_13 = arith.constant dense<0.000000e+00> : vector<2x3xf32>
    %28 = tpu.matmul %26, %27, %cst_13 {dimension_numbers = #tpu.dot_dimension_numbers<[1], [0], [0], [1], [0, 0, 1, 1], [], []>} : vector<2x32xf32>, vector<32x3xf32>, vector<2x3xf32> -> vector<2x3xf32>
    %c0_14 = arith.constant 0 : index
    %c0_15 = arith.constant 0 : index
    %29 = vector.load %arg5[%c0_14, %c0_15] : memref<1x3xf32, #tpu.memory_space<vmem>>, vector<1x3xf32>
    %30 = vector.broadcast %29 : vector<1x3xf32> to vector<2x3xf32>
    %31 = arith.addf %28, %30 : vector<2x3xf32>
    %c0_16 = arith.constant 0 : index
    %c0_17 = arith.constant 0 : index
    %32 = vector.load %arg6[%c0_16, %c0_17] : memref<2x3xf32, #tpu.memory_space<vmem>>, vector<2x3xf32>
    tpu.vector_store %arg6[%c0_16, %c0_17], %31 {strides = array<i32>} : memref<2x3xf32, #tpu.memory_space<vmem>>, vector<2x3xf32>,
    return
  }
  func.func @transform_0(%arg0: i32) -> (i32, i32) {
    %c0_i32 = arith.constant 0 : i32
    %c0_i32_0 = arith.constant 0 : i32
    return %arg0, %c0_i32 : i32, i32
  }
  func.func @transform_1(%arg0: i32) -> (i32, i32) {
    %c0_i32 = arith.constant 0 : i32
    %c0_i32_0 = arith.constant 0 : i32
    %c0_i32_1 = arith.constant 0 : i32
    return %c0_i32, %c0_i32_0 : i32, i32
  }
  func.func @transform_2(%arg0: i32) -> (i32, i32) {
    %c0_i32 = arith.constant 0 : i32
    %c0_i32_0 = arith.constant 0 : i32
    %c0_i32_1 = arith.constant 0 : i32
    return %c0_i32, %c0_i32_0 : i32, i32
  }
  func.func @transform_3(%arg0: i32) -> (i32, i32) {
    %c0_i32 = arith.constant 0 : i32
    %c0_i32_0 = arith.constant 0 : i32
    %c0_i32_1 = arith.constant 0 : i32
    return %c0_i32, %c0_i32_0 : i32, i32
  }
  func.func @transform_4(%arg0: i32) -> (i32, i32) {
    %c0_i32 = arith.constant 0 : i32
    %c0_i32_0 = arith.constant 0 : i32
    %c0_i32_1 = arith.constant 0 : i32
    return %c0_i32, %c0_i32_0 : i32, i32
  }
  func.func @transform_5(%arg0: i32) -> (i32, i32) {
    %c0_i32 = arith.constant 0 : i32
    %c0_i32_0 = arith.constant 0 : i32
    return %arg0, %c0_i32 : i32, i32
  }
}

</mosaic_0001>

<llo_original>
// kernel: gnt_moe_forward.4
$region0: #{gnt_moe_forward.4}
  #allocation0 [shape = 'u32[]', space=smem, size = 0x4, offset = 0x4, fixed_abs, tag = 'smem constant byte address 0x4 - core index']
  #allocation1 [shape = 'u32[144,128]{1,0:T(1,128)}', space=vmem, size = 0x12000, scoped, tag = 'internal scratch']
  %s0 = inlined_call_operand.vmem [shape: f32[4,16,35], index: 0, kind: input, shape index: {}]
  %s1 = inlined_call_operand.vmem [shape: f32[35,32], index: 1, kind: input, shape index: {}]
  %s2 = inlined_call_operand.vmem [shape: f32[1,32], index: 2, kind: input, shape index: {}]
  %s3 = inlined_call_operand.vmem [shape: f32[32,32], index: 3, kind: input, shape index: {}]
  %s4 = inlined_call_operand.vmem [shape: f32[1,32], index: 4, kind: input, shape index: {}]
  %s5 = inlined_call_operand.vmem [shape: f32[4,16,32], index: 5, kind: output, shape index: {0}]
  %s6 = inlined_call_operand.vmem [shape: f32[16,32], index: 6, kind: output, shape index: {1}]
  %7 = xla_tuple %s5, %s6
  %s8 = sld [smem:[#allocation0]]
  $region38: #{gnt_moe_forward.4} parent=0
    _
  %s10 = ssub.s32 1, %s8
  %s11 = scalar_select 0, %s10, %s8
  // Predicated region
  $region2: #{gnt_moe_forward.4} parent=0 // pred_check
    _
  $region3: #{gnt_moe_forward.4} parent=0 // pred_check_branch
    %13 = sbr.rel (0) target = $region5
  $region4: #{gnt_moe_forward.4} parent=0 // pred_region
    _
  $region5: #{gnt_moe_forward.4} parent=0 // pred_fallthru
    _
  // Predicated region
  $region6: #{gnt_moe_forward.4} parent=0 // pred_check
    _
  $region7: #{gnt_moe_forward.4} parent=0 // pred_check_branch
    %15 = sbr.rel (0) target = $region9
  $region8: #{gnt_moe_forward.4} parent=0 // pred_region
    _
  $region9: #{gnt_moe_forward.4} parent=0 // pred_fallthru
    _
  // Predicated region
  $region10: #{gnt_moe_forward.4} parent=0 // pred_check
    _
  $region11: #{gnt_moe_forward.4} parent=0 // pred_check_branch
    %17 = sbr.rel (0) target = $region13
  $region12: #{gnt_moe_forward.4} parent=0 // pred_region
    _
  $region13: #{gnt_moe_forward.4} parent=0 // pred_fallthru
    _
  // Predicated region
  $region14: #{gnt_moe_forward.4} parent=0 // pred_check
    _
  $region15: #{gnt_moe_forward.4} parent=0 // pred_check_branch
    %19 = sbr.rel (0) target = $region17
  $region16: #{gnt_moe_forward.4} parent=0 // pred_region
    _
  $region17: #{gnt_moe_forward.4} parent=0 // pred_fallthru
    _
  // Predicated region
  $region18: #{gnt_moe_forward.4} parent=0 // pred_check
    _
  $region19: #{gnt_moe_forward.4} parent=0 // pred_check_branch
    %21 = sbr.rel (0) target = $region21
  $region20: #{gnt_moe_forward.4} parent=0 // pred_region
    _
  $region21: #{gnt_moe_forward.4} parent=0 // pred_fallthru
    _
  %v22 = vld [vmem:[%s0] sm:$0xff]
  %v23 = vld [vmem:[%s0 + $0x8] sm:$0xff]
  %v24 = vld [vmem:[%s0 + $0x10] sm:$0xff]
  %v25 = vld [vmem:[%s0 + $0x18] sm:$0xff]
  %v26 = vld [vmem:[%s0 + $0x20] sm:$0xff]
  %v27 = vld [vmem:[%s0 + $0x28] sm:$0xff]
  %v28 = vld [vmem:[%s0 + $0x30] sm:$0xff]
  %v29 = vld [vmem:[%s0 + $0x38] sm:$0xff]
  %v30 = vld [vmem:[%s1] sm:$0xff]
  %v31 = vld [vmem:[%s1 + $0x8] sm:$0xff]
  %v32 = vld [vmem:[%s1 + $0x10] sm:$0xff]
  %v33 = vld [vmem:[%s1 + $0x18] sm:$0xff]
  %v34 = vld [vmem:[%s1 + $0x20] sm:$0x7]
  %v35 = vld [vmem:[%s2] sm:$0x1]
  %v37 = vlaneseq
  %v38 = vshrl.u32 %v37, 7
  %v39 = vsub.s32 0, %v38
  %v40 = vrot.slane %v35, %v39
  %vm42 = vcmask 285696
  %v44 = vsel %vm42, %v22, 0
  %v47 = vsel %vm42, %v23, 0
  %v50 = vsel %vm42, %v24, 0
  %v53 = vsel %vm42, %v25, 0
  %v56 = vsel %vm42, %v26, 0
  %v59 = vsel %vm42, %v27, 0
  %v62 = vsel %vm42, %v28, 0
  %v65 = vsel %vm42, %v29, 0
  %vm67 = vcmask 1042432
  %v69 = vsel %vm67, %v34, 0
  %71 = vmatprep.subr.mxu0 0.0
  %72 = vmatpush1.msra.mxu0 %v30
  %73 = vmatprep.subr.mxu0 0.0
  %74 = vmatpush1.msra.mxu0 %v31
  %75 = vmatprep.subr.mxu0 0.0
  %76 = vmatpush1.msra.mxu0 %v32
  %77 = vmatprep.subr.mxu0 0.0
  %78 = vmatpush1.msra.mxu0 %v33
  %79 = vmatprep.subr.mxu0 0.0
  %80 = vmatpush1.msra.mxu0 %v69
  %81 = vmatprep.subr.mxu0 0.0
  %82 = vmatpush1.msra.mxu0 0.0
  %83 = vmatprep.subr.mxu0 0.0
  %84 = vmatpush1.msra.mxu0 0.0
  %85 = vmatprep.subr.mxu0 0.0
  %86 = vmatpush1.msra.mxu0 0.0
  %87 = vmatprep.subr.mxu0 0.0
  %88 = vmatpush1.msra.mxu0 0.0
  %89 = vmatprep.subr.mxu0 0.0
  %90 = vmatpush1.msra.mxu0 0.0
  %91 = vmatprep.subr.mxu0 0.0
  %92 = vmatpush1.msra.mxu0 0.0
  %93 = vmatprep.subr.mxu0 0.0
  %94 = vmatpush1.msra.mxu0 0.0
  %95 = vmatprep.subr.mxu0 0.0
  %96 = vmatpush1.msra.mxu0 0.0
  %97 = vmatprep.subr.mxu0 0.0
  %98 = vmatpush1.msra.mxu0 0.0
  %99 = vmatprep.subr.mxu0 0.0
  %100 = vmatpush1.msra.mxu0 0.0
  %101 = vmatprep.subr.mxu0 0.0
  %102 = vmatpush1.msra.mxu0 0.0
  %103 = vmatprep.subr.mxu0 0.0
  %104 = vmatpush1.msra.mxu0 0.0
  %105 = vmatprep.subr.mxu0 0.0
  %106 = vmatpush1.msra.mxu0 0.0
  %107 = vmatprep.subr.mxu0 0.0
  %108 = vmatpush1.msra.mxu0 0.0
  %109 = vmatprep.subr.mxu0 0.0
  %110 = vmatpush1.msra.mxu0 0.0
  %111 = vmatprep.subr.mxu0 0.0
  %112 = vmatpush1.msra.mxu0 0.0
  %113 = vmatprep.subr.mxu0 0.0
  %114 = vmatpush1.msra.mxu0 0.0
  %115 = vmatprep.subr.mxu0 0.0
  %116 = vmatpush1.msra.mxu0 0.0
  %117 = vmatprep.subr.mxu0 0.0
  %118 = vmatpush1.msra.mxu0 0.0
  %119 = vmatprep.subr.mxu0 0.0
  %120 = vmatpush1.msra.mxu0 0.0
  %121 = vmatprep.subr.mxu0 0.0
  %122 = vmatpush1.msra.mxu0 0.0
  %123 = vmatprep.subr.mxu0 0.0
  %124 = vmatpush1.msra.mxu0 0.0
  %125 = vmatprep.subr.mxu0 0.0
  %126 = vmatpush1.msra.mxu0 0.0
  %127 = vmatprep.subr.mxu0 0.0
  %128 = vmatpush1.msra.mxu0 0.0
  %129 = vmatprep.subr.mxu0 0.0
  %130 = vmatpush1.msra.mxu0 0.0
  %131 = vmatprep.subr.mxu0 0.0
  %132 = vmatpush1.msra.mxu0 0.0
  %133 = vmatprep.subr.mxu0 0.0
  %134 = vmatpush1.msra.mxu0 0.0
  %135 = vmatprep.mubr.f32.mxu0 0.0
  %136 = vmatmul.mubr.f32.gmra.mrb[0].mxu0 %v44
  %v137 = vpop.f32.mrb[0].mxu0
  %v138 = vadd.f32 %v40, %v137
  %v139 = vpop.f32.mrb[0].mxu0
  %140 = vmatprep.mubr.f32.mxu0 0.0
  %141 = vmatmul.mubr.f32.gmra.mrb[0].mxu0 %v47
  %v142 = vpop.f32.mrb[0].mxu0
  %v143 = vadd.f32 %v40, %v142
  %v144 = vpop.f32.mrb[0].mxu0
  %145 = vmatprep.mubr.f32.mxu0 0.0
  %146 = vmatmul.mubr.f32.gmra.mrb[0].mxu0 %v50
  %v147 = vpop.f32.mrb[0].mxu0
  %v148 = vadd.f32 %v40, %v147
  %v149 = vpop.f32.mrb[0].mxu0
  %150 = vmatprep.mubr.f32.mxu0 0.0
  %151 = vmatmul.mubr.f32.gmra.mrb[0].mxu0 %v53
  %v152 = vpop.f32.mrb[0].mxu0
  %v153 = vadd.f32 %v40, %v152
  %v154 = vpop.f32.mrb[0].mxu0
  %155 = vmatprep.mubr.f32.mxu0 0.0
  %156 = vmatmul.mubr.f32.gmra.mrb[0].mxu0 %v56
  %v157 = vpop.f32.mrb[0].mxu0
  %v158 = vadd.f32 %v40, %v157
  %v159 = vpop.f32.mrb[0].mxu0
  %160 = vmatprep.mubr.f32.mxu0 0.0
  %161 = vmatmul.mubr.f32.gmra.mrb[0].mxu0 %v59
  %v162 = vpop.f32.mrb[0].mxu0
  %v163 = vadd.f32 %v40, %v162
  %v164 = vpop.f32.mrb[0].mxu0
  %165 = vmatprep.mubr.f32.mxu0 0.0
  %166 = vmatmul.mubr.f32.gmra.mrb[0].mxu0 %v62
  %v167 = vpop.f32.mrb[0].mxu0
  %v168 = vadd.f32 %v40, %v167
  %v169 = vpop.f32.mrb[0].mxu0
  %170 = vmatprep.mubr.f32.mxu0 0.0
  %171 = vmatmul.mubr.f32.gmra.mrb[0].mxu0 %v65
  %v172 = vpop.f32.mrb[0].mxu0
  %v173 = vadd.f32 %v40, %v172
  %v174 = vpop.f32.mrb[0].mxu0
  %175 = vdwg.mxu0
  %v176 = vmax.f32 %v138, 0.0
  %v177 = vmax.f32 %v143, 0.0
  %v178 = vmax.f32 %v148, 0.0
  %v179 = vmax.f32 %v153, 0.0
  %v180 = vmax.f32 %v158, 0.0
  %v181 = vmax.f32 %v163, 0.0
  %v182 = vmax.f32 %v168, 0.0
  %v183 = vmax.f32 %v173, 0.0
  %v184 = vld [vmem:[%s3] sm:$0xff]
  %v185 = vld [vmem:[%s3 + $0x8] sm:$0xff]
  %v186 = vld [vmem:[%s3 + $0x10] sm:$0xff]
  %v187 = vld [vmem:[%s3 + $0x18] sm:$0xff]
  %v188 = vld [vmem:[%s4] sm:$0x1]
  %v190 = vlaneseq
  %v191 = vshrl.u32 %v190, 7
  %v192 = vsub.s32 0, %v191
  %v193 = vrot.slane %v188, %v192
  %vm195 = vcmask 261120
  %v197 = vsel %vm195, %v176, 0
  %v200 = vsel %vm195, %v177, 0
  %v203 = vsel %vm195, %v178, 0
  %v206 = vsel %vm195, %v179, 0
  %v209 = vsel %vm195, %v180, 0
  %v212 = vsel %vm195, %v181, 0
  %v215 = vsel %vm195, %v182, 0
  %v218 = vsel %vm195, %v183, 0
  %220 = vmatprep.subr.mxu0 0.0
  %221 = vmatpush1.msra.mxu0 %v184
  %222 = vmatprep.subr.mxu0 0.0
  %223 = vmatpush1.msra.mxu0 %v185
  %224 = vmatprep.subr.mxu0 0.0
  %225 = vmatpush1.msra.mxu0 %v186
  %226 = vmatprep.subr.mxu0 0.0
  %227 = vmatpush1.msra.mxu0 %v187
  %228 = vmatprep.subr.mxu0 0.0
  %229 = vmatpush1.msra.mxu0 0.0
  %230 = vmatprep.subr.mxu0 0.0
  %231 = vmatpush1.msra.mxu0 0.0
  %232 = vmatprep.subr.mxu0 0.0
  %233 = vmatpush1.msra.mxu0 0.0
  %234 = vmatprep.subr.mxu0 0.0
  %235 = vmatpush1.msra.mxu0 0.0
  %236 = vmatprep.subr.mxu0 0.0
  %237 = vmatpush1.msra.mxu0 0.0
  %238 = vmatprep.subr.mxu0 0.0
  %239 = vmatpush1.msra.mxu0 0.0
  %240 = vmatprep.subr.mxu0 0.0
  %241 = vmatpush1.msra.mxu0 0.0
  %242 = vmatprep.subr.mxu0 0.0
  %243 = vmatpush1.msra.mxu0 0.0
  %244 = vmatprep.subr.mxu0 0.0
  %245 = vmatpush1.msra.mxu0 0.0
  %246 = vmatprep.subr.mxu0 0.0
  %247 = vmatpush1.msra.mxu0 0.0
  %248 = vmatprep.subr.mxu0 0.0
  %249 = vmatpush1.msra.mxu0 0.0
  %250 = vmatprep.subr.mxu0 0.0
  %251 = vmatpush1.msra.mxu0 0.0
  %252 = vmatprep.subr.mxu0 0.0
  %253 = vmatpush1.msra.mxu0 0.0
  %254 = vmatprep.subr.mxu0 0.0
  %255 = vmatpush1.msra.mxu0 0.0
  %256 = vmatprep.subr.mxu0 0.0
  %257 = vmatpush1.msra.mxu0 0.0
  %258 = vmatprep.subr.mxu0 0.0
  %259 = vmatpush1.msra.mxu0 0.0
  %260 = vmatprep.subr.mxu0 0.0
  %261 = vmatpush1.msra.mxu0 0.0
  %262 = vmatprep.subr.mxu0 0.0
  %263 = vmatpush1.msra.mxu0 0.0
  %264 = vmatprep.subr.mxu0 0.0
  %265 = vmatpush1.msra.mxu0 0.0
  %266 = vmatprep.subr.mxu0 0.0
  %267 = vmatpush1.msra.mxu0 0.0
  %268 = vmatprep.subr.mxu0 0.0
  %269 = vmatpush1.msra.mxu0 0.0
  %270 = vmatprep.subr.mxu0 0.0
  %271 = vmatpush1.msra.mxu0 0.0
  %272 = vmatprep.subr.mxu0 0.0
  %273 = vmatpush1.msra.mxu0 0.0
  %274 = vmatprep.subr.mxu0 0.0
  %275 = vmatpush1.msra.mxu0 0.0
  %276 = vmatprep.subr.mxu0 0.0
  %277 = vmatpush1.msra.mxu0 0.0
  %278 = vmatprep.subr.mxu0 0.0
  %279 = vmatpush1.msra.mxu0 0.0
  %280 = vmatprep.subr.mxu0 0.0
  %281 = vmatpush1.msra.mxu0 0.0
  %282 = vmatprep.subr.mxu0 0.0
  %283 = vmatpush1.msra.mxu0 0.0
  %284 = vmatprep.mubr.f32.mxu0 0.0
  %285 = vmatmul.mubr.f32.gmra.mrb[0].mxu0 %v197
  %v286 = vpop.f32.mrb[0].mxu0
  %v287 = vadd.f32 %v193, %v286
  %v288 = vpop.f32.mrb[0].mxu0
  %289 = vmatprep.mubr.f32.mxu0 0.0
  %290 = vmatmul.mubr.f32.gmra.mrb[0].mxu0 %v200
  %v291 = vpop.f32.mrb[0].mxu0
  %v292 = vadd.f32 %v193, %v291
  %v293 = vpop.f32.mrb[0].mxu0
  %294 = vmatprep.mubr.f32.mxu0 0.0
  %295 = vmatmul.mubr.f32.gmra.mrb[0].mxu0 %v203
  %v296 = vpop.f32.mrb[0].mxu0
  %v297 = vadd.f32 %v193, %v296
  %v298 = vpop.f32.mrb[0].mxu0
  %299 = vmatprep.mubr.f32.mxu0 0.0
  %300 = vmatmul.mubr.f32.gmra.mrb[0].mxu0 %v206
  %v301 = vpop.f32.mrb[0].mxu0
  %v302 = vadd.f32 %v193, %v301
  %v303 = vpop.f32.mrb[0].mxu0
  %304 = vmatprep.mubr.f32.mxu0 0.0
  %305 = vmatmul.mubr.f32.gmra.mrb[0].mxu0 %v209
  %v306 = vpop.f32.mrb[0].mxu0
  %v307 = vadd.f32 %v193, %v306
  %v308 = vpop.f32.mrb[0].mxu0
  %309 = vmatprep.mubr.f32.mxu0 0.0
  %310 = vmatmul.mubr.f32.gmra.mrb[0].mxu0 %v212
  %v311 = vpop.f32.mrb[0].mxu0
  %v312 = vadd.f32 %v193, %v311
  %v313 = vpop.f32.mrb[0].mxu0
  %314 = vmatprep.mubr.f32.mxu0 0.0
  %315 = vmatmul.mubr.f32.gmra.mrb[0].mxu0 %v215
  %v316 = vpop.f32.mrb[0].mxu0
  %v317 = vadd.f32 %v193, %v316
  %v318 = vpop.f32.mrb[0].mxu0
  %319 = vmatprep.mubr.f32.mxu0 0.0
  %320 = vmatmul.mubr.f32.gmra.mrb[0].mxu0 %v218
  %v321 = vpop.f32.mrb[0].mxu0
  %v322 = vadd.f32 %v193, %v321
  %v323 = vpop.f32.mrb[0].mxu0
  %324 = vdwg.mxu0
  %325 = vst.msk [vmem:[%s5] sm:$0xff] %vm195, %v287
  %326 = vst.msk [vmem:[%s5 + $0x8] sm:$0xff] %vm195, %v292
  %327 = vst.msk [vmem:[%s5 + $0x10] sm:$0xff] %vm195, %v297
  %328 = vst.msk [vmem:[%s5 + $0x18] sm:$0xff] %vm195, %v302
  %329 = vst.msk [vmem:[%s5 + $0x20] sm:$0xff] %vm195, %v307
  %330 = vst.msk [vmem:[%s5 + $0x28] sm:$0xff] %vm195, %v312
  %331 = vst.msk [vmem:[%s5 + $0x30] sm:$0xff] %vm195, %v317
  %332 = vst.msk [vmem:[%s5 + $0x38] sm:$0xff] %vm195, %v322
  %v333 = vmax.f32 %v287, %v297
  %v334 = vmax.f32 %v292, %v302
  %v335 = vmax.f32 %v333, %v307
  %v336 = vmax.f32 %v334, %v312
  %v337 = vmax.f32 %v335, %v317
  %v338 = vmax.f32 %v336, %v322
  %339 = vst.msk [vmem:[%s6] sm:$0xff] %vm195, %v337
  %340 = vst.msk [vmem:[%s6 + $0x8] sm:$0xff] %vm195, %v338
  // Predicated region
  $region22: #{gnt_moe_forward.4} parent=0 // pred_check
    _
  $region23: #{gnt_moe_forward.4} parent=0 // pred_check_branch
    %342 = sbr.rel (0) target = $region25
  $region24: #{gnt_moe_forward.4} parent=0 // pred_region
    _
  $region25: #{gnt_moe_forward.4} parent=0 // pred_fallthru
    _
  // Predicated region
  $region26: #{gnt_moe_forward.4} parent=0 // pred_check
    _
  $region27: #{gnt_moe_forward.4} parent=0 // pred_check_branch
    %344 = sbr.rel (0) target = $region29
  $region28: #{gnt_moe_forward.4} parent=0 // pred_region
    _
  $region29: #{gnt_moe_forward.4} parent=0 // pred_fallthru
    _
  // Predicated region
  $region30: #{gnt_moe_forward.4} parent=0 // pred_check
    _
  $region31: #{gnt_moe_forward.4} parent=0 // pred_check_branch
    %346 = sbr.rel (0) target = $region33
  $region32: #{gnt_moe_forward.4} parent=0 // pred_region
    _
  $region33: #{gnt_moe_forward.4} parent=0 // pred_fallthru
    _
  // Predicated region
  $region34: #{gnt_moe_forward.4} parent=0 // pred_check
    _
  $region35: #{gnt_moe_forward.4} parent=0 // pred_check_branch
    %348 = sbr.rel (0) target = $region37
  $region36: #{gnt_moe_forward.4} parent=0 // pred_region
    _
  $region37: #{gnt_moe_forward.4} parent=0 // pred_fallthru
    _

// kernel: gnt_moe_forward.7
$region0: #{gnt_moe_forward.7}
  #allocation0 [shape = 'u32[]', space=smem, size = 0x4, offset = 0x4, fixed_abs, tag = 'smem constant byte address 0x4 - core index']
  #allocation1 [shape = 'u32[144,128]{1,0:T(1,128)}', space=vmem, size = 0x12000, scoped, tag = 'internal scratch']
  %s0 = inlined_call_operand.vmem [shape: f32[16,32], index: 0, kind: input, shape index: {}]
  %s1 = inlined_call_operand.vmem [shape: f32[1,32], index: 1, kind: input, shape index: {}]
  %s2 = inlined_call_operand.vmem [shape: f32[1,32], index: 2, kind: input, shape index: {}]
  %s3 = inlined_call_operand.vmem [shape: f32[32,3], index: 3, kind: input, shape index: {}]
  %s4 = inlined_call_operand.vmem [shape: f32[1,3], index: 4, kind: input, shape index: {}]
  %s5 = inlined_call_operand.hbm [shape: f32[2,3], index: 5, kind: output, shape index: {}]
  %s6 = sld [smem:[#allocation0]]
  $region30: #{gnt_moe_forward.7} parent=0
    _
  %s8 = ssub.s32 1, %s6
  %s9 = scalar_select 0, %s8, %s6
  $region1: #{gnt_moe_forward.7} parent=0
    #allocation2 [shape = 'u8[1024]{0}', space=vmem, size = 0x400, scoped, tag = 'output window, operand 0, single buffered']
    #allocation3 [shape = 's32[1]{0}', space=sflag, size = 0x4, scoped, tag = 'scoped memory for gnt_moe_forward.7']
    %10 = vsyncpa [#allocation3], 0
    // Predicated region
    $region2: #{gnt_moe_forward.7} parent=1 // pred_check
      _
    $region3: #{gnt_moe_forward.7} parent=1 // pred_check_branch
      %12 = sbr.rel (0) target = $region5
    $region4: #{gnt_moe_forward.7} parent=1 // pred_region
      _
    $region5: #{gnt_moe_forward.7} parent=1 // pred_fallthru
      _
    // Predicated region
    $region6: #{gnt_moe_forward.7} parent=1 // pred_check
      _
    $region7: #{gnt_moe_forward.7} parent=1 // pred_check_branch
      %14 = sbr.rel (0) target = $region9
    $region8: #{gnt_moe_forward.7} parent=1 // pred_region
      _
    $region9: #{gnt_moe_forward.7} parent=1 // pred_fallthru
      _
    // Predicated region
    $region10: #{gnt_moe_forward.7} parent=1 // pred_check
      _
    $region11: #{gnt_moe_forward.7} parent=1 // pred_check_branch
      %16 = sbr.rel (0) target = $region13
    $region12: #{gnt_moe_forward.7} parent=1 // pred_region
      _
    $region13: #{gnt_moe_forward.7} parent=1 // pred_fallthru
      _
    // Predicated region
    $region14: #{gnt_moe_forward.7} parent=1 // pred_check
      _
    $region15: #{gnt_moe_forward.7} parent=1 // pred_check_branch
      %18 = sbr.rel (0) target = $region17
    $region16: #{gnt_moe_forward.7} parent=1 // pred_region
      _
    $region17: #{gnt_moe_forward.7} parent=1 // pred_fallthru
      _
    // Predicated region
    $region18: #{gnt_moe_forward.7} parent=1 // pred_check
      _
    $region19: #{gnt_moe_forward.7} parent=1 // pred_check_branch
      %20 = sbr.rel (0) target = $region21
    $region20: #{gnt_moe_forward.7} parent=1 // pred_region
      _
    $region21: #{gnt_moe_forward.7} parent=1 // pred_fallthru
      _
    %v21 = vld [vmem:[%s0] sm:$0xff]
    %v22 = vld [vmem:[%s0 + $0x8] sm:$0xff]
    %v23 = vld [vmem:[%s1] sm:$0x1]
    %v24 = vld [vmem:[%s2] sm:$0x1]
    %vm25 = vcmask 261120
    %v26 = vsel %vm25, %v21, 0.0
    %27 = vadd.xlane.f32.xlu0 %v26
    %v28 = vpop.xlane.xlu0 %27
    %v29 = vsel %vm25, %v22, 0.0
    %30 = vadd.xlane.f32.xlu0 %v29
    %v31 = vpop.xlane.xlu0 %30
    %v32 = vrcp.pop 32.0
    %v33 = vmul.f32 %v28, %v32
    %v34 = vmul.f32 %v31, %v32
    %v35 = vsub.f32 %v21, %v33
    %v36 = vsub.f32 %v22, %v34
    %v37 = vmul.f32 %v35, %v35
    %v38 = vmul.f32 %v36, %v36
    %v39 = vsel %vm25, %v37, 0.0
    %40 = vadd.xlane.f32.xlu0 %v39
    %v41 = vpop.xlane.xlu0 %40
    %v42 = vsel %vm25, %v38, 0.0
    %43 = vadd.xlane.f32.xlu0 %v42
    %v44 = vpop.xlane.xlu0 %43
    %v45 = vmul.f32 %v41, %v32
    %v46 = vmul.f32 %v44, %v32
    %v47 = vadd.f32 %v45, 1e-05
    %v48 = vadd.f32 %v46, 1e-05
    %v49 = vrsqrt.pop %v47
    %v50 = vrsqrt.pop %v48
    %v51 = vmul.f32 %v35, %v49
    %v52 = vmul.f32 %v36, %v50
    %v54 = vlaneseq
    %v55 = vshrl.u32 %v54, 7
    %v56 = vsub.s32 0, %v55
    %v57 = vrot.slane %v23, %v56
    %v59 = vmul.f32 %v51, %v57
    %v60 = vmul.f32 %v52, %v57
    %v62 = vlaneseq
    %v63 = vshrl.u32 %v62, 7
    %v64 = vsub.s32 0, %v63
    %v65 = vrot.slane %v24, %v64
    %v67 = vadd.f32 %v59, %v65
    %v68 = vadd.f32 %v60, %v65
    %v69 = vsel %vm25, %v67, 0.0
    %v70 = vrot.slane %v69, 4
    %v71 = vadd.f32 %v69, %v70
    %v72 = vrot.slane %v71, 2
    %v73 = vadd.f32 %v71, %v72
    %v74 = vrot.slane %v73, 1
    %v75 = vadd.f32 %v73, %v74
    %v76 = vsel %vm25, %v68, 0.0
    %v77 = vrot.slane %v76, 4
    %v78 = vadd.f32 %v76, %v77
    %v79 = vrot.slane %v78, 2
    %v80 = vadd.f32 %v78, %v79
    %v81 = vrot.slane %v80, 1
    %v82 = vadd.f32 %v80, %v81
    %v83 = vrcp.pop 8.0
    %v84 = vmul.f32 %v75, %v83
    %v85 = vmul.f32 %v82, %v83
    %v86 = vld [vmem:[%s3] sm:$0xff]
    %v87 = vld [vmem:[%s3 + $0x8] sm:$0xff]
    %v88 = vld [vmem:[%s3 + $0x10] sm:$0xff]
    %v89 = vld [vmem:[%s3 + $0x18] sm:$0xff]
    %v90 = vld [vmem:[%s4] sm:$0x1]
    %v92 = vlaneseq
    %v93 = vshrl.u32 %v92, 7
    %v94 = vsub.s32 0, %v93
    %v95 = vrot.slane %v90, %v94
    %vm99 = vcmask 1041409
    %v100 = vsel %vm99, %v85, %v84
    %v101 = vsel %vm25, %v100, 0
    %103 = vmatprep.subr.mxu0 0.0
    %104 = vmatpush1.msra.mxu0 %v86
    %105 = vmatprep.subr.mxu0 0.0
    %106 = vmatpush1.msra.mxu0 %v87
    %107 = vmatprep.subr.mxu0 0.0
    %108 = vmatpush1.msra.mxu0 %v88
    %109 = vmatprep.subr.mxu0 0.0
    %110 = vmatpush1.msra.mxu0 %v89
    %111 = vmatprep.subr.mxu0 0.0
    %112 = vmatpush1.msra.mxu0 0.0
    %113 = vmatprep.subr.mxu0 0.0
    %114 = vmatpush1.msra.mxu0 0.0
    %115 = vmatprep.subr.mxu0 0.0
    %116 = vmatpush1.msra.mxu0 0.0
    %117 = vmatprep.subr.mxu0 0.0
    %118 = vmatpush1.msra.mxu0 0.0
    %119 = vmatprep.subr.mxu0 0.0
    %120 = vmatpush1.msra.mxu0 0.0
    %121 = vmatprep.subr.mxu0 0.0
    %122 = vmatpush1.msra.mxu0 0.0
    %123 = vmatprep.subr.mxu0 0.0
    %124 = vmatpush1.msra.mxu0 0.0
    %125 = vmatprep.subr.mxu0 0.0
    %126 = vmatpush1.msra.mxu0 0.0
    %127 = vmatprep.subr.mxu0 0.0
    %128 = vmatpush1.msra.mxu0 0.0
    %129 = vmatprep.subr.mxu0 0.0
    %130 = vmatpush1.msra.mxu0 0.0
    %131 = vmatprep.subr.mxu0 0.0
    %132 = vmatpush1.msra.mxu0 0.0
    %133 = vmatprep.subr.mxu0 0.0
    %134 = vmatpush1.msra.mxu0 0.0
    %135 = vmatprep.subr.mxu0 0.0
    %136 = vmatpush1.msra.mxu0 0.0
    %137 = vmatprep.subr.mxu0 0.0
    %138 = vmatpush1.msra.mxu0 0.0
    %139 = vmatprep.subr.mxu0 0.0
    %140 = vmatpush1.msra.mxu0 0.0
    %141 = vmatprep.subr.mxu0 0.0
    %142 = vmatpush1.msra.mxu0 0.0
    %143 = vmatprep.subr.mxu0 0.0
    %144 = vmatpush1.msra.mxu0 0.0
    %145 = vmatprep.subr.mxu0 0.0
    %146 = vmatpush1.msra.mxu0 0.0
    %147 = vmatprep.subr.mxu0 0.0
    %148 = vmatpush1.msra.mxu0 0.0
    %149 = vmatprep.subr.mxu0 0.0
    %150 = vmatpush1.msra.mxu0 0.0
    %151 = vmatprep.subr.mxu0 0.0
    %152 = vmatpush1.msra.mxu0 0.0
    %153 = vmatprep.subr.mxu0 0.0
    %154 = vmatpush1.msra.mxu0 0.0
    %155 = vmatprep.subr.mxu0 0.0
    %156 = vmatpush1.msra.mxu0 0.0
    %157 = vmatprep.subr.mxu0 0.0
    %158 = vmatpush1.msra.mxu0 0.0
    %159 = vmatprep.subr.mxu0 0.0
    %160 = vmatpush1.msra.mxu0 0.0
    %161 = vmatprep.subr.mxu0 0.0
    %162 = vmatpush1.msra.mxu0 0.0
    %163 = vmatprep.subr.mxu0 0.0
    %164 = vmatpush1.msra.mxu0 0.0
    %165 = vmatprep.subr.mxu0 0.0
    %166 = vmatpush1.msra.mxu0 0.0
    %167 = vmatprep.mubr.f32.mxu0 0.0
    %168 = vmatmul.mubr.f32.gmra.mrb[0].mxu0 %v101
    %v169 = vpop.f32.mrb[0].mxu0
    %v170 = vadd.f32 %v95, %v169
    %v171 = vpop.f32.mrb[0].mxu0
    %172 = vdwg.mxu0
    %vm173 = vcmask 17408
    %174 = vst.msk [vmem:[#allocation2] sm:$0x3] %vm173, %v170
    // Predicated region
    $region22: #{gnt_moe_forward.7} parent=1 // pred_check
      _
    $region23: #{gnt_moe_forward.7} parent=1 // pred_check_branch
      %176 = sbr.rel (0) target = $region25
    $region24: #{gnt_moe_forward.7} parent=1 // pred_region
      %s178 = ssub.s32 32, 32
      %179 = vsyncadd [#allocation3], %s178
      %s181 = sshll.u32 [#allocation2], 4
      %s182 = int_to_ptr.vmem [resolvable:$true] %s181
      %184 = dma.vmem_to_hbm [thread:$0]  %s182, 32, %s5, [#allocation3]
    $region25: #{gnt_moe_forward.7} parent=1 // pred_fallthru
      _
    // Predicated region
    $region26: #{gnt_moe_forward.7} parent=1 // pred_check
      _
    $region27: #{gnt_moe_forward.7} parent=1 // pred_check_branch
      %186 = sbr.rel (0) target = $region29
    $region28: #{gnt_moe_forward.7} parent=1 // pred_region
      %187 = dma.done [#allocation3], 32
    $region29: #{gnt_moe_forward.7} parent=1 // pred_fallthru
      _
    %188 = vsyncpa [#allocation3], 1

// kernel: gnt_moe_forward.5
$region0: #{gnt_moe_forward.5}
  #allocation0 [shape = 'u32[]', space=smem, size = 0x4, offset = 0x4, fixed_abs, tag = 'smem constant byte address 0x4 - core index']
  #allocation1 [shape = 'u32[144,128]{1,0:T(1,128)}', space=vmem, size = 0x12000, scoped, tag = 'internal scratch']
  %s0 = inlined_call_operand.smem [shape: u32[43], index: -1, kind: input, shape index: {}]
  %s1 = sld [smem:[%s0]]
  %s2 = scalar_lea.smem %s0, 1
  %s3 = sld [smem:[%s2]]
  %s4 = scalar_lea.smem %s0, 2
  %s5 = sld [smem:[%s4]]
  %s6 = scalar_lea.smem %s0, 3
  %s7 = sld [smem:[%s6]]
  %s8 = scalar_lea.smem %s0, 4
  %s9 = sld [smem:[%s8]]
  %s10 = scalar_lea.smem %s0, 5
  %s11 = sld [smem:[%s10]]
  %s12 = scalar_lea.smem %s0, 6
  %s13 = sld [smem:[%s12]]
  %s14 = scalar_lea.smem %s0, 7
  %s15 = sld [smem:[%s14]]
  %s16 = scalar_lea.smem %s0, 8
  %s17 = sld [smem:[%s16]]
  %s18 = scalar_lea.smem %s0, 9
  %s19 = sld [smem:[%s18]]
  %s20 = scalar_lea.smem %s0, 10
  %s21 = sld [smem:[%s20]]
  %s22 = scalar_lea.smem %s0, 11
  %s23 = sld [smem:[%s22]]
  %s24 = scalar_lea.smem %s0, 12
  %s25 = sld [smem:[%s24]]
  %s26 = scalar_lea.smem %s0, 13
  %s27 = sld [smem:[%s26]]
  %s28 = scalar_lea.smem %s0, 14
  %s29 = sld [smem:[%s28]]
  %s30 = scalar_lea.smem %s0, 15
  %s31 = sld [smem:[%s30]]
  %s32 = scalar_lea.smem %s0, 16
  %s33 = sld [smem:[%s32]]
  %s34 = scalar_lea.smem %s0, 17
  %s35 = sld [smem:[%s34]]
  %s36 = scalar_lea.smem %s0, 18
  %s37 = sld [smem:[%s36]]
  %s38 = scalar_lea.smem %s0, 19
  %s39 = sld [smem:[%s38]]
  %s40 = scalar_lea.smem %s0, 20
  %s41 = sld [smem:[%s40]]
  %s42 = scalar_lea.smem %s0, 21
  %s43 = sld [smem:[%s42]]
  %s44 = scalar_lea.smem %s0, 22
  %s45 = sld [smem:[%s44]]
  %s46 = scalar_lea.smem %s0, 23
  %s47 = sld [smem:[%s46]]
  %s48 = scalar_lea.smem %s0, 24
  %s49 = sld [smem:[%s48]]
  %s50 = scalar_lea.smem %s0, 25
  %s51 = sld [smem:[%s50]]
  %s52 = scalar_lea.smem %s0, 26
  %s53 = sld [smem:[%s52]]
  %s54 = scalar_lea.smem %s0, 27
  %s55 = sld [smem:[%s54]]
  %s56 = scalar_lea.smem %s0, 28
  %s57 = sld [smem:[%s56]]
  %s58 = scalar_lea.smem %s0, 29
  %s59 = sld [smem:[%s58]]
  %s60 = scalar_lea.smem %s0, 30
  %s61 = sld [smem:[%s60]]
  %s62 = scalar_lea.smem %s0, 31
  %s63 = sld [smem:[%s62]]
  %s64 = scalar_lea.smem %s0, 32
  %s65 = sld [smem:[%s64]]
  %s66 = scalar_lea.smem %s0, 33
  %s67 = sld [smem:[%s66]]
  %s68 = scalar_lea.smem %s0, 34
  %s69 = sld [smem:[%s68]]
  %s70 = scalar_lea.smem %s0, 35
  %s71 = sld [smem:[%s70]]
  %s72 = scalar_lea.smem %s0, 36
  %s73 = sld [smem:[%s72]]
  %s74 = scalar_lea.smem %s0, 37
  %s75 = sld [smem:[%s74]]
  %s76 = scalar_lea.smem %s0, 38
  %s77 = sld [smem:[%s76]]
  %s78 = scalar_lea.smem %s0, 39
  %s79 = sld [smem:[%s78]]
  %s80 = scalar_lea.smem %s0, 40
  %s81 = sld [smem:[%s80]]
  %s82 = scalar_lea.smem %s0, 41
  %s83 = sld [smem:[%s82]]
  %s84 = scalar_lea.smem %s0, 42
  %s85 = sld [smem:[%s84]]
  %s86 = sld [smem:[#allocation0]]
  $region178: #{gnt_moe_forward.5} parent=0
    _
  %s88 = ssub.s32 1, %s86
  %s89 = scalar_select 0, %s88, %s86
  // Predicated region
  $region2: #{gnt_moe_forward.5} parent=0 // pred_check
    _
  $region3: #{gnt_moe_forward.5} parent=0 // pred_check_branch
    %91 = sbr.rel (0) target = $region5
  $region4: #{gnt_moe_forward.5} parent=0 // pred_region
    _
  $region5: #{gnt_moe_forward.5} parent=0 // pred_fallthru
    _
  // Predicated region
  $region6: #{gnt_moe_forward.5} parent=0 // pred_check
    _
  $region7: #{gnt_moe_forward.5} parent=0 // pred_check_branch
    %93 = sbr.rel (0) target = $region9
  $region8: #{gnt_moe_forward.5} parent=0 // pred_region
    _
  $region9: #{gnt_moe_forward.5} parent=0 // pred_fallthru
    _
  // Predicated region
  $region10: #{gnt_moe_forward.5} parent=0 // pred_check
    _
  $region11: #{gnt_moe_forward.5} parent=0 // pred_check_branch
    %95 = sbr.rel (0) target = $region13
  $region12: #{gnt_moe_forward.5} parent=0 // pred_region
    _
  $region13: #{gnt_moe_forward.5} parent=0 // pred_fallthru
    _
  // Predicated region
  $region14: #{gnt_moe_forward.5} parent=0 // pred_check
    _
  $region15: #{gnt_moe_forward.5} parent=0 // pred_check_branch
    %97 = sbr.rel (0) target = $region17
  $region16: #{gnt_moe_forward.5} parent=0 // pred_region
    _
  $region17: #{gnt_moe_forward.5} parent=0 // pred_fallthru
    _
  // Predicated region
  $region18: #{gnt_moe_forward.5} parent=0 // pred_check
    _
  $region19: #{gnt_moe_forward.5} parent=0 // pred_check_branch
    %99 = sbr.rel (0) target = $region21
  $region20: #{gnt_moe_forward.5} parent=0 // pred_region
    _
  $region21: #{gnt_moe_forward.5} parent=0 // pred_fallthru
    _
  // Predicated region
  $region22: #{gnt_moe_forward.5} parent=0 // pred_check
    _
  $region23: #{gnt_moe_forward.5} parent=0 // pred_check_branch
    %101 = sbr.rel (0) target = $region25
  $region24: #{gnt_moe_forward.5} parent=0 // pred_region
    _
  $region25: #{gnt_moe_forward.5} parent=0 // pred_fallthru
    _
  // Predicated region
  $region26: #{gnt_moe_forward.5} parent=0 // pred_check
    _
  $region27: #{gnt_moe_forward.5} parent=0 // pred_check_branch
    %103 = sbr.rel (0) target = $region29
  $region28: #{gnt_moe_forward.5} parent=0 // pred_region
    _
  $region29: #{gnt_moe_forward.5} parent=0 // pred_fallthru
    _
  // Predicated region
  $region30: #{gnt_moe_forward.5} parent=0 // pred_check
    _
  $region31: #{gnt_moe_forward.5} parent=0 // pred_check_branch
    %105 = sbr.rel (0) target = $region33
  $region32: #{gnt_moe_forward.5} parent=0 // pred_region
    _
  $region33: #{gnt_moe_forward.5} parent=0 // pred_fallthru
    _
  // Predicated region
  $region34: #{gnt_moe_forward.5} parent=0 // pred_check
    _
  $region35: #{gnt_moe_forward.5} parent=0 // pred_check_branch
    %107 = sbr.rel (0) target = $region37
  $region36: #{gnt_moe_forward.5} parent=0 // pred_region
    _
  $region37: #{gnt_moe_forward.5} parent=0 // pred_fallthru
    _
  // Predicated region
  $region38: #{gnt_moe_forward.5} parent=0 // pred_check
    _
  $region39: #{gnt_moe_forward.5} parent=0 // pred_check_branch
    %109 = sbr.rel (0) target = $region41
  $region40: #{gnt_moe_forward.5} parent=0 // pred_region
    _
  $region41: #{gnt_moe_forward.5} parent=0 // pred_fallthru
    _
  // Predicated region
  $region42: #{gnt_moe_forward.5} parent=0 // pred_check
    _
  $region43: #{gnt_moe_forward.5} parent=0 // pred_check_branch
    %111 = sbr.rel (0) target = $region45
  $region44: #{gnt_moe_forward.5} parent=0 // pred_region
    _
  $region45: #{gnt_moe_forward.5} parent=0 // pred_fallthru
    _
  // Predicated region
  $region46: #{gnt_moe_forward.5} parent=0 // pred_check
    _
  $region47: #{gnt_moe_forward.5} parent=0 // pred_check_branch
    %113 = sbr.rel (0) target = $region49
  $region48: #{gnt_moe_forward.5} parent=0 // pred_region
    _
  $region49: #{gnt_moe_forward.5} parent=0 // pred_fallthru
    _
  // Predicated region
  $region50: #{gnt_moe_forward.5} parent=0 // pred_check
    _
  $region51: #{gnt_moe_forward.5} parent=0 // pred_check_branch
    %115 = sbr.rel (0) target = $region53
  $region52: #{gnt_moe_forward.5} parent=0 // pred_region
    _
  $region53: #{gnt_moe_forward.5} parent=0 // pred_fallthru
    _
  // Predicated region
  $region54: #{gnt_moe_forward.5} parent=0 // pred_check
    _
  $region55: #{gnt_moe_forward.5} parent=0 // pred_check_branch
    %117 = sbr.rel (0) target = $region57
  $region56: #{gnt_moe_forward.5} parent=0 // pred_region
    _
  $region57: #{gnt_moe_forward.5} parent=0 // pred_fallthru
    _
  // Predicated region
  $region58: #{gnt_moe_forward.5} parent=0 // pred_check
    _
  $region59: #{gnt_moe_forward.5} parent=0 // pred_check_branch
    %119 = sbr.rel (0) target = $region61
  $region60: #{gnt_moe_forward.5} parent=0 // pred_region
    _
  $region61: #{gnt_moe_forward.5} parent=0 // pred_fallthru
    _
  // Predicated region
  $region62: #{gnt_moe_forward.5} parent=0 // pred_check
    _
  $region63: #{gnt_moe_forward.5} parent=0 // pred_check_branch
    %121 = sbr.rel (0) target = $region65
  $region64: #{gnt_moe_forward.5} parent=0 // pred_region
    _
  $region65: #{gnt_moe_forward.5} parent=0 // pred_fallthru
    _
  // Predicated region
  $region66: #{gnt_moe_forward.5} parent=0 // pred_check
    _
  $region67: #{gnt_moe_forward.5} parent=0 // pred_check_branch
    %123 = sbr.rel (0) target = $region69
  $region68: #{gnt_moe_forward.5} parent=0 // pred_region
    _
  $region69: #{gnt_moe_forward.5} parent=0 // pred_fallthru
    _
  // Predicated region
  $region70: #{gnt_moe_forward.5} parent=0 // pred_check
    _
  $region71: #{gnt_moe_forward.5} parent=0 // pred_check_branch
    %125 = sbr.rel (0) target = $region73
  $region72: #{gnt_moe_forward.5} parent=0 // pred_region
    _
  $region73: #{gnt_moe_forward.5} parent=0 // pred_fallthru
    _
  // Predicated region
  $region74: #{gnt_moe_forward.5} parent=0 // pred_check
    _
  $region75: #{gnt_moe_forward.5} parent=0 // pred_check_branch
    %127 = sbr.rel (0) target = $region77
  $region76: #{gnt_moe_forward.5} parent=0 // pred_region
    _
  $region77: #{gnt_moe_forward.5} parent=0 // pred_fallthru
    _
  // Predicated region
  $region78: #{gnt_moe_forward.5} parent=0 // pred_check
    _
  $region79: #{gnt_moe_forward.5} parent=0 // pred_check_branch
    %129 = sbr.rel (0) target = $region81
  $region80: #{gnt_moe_forward.5} parent=0 // pred_region
    _
  $region81: #{gnt_moe_forward.5} parent=0 // pred_fallthru
    _
  // Predicated region
  $region82: #{gnt_moe_forward.5} parent=0 // pred_check
    _
  $region83: #{gnt_moe_forward.5} parent=0 // pred_check_branch
    %131 = sbr.rel (0) target = $region85
  $region84: #{gnt_moe_forward.5} parent=0 // pred_region
    _
  $region85: #{gnt_moe_forward.5} parent=0 // pred_fallthru
    _
  // Predicated region
  $region86: #{gnt_moe_forward.5} parent=0 // pred_check
    _
  $region87: #{gnt_moe_forward.5} parent=0 // pred_check_branch
    %133 = sbr.rel (0) target = $region89
  $region88: #{gnt_moe_forward.5} parent=0 // pred_region
    _
  $region89: #{gnt_moe_forward.5} parent=0 // pred_fallthru
    _
  // Predicated region
  $region90: #{gnt_moe_forward.5} parent=0 // pred_check
    _
  $region91: #{gnt_moe_forward.5} parent=0 // pred_check_branch
    %135 = sbr.rel (0) target = $region93
  $region92: #{gnt_moe_forward.5} parent=0 // pred_region
    _
  $region93: #{gnt_moe_forward.5} parent=0 // pred_fallthru
    _
  // Predicated region
  $region94: #{gnt_moe_forward.5} parent=0 // pred_check
    _
  $region95: #{gnt_moe_forward.5} parent=0 // pred_check_branch
    %137 = sbr.rel (0) target = $region97
  $region96: #{gnt_moe_forward.5} parent=0 // pred_region
    _
  $region97: #{gnt_moe_forward.5} parent=0 // pred_fallthru
    _
  // Predicated region
  $region98: #{gnt_moe_forward.5} parent=0 // pred_check
    _
  $region99: #{gnt_moe_forward.5} parent=0 // pred_check_branch
    %139 = sbr.rel (0) target = $region101
  $region100: #{gnt_moe_forward.5} parent=0 // pred_region
    _
  $region101: #{gnt_moe_forward.5} parent=0 // pred_fallthru
    _
  // Predicated region
  $region102: #{gnt_moe_forward.5} parent=0 // pred_check
    _
  $region103: #{gnt_moe_forward.5} parent=0 // pred_check_branch
    %141 = sbr.rel (0) target = $region105
  $region104: #{gnt_moe_forward.5} parent=0 // pred_region
    _
  $region105: #{gnt_moe_forward.5} parent=0 // pred_fallthru
    _
  // Predicated region
  $region106: #{gnt_moe_forward.5} parent=0 // pred_check
    _
  $region107: #{gnt_moe_forward.5} parent=0 // pred_check_branch
    %143 = sbr.rel (0) target = $region109
  $region108: #{gnt_moe_forward.5} parent=0 // pred_region
    _
  $region109: #{gnt_moe_forward.5} parent=0 // pred_fallthru
    _
  // Predicated region
  $region110: #{gnt_moe_forward.5} parent=0 // pred_check
    _
  $region111: #{gnt_moe_forward.5} parent=0 // pred_check_branch
    %145 = sbr.rel (0) target = $region113
  $region112: #{gnt_moe_forward.5} parent=0 // pred_region
    _
  $region113: #{gnt_moe_forward.5} parent=0 // pred_fallthru
    _
  // Predicated region
  $region114: #{gnt_moe_forward.5} parent=0 // pred_check
    _
  $region115: #{gnt_moe_forward.5} parent=0 // pred_check_branch
    %147 = sbr.rel (0) target = $region117
  $region116: #{gnt_moe_forward.5} parent=0 // pred_region
    _
  $region117: #{gnt_moe_forward.5} parent=0 // pred_fallthru
    _
  // Predicated region
  $region118: #{gnt_moe_forward.5} parent=0 // pred_check
    _
  $region119: #{gnt_moe_forward.5} parent=0 // pred_check_branch
    %149 = sbr.rel (0) target = $region121
  $region120: #{gnt_moe_forward.5} parent=0 // pred_region
    _
  $region121: #{gnt_moe_forward.5} parent=0 // pred_fallthru
    _
  // Predicated region
  $region122: #{gnt_moe_forward.5} parent=0 // pred_check
    _
  $region123: #{gnt_moe_forward.5} parent=0 // pred_check_branch
    %151 = sbr.rel (0) target = $region125
  $region124: #{gnt_moe_forward.5} parent=0 // pred_region
    _
  $region125: #{gnt_moe_forward.5} parent=0 // pred_fallthru
    _
  // Predicated region
  $region126: #{gnt_moe_forward.5} parent=0 // pred_check
    _
  $region127: #{gnt_moe_forward.5} parent=0 // pred_check_branch
    %153 = sbr.rel (0) target = $region129
  $region128: #{gnt_moe_forward.5} parent=0 // pred_region
    _
  $region129: #{gnt_moe_forward.5} parent=0 // pred_fallthru
    _
  // Predicated region
  $region130: #{gnt_moe_forward.5} parent=0 // pred_check
    _
  $region131: #{gnt_moe_forward.5} parent=0 // pred_check_branch
    %155 = sbr.rel (0) target = $region133
  $region132: #{gnt_moe_forward.5} parent=0 // pred_region
    _
  $region133: #{gnt_moe_forward.5} parent=0 // pred_fallthru
    _
  // Predicated region
  $region134: #{gnt_moe_forward.5} parent=0 // pred_check
    _
  $region135: #{gnt_moe_forward.5} parent=0 // pred_check_branch
    %157 = sbr.rel (0) target = $region137
  $region136: #{gnt_moe_forward.5} parent=0 // pred_region
    _
  $region137: #{gnt_moe_forward.5} parent=0 // pred_fallthru
    _
  // Predicated region
  $region138: #{gnt_moe_forward.5} parent=0 // pred_check
    _
  $region139: #{gnt_moe_forward.5} parent=0 // pred_check_branch
    %159 = sbr.rel (0) target = $region141
  $region140: #{gnt_moe_forward.5} parent=0 // pred_region
    _
  $region141: #{gnt_moe_forward.5} parent=0 // pred_fallthru
    _
  // Predicated region
  $region142: #{gnt_moe_forward.5} parent=0 // pred_check
    _
  $region143: #{gnt_moe_forward.5} parent=0 // pred_check_branch
    %161 = sbr.rel (0) target = $region145
  $region144: #{gnt_moe_forward.5} parent=0 // pred_region
    _
  $region145: #{gnt_moe_forward.5} parent=0 // pred_fallthru
    _
  // Predicated region
  $region146: #{gnt_moe_forward.5} parent=0 // pred_check
    _
  $region147: #{gnt_moe_forward.5} parent=0 // pred_check_branch
    %163 = sbr.rel (0) target = $region149
  $region148: #{gnt_moe_forward.5} parent=0 // pred_region
    _
  $region149: #{gnt_moe_forward.5} parent=0 // pred_fallthru
    _
  // Predicated region
  $region150: #{gnt_moe_forward.5} parent=0 // pred_check
    _
  $region151: #{gnt_moe_forward.5} parent=0 // pred_check_branch
    %165 = sbr.rel (0) target = $region153
  $region152: #{gnt_moe_forward.5} parent=0 // pred_region
    _
  $region153: #{gnt_moe_forward.5} parent=0 // pred_fallthru
    _
  // Predicated region
  $region154: #{gnt_moe_forward.5} parent=0 // pred_check
    _
  $region155: #{gnt_moe_forward.5} parent=0 // pred_check_branch
    %167 = sbr.rel (0) target = $region157
  $region156: #{gnt_moe_forward.5} parent=0 // pred_region
    _
  $region157: #{gnt_moe_forward.5} parent=0 // pred_fallthru
    _
  // Predicated region
  $region158: #{gnt_moe_forward.5} parent=0 // pred_check
    _
  $region159: #{gnt_moe_forward.5} parent=0 // pred_check_branch
    %169 = sbr.rel (0) target = $region161
  $region160: #{gnt_moe_forward.5} parent=0 // pred_region
    _
  $region161: #{gnt_moe_forward.5} parent=0 // pred_fallthru
    _
  // Predicated region
  $region162: #{gnt_moe_forward.5} parent=0 // pred_check
    _
  $region163: #{gnt_moe_forward.5} parent=0 // pred_check_branch
    %171 = sbr.rel (0) target = $region165
  $region164: #{gnt_moe_forward.5} parent=0 // pred_region
    _
  $region165: #{gnt_moe_forward.5} parent=0 // pred_fallthru
    _
  // Predicated region
  $region166: #{gnt_moe_forward.5} parent=0 // pred_check
    _
  $region167: #{gnt_moe_forward.5} parent=0 // pred_check_branch
    %173 = sbr.rel (0) target = $region169
  $region168: #{gnt_moe_forward.5} parent=0 // pred_region
    _
  $region169: #{gnt_moe_forward.5} parent=0 // pred_fallthru
    _
  %v174 = vld [vmem:[%s11] sm:$0x1]
  %v175 = vld [vmem:[%s13] sm:$0x1]
  %v176 = vld [vmem:[%s15] sm:$0xff]
  %v177 = vld [vmem:[%s15 + $0x8] sm:$0xff]
  %v178 = vld [vmem:[%s15 + $0x10] sm:$0xff]
  %v179 = vld [vmem:[%s15 + $0x18] sm:$0xff]
  %v180 = vld [vmem:[%s17] sm:$0xff]
  %v181 = vld [vmem:[%s17 + $0x8] sm:$0xff]
  %v182 = vld [vmem:[%s17 + $0x10] sm:$0xff]
  %v183 = vld [vmem:[%s17 + $0x18] sm:$0xff]
  %v184 = vld [vmem:[%s19] sm:$0xff]
  %v185 = vld [vmem:[%s19 + $0x8] sm:$0xff]
  %v186 = vld [vmem:[%s19 + $0x10] sm:$0xff]
  %v187 = vld [vmem:[%s19 + $0x18] sm:$0xff]
  %v188 = vld [vmem:[%s21] sm:$0xf]
  %v189 = vld [vmem:[%s23] sm:$0x1]
  %v190 = vld [vmem:[%s25] sm:$0xf]
  %v191 = vld [vmem:[%s27] sm:$0x1]
  %v192 = vld [vmem:[%s29] sm:$0xff]
  %v193 = vld [vmem:[%s29 + $0x8] sm:$0xff]
  %v194 = vld [vmem:[%s29 + $0x10] sm:$0xff]
  %v195 = vld [vmem:[%s29 + $0x18] sm:$0xff]
  %v196 = vld [vmem:[%s31] sm:$0x1]
  %v197 = vld [vmem:[%s33] sm:$0xf]
  %v198 = vld [vmem:[%s35] sm:$0x1]
  %v199 = vld [vmem:[%s37] sm:$0xff]
  %v200 = vld [vmem:[%s37 + $0x8] sm:$0xff]
  %v201 = vld [vmem:[%s37 + $0x10] sm:$0xff]
  %v202 = vld [vmem:[%s37 + $0x18] sm:$0xff]
  %v203 = vld [vmem:[%s39] sm:$0x1]
  %v204 = vld [vmem:[%s41] sm:$0x1]
  %v205 = vld [vmem:[%s43] sm:$0x1]
  %v206 = vld [vmem:[%s45] sm:$0xff]
  %v207 = vld [vmem:[%s45 + $0x8] sm:$0xff]
  %v208 = vld [vmem:[%s45 + $0x10] sm:$0xff]
  %v209 = vld [vmem:[%s45 + $0x18] sm:$0xff]
  %v210 = vld [vmem:[%s47] sm:$0x1]
  %v211 = vld [vmem:[%s49] sm:$0xff]
  %v212 = vld [vmem:[%s49 + $0x8] sm:$0xff]
  %v213 = vld [vmem:[%s49 + $0x10] sm:$0xff]
  %v214 = vld [vmem:[%s49 + $0x18] sm:$0xff]
  %v215 = vld [vmem:[%s49 + $0x20] sm:$0xff]
  %v216 = vld [vmem:[%s49 + $0x28] sm:$0xff]
  %v217 = vld [vmem:[%s49 + $0x30] sm:$0xff]
  %v218 = vld [vmem:[%s49 + $0x38] sm:$0xff]
  %v219 = vld [vmem:[%s49 + $0x40] sm:$0xff]
  %v220 = vld [vmem:[%s49 + $0x48] sm:$0xff]
  %v221 = vld [vmem:[%s49 + $0x50] sm:$0xff]
  %v222 = vld [vmem:[%s49 + $0x58] sm:$0xff]
  %v223 = vld [vmem:[%s49 + $0x60] sm:$0xff]
  %v224 = vld [vmem:[%s49 + $0x68] sm:$0xff]
  %v225 = vld [vmem:[%s49 + $0x70] sm:$0xff]
  %v226 = vld [vmem:[%s49 + $0x78] sm:$0xff]
  %v227 = vld [vmem:[%s51] sm:$0x1]
  %v228 = vld [vmem:[%s53] sm:$0xff]
  %v229 = vld [vmem:[%s53 + $0x8] sm:$0xff]
  %v230 = vld [vmem:[%s53 + $0x10] sm:$0xff]
  %v231 = vld [vmem:[%s53 + $0x18] sm:$0xff]
  %v232 = vld [vmem:[%s55] sm:$0xff]
  %v233 = vld [vmem:[%s55 + $0x8] sm:$0xff]
  %v234 = vld [vmem:[%s55 + $0x10] sm:$0xff]
  %v235 = vld [vmem:[%s55 + $0x18] sm:$0xff]
  %v236 = vld [vmem:[%s55 + $0x20] sm:$0xff]
  %v237 = vld [vmem:[%s55 + $0x28] sm:$0xff]
  %v238 = vld [vmem:[%s55 + $0x30] sm:$0xff]
  %v239 = vld [vmem:[%s55 + $0x38] sm:$0xff]
  %v240 = vld [vmem:[%s55 + $0x40] sm:$0xff]
  %v241 = vld [vmem:[%s55 + $0x48] sm:$0xff]
  %v242 = vld [vmem:[%s55 + $0x50] sm:$0xff]
  %v243 = vld [vmem:[%s55 + $0x58] sm:$0xff]
  %v244 = vld [vmem:[%s55 + $0x60] sm:$0xff]
  %v245 = vld [vmem:[%s55 + $0x68] sm:$0xff]
  %v246 = vld [vmem:[%s55 + $0x70] sm:$0xff]
  %v247 = vld [vmem:[%s55 + $0x78] sm:$0xff]
  %v248 = vld [vmem:[%s57] sm:$0x1]
  %v249 = vld [vmem:[%s59] sm:$0xff]
  %v250 = vld [vmem:[%s59 + $0x8] sm:$0xff]
  %v251 = vld [vmem:[%s59 + $0x10] sm:$0xff]
  %v252 = vld [vmem:[%s59 + $0x18] sm:$0xff]
  %v253 = vld [vmem:[%s61] sm:$0x1]
  %v254 = vld [vmem:[%s63] sm:$0x1]
  %v255 = vld [vmem:[%s65] sm:$0x1]
  %v256 = vld [vmem:[%s67] sm:$0xff]
  %v257 = vld [vmem:[%s67 + $0x8] sm:$0xff]
  %v258 = vld [vmem:[%s67 + $0x10] sm:$0xff]
  %v259 = vld [vmem:[%s67 + $0x18] sm:$0xff]
  %v260 = vld [vmem:[%s69] sm:$0xff]
  %v261 = vld [vmem:[%s69 + $0x8] sm:$0xff]
  %v262 = vld [vmem:[%s69 + $0x10] sm:$0xff]
  %v263 = vld [vmem:[%s69 + $0x18] sm:$0xff]
  %v264 = vld [vmem:[%s71] sm:$0x1]
  %v265 = vld [vmem:[%s73] sm:$0x1]
  %v266 = vld [vmem:[%s75] sm:$0x1]
  %v267 = vld [vmem:[%s77] sm:$0xff]
  %v268 = vld [vmem:[%s77 + $0x8] sm:$0xff]
  %v269 = vld [vmem:[%s77 + $0x10] sm:$0xff]
  %v270 = vld [vmem:[%s77 + $0x18] sm:$0xff]
  %v271 = vld [vmem:[%s79] sm:$0x1]
  %v272 = vld [vmem:[%s81] sm:$0xff]
  %v273 = vld [vmem:[%s81 + $0x8] sm:$0xff]
  %v274 = vld [vmem:[%s81 + $0x10] sm:$0xff]
  %v275 = vld [vmem:[%s81 + $0x18] sm:$0xff]
  %v276 = vld [vmem:[%s81 + $0x20] sm:$0xff]
  %v277 = vld [vmem:[%s81 + $0x28] sm:$0xff]
  %v278 = vld [vmem:[%s81 + $0x30] sm:$0xff]
  %v279 = vld [vmem:[%s81 + $0x38] sm:$0xff]
  %v280 = vld [vmem:[%s81 + $0x40] sm:$0xff]
  %v281 = vld [vmem:[%s81 + $0x48] sm:$0xff]
  %v282 = vld [vmem:[%s81 + $0x50] sm:$0xff]
  %v283 = vld [vmem:[%s81 + $0x58] sm:$0xff]
  %v284 = vld [vmem:[%s81 + $0x60] sm:$0xff]
  %v285 = vld [vmem:[%s81 + $0x68] sm:$0xff]
  %v286 = vld [vmem:[%s81 + $0x70] sm:$0xff]
  %v287 = vld [vmem:[%s81 + $0x78] sm:$0xff]
  %v288 = vld [vmem:[%s83] sm:$0x1]
  %v289 = vld [vmem:[%s1] sm:$0xff]
  %v290 = vld [vmem:[%s1 + $0x8] sm:$0xff]
  %v291 = vld [vmem:[%s3] sm:$0xff]
  %v292 = vld [vmem:[%s3 + $0x8] sm:$0xff]
  %v293 = vld [vmem:[%s3 + $0x10] sm:$0xff]
  %v294 = vld [vmem:[%s3 + $0x18] sm:$0xff]
  %v295 = vld [vmem:[%s3 + $0x20] sm:$0xff]
  %v296 = vld [vmem:[%s3 + $0x28] sm:$0xff]
  %v297 = vld [vmem:[%s3 + $0x30] sm:$0xff]
  %v298 = vld [vmem:[%s3 + $0x38] sm:$0xff]
  %v299 = vld [vmem:[%s5] sm:$0xff]
  %v300 = vld [vmem:[%s5 + $0x8] sm:$0xff]
  %v301 = vld [vmem:[%s5 + $0x10] sm:$0xff]
  %v302 = vld [vmem:[%s5 + $0x18] sm:$0xff]
  %v303 = vld [vmem:[%s5 + $0x20] sm:$0xff]
  %v304 = vld [vmem:[%s5 + $0x28] sm:$0xff]
  %v305 = vld [vmem:[%s5 + $0x30] sm:$0xff]
  %v306 = vld [vmem:[%s5 + $0x38] sm:$0xff]
  %v307 = vld [vmem:[%s7] sm:$0xff]
  %v308 = vld [vmem:[%s7 + $0x8] sm:$0xff]
  %v309 = vld [vmem:[%s7 + $0x10] sm:$0xff]
  %v310 = vld [vmem:[%s7 + $0x18] sm:$0xff]
  %v311 = vld [vmem:[%s7 + $0x20] sm:$0xff]
  %v312 = vld [vmem:[%s7 + $0x28] sm:$0xff]
  %v313 = vld [vmem:[%s7 + $0x30] sm:$0xff]
  %v314 = vld [vmem:[%s7 + $0x38] sm:$0xff]
  %vm315 = vcmask 261120
  %v316 = vsel %vm315, %v289, 0.0
  %317 = vadd.xlane.f32.xlu0 %v316
  %v318 = vpop.xlane.xlu0 %317
  %v319 = vsel %vm315, %v290, 0.0
  %320 = vadd.xlane.f32.xlu0 %v319
  %v321 = vpop.xlane.xlu0 %320
  %v322 = vrcp.pop 32.0
  %v323 = vmul.f32 %v318, %v322
  %v324 = vmul.f32 %v321, %v322
  %v325 = vsub.f32 %v289, %v323
  %v326 = vsub.f32 %v290, %v324
  %v327 = vmul.f32 %v325, %v325
  %v328 = vmul.f32 %v326, %v326
  %v329 = vsel %vm315, %v327, 0.0
  %330 = vadd.xlane.f32.xlu0 %v329
  %v331 = vpop.xlane.xlu0 %330
  %v332 = vsel %vm315, %v328, 0.0
  %333 = vadd.xlane.f32.xlu0 %v332
  %v334 = vpop.xlane.xlu0 %333
  %v335 = vmul.f32 %v331, %v322
  %v336 = vmul.f32 %v334, %v322
  %v337 = vadd.f32 %v335, 1e-06
  %v338 = vadd.f32 %v336, 1e-06
  %v339 = vrsqrt.pop %v337
  %v340 = vrsqrt.pop %v338
  %v341 = vmul.f32 %v325, %v339
  %v342 = vmul.f32 %v326, %v340
  %v344 = vlaneseq
  %v345 = vshrl.u32 %v344, 7
  %v346 = vsub.s32 0, %v345
  %v347 = vrot.slane %v174, %v346
  %v349 = vmul.f32 %v341, %v347
  %v350 = vmul.f32 %v342, %v347
  %v352 = vlaneseq
  %v353 = vshrl.u32 %v352, 7
  %v354 = vsub.s32 0, %v353
  %v355 = vrot.slane %v175, %v354
  %v357 = vadd.f32 %v349, %v355
  %v358 = vadd.f32 %v350, %v355
  %v360 = vsel %vm315, %v357, 0
  %v363 = vsel %vm315, %v358, 0
  %365 = vmatprep.subr.mxu0 0.0
  %366 = vmatpush1.msra.mxu0 %v176
  %367 = vmatprep.subr.mxu0 0.0
  %368 = vmatpush1.msra.mxu0 %v177
  %369 = vmatprep.subr.mxu0 0.0
  %370 = vmatpush1.msra.mxu0 %v178
  %371 = vmatprep.subr.mxu0 0.0
  %372 = vmatpush1.msra.mxu0 %v179
  %373 = vmatprep.subr.mxu0 0.0
  %374 = vmatpush1.msra.mxu0 0.0
  %375 = vmatprep.subr.mxu0 0.0
  %376 = vmatpush1.msra.mxu0 0.0
  %377 = vmatprep.subr.mxu0 0.0
  %378 = vmatpush1.msra.mxu0 0.0
  %379 = vmatprep.subr.mxu0 0.0
  %380 = vmatpush1.msra.mxu0 0.0
  %381 = vmatprep.subr.mxu0 0.0
  %382 = vmatpush1.msra.mxu0 0.0
  %383 = vmatprep.subr.mxu0 0.0
  %384 = vmatpush1.msra.mxu0 0.0
  %385 = vmatprep.subr.mxu0 0.0
  %386 = vmatpush1.msra.mxu0 0.0
  %387 = vmatprep.subr.mxu0 0.0
  %388 = vmatpush1.msra.mxu0 0.0
  %389 = vmatprep.subr.mxu0 0.0
  %390 = vmatpush1.msra.mxu0 0.0
  %391 = vmatprep.subr.mxu0 0.0
  %392 = vmatpush1.msra.mxu0 0.0
  %393 = vmatprep.subr.mxu0 0.0
  %394 = vmatpush1.msra.mxu0 0.0
  %395 = vmatprep.subr.mxu0 0.0
  %396 = vmatpush1.msra.mxu0 0.0
  %397 = vmatprep.subr.mxu0 0.0
  %398 = vmatpush1.msra.mxu0 0.0
  %399 = vmatprep.subr.mxu0 0.0
  %400 = vmatpush1.msra.mxu0 0.0
  %401 = vmatprep.subr.mxu0 0.0
  %402 = vmatpush1.msra.mxu0 0.0
  %403 = vmatprep.subr.mxu0 0.0
  %404 = vmatpush1.msra.mxu0 0.0
  %405 = vmatprep.subr.mxu0 0.0
  %406 = vmatpush1.msra.mxu0 0.0
  %407 = vmatprep.subr.mxu0 0.0
  %408 = vmatpush1.msra.mxu0 0.0
  %409 = vmatprep.subr.mxu0 0.0
  %410 = vmatpush1.msra.mxu0 0.0
  %411 = vmatprep.subr.mxu0 0.0
  %412 = vmatpush1.msra.mxu0 0.0
  %413 = vmatprep.subr.mxu0 0.0
  %414 = vmatpush1.msra.mxu0 0.0
  %415 = vmatprep.subr.mxu0 0.0
  %416 = vmatpush1.msra.mxu0 0.0
  %417 = vmatprep.subr.mxu0 0.0
  %418 = vmatpush1.msra.mxu0 0.0
  %419 = vmatprep.subr.mxu0 0.0
  %420 = vmatpush1.msra.mxu0 0.0
  %421 = vmatprep.subr.mxu0 0.0
  %422 = vmatpush1.msra.mxu0 0.0
  %423 = vmatprep.subr.mxu0 0.0
  %424 = vmatpush1.msra.mxu0 0.0
  %425 = vmatprep.subr.mxu0 0.0
  %426 = vmatpush1.msra.mxu0 0.0
  %427 = vmatprep.subr.mxu0 0.0
  %428 = vmatpush1.msra.mxu0 0.0
  %429 = vmatprep.mubr.f32.mxu0 0.0
  %430 = vmatmul.mubr.f32.gmra.mrb[0].mxu0 %v360
  %v431 = vpop.f32.mrb[0].mxu0
  %v432 = vadd.f32 0.0, %v431
  %v433 = vpop.f32.mrb[0].mxu0
  %434 = vmatprep.mubr.f32.mxu0 0.0
  %435 = vmatmul.mubr.f32.gmra.mrb[0].mxu0 %v363
  %v436 = vpop.f32.mrb[0].mxu0
  %v437 = vadd.f32 0.0, %v436
  %v438 = vpop.f32.mrb[0].mxu0
  %439 = vdwg.mxu0
  %v441 = vsel %vm315, %v291, 0
  %v444 = vsel %vm315, %v292, 0
  %v447 = vsel %vm315, %v293, 0
  %v450 = vsel %vm315, %v294, 0
  %v453 = vsel %vm315, %v295, 0
  %v456 = vsel %vm315, %v296, 0
  %v459 = vsel %vm315, %v297, 0
  %v462 = vsel %vm315, %v298, 0
  %464 = vmatprep.subr.mxu0 0.0
  %465 = vmatpush1.msra.mxu0 %v180
  %466 = vmatprep.subr.mxu0 0.0
  %467 = vmatpush1.msra.mxu0 %v181
  %468 = vmatprep.subr.mxu0 0.0
  %469 = vmatpush1.msra.mxu0 %v182
  %470 = vmatprep.subr.mxu0 0.0
  %471 = vmatpush1.msra.mxu0 %v183
  %472 = vmatprep.subr.mxu0 0.0
  %473 = vmatpush1.msra.mxu0 0.0
  %474 = vmatprep.subr.mxu0 0.0
  %475 = vmatpush1.msra.mxu0 0.0
  %476 = vmatprep.subr.mxu0 0.0
  %477 = vmatpush1.msra.mxu0 0.0
  %478 = vmatprep.subr.mxu0 0.0
  %479 = vmatpush1.msra.mxu0 0.0
  %480 = vmatprep.subr.mxu0 0.0
  %481 = vmatpush1.msra.mxu0 0.0
  %482 = vmatprep.subr.mxu0 0.0
  %483 = vmatpush1.msra.mxu0 0.0
  %484 = vmatprep.subr.mxu0 0.0
  %485 = vmatpush1.msra.mxu0 0.0
  %486 = vmatprep.subr.mxu0 0.0
  %487 = vmatpush1.msra.mxu0 0.0
  %488 = vmatprep.subr.mxu0 0.0
  %489 = vmatpush1.msra.mxu0 0.0
  %490 = vmatprep.subr.mxu0 0.0
  %491 = vmatpush1.msra.mxu0 0.0
  %492 = vmatprep.subr.mxu0 0.0
  %493 = vmatpush1.msra.mxu0 0.0
  %494 = vmatprep.subr.mxu0 0.0
  %495 = vmatpush1.msra.mxu0 0.0
  %496 = vmatprep.subr.mxu0 0.0
  %497 = vmatpush1.msra.mxu0 0.0
  %498 = vmatprep.subr.mxu0 0.0
  %499 = vmatpush1.msra.mxu0 0.0
  %500 = vmatprep.subr.mxu0 0.0
  %501 = vmatpush1.msra.mxu0 0.0
  %502 = vmatprep.subr.mxu0 0.0
  %503 = vmatpush1.msra.mxu0 0.0
  %504 = vmatprep.subr.mxu0 0.0
  %505 = vmatpush1.msra.mxu0 0.0
  %506 = vmatprep.subr.mxu0 0.0
  %507 = vmatpush1.msra.mxu0 0.0
  %508 = vmatprep.subr.mxu0 0.0
  %509 = vmatpush1.msra.mxu0 0.0
  %510 = vmatprep.subr.mxu0 0.0
  %511 = vmatpush1.msra.mxu0 0.0
  %512 = vmatprep.subr.mxu0 0.0
  %513 = vmatpush1.msra.mxu0 0.0
  %514 = vmatprep.subr.mxu0 0.0
  %515 = vmatpush1.msra.mxu0 0.0
  %516 = vmatprep.subr.mxu0 0.0
  %517 = vmatpush1.msra.mxu0 0.0
  %518 = vmatprep.subr.mxu0 0.0
  %519 = vmatpush1.msra.mxu0 0.0
  %520 = vmatprep.subr.mxu0 0.0
  %521 = vmatpush1.msra.mxu0 0.0
  %522 = vmatprep.subr.mxu0 0.0
  %523 = vmatpush1.msra.mxu0 0.0
  %524 = vmatprep.subr.mxu0 0.0
  %525 = vmatpush1.msra.mxu0 0.0
  %526 = vmatprep.subr.mxu0 0.0
  %527 = vmatpush1.msra.mxu0 0.0
  %528 = vmatprep.mubr.f32.mxu0 0.0
  %529 = vmatmul.mubr.f32.gmra.mrb[0].mxu0 %v441
  %v530 = vpop.f32.mrb[0].mxu0
  %v531 = vadd.f32 0.0, %v530
  %v532 = vpop.f32.mrb[0].mxu0
  %533 = vmatprep.mubr.f32.mxu0 0.0
  %534 = vmatmul.mubr.f32.gmra.mrb[0].mxu0 %v444
  %v535 = vpop.f32.mrb[0].mxu0
  %v536 = vadd.f32 0.0, %v535
  %v537 = vpop.f32.mrb[0].mxu0
  %538 = vmatprep.mubr.f32.mxu0 0.0
  %539 = vmatmul.mubr.f32.gmra.mrb[0].mxu0 %v447
  %v540 = vpop.f32.mrb[0].mxu0
  %v541 = vadd.f32 0.0, %v540
  %v542 = vpop.f32.mrb[0].mxu0
  %543 = vmatprep.mubr.f32.mxu0 0.0
  %544 = vmatmul.mubr.f32.gmra.mrb[0].mxu0 %v450
  %v545 = vpop.f32.mrb[0].mxu0
  %v546 = vadd.f32 0.0, %v545
  %v547 = vpop.f32.mrb[0].mxu0
  %548 = vmatprep.mubr.f32.mxu0 0.0
  %549 = vmatmul.mubr.f32.gmra.mrb[0].mxu0 %v453
  %v550 = vpop.f32.mrb[0].mxu0
  %v551 = vadd.f32 0.0, %v550
  %v552 = vpop.f32.mrb[0].mxu0
  %553 = vmatprep.mubr.f32.mxu0 0.0
  %554 = vmatmul.mubr.f32.gmra.mrb[0].mxu0 %v456
  %v555 = vpop.f32.mrb[0].mxu0
  %v556 = vadd.f32 0.0, %v555
  %v557 = vpop.f32.mrb[0].mxu0
  %558 = vmatprep.mubr.f32.mxu0 0.0
  %559 = vmatmul.mubr.f32.gmra.mrb[0].mxu0 %v459
  %v560 = vpop.f32.mrb[0].mxu0
  %v561 = vadd.f32 0.0, %v560
  %v562 = vpop.f32.mrb[0].mxu0
  %563 = vmatprep.mubr.f32.mxu0 0.0
  %564 = vmatmul.mubr.f32.gmra.mrb[0].mxu0 %v462
  %v565 = vpop.f32.mrb[0].mxu0
  %v566 = vadd.f32 0.0, %v565
  %v567 = vpop.f32.mrb[0].mxu0
  %568 = vdwg.mxu0
  %v570 = vlaneseq
  %v571 = vshrl.u32 %v570, 7
  %v572 = vsub.s32 0, %v571
  %v573 = vrot.slane %v189, %v572
  %vm575 = vcmask 31744
  %v577 = vsel %vm575, %v299, 0
  %v580 = vsel %vm575, %v300, 0
  %v583 = vsel %vm575, %v301, 0
  %v586 = vsel %vm575, %v302, 0
  %v589 = vsel %vm575, %v303, 0
  %v592 = vsel %vm575, %v304, 0
  %v595 = vsel %vm575, %v305, 0
  %v598 = vsel %vm575, %v306, 0
  %vm600 = vcmask 1043456
  %v602 = vsel %vm600, %v188, 0
  %604 = vmatprep.subr.mxu0 0.0
  %605 = vmatpush1.msra.mxu0 %v602
  %606 = vmatprep.subr.mxu0 0.0
  %607 = vmatpush1.msra.mxu0 0.0
  %608 = vmatprep.subr.mxu0 0.0
  %609 = vmatpush1.msra.mxu0 0.0
  %610 = vmatprep.subr.mxu0 0.0
  %611 = vmatpush1.msra.mxu0 0.0
  %612 = vmatprep.subr.mxu0 0.0
  %613 = vmatpush1.msra.mxu0 0.0
  %614 = vmatprep.subr.mxu0 0.0
  %615 = vmatpush1.msra.mxu0 0.0
  %616 = vmatprep.subr.mxu0 0.0
  %617 = vmatpush1.msra.mxu0 0.0
  %618 = vmatprep.subr.mxu0 0.0
  %619 = vmatpush1.msra.mxu0 0.0
  %620 = vmatprep.subr.mxu0 0.0
  %621 = vmatpush1.msra.mxu0 0.0
  %622 = vmatprep.subr.mxu0 0.0
  %623 = vmatpush1.msra.mxu0 0.0
  %624 = vmatprep.subr.mxu0 0.0
  %625 = vmatpush1.msra.mxu0 0.0
  %626 = vmatprep.subr.mxu0 0.0
  %627 = vmatpush1.msra.mxu0 0.0
  %628 = vmatprep.subr.mxu0 0.0
  %629 = vmatpush1.msra.mxu0 0.0
  %630 = vmatprep.subr.mxu0 0.0
  %631 = vmatpush1.msra.mxu0 0.0
  %632 = vmatprep.subr.mxu0 0.0
  %633 = vmatpush1.msra.mxu0 0.0
  %634 = vmatprep.subr.mxu0 0.0
  %635 = vmatpush1.msra.mxu0 0.0
  %636 = vmatprep.subr.mxu0 0.0
  %637 = vmatpush1.msra.mxu0 0.0
  %638 = vmatprep.subr.mxu0 0.0
  %639 = vmatpush1.msra.mxu0 0.0
  %640 = vmatprep.subr.mxu0 0.0
  %641 = vmatpush1.msra.mxu0 0.0
  %642 = vmatprep.subr.mxu0 0.0
  %643 = vmatpush1.msra.mxu0 0.0
  %644 = vmatprep.subr.mxu0 0.0
  %645 = vmatpush1.msra.mxu0 0.0
  %646 = vmatprep.subr.mxu0 0.0
  %647 = vmatpush1.msra.mxu0 0.0
  %648 = vmatprep.subr.mxu0 0.0
  %649 = vmatpush1.msra.mxu0 0.0
  %650 = vmatprep.subr.mxu0 0.0
  %651 = vmatpush1.msra.mxu0 0.0
  %652 = vmatprep.subr.mxu0 0.0
  %653 = vmatpush1.msra.mxu0 0.0
  %654 = vmatprep.subr.mxu0 0.0
  %655 = vmatpush1.msra.mxu0 0.0
  %656 = vmatprep.subr.mxu0 0.0
  %657 = vmatpush1.msra.mxu0 0.0
  %658 = vmatprep.subr.mxu0 0.0
  %659 = vmatpush1.msra.mxu0 0.0
  %660 = vmatprep.subr.mxu0 0.0
  %661 = vmatpush1.msra.mxu0 0.0
  %662 = vmatprep.subr.mxu0 0.0
  %663 = vmatpush1.msra.mxu0 0.0
  %664 = vmatprep.subr.mxu0 0.0
  %665 = vmatpush1.msra.mxu0 0.0
  %666 = vmatprep.subr.mxu0 0.0
  %667 = vmatpush1.msra.mxu0 0.0
  %668 = vmatprep.mubr.f32.mxu0 0.0
  %669 = vmatmul.mubr.f32.gmra.mrb[0].mxu0 %v577
  %v670 = vpop.f32.mrb[0].mxu0
  %v671 = vadd.f32 %v573, %v670
  %v672 = vpop.f32.mrb[0].mxu0
  %673 = vmatprep.mubr.f32.mxu0 0.0
  %674 = vmatmul.mubr.f32.gmra.mrb[0].mxu0 %v580
  %v675 = vpop.f32.mrb[0].mxu0
  %v676 = vadd.f32 %v573, %v675
  %v677 = vpop.f32.mrb[0].mxu0
  %678 = vmatprep.mubr.f32.mxu0 0.0
  %679 = vmatmul.mubr.f32.gmra.mrb[0].mxu0 %v583
  %v680 = vpop.f32.mrb[0].mxu0
  %v681 = vadd.f32 %v573, %v680
  %v682 = vpop.f32.mrb[0].mxu0
  %683 = vmatprep.mubr.f32.mxu0 0.0
  %684 = vmatmul.mubr.f32.gmra.mrb[0].mxu0 %v586
  %v685 = vpop.f32.mrb[0].mxu0
  %v686 = vadd.f32 %v573, %v685
  %v687 = vpop.f32.mrb[0].mxu0
  %688 = vmatprep.mubr.f32.mxu0 0.0
  %689 = vmatmul.mubr.f32.gmra.mrb[0].mxu0 %v589
  %v690 = vpop.f32.mrb[0].mxu0
  %v691 = vadd.f32 %v573, %v690
  %v692 = vpop.f32.mrb[0].mxu0
  %693 = vmatprep.mubr.f32.mxu0 0.0
  %694 = vmatmul.mubr.f32.gmra.mrb[0].mxu0 %v592
  %v695 = vpop.f32.mrb[0].mxu0
  %v696 = vadd.f32 %v573, %v695
  %v697 = vpop.f32.mrb[0].mxu0
  %698 = vmatprep.mubr.f32.mxu0 0.0
  %699 = vmatmul.mubr.f32.gmra.mrb[0].mxu0 %v595
  %v700 = vpop.f32.mrb[0].mxu0
  %v701 = vadd.f32 %v573, %v700
  %v702 = vpop.f32.mrb[0].mxu0
  %703 = vmatprep.mubr.f32.mxu0 0.0
  %704 = vmatmul.mubr.f32.gmra.mrb[0].mxu0 %v598
  %v705 = vpop.f32.mrb[0].mxu0
  %v706 = vadd.f32 %v573, %v705
  %v707 = vpop.f32.mrb[0].mxu0
  %708 = vdwg.mxu0
  %v709 = vmax.f32 %v671, 0.0
  %v710 = vmax.f32 %v676, 0.0
  %v711 = vmax.f32 %v681, 0.0
  %v712 = vmax.f32 %v686, 0.0
  %v713 = vmax.f32 %v691, 0.0
  %v714 = vmax.f32 %v696, 0.0
  %v715 = vmax.f32 %v701, 0.0
  %v716 = vmax.f32 %v706, 0.0
  %v718 = vlaneseq
  %v719 = vshrl.u32 %v718, 7
  %v720 = vsub.s32 0, %v719
  %v721 = vrot.slane %v191, %v720
  %v724 = vsel %vm575, %v709, 0
  %v727 = vsel %vm575, %v710, 0
  %v730 = vsel %vm575, %v711, 0
  %v733 = vsel %vm575, %v712, 0
  %v736 = vsel %vm575, %v713, 0
  %v739 = vsel %vm575, %v714, 0
  %v742 = vsel %vm575, %v715, 0
  %v745 = vsel %vm575, %v716, 0
  %v748 = vsel %vm600, %v190, 0
  %750 = vmatprep.subr.mxu0 0.0
  %751 = vmatpush1.msra.mxu0 %v748
  %752 = vmatprep.subr.mxu0 0.0
  %753 = vmatpush1.msra.mxu0 0.0
  %754 = vmatprep.subr.mxu0 0.0
  %755 = vmatpush1.msra.mxu0 0.0
  %756 = vmatprep.subr.mxu0 0.0
  %757 = vmatpush1.msra.mxu0 0.0
  %758 = vmatprep.subr.mxu0 0.0
  %759 = vmatpush1.msra.mxu0 0.0
  %760 = vmatprep.subr.mxu0 0.0
  %761 = vmatpush1.msra.mxu0 0.0
  %762 = vmatprep.subr.mxu0 0.0
  %763 = vmatpush1.msra.mxu0 0.0
  %764 = vmatprep.subr.mxu0 0.0
  %765 = vmatpush1.msra.mxu0 0.0
  %766 = vmatprep.subr.mxu0 0.0
  %767 = vmatpush1.msra.mxu0 0.0
  %768 = vmatprep.subr.mxu0 0.0
  %769 = vmatpush1.msra.mxu0 0.0
  %770 = vmatprep.subr.mxu0 0.0
  %771 = vmatpush1.msra.mxu0 0.0
  %772 = vmatprep.subr.mxu0 0.0
  %773 = vmatpush1.msra.mxu0 0.0
  %774 = vmatprep.subr.mxu0 0.0
  %775 = vmatpush1.msra.mxu0 0.0
  %776 = vmatprep.subr.mxu0 0.0
  %777 = vmatpush1.msra.mxu0 0.0
  %778 = vmatprep.subr.mxu0 0.0
  %779 = vmatpush1.msra.mxu0 0.0
  %780 = vmatprep.subr.mxu0 0.0
  %781 = vmatpush1.msra.mxu0 0.0
  %782 = vmatprep.subr.mxu0 0.0
  %783 = vmatpush1.msra.mxu0 0.0
  %784 = vmatprep.subr.mxu0 0.0
  %785 = vmatpush1.msra.mxu0 0.0
  %786 = vmatprep.subr.mxu0 0.0
  %787 = vmatpush1.msra.mxu0 0.0
  %788 = vmatprep.subr.mxu0 0.0
  %789 = vmatpush1.msra.mxu0 0.0
  %790 = vmatprep.subr.mxu0 0.0
  %791 = vmatpush1.msra.mxu0 0.0
  %792 = vmatprep.subr.mxu0 0.0
  %793 = vmatpush1.msra.mxu0 0.0
  %794 = vmatprep.subr.mxu0 0.0
  %795 = vmatpush1.msra.mxu0 0.0
  %796 = vmatprep.subr.mxu0 0.0
  %797 = vmatpush1.msra.mxu0 0.0
  %798 = vmatprep.subr.mxu0 0.0
  %799 = vmatpush1.msra.mxu0 0.0
  %800 = vmatprep.subr.mxu0 0.0
  %801 = vmatpush1.msra.mxu0 0.0
  %802 = vmatprep.subr.mxu0 0.0
  %803 = vmatpush1.msra.mxu0 0.0
  %804 = vmatprep.subr.mxu0 0.0
  %805 = vmatpush1.msra.mxu0 0.0
  %806 = vmatprep.subr.mxu0 0.0
  %807 = vmatpush1.msra.mxu0 0.0
  %808 = vmatprep.subr.mxu0 0.0
  %809 = vmatpush1.msra.mxu0 0.0
  %810 = vmatprep.subr.mxu0 0.0
  %811 = vmatpush1.msra.mxu0 0.0
  %812 = vmatprep.subr.mxu0 0.0
  %813 = vmatpush1.msra.mxu0 0.0
  %814 = vmatprep.mubr.f32.mxu0 0.0
  %815 = vmatmul.mubr.f32.gmra.mrb[0].mxu0 %v724
  %v816 = vpop.f32.mrb[0].mxu0
  %v817 = vadd.f32 %v721, %v816
  %v818 = vpop.f32.mrb[0].mxu0
  %819 = vmatprep.mubr.f32.mxu0 0.0
  %820 = vmatmul.mubr.f32.gmra.mrb[0].mxu0 %v727
  %v821 = vpop.f32.mrb[0].mxu0
  %v822 = vadd.f32 %v721, %v821
  %v823 = vpop.f32.mrb[0].mxu0
  %824 = vmatprep.mubr.f32.mxu0 0.0
  %825 = vmatmul.mubr.f32.gmra.mrb[0].mxu0 %v730
  %v826 = vpop.f32.mrb[0].mxu0
  %v827 = vadd.f32 %v721, %v826
  %v828 = vpop.f32.mrb[0].mxu0
  %829 = vmatprep.mubr.f32.mxu0 0.0
  %830 = vmatmul.mubr.f32.gmra.mrb[0].mxu0 %v733
  %v831 = vpop.f32.mrb[0].mxu0
  %v832 = vadd.f32 %v721, %v831
  %v833 = vpop.f32.mrb[0].mxu0
  %834 = vmatprep.mubr.f32.mxu0 0.0
  %835 = vmatmul.mubr.f32.gmra.mrb[0].mxu0 %v736
  %v836 = vpop.f32.mrb[0].mxu0
  %v837 = vadd.f32 %v721, %v836
  %v838 = vpop.f32.mrb[0].mxu0
  %839 = vmatprep.mubr.f32.mxu0 0.0
  %840 = vmatmul.mubr.f32.gmra.mrb[0].mxu0 %v739
  %v841 = vpop.f32.mrb[0].mxu0
  %v842 = vadd.f32 %v721, %v841
  %v843 = vpop.f32.mrb[0].mxu0
  %844 = vmatprep.mubr.f32.mxu0 0.0
  %845 = vmatmul.mubr.f32.gmra.mrb[0].mxu0 %v742
  %v846 = vpop.f32.mrb[0].mxu0
  %v847 = vadd.f32 %v721, %v846
  %v848 = vpop.f32.mrb[0].mxu0
  %849 = vmatprep.mubr.f32.mxu0 0.0
  %850 = vmatmul.mubr.f32.gmra.mrb[0].mxu0 %v745
  %v851 = vpop.f32.mrb[0].mxu0
  %v852 = vadd.f32 %v721, %v851
  %v853 = vpop.f32.mrb[0].mxu0
  %854 = vdwg.mxu0
  %v855 = vadd.f32 %v531, %v817
  %v856 = vadd.f32 %v536, %v822
  %v857 = vadd.f32 %v541, %v827
  %v858 = vadd.f32 %v546, %v832
  %v859 = vadd.f32 %v551, %v837
  %v860 = vadd.f32 %v556, %v842
  %v861 = vadd.f32 %v561, %v847
  %v862 = vadd.f32 %v566, %v852
  %v863 = vsub.f32 %v855, %v432
  %v864 = vsub.f32 %v856, %v437
  %v865 = vsub.f32 %v857, %v432
  %v866 = vsub.f32 %v858, %v437
  %v867 = vsub.f32 %v859, %v432
  %v868 = vsub.f32 %v860, %v437
  %v869 = vsub.f32 %v861, %v432
  %v870 = vsub.f32 %v862, %v437
  %v872 = vlaneseq
  %v873 = vshrl.u32 %v872, 7
  %v874 = vsub.s32 0, %v873
  %v875 = vrot.slane %v196, %v874
  %v878 = vsel %vm315, %v863, 0
  %v881 = vsel %vm315, %v864, 0
  %v884 = vsel %vm315, %v865, 0
  %v887 = vsel %vm315, %v866, 0
  %v890 = vsel %vm315, %v867, 0
  %v893 = vsel %vm315, %v868, 0
  %v896 = vsel %vm315, %v869, 0
  %v899 = vsel %vm315, %v870, 0
  %901 = vmatprep.subr.mxu0 0.0
  %902 = vmatpush1.msra.mxu0 %v192
  %903 = vmatprep.subr.mxu0 0.0
  %904 = vmatpush1.msra.mxu0 %v193
  %905 = vmatprep.subr.mxu0 0.0
  %906 = vmatpush1.msra.mxu0 %v194
  %907 = vmatprep.subr.mxu0 0.0
  %908 = vmatpush1.msra.mxu0 %v195
  %909 = vmatprep.subr.mxu0 0.0
  %910 = vmatpush1.msra.mxu0 0.0
  %911 = vmatprep.subr.mxu0 0.0
  %912 = vmatpush1.msra.mxu0 0.0
  %913 = vmatprep.subr.mxu0 0.0
  %914 = vmatpush1.msra.mxu0 0.0
  %915 = vmatprep.subr.mxu0 0.0
  %916 = vmatpush1.msra.mxu0 0.0
  %917 = vmatprep.subr.mxu0 0.0
  %918 = vmatpush1.msra.mxu0 0.0
  %919 = vmatprep.subr.mxu0 0.0
  %920 = vmatpush1.msra.mxu0 0.0
  %921 = vmatprep.subr.mxu0 0.0
  %922 = vmatpush1.msra.mxu0 0.0
  %923 = vmatprep.subr.mxu0 0.0
  %924 = vmatpush1.msra.mxu0 0.0
  %925 = vmatprep.subr.mxu0 0.0
  %926 = vmatpush1.msra.mxu0 0.0
  %927 = vmatprep.subr.mxu0 0.0
  %928 = vmatpush1.msra.mxu0 0.0
  %929 = vmatprep.subr.mxu0 0.0
  %930 = vmatpush1.msra.mxu0 0.0
  %931 = vmatprep.subr.mxu0 0.0
  %932 = vmatpush1.msra.mxu0 0.0
  %933 = vmatprep.subr.mxu0 0.0
  %934 = vmatpush1.msra.mxu0 0.0
  %935 = vmatprep.subr.mxu0 0.0
  %936 = vmatpush1.msra.mxu0 0.0
  %937 = vmatprep.subr.mxu0 0.0
  %938 = vmatpush1.msra.mxu0 0.0
  %939 = vmatprep.subr.mxu0 0.0
  %940 = vmatpush1.msra.mxu0 0.0
  %941 = vmatprep.subr.mxu0 0.0
  %942 = vmatpush1.msra.mxu0 0.0
  %943 = vmatprep.subr.mxu0 0.0
  %944 = vmatpush1.msra.mxu0 0.0
  %945 = vmatprep.subr.mxu0 0.0
  %946 = vmatpush1.msra.mxu0 0.0
  %947 = vmatprep.subr.mxu0 0.0
  %948 = vmatpush1.msra.mxu0 0.0
  %949 = vmatprep.subr.mxu0 0.0
  %950 = vmatpush1.msra.mxu0 0.0
  %951 = vmatprep.subr.mxu0 0.0
  %952 = vmatpush1.msra.mxu0 0.0
  %953 = vmatprep.subr.mxu0 0.0
  %954 = vmatpush1.msra.mxu0 0.0
  %955 = vmatprep.subr.mxu0 0.0
  %956 = vmatpush1.msra.mxu0 0.0
  %957 = vmatprep.subr.mxu0 0.0
  %958 = vmatpush1.msra.mxu0 0.0
  %959 = vmatprep.subr.mxu0 0.0
  %960 = vmatpush1.msra.mxu0 0.0
  %961 = vmatprep.subr.mxu0 0.0
  %962 = vmatpush1.msra.mxu0 0.0
  %963 = vmatprep.subr.mxu0 0.0
  %964 = vmatpush1.msra.mxu0 0.0
  %965 = vmatprep.mubr.f32.mxu0 0.0
  %966 = vmatmul.mubr.f32.gmra.mrb[0].mxu0 %v878
  %v967 = vpop.f32.mrb[0].mxu0
  %v968 = vadd.f32 %v875, %v967
  %v969 = vpop.f32.mrb[0].mxu0
  %970 = vmatprep.mubr.f32.mxu0 0.0
  %971 = vmatmul.mubr.f32.gmra.mrb[0].mxu0 %v881
  %v972 = vpop.f32.mrb[0].mxu0
  %v973 = vadd.f32 %v875, %v972
  %v974 = vpop.f32.mrb[0].mxu0
  %975 = vmatprep.mubr.f32.mxu0 0.0
  %976 = vmatmul.mubr.f32.gmra.mrb[0].mxu0 %v884
  %v977 = vpop.f32.mrb[0].mxu0
  %v978 = vadd.f32 %v875, %v977
  %v979 = vpop.f32.mrb[0].mxu0
  %980 = vmatprep.mubr.f32.mxu0 0.0
  %981 = vmatmul.mubr.f32.gmra.mrb[0].mxu0 %v887
  %v982 = vpop.f32.mrb[0].mxu0
  %v983 = vadd.f32 %v875, %v982
  %v984 = vpop.f32.mrb[0].mxu0
  %985 = vmatprep.mubr.f32.mxu0 0.0
  %986 = vmatmul.mubr.f32.gmra.mrb[0].mxu0 %v890
  %v987 = vpop.f32.mrb[0].mxu0
  %v988 = vadd.f32 %v875, %v987
  %v989 = vpop.f32.mrb[0].mxu0
  %990 = vmatprep.mubr.f32.mxu0 0.0
  %991 = vmatmul.mubr.f32.gmra.mrb[0].mxu0 %v893
  %v992 = vpop.f32.mrb[0].mxu0
  %v993 = vadd.f32 %v875, %v992
  %v994 = vpop.f32.mrb[0].mxu0
  %995 = vmatprep.mubr.f32.mxu0 0.0
  %996 = vmatmul.mubr.f32.gmra.mrb[0].mxu0 %v896
  %v997 = vpop.f32.mrb[0].mxu0
  %v998 = vadd.f32 %v875, %v997
  %v999 = vpop.f32.mrb[0].mxu0
  %1000 = vmatprep.mubr.f32.mxu0 0.0
  %1001 = vmatmul.mubr.f32.gmra.mrb[0].mxu0 %v899
  %v1002 = vpop.f32.mrb[0].mxu0
  %v1003 = vadd.f32 %v875, %v1002
  %v1004 = vpop.f32.mrb[0].mxu0
  %1005 = vdwg.mxu0
  %v1006 = vmax.f32 %v968, 0.0
  %v1007 = vmax.f32 %v973, 0.0
  %v1008 = vmax.f32 %v978, 0.0
  %v1009 = vmax.f32 %v983, 0.0
  %v1010 = vmax.f32 %v988, 0.0
  %v1011 = vmax.f32 %v993, 0.0
  %v1012 = vmax.f32 %v998, 0.0
  %v1013 = vmax.f32 %v1003, 0.0
  %v1015 = vlaneseq
  %v1016 = vshrl.u32 %v1015, 7
  %v1017 = vsub.s32 0, %v1016
  %v1018 = vrot.slane %v198, %v1017
  %v1021 = vsel %vm575, %v1006, 0
  %v1024 = vsel %vm575, %v1007, 0
  %v1027 = vsel %vm575, %v1008, 0
  %v1030 = vsel %vm575, %v1009, 0
  %v1033 = vsel %vm575, %v1010, 0
  %v1036 = vsel %vm575, %v1011, 0
  %v1039 = vsel %vm575, %v1012, 0
  %v1042 = vsel %vm575, %v1013, 0
  %v1045 = vsel %vm600, %v197, 0
  %1047 = vmatprep.subr.mxu0 0.0
  %1048 = vmatpush1.msra.mxu0 %v1045
  %1049 = vmatprep.subr.mxu0 0.0
  %1050 = vmatpush1.msra.mxu0 0.0
  %1051 = vmatprep.subr.mxu0 0.0
  %1052 = vmatpush1.msra.mxu0 0.0
  %1053 = vmatprep.subr.mxu0 0.0
  %1054 = vmatpush1.msra.mxu0 0.0
  %1055 = vmatprep.subr.mxu0 0.0
  %1056 = vmatpush1.msra.mxu0 0.0
  %1057 = vmatprep.subr.mxu0 0.0
  %1058 = vmatpush1.msra.mxu0 0.0
  %1059 = vmatprep.subr.mxu0 0.0
  %1060 = vmatpush1.msra.mxu0 0.0
  %1061 = vmatprep.subr.mxu0 0.0
  %1062 = vmatpush1.msra.mxu0 0.0
  %1063 = vmatprep.subr.mxu0 0.0
  %1064 = vmatpush1.msra.mxu0 0.0
  %1065 = vmatprep.subr.mxu0 0.0
  %1066 = vmatpush1.msra.mxu0 0.0
  %1067 = vmatprep.subr.mxu0 0.0
  %1068 = vmatpush1.msra.mxu0 0.0
  %1069 = vmatprep.subr.mxu0 0.0
  %1070 = vmatpush1.msra.mxu0 0.0
  %1071 = vmatprep.subr.mxu0 0.0
  %1072 = vmatpush1.msra.mxu0 0.0
  %1073 = vmatprep.subr.mxu0 0.0
  %1074 = vmatpush1.msra.mxu0 0.0
  %1075 = vmatprep.subr.mxu0 0.0
  %1076 = vmatpush1.msra.mxu0 0.0
  %1077 = vmatprep.subr.mxu0 0.0
  %1078 = vmatpush1.msra.mxu0 0.0
  %1079 = vmatprep.subr.mxu0 0.0
  %1080 = vmatpush1.msra.mxu0 0.0
  %1081 = vmatprep.subr.mxu0 0.0
  %1082 = vmatpush1.msra.mxu0 0.0
  %1083 = vmatprep.subr.mxu0 0.0
  %1084 = vmatpush1.msra.mxu0 0.0
  %1085 = vmatprep.subr.mxu0 0.0
  %1086 = vmatpush1.msra.mxu0 0.0
  %1087 = vmatprep.subr.mxu0 0.0
  %1088 = vmatpush1.msra.mxu0 0.0
  %1089 = vmatprep.subr.mxu0 0.0
  %1090 = vmatpush1.msra.mxu0 0.0
  %1091 = vmatprep.subr.mxu0 0.0
  %1092 = vmatpush1.msra.mxu0 0.0
  %1093 = vmatprep.subr.mxu0 0.0
  %1094 = vmatpush1.msra.mxu0 0.0
  %1095 = vmatprep.subr.mxu0 0.0
  %1096 = vmatpush1.msra.mxu0 0.0
  %1097 = vmatprep.subr.mxu0 0.0
  %1098 = vmatpush1.msra.mxu0 0.0
  %1099 = vmatprep.subr.mxu0 0.0
  %1100 = vmatpush1.msra.mxu0 0.0
  %1101 = vmatprep.subr.mxu0 0.0
  %1102 = vmatpush1.msra.mxu0 0.0
  %1103 = vmatprep.subr.mxu0 0.0
  %1104 = vmatpush1.msra.mxu0 0.0
  %1105 = vmatprep.subr.mxu0 0.0
  %1106 = vmatpush1.msra.mxu0 0.0
  %1107 = vmatprep.subr.mxu0 0.0
  %1108 = vmatpush1.msra.mxu0 0.0
  %1109 = vmatprep.subr.mxu0 0.0
  %1110 = vmatpush1.msra.mxu0 0.0
  %1111 = vmatprep.mubr.f32.mxu0 0.0
  %1112 = vmatmul.mubr.f32.gmra.mrb[0].mxu0 %v1021
  %v1113 = vpop.f32.mrb[0].mxu0
  %v1114 = vadd.f32 %v1018, %v1113
  %v1115 = vpop.f32.mrb[0].mxu0
  %1116 = vmatprep.mubr.f32.mxu0 0.0
  %1117 = vmatmul.mubr.f32.gmra.mrb[0].mxu0 %v1024
  %v1118 = vpop.f32.mrb[0].mxu0
  %v1119 = vadd.f32 %v1018, %v1118
  %v1120 = vpop.f32.mrb[0].mxu0
  %1121 = vmatprep.mubr.f32.mxu0 0.0
  %1122 = vmatmul.mubr.f32.gmra.mrb[0].mxu0 %v1027
  %v1123 = vpop.f32.mrb[0].mxu0
  %v1124 = vadd.f32 %v1018, %v1123
  %v1125 = vpop.f32.mrb[0].mxu0
  %1126 = vmatprep.mubr.f32.mxu0 0.0
  %1127 = vmatmul.mubr.f32.gmra.mrb[0].mxu0 %v1030
  %v1128 = vpop.f32.mrb[0].mxu0
  %v1129 = vadd.f32 %v1018, %v1128
  %v1130 = vpop.f32.mrb[0].mxu0
  %1131 = vmatprep.mubr.f32.mxu0 0.0
  %1132 = vmatmul.mubr.f32.gmra.mrb[0].mxu0 %v1033
  %v1133 = vpop.f32.mrb[0].mxu0
  %v1134 = vadd.f32 %v1018, %v1133
  %v1135 = vpop.f32.mrb[0].mxu0
  %1136 = vmatprep.mubr.f32.mxu0 0.0
  %1137 = vmatmul.mubr.f32.gmra.mrb[0].mxu0 %v1036
  %v1138 = vpop.f32.mrb[0].mxu0
  %v1139 = vadd.f32 %v1018, %v1138
  %v1140 = vpop.f32.mrb[0].mxu0
  %1141 = vmatprep.mubr.f32.mxu0 0.0
  %1142 = vmatmul.mubr.f32.gmra.mrb[0].mxu0 %v1039
  %v1143 = vpop.f32.mrb[0].mxu0
  %v1144 = vadd.f32 %v1018, %v1143
  %v1145 = vpop.f32.mrb[0].mxu0
  %1146 = vmatprep.mubr.f32.mxu0 0.0
  %1147 = vmatmul.mubr.f32.gmra.mrb[0].mxu0 %v1042
  %v1148 = vpop.f32.mrb[0].mxu0
  %v1149 = vadd.f32 %v1018, %v1148
  %v1150 = vpop.f32.mrb[0].mxu0
  %1151 = vdwg.mxu0
  %vm1152 = vcmp.eq.f32.partialorder %v307, 0.0
  %vm1153 = vcmp.eq.f32.partialorder %v308, 0.0
  %vm1154 = vcmp.eq.f32.partialorder %v309, 0.0
  %vm1155 = vcmp.eq.f32.partialorder %v310, 0.0
  %vm1156 = vcmp.eq.f32.partialorder %v311, 0.0
  %vm1157 = vcmp.eq.f32.partialorder %v312, 0.0
  %vm1158 = vcmp.eq.f32.partialorder %v313, 0.0
  %vm1159 = vcmp.eq.f32.partialorder %v314, 0.0
  %v1160 = vsel %vm1152, 1, 0
  %v1161 = vsel %vm1153, 1, 0
  %v1162 = vsel %vm1154, 1, 0
  %v1163 = vsel %vm1155, 1, 0
  %v1164 = vsel %vm1156, 1, 0
  %v1165 = vsel %vm1157, 1, 0
  %v1166 = vsel %vm1158, 1, 0
  %v1167 = vsel %vm1159, 1, 0
  %1168 = vset.pattern.permute.xlu0 0
  %1169 = vperm.xlu0 %1168, %v1160
  %v1170 = vpop.permute.xlu0 %1169
  %1171 = vset.pattern.permute.xlu0 0
  %1172 = vperm.xlu0 %1171, %v1161
  %v1173 = vpop.permute.xlu0 %1172
  %1174 = vset.pattern.permute.xlu0 0
  %1175 = vperm.xlu0 %1174, %v1162
  %v1176 = vpop.permute.xlu0 %1175
  %1177 = vset.pattern.permute.xlu0 0
  %1178 = vperm.xlu0 %1177, %v1163
  %v1179 = vpop.permute.xlu0 %1178
  %1180 = vset.pattern.permute.xlu0 0
  %1181 = vperm.xlu0 %1180, %v1164
  %v1182 = vpop.permute.xlu0 %1181
  %1183 = vset.pattern.permute.xlu0 0
  %1184 = vperm.xlu0 %1183, %v1165
  %v1185 = vpop.permute.xlu0 %1184
  %1186 = vset.pattern.permute.xlu0 0
  %1187 = vperm.xlu0 %1186, %v1166
  %v1188 = vpop.permute.xlu0 %1187
  %1189 = vset.pattern.permute.xlu0 0
  %1190 = vperm.xlu0 %1189, %v1167
  %v1191 = vpop.permute.xlu0 %1190
  %vm1192 = vcmp.eq.s32.totalorder %v1170, 1
  %vm1193 = vcmp.eq.s32.totalorder %v1173, 1
  %vm1194 = vcmp.eq.s32.totalorder %v1176, 1
  %vm1195 = vcmp.eq.s32.totalorder %v1179, 1
  %vm1196 = vcmp.eq.s32.totalorder %v1182, 1
  %vm1197 = vcmp.eq.s32.totalorder %v1185, 1
  %vm1198 = vcmp.eq.s32.totalorder %v1188, 1
  %vm1199 = vcmp.eq.s32.totalorder %v1191, 1
  %v1200 = vsel %vm1192, -1e+09, %v1114
  %v1201 = vsel %vm1193, -1e+09, %v1119
  %v1202 = vsel %vm1194, -1e+09, %v1124
  %v1203 = vsel %vm1195, -1e+09, %v1129
  %v1204 = vsel %vm1196, -1e+09, %v1134
  %v1205 = vsel %vm1197, -1e+09, %v1139
  %v1206 = vsel %vm1198, -1e+09, %v1144
  %v1207 = vsel %vm1199, -1e+09, %v1149
  %v1209 = vsel %vm315, %v531, 0
  %v1212 = vsel %vm315, %v536, 0
  %v1215 = vsel %vm315, %v541, 0
  %v1218 = vsel %vm315, %v546, 0
  %v1221 = vsel %vm315, %v551, 0
  %v1224 = vsel %vm315, %v556, 0
  %v1227 = vsel %vm315, %v561, 0
  %v1230 = vsel %vm315, %v566, 0
  %1232 = vmatprep.subr.mxu0 0.0
  %1233 = vmatpush1.msra.mxu0 %v184
  %1234 = vmatprep.subr.mxu0 0.0
  %1235 = vmatpush1.msra.mxu0 %v185
  %1236 = vmatprep.subr.mxu0 0.0
  %1237 = vmatpush1.msra.mxu0 %v186
  %1238 = vmatprep.subr.mxu0 0.0
  %1239 = vmatpush1.msra.mxu0 %v187
  %1240 = vmatprep.subr.mxu0 0.0
  %1241 = vmatpush1.msra.mxu0 0.0
  %1242 = vmatprep.subr.mxu0 0.0
  %1243 = vmatpush1.msra.mxu0 0.0
  %1244 = vmatprep.subr.mxu0 0.0
  %1245 = vmatpush1.msra.mxu0 0.0
  %1246 = vmatprep.subr.mxu0 0.0
  %1247 = vmatpush1.msra.mxu0 0.0
  %1248 = vmatprep.subr.mxu0 0.0
  %1249 = vmatpush1.msra.mxu0 0.0
  %1250 = vmatprep.subr.mxu0 0.0
  %1251 = vmatpush1.msra.mxu0 0.0
  %1252 = vmatprep.subr.mxu0 0.0
  %1253 = vmatpush1.msra.mxu0 0.0
  %1254 = vmatprep.subr.mxu0 0.0
  %1255 = vmatpush1.msra.mxu0 0.0
  %1256 = vmatprep.subr.mxu0 0.0
  %1257 = vmatpush1.msra.mxu0 0.0
  %1258 = vmatprep.subr.mxu0 0.0
  %1259 = vmatpush1.msra.mxu0 0.0
  %1260 = vmatprep.subr.mxu0 0.0
  %1261 = vmatpush1.msra.mxu0 0.0
  %1262 = vmatprep.subr.mxu0 0.0
  %1263 = vmatpush1.msra.mxu0 0.0
  %1264 = vmatprep.subr.mxu0 0.0
  %1265 = vmatpush1.msra.mxu0 0.0
  %1266 = vmatprep.subr.mxu0 0.0
  %1267 = vmatpush1.msra.mxu0 0.0
  %1268 = vmatprep.subr.mxu0 0.0
  %1269 = vmatpush1.msra.mxu0 0.0
  %1270 = vmatprep.subr.mxu0 0.0
  %1271 = vmatpush1.msra.mxu0 0.0
  %1272 = vmatprep.subr.mxu0 0.0
  %1273 = vmatpush1.msra.mxu0 0.0
  %1274 = vmatprep.subr.mxu0 0.0
  %1275 = vmatpush1.msra.mxu0 0.0
  %1276 = vmatprep.subr.mxu0 0.0
  %1277 = vmatpush1.msra.mxu0 0.0
  %1278 = vmatprep.subr.mxu0 0.0
  %1279 = vmatpush1.msra.mxu0 0.0
  %1280 = vmatprep.subr.mxu0 0.0
  %1281 = vmatpush1.msra.mxu0 0.0
  %1282 = vmatprep.subr.mxu0 0.0
  %1283 = vmatpush1.msra.mxu0 0.0
  %1284 = vmatprep.subr.mxu0 0.0
  %1285 = vmatpush1.msra.mxu0 0.0
  %1286 = vmatprep.subr.mxu0 0.0
  %1287 = vmatpush1.msra.mxu0 0.0
  %1288 = vmatprep.subr.mxu0 0.0
  %1289 = vmatpush1.msra.mxu0 0.0
  %1290 = vmatprep.subr.mxu0 0.0
  %1291 = vmatpush1.msra.mxu0 0.0
  %1292 = vmatprep.subr.mxu0 0.0
  %1293 = vmatpush1.msra.mxu0 0.0
  %1294 = vmatprep.subr.mxu0 0.0
  %1295 = vmatpush1.msra.mxu0 0.0
  %1296 = vmatprep.mubr.f32.mxu0 0.0
  %1297 = vmatmul.mubr.f32.gmra.mrb[0].mxu0 %v1209
  %v1298 = vpop.f32.mrb[0].mxu0
  %v1299 = vadd.f32 %v817, %v1298
  %v1300 = vpop.f32.mrb[0].mxu0
  %1301 = vmatprep.mubr.f32.mxu0 0.0
  %1302 = vmatmul.mubr.f32.gmra.mrb[0].mxu0 %v1212
  %v1303 = vpop.f32.mrb[0].mxu0
  %v1304 = vadd.f32 %v822, %v1303
  %v1305 = vpop.f32.mrb[0].mxu0
  %1306 = vmatprep.mubr.f32.mxu0 0.0
  %1307 = vmatmul.mubr.f32.gmra.mrb[0].mxu0 %v1215
  %v1308 = vpop.f32.mrb[0].mxu0
  %v1309 = vadd.f32 %v827, %v1308
  %v1310 = vpop.f32.mrb[0].mxu0
  %1311 = vmatprep.mubr.f32.mxu0 0.0
  %1312 = vmatmul.mubr.f32.gmra.mrb[0].mxu0 %v1218
  %v1313 = vpop.f32.mrb[0].mxu0
  %v1314 = vadd.f32 %v832, %v1313
  %v1315 = vpop.f32.mrb[0].mxu0
  %1316 = vmatprep.mubr.f32.mxu0 0.0
  %1317 = vmatmul.mubr.f32.gmra.mrb[0].mxu0 %v1221
  %v1318 = vpop.f32.mrb[0].mxu0
  %v1319 = vadd.f32 %v837, %v1318
  %v1320 = vpop.f32.mrb[0].mxu0
  %1321 = vmatprep.mubr.f32.mxu0 0.0
  %1322 = vmatmul.mubr.f32.gmra.mrb[0].mxu0 %v1224
  %v1323 = vpop.f32.mrb[0].mxu0
  %v1324 = vadd.f32 %v842, %v1323
  %v1325 = vpop.f32.mrb[0].mxu0
  %1326 = vmatprep.mubr.f32.mxu0 0.0
  %1327 = vmatmul.mubr.f32.gmra.mrb[0].mxu0 %v1227
  %v1328 = vpop.f32.mrb[0].mxu0
  %v1329 = vadd.f32 %v847, %v1328
  %v1330 = vpop.f32.mrb[0].mxu0
  %1331 = vmatprep.mubr.f32.mxu0 0.0
  %1332 = vmatmul.mubr.f32.gmra.mrb[0].mxu0 %v1230
  %v1333 = vpop.f32.mrb[0].mxu0
  %v1334 = vadd.f32 %v852, %v1333
  %v1335 = vpop.f32.mrb[0].mxu0
  %1336 = vdwg.mxu0
  %v1337 = vmax.f32 %v1200, %v1202
  %v1338 = vmax.f32 %v1201, %v1203
  %v1339 = vmax.f32 %v1337, %v1204
  %v1340 = vmax.f32 %v1338, %v1205
  %v1341 = vmax.f32 %v1339, %v1206
  %v1342 = vmax.f32 %v1340, %v1207
  %v1343 = vsub.f32 %v1200, %v1341
  %v1344 = vsub.f32 %v1201, %v1342
  %v1345 = vmul.f32 %v1343, 1.442695
  %v1346 = vpow.pop %v1345
  %v1347 = vmul.f32 %v1344, 1.442695
  %v1348 = vpow.pop %v1347
  %v1349 = vadd.f32 %v1346, 0.0
  %v1350 = vadd.f32 %v1348, 0.0
  %v1351 = vmul.f32 %v1299, %v1346
  %v1352 = vmul.f32 %v1304, %v1348
  %v1353 = vadd.f32 %v1351, 0.0
  %v1354 = vadd.f32 %v1352, 0.0
  %v1355 = vsub.f32 %v1202, %v1341
  %v1356 = vsub.f32 %v1203, %v1342
  %v1357 = vmul.f32 %v1355, 1.442695
  %v1358 = vpow.pop %v1357
  %v1359 = vmul.f32 %v1356, 1.442695
  %v1360 = vpow.pop %v1359
  %v1361 = vadd.f32 %v1349, %v1358
  %v1362 = vadd.f32 %v1350, %v1360
  %v1363 = vmul.f32 %v1309, %v1358
  %v1364 = vmul.f32 %v1314, %v1360
  %v1365 = vadd.f32 %v1353, %v1363
  %v1366 = vadd.f32 %v1354, %v1364
  %v1367 = vsub.f32 %v1204, %v1341
  %v1368 = vsub.f32 %v1205, %v1342
  %v1369 = vmul.f32 %v1367, 1.442695
  %v1370 = vpow.pop %v1369
  %v1371 = vmul.f32 %v1368, 1.442695
  %v1372 = vpow.pop %v1371
  %v1373 = vadd.f32 %v1361, %v1370
  %v1374 = vadd.f32 %v1362, %v1372
  %v1375 = vmul.f32 %v1319, %v1370
  %v1376 = vmul.f32 %v1324, %v1372
  %v1377 = vadd.f32 %v1365, %v1375
  %v1378 = vadd.f32 %v1366, %v1376
  %v1379 = vsub.f32 %v1206, %v1341
  %v1380 = vsub.f32 %v1207, %v1342
  %v1381 = vmul.f32 %v1379, 1.442695
  %v1382 = vpow.pop %v1381
  %v1383 = vmul.f32 %v1380, 1.442695
  %v1384 = vpow.pop %v1383
  %v1385 = vadd.f32 %v1373, %v1382
  %v1386 = vadd.f32 %v1374, %v1384
  %v1387 = vmul.f32 %v1329, %v1382
  %v1388 = vmul.f32 %v1334, %v1384
  %v1389 = vadd.f32 %v1377, %v1387
  %v1390 = vadd.f32 %v1378, %v1388
  %v1391 = vrcp.pop %v1385
  %v1392 = vrcp.pop %v1386
  %v1393 = vmul.f32 %v1389, %v1391
  %v1394 = vmul.f32 %v1390, %v1392
  %v1396 = vlaneseq
  %v1397 = vshrl.u32 %v1396, 7
  %v1398 = vsub.s32 0, %v1397
  %v1399 = vrot.slane %v203, %v1398
  %v1402 = vsel %vm315, %v1393, 0
  %v1405 = vsel %vm315, %v1394, 0
  %1407 = vmatprep.subr.mxu0 0.0
  %1408 = vmatpush1.msra.mxu0 %v199
  %1409 = vmatprep.subr.mxu0 0.0
  %1410 = vmatpush1.msra.mxu0 %v200
  %1411 = vmatprep.subr.mxu0 0.0
  %1412 = vmatpush1.msra.mxu0 %v201
  %1413 = vmatprep.subr.mxu0 0.0
  %1414 = vmatpush1.msra.mxu0 %v202
  %1415 = vmatprep.subr.mxu0 0.0
  %1416 = vmatpush1.msra.mxu0 0.0
  %1417 = vmatprep.subr.mxu0 0.0
  %1418 = vmatpush1.msra.mxu0 0.0
  %1419 = vmatprep.subr.mxu0 0.0
  %1420 = vmatpush1.msra.mxu0 0.0
  %1421 = vmatprep.subr.mxu0 0.0
  %1422 = vmatpush1.msra.mxu0 0.0
  %1423 = vmatprep.subr.mxu0 0.0
  %1424 = vmatpush1.msra.mxu0 0.0
  %1425 = vmatprep.subr.mxu0 0.0
  %1426 = vmatpush1.msra.mxu0 0.0
  %1427 = vmatprep.subr.mxu0 0.0
  %1428 = vmatpush1.msra.mxu0 0.0
  %1429 = vmatprep.subr.mxu0 0.0
  %1430 = vmatpush1.msra.mxu0 0.0
  %1431 = vmatprep.subr.mxu0 0.0
  %1432 = vmatpush1.msra.mxu0 0.0
  %1433 = vmatprep.subr.mxu0 0.0
  %1434 = vmatpush1.msra.mxu0 0.0
  %1435 = vmatprep.subr.mxu0 0.0
  %1436 = vmatpush1.msra.mxu0 0.0
  %1437 = vmatprep.subr.mxu0 0.0
  %1438 = vmatpush1.msra.mxu0 0.0
  %1439 = vmatprep.subr.mxu0 0.0
  %1440 = vmatpush1.msra.mxu0 0.0
  %1441 = vmatprep.subr.mxu0 0.0
  %1442 = vmatpush1.msra.mxu0 0.0
  %1443 = vmatprep.subr.mxu0 0.0
  %1444 = vmatpush1.msra.mxu0 0.0
  %1445 = vmatprep.subr.mxu0 0.0
  %1446 = vmatpush1.msra.mxu0 0.0
  %1447 = vmatprep.subr.mxu0 0.0
  %1448 = vmatpush1.msra.mxu0 0.0
  %1449 = vmatprep.subr.mxu0 0.0
  %1450 = vmatpush1.msra.mxu0 0.0
  %1451 = vmatprep.subr.mxu0 0.0
  %1452 = vmatpush1.msra.mxu0 0.0
  %1453 = vmatprep.subr.mxu0 0.0
  %1454 = vmatpush1.msra.mxu0 0.0
  %1455 = vmatprep.subr.mxu0 0.0
  %1456 = vmatpush1.msra.mxu0 0.0
  %1457 = vmatprep.subr.mxu0 0.0
  %1458 = vmatpush1.msra.mxu0 0.0
  %1459 = vmatprep.subr.mxu0 0.0
  %1460 = vmatpush1.msra.mxu0 0.0
  %1461 = vmatprep.subr.mxu0 0.0
  %1462 = vmatpush1.msra.mxu0 0.0
  %1463 = vmatprep.subr.mxu0 0.0
  %1464 = vmatpush1.msra.mxu0 0.0
  %1465 = vmatprep.subr.mxu0 0.0
  %1466 = vmatpush1.msra.mxu0 0.0
  %1467 = vmatprep.subr.mxu0 0.0
  %1468 = vmatpush1.msra.mxu0 0.0
  %1469 = vmatprep.subr.mxu0 0.0
  %1470 = vmatpush1.msra.mxu0 0.0
  %1471 = vmatprep.mubr.f32.mxu0 0.0
  %1472 = vmatmul.mubr.f32.gmra.mrb[0].mxu0 %v1402
  %v1473 = vpop.f32.mrb[0].mxu0
  %v1474 = vadd.f32 %v1399, %v1473
  %v1475 = vpop.f32.mrb[0].mxu0
  %1476 = vmatprep.mubr.f32.mxu0 0.0
  %1477 = vmatmul.mubr.f32.gmra.mrb[0].mxu0 %v1405
  %v1478 = vpop.f32.mrb[0].mxu0
  %v1479 = vadd.f32 %v1399, %v1478
  %v1480 = vpop.f32.mrb[0].mxu0
  %1481 = vdwg.mxu0
  %v1482 = vadd.f32 %v1474, %v289
  %v1483 = vadd.f32 %v1479, %v290
  %v1484 = vsel %vm315, %v1482, 0.0
  %1485 = vadd.xlane.f32.xlu0 %v1484
  %v1486 = vpop.xlane.xlu0 %1485
  %v1487 = vsel %vm315, %v1483, 0.0
  %1488 = vadd.xlane.f32.xlu0 %v1487
  %v1489 = vpop.xlane.xlu0 %1488
  %v1490 = vmul.f32 %v1486, %v322
  %v1491 = vmul.f32 %v1489, %v322
  %v1492 = vsub.f32 %v1482, %v1490
  %v1493 = vsub.f32 %v1483, %v1491
  %v1494 = vmul.f32 %v1492, %v1492
  %v1495 = vmul.f32 %v1493, %v1493
  %v1496 = vsel %vm315, %v1494, 0.0
  %1497 = vadd.xlane.f32.xlu0 %v1496
  %v1498 = vpop.xlane.xlu0 %1497
  %v1499 = vsel %vm315, %v1495, 0.0
  %1500 = vadd.xlane.f32.xlu0 %v1499
  %v1501 = vpop.xlane.xlu0 %1500
  %v1502 = vmul.f32 %v1498, %v322
  %v1503 = vmul.f32 %v1501, %v322
  %v1504 = vadd.f32 %v1502, 1e-06
  %v1505 = vadd.f32 %v1503, 1e-06
  %v1506 = vrsqrt.pop %v1504
  %v1507 = vrsqrt.pop %v1505
  %v1508 = vmul.f32 %v1492, %v1506
  %v1509 = vmul.f32 %v1493, %v1507
  %v1511 = vlaneseq
  %v1512 = vshrl.u32 %v1511, 7
  %v1513 = vsub.s32 0, %v1512
  %v1514 = vrot.slane %v204, %v1513
  %v1516 = vmul.f32 %v1508, %v1514
  %v1517 = vmul.f32 %v1509, %v1514
  %v1519 = vlaneseq
  %v1520 = vshrl.u32 %v1519, 7
  %v1521 = vsub.s32 0, %v1520
  %v1522 = vrot.slane %v205, %v1521
  %v1524 = vadd.f32 %v1516, %v1522
  %v1525 = vadd.f32 %v1517, %v1522
  %v1527 = vlaneseq
  %v1528 = vshrl.u32 %v1527, 7
  %v1529 = vsub.s32 0, %v1528
  %v1530 = vrot.slane %v210, %v1529
  %v1533 = vsel %vm315, %v1524, 0
  %v1536 = vsel %vm315, %v1525, 0
  %1538 = vmatprep.subr.mxu0 0.0
  %1539 = vmatpush1.msra.mxu0 %v206
  %1540 = vmatprep.subr.mxu0 0.0
  %1541 = vmatpush1.msra.mxu0 %v207
  %1542 = vmatprep.subr.mxu0 0.0
  %1543 = vmatpush1.msra.mxu0 %v208
  %1544 = vmatprep.subr.mxu0 0.0
  %1545 = vmatpush1.msra.mxu0 %v209
  %1546 = vmatprep.subr.mxu0 0.0
  %1547 = vmatpush1.msra.mxu0 0.0
  %1548 = vmatprep.subr.mxu0 0.0
  %1549 = vmatpush1.msra.mxu0 0.0
  %1550 = vmatprep.subr.mxu0 0.0
  %1551 = vmatpush1.msra.mxu0 0.0
  %1552 = vmatprep.subr.mxu0 0.0
  %1553 = vmatpush1.msra.mxu0 0.0
  %1554 = vmatprep.subr.mxu0 0.0
  %1555 = vmatpush1.msra.mxu0 0.0
  %1556 = vmatprep.subr.mxu0 0.0
  %1557 = vmatpush1.msra.mxu0 0.0
  %1558 = vmatprep.subr.mxu0 0.0
  %1559 = vmatpush1.msra.mxu0 0.0
  %1560 = vmatprep.subr.mxu0 0.0
  %1561 = vmatpush1.msra.mxu0 0.0
  %1562 = vmatprep.subr.mxu0 0.0
  %1563 = vmatpush1.msra.mxu0 0.0
  %1564 = vmatprep.subr.mxu0 0.0
  %1565 = vmatpush1.msra.mxu0 0.0
  %1566 = vmatprep.subr.mxu0 0.0
  %1567 = vmatpush1.msra.mxu0 0.0
  %1568 = vmatprep.subr.mxu0 0.0
  %1569 = vmatpush1.msra.mxu0 0.0
  %1570 = vmatprep.subr.mxu0 0.0
  %1571 = vmatpush1.msra.mxu0 0.0
  %1572 = vmatprep.subr.mxu0 0.0
  %1573 = vmatpush1.msra.mxu0 0.0
  %1574 = vmatprep.subr.mxu0 0.0
  %1575 = vmatpush1.msra.mxu0 0.0
  %1576 = vmatprep.subr.mxu0 0.0
  %1577 = vmatpush1.msra.mxu0 0.0
  %1578 = vmatprep.subr.mxu0 0.0
  %1579 = vmatpush1.msra.mxu0 0.0
  %1580 = vmatprep.subr.mxu0 0.0
  %1581 = vmatpush1.msra.mxu0 0.0
  %1582 = vmatprep.subr.mxu0 0.0
  %1583 = vmatpush1.msra.mxu0 0.0
  %1584 = vmatprep.subr.mxu0 0.0
  %1585 = vmatpush1.msra.mxu0 0.0
  %1586 = vmatprep.subr.mxu0 0.0
  %1587 = vmatpush1.msra.mxu0 0.0
  %1588 = vmatprep.subr.mxu0 0.0
  %1589 = vmatpush1.msra.mxu0 0.0
  %1590 = vmatprep.subr.mxu0 0.0
  %1591 = vmatpush1.msra.mxu0 0.0
  %1592 = vmatprep.subr.mxu0 0.0
  %1593 = vmatpush1.msra.mxu0 0.0
  %1594 = vmatprep.subr.mxu0 0.0
  %1595 = vmatpush1.msra.mxu0 0.0
  %1596 = vmatprep.subr.mxu0 0.0
  %1597 = vmatpush1.msra.mxu0 0.0
  %1598 = vmatprep.subr.mxu0 0.0
  %1599 = vmatpush1.msra.mxu0 0.0
  %1600 = vmatprep.subr.mxu0 0.0
  %1601 = vmatpush1.msra.mxu0 0.0
  %1602 = vmatprep.mubr.f32.mxu0 0.0
  %1603 = vmatmul.mubr.f32.gmra.mrb[0].mxu0 %v1533
  %v1604 = vpop.f32.mrb[0].mxu0
  %v1605 = vadd.f32 %v1530, %v1604
  %v1606 = vpop.f32.mrb[0].mxu0
  %1607 = vmatprep.mubr.f32.mxu0 0.0
  %1608 = vmatmul.mubr.f32.gmra.mrb[0].mxu0 %v1536
  %v1609 = vpop.f32.mrb[0].mxu0
  %v1610 = vadd.f32 %v1530, %v1609
  %v1611 = vpop.f32.mrb[0].mxu0
  %1612 = vdwg.mxu0
  %v1613 = vmax.f32 %v1605, 0.0
  %v1614 = vmax.f32 %v1610, 0.0
  %v1616 = vlaneseq
  %v1617 = vshrl.u32 %v1616, 7
  %v1618 = vsub.s32 0, %v1617
  %v1619 = vrot.slane %v227, %v1618
  %1621 = vmatprep.subr.mxu0 0.0
  %1622 = vmatpush1.msra.mxu0 %v211
  %1623 = vmatprep.subr.mxu0 0.0
  %1624 = vmatpush1.msra.mxu0 %v212
  %1625 = vmatprep.subr.mxu0 0.0
  %1626 = vmatpush1.msra.mxu0 %v213
  %1627 = vmatprep.subr.mxu0 0.0
  %1628 = vmatpush1.msra.mxu0 %v214
  %1629 = vmatprep.subr.mxu0 0.0
  %1630 = vmatpush1.msra.mxu0 %v215
  %1631 = vmatprep.subr.mxu0 0.0
  %1632 = vmatpush1.msra.mxu0 %v216
  %1633 = vmatprep.subr.mxu0 0.0
  %1634 = vmatpush1.msra.mxu0 %v217
  %1635 = vmatprep.subr.mxu0 0.0
  %1636 = vmatpush1.msra.mxu0 %v218
  %1637 = vmatprep.subr.mxu0 0.0
  %1638 = vmatpush1.msra.mxu0 %v219
  %1639 = vmatprep.subr.mxu0 0.0
  %1640 = vmatpush1.msra.mxu0 %v220
  %1641 = vmatprep.subr.mxu0 0.0
  %1642 = vmatpush1.msra.mxu0 %v221
  %1643 = vmatprep.subr.mxu0 0.0
  %1644 = vmatpush1.msra.mxu0 %v222
  %1645 = vmatprep.subr.mxu0 0.0
  %1646 = vmatpush1.msra.mxu0 %v223
  %1647 = vmatprep.subr.mxu0 0.0
  %1648 = vmatpush1.msra.mxu0 %v224
  %1649 = vmatprep.subr.mxu0 0.0
  %1650 = vmatpush1.msra.mxu0 %v225
  %1651 = vmatprep.subr.mxu0 0.0
  %1652 = vmatpush1.msra.mxu0 %v226
  %1653 = vmatprep.subr.mxu0 0.0
  %1654 = vmatpush1.msra.mxu0 0.0
  %1655 = vmatprep.subr.mxu0 0.0
  %1656 = vmatpush1.msra.mxu0 0.0
  %1657 = vmatprep.subr.mxu0 0.0
  %1658 = vmatpush1.msra.mxu0 0.0
  %1659 = vmatprep.subr.mxu0 0.0
  %1660 = vmatpush1.msra.mxu0 0.0
  %1661 = vmatprep.subr.mxu0 0.0
  %1662 = vmatpush1.msra.mxu0 0.0
  %1663 = vmatprep.subr.mxu0 0.0
  %1664 = vmatpush1.msra.mxu0 0.0
  %1665 = vmatprep.subr.mxu0 0.0
  %1666 = vmatpush1.msra.mxu0 0.0
  %1667 = vmatprep.subr.mxu0 0.0
  %1668 = vmatpush1.msra.mxu0 0.0
  %1669 = vmatprep.subr.mxu0 0.0
  %1670 = vmatpush1.msra.mxu0 0.0
  %1671 = vmatprep.subr.mxu0 0.0
  %1672 = vmatpush1.msra.mxu0 0.0
  %1673 = vmatprep.subr.mxu0 0.0
  %1674 = vmatpush1.msra.mxu0 0.0
  %1675 = vmatprep.subr.mxu0 0.0
  %1676 = vmatpush1.msra.mxu0 0.0
  %1677 = vmatprep.subr.mxu0 0.0
  %1678 = vmatpush1.msra.mxu0 0.0
  %1679 = vmatprep.subr.mxu0 0.0
  %1680 = vmatpush1.msra.mxu0 0.0
  %1681 = vmatprep.subr.mxu0 0.0
  %1682 = vmatpush1.msra.mxu0 0.0
  %1683 = vmatprep.subr.mxu0 0.0
  %1684 = vmatpush1.msra.mxu0 0.0
  %1685 = vmatprep.mubr.f32.mxu0 0.0
  %1686 = vmatmul.mubr.f32.gmra.mrb[0].mxu0 %v1613
  %v1687 = vpop.f32.mrb[0].mxu0
  %v1688 = vadd.f32 %v1619, %v1687
  %v1689 = vpop.f32.mrb[0].mxu0
  %1690 = vmatprep.mubr.f32.mxu0 0.0
  %1691 = vmatmul.mubr.f32.gmra.mrb[0].mxu0 %v1614
  %v1692 = vpop.f32.mrb[0].mxu0
  %v1693 = vadd.f32 %v1619, %v1692
  %v1694 = vpop.f32.mrb[0].mxu0
  %1695 = vdwg.mxu0
  %v1696 = vadd.f32 %v1688, %v1482
  %v1697 = vadd.f32 %v1693, %v1483
  %v1698 = vld [vmem:[%s9] sm:$0xff]
  %v1699 = vld [vmem:[%s9 + $0x8] sm:$0xff]
  %1700 = vmatprep.subr.mxu0 0.0
  %1701 = vmatpush1.msra.mxu0 %v232
  %1702 = vmatprep.subr.mxu0 0.0
  %1703 = vmatpush1.msra.mxu0 %v233
  %1704 = vmatprep.subr.mxu0 0.0
  %1705 = vmatpush1.msra.mxu0 %v234
  %1706 = vmatprep.subr.mxu0 0.0
  %1707 = vmatpush1.msra.mxu0 %v235
  %1708 = vmatprep.subr.mxu0 0.0
  %1709 = vmatpush1.msra.mxu0 %v236
  %1710 = vmatprep.subr.mxu0 0.0
  %1711 = vmatpush1.msra.mxu0 %v237
  %1712 = vmatprep.subr.mxu0 0.0
  %1713 = vmatpush1.msra.mxu0 %v238
  %1714 = vmatprep.subr.mxu0 0.0
  %1715 = vmatpush1.msra.mxu0 %v239
  %1716 = vmatprep.subr.mxu0 0.0
  %1717 = vmatpush1.msra.mxu0 %v240
  %1718 = vmatprep.subr.mxu0 0.0
  %1719 = vmatpush1.msra.mxu0 %v241
  %1720 = vmatprep.subr.mxu0 0.0
  %1721 = vmatpush1.msra.mxu0 %v242
  %1722 = vmatprep.subr.mxu0 0.0
  %1723 = vmatpush1.msra.mxu0 %v243
  %1724 = vmatprep.subr.mxu0 0.0
  %1725 = vmatpush1.msra.mxu0 %v244
  %1726 = vmatprep.subr.mxu0 0.0
  %1727 = vmatpush1.msra.mxu0 %v245
  %1728 = vmatprep.subr.mxu0 0.0
  %1729 = vmatpush1.msra.mxu0 %v246
  %1730 = vmatprep.subr.mxu0 0.0
  %1731 = vmatpush1.msra.mxu0 %v247
  %1732 = vmatprep.subr.mxu0 0.0
  %1733 = vmatpush1.msra.mxu0 0.0
  %1734 = vmatprep.subr.mxu0 0.0
  %1735 = vmatpush1.msra.mxu0 0.0
  %1736 = vmatprep.subr.mxu0 0.0
  %1737 = vmatpush1.msra.mxu0 0.0
  %1738 = vmatprep.subr.mxu0 0.0
  %1739 = vmatpush1.msra.mxu0 0.0
  %1740 = vmatprep.subr.mxu0 0.0
  %1741 = vmatpush1.msra.mxu0 0.0
  %1742 = vmatprep.subr.mxu0 0.0
  %1743 = vmatpush1.msra.mxu0 0.0
  %1744 = vmatprep.subr.mxu0 0.0
  %1745 = vmatpush1.msra.mxu0 0.0
  %1746 = vmatprep.subr.mxu0 0.0
  %1747 = vmatpush1.msra.mxu0 0.0
  %1748 = vmatprep.subr.mxu0 0.0
  %1749 = vmatpush1.msra.mxu0 0.0
  %1750 = vmatprep.subr.mxu0 0.0
  %1751 = vmatpush1.msra.mxu0 0.0
  %1752 = vmatprep.subr.mxu0 0.0
  %1753 = vmatpush1.msra.mxu0 0.0
  %1754 = vmatprep.subr.mxu0 0.0
  %1755 = vmatpush1.msra.mxu0 0.0
  %1756 = vmatprep.subr.mxu0 0.0
  %1757 = vmatpush1.msra.mxu0 0.0
  %1758 = vmatprep.subr.mxu0 0.0
  %1759 = vmatpush1.msra.mxu0 0.0
  %1760 = vmatprep.subr.mxu0 0.0
  %1761 = vmatpush1.msra.mxu0 0.0
  %1762 = vmatprep.subr.mxu0 0.0
  %1763 = vmatpush1.msra.mxu0 0.0
  %1764 = vmatprep.mubr.f32.mxu0 0.0
  %1765 = vmatmul.mubr.f32.gmra.mrb[0].mxu0 %v1698
  %v1766 = vpop.f32.mrb[0].mxu0
  %v1767 = vadd.f32 0.0, %v1766
  %v1768 = vpop.f32.mrb[0].mxu0
  %1769 = vmatprep.mubr.f32.mxu0 0.0
  %1770 = vmatmul.mubr.f32.gmra.mrb[0].mxu0 %v1699
  %v1771 = vpop.f32.mrb[0].mxu0
  %v1772 = vadd.f32 0.0, %v1771
  %v1773 = vpop.f32.mrb[0].mxu0
  %1774 = vdwg.mxu0
  %v1776 = vsel %vm315, %v1696, 0
  %v1779 = vsel %vm315, %v1697, 0
  %1781 = vmatprep.subr.mxu0 0.0
  %1782 = vmatpush1.msra.mxu0 %v228
  %1783 = vmatprep.subr.mxu0 0.0
  %1784 = vmatpush1.msra.mxu0 %v229
  %1785 = vmatprep.subr.mxu0 0.0
  %1786 = vmatpush1.msra.mxu0 %v230
  %1787 = vmatprep.subr.mxu0 0.0
  %1788 = vmatpush1.msra.mxu0 %v231
  %1789 = vmatprep.subr.mxu0 0.0
  %1790 = vmatpush1.msra.mxu0 0.0
  %1791 = vmatprep.subr.mxu0 0.0
  %1792 = vmatpush1.msra.mxu0 0.0
  %1793 = vmatprep.subr.mxu0 0.0
  %1794 = vmatpush1.msra.mxu0 0.0
  %1795 = vmatprep.subr.mxu0 0.0
  %1796 = vmatpush1.msra.mxu0 0.0
  %1797 = vmatprep.subr.mxu0 0.0
  %1798 = vmatpush1.msra.mxu0 0.0
  %1799 = vmatprep.subr.mxu0 0.0
  %1800 = vmatpush1.msra.mxu0 0.0
  %1801 = vmatprep.subr.mxu0 0.0
  %1802 = vmatpush1.msra.mxu0 0.0
  %1803 = vmatprep.subr.mxu0 0.0
  %1804 = vmatpush1.msra.mxu0 0.0
  %1805 = vmatprep.subr.mxu0 0.0
  %1806 = vmatpush1.msra.mxu0 0.0
  %1807 = vmatprep.subr.mxu0 0.0
  %1808 = vmatpush1.msra.mxu0 0.0
  %1809 = vmatprep.subr.mxu0 0.0
  %1810 = vmatpush1.msra.mxu0 0.0
  %1811 = vmatprep.subr.mxu0 0.0
  %1812 = vmatpush1.msra.mxu0 0.0
  %1813 = vmatprep.subr.mxu0 0.0
  %1814 = vmatpush1.msra.mxu0 0.0
  %1815 = vmatprep.subr.mxu0 0.0
  %1816 = vmatpush1.msra.mxu0 0.0
  %1817 = vmatprep.subr.mxu0 0.0
  %1818 = vmatpush1.msra.mxu0 0.0
  %1819 = vmatprep.subr.mxu0 0.0
  %1820 = vmatpush1.msra.mxu0 0.0
  %1821 = vmatprep.subr.mxu0 0.0
  %1822 = vmatpush1.msra.mxu0 0.0
  %1823 = vmatprep.subr.mxu0 0.0
  %1824 = vmatpush1.msra.mxu0 0.0
  %1825 = vmatprep.subr.mxu0 0.0
  %1826 = vmatpush1.msra.mxu0 0.0
  %1827 = vmatprep.subr.mxu0 0.0
  %1828 = vmatpush1.msra.mxu0 0.0
  %1829 = vmatprep.subr.mxu0 0.0
  %1830 = vmatpush1.msra.mxu0 0.0
  %1831 = vmatprep.subr.mxu0 0.0
  %1832 = vmatpush1.msra.mxu0 0.0
  %1833 = vmatprep.subr.mxu0 0.0
  %1834 = vmatpush1.msra.mxu0 0.0
  %1835 = vmatprep.subr.mxu0 0.0
  %1836 = vmatpush1.msra.mxu0 0.0
  %1837 = vmatprep.subr.mxu0 0.0
  %1838 = vmatpush1.msra.mxu0 0.0
  %1839 = vmatprep.subr.mxu0 0.0
  %1840 = vmatpush1.msra.mxu0 0.0
  %1841 = vmatprep.subr.mxu0 0.0
  %1842 = vmatpush1.msra.mxu0 0.0
  %1843 = vmatprep.subr.mxu0 0.0
  %1844 = vmatpush1.msra.mxu0 0.0
  %1845 = vmatprep.mubr.f32.mxu0 0.0
  %1846 = vmatmul.mubr.f32.gmra.mrb[0].mxu0 %v1776
  %v1847 = vpop.f32.mrb[0].mxu0
  %v1848 = vadd.f32 %v1767, %v1847
  %v1849 = vpop.f32.mrb[0].mxu0
  %1850 = vmatprep.mubr.f32.mxu0 0.0
  %1851 = vmatmul.mubr.f32.gmra.mrb[0].mxu0 %v1779
  %v1852 = vpop.f32.mrb[0].mxu0
  %v1853 = vadd.f32 %v1772, %v1852
  %v1854 = vpop.f32.mrb[0].mxu0
  %1855 = vdwg.mxu0
  %v1857 = vlaneseq
  %v1858 = vshrl.u32 %v1857, 7
  %v1859 = vsub.s32 0, %v1858
  %v1860 = vrot.slane %v248, %v1859
  %v1862 = vadd.f32 %v1848, %v1860
  %v1863 = vadd.f32 %v1853, %v1860
  %v1864 = vmax.f32 %v1862, 0.0
  %v1865 = vmax.f32 %v1863, 0.0
  %v1867 = vlaneseq
  %v1868 = vshrl.u32 %v1867, 7
  %v1869 = vsub.s32 0, %v1868
  %v1870 = vrot.slane %v253, %v1869
  %v1873 = vsel %vm315, %v1864, 0
  %v1876 = vsel %vm315, %v1865, 0
  %1878 = vmatprep.subr.mxu0 0.0
  %1879 = vmatpush1.msra.mxu0 %v249
  %1880 = vmatprep.subr.mxu0 0.0
  %1881 = vmatpush1.msra.mxu0 %v250
  %1882 = vmatprep.subr.mxu0 0.0
  %1883 = vmatpush1.msra.mxu0 %v251
  %1884 = vmatprep.subr.mxu0 0.0
  %1885 = vmatpush1.msra.mxu0 %v252
  %1886 = vmatprep.subr.mxu0 0.0
  %1887 = vmatpush1.msra.mxu0 0.0
  %1888 = vmatprep.subr.mxu0 0.0
  %1889 = vmatpush1.msra.mxu0 0.0
  %1890 = vmatprep.subr.mxu0 0.0
  %1891 = vmatpush1.msra.mxu0 0.0
  %1892 = vmatprep.subr.mxu0 0.0
  %1893 = vmatpush1.msra.mxu0 0.0
  %1894 = vmatprep.subr.mxu0 0.0
  %1895 = vmatpush1.msra.mxu0 0.0
  %1896 = vmatprep.subr.mxu0 0.0
  %1897 = vmatpush1.msra.mxu0 0.0
  %1898 = vmatprep.subr.mxu0 0.0
  %1899 = vmatpush1.msra.mxu0 0.0
  %1900 = vmatprep.subr.mxu0 0.0
  %1901 = vmatpush1.msra.mxu0 0.0
  %1902 = vmatprep.subr.mxu0 0.0
  %1903 = vmatpush1.msra.mxu0 0.0
  %1904 = vmatprep.subr.mxu0 0.0
  %1905 = vmatpush1.msra.mxu0 0.0
  %1906 = vmatprep.subr.mxu0 0.0
  %1907 = vmatpush1.msra.mxu0 0.0
  %1908 = vmatprep.subr.mxu0 0.0
  %1909 = vmatpush1.msra.mxu0 0.0
  %1910 = vmatprep.subr.mxu0 0.0
  %1911 = vmatpush1.msra.mxu0 0.0
  %1912 = vmatprep.subr.mxu0 0.0
  %1913 = vmatpush1.msra.mxu0 0.0
  %1914 = vmatprep.subr.mxu0 0.0
  %1915 = vmatpush1.msra.mxu0 0.0
  %1916 = vmatprep.subr.mxu0 0.0
  %1917 = vmatpush1.msra.mxu0 0.0
  %1918 = vmatprep.subr.mxu0 0.0
  %1919 = vmatpush1.msra.mxu0 0.0
  %1920 = vmatprep.subr.mxu0 0.0
  %1921 = vmatpush1.msra.mxu0 0.0
  %1922 = vmatprep.subr.mxu0 0.0
  %1923 = vmatpush1.msra.mxu0 0.0
  %1924 = vmatprep.subr.mxu0 0.0
  %1925 = vmatpush1.msra.mxu0 0.0
  %1926 = vmatprep.subr.mxu0 0.0
  %1927 = vmatpush1.msra.mxu0 0.0
  %1928 = vmatprep.subr.mxu0 0.0
  %1929 = vmatpush1.msra.mxu0 0.0
  %1930 = vmatprep.subr.mxu0 0.0
  %1931 = vmatpush1.msra.mxu0 0.0
  %1932 = vmatprep.subr.mxu0 0.0
  %1933 = vmatpush1.msra.mxu0 0.0
  %1934 = vmatprep.subr.mxu0 0.0
  %1935 = vmatpush1.msra.mxu0 0.0
  %1936 = vmatprep.subr.mxu0 0.0
  %1937 = vmatpush1.msra.mxu0 0.0
  %1938 = vmatprep.subr.mxu0 0.0
  %1939 = vmatpush1.msra.mxu0 0.0
  %1940 = vmatprep.subr.mxu0 0.0
  %1941 = vmatpush1.msra.mxu0 0.0
  %1942 = vmatprep.mubr.f32.mxu0 0.0
  %1943 = vmatmul.mubr.f32.gmra.mrb[0].mxu0 %v1873
  %v1944 = vpop.f32.mrb[0].mxu0
  %v1945 = vadd.f32 %v1870, %v1944
  %v1946 = vpop.f32.mrb[0].mxu0
  %1947 = vmatprep.mubr.f32.mxu0 0.0
  %1948 = vmatmul.mubr.f32.gmra.mrb[0].mxu0 %v1876
  %v1949 = vpop.f32.mrb[0].mxu0
  %v1950 = vadd.f32 %v1870, %v1949
  %v1951 = vpop.f32.mrb[0].mxu0
  %1952 = vdwg.mxu0
  %v1953 = vsel %vm315, %v1945, 0.0
  %1954 = vadd.xlane.f32.xlu0 %v1953
  %v1955 = vpop.xlane.xlu0 %1954
  %v1956 = vsel %vm315, %v1950, 0.0
  %1957 = vadd.xlane.f32.xlu0 %v1956
  %v1958 = vpop.xlane.xlu0 %1957
  %v1959 = vmul.f32 %v1955, %v322
  %v1960 = vmul.f32 %v1958, %v322
  %v1961 = vsub.f32 %v1945, %v1959
  %v1962 = vsub.f32 %v1950, %v1960
  %v1963 = vmul.f32 %v1961, %v1961
  %v1964 = vmul.f32 %v1962, %v1962
  %v1965 = vsel %vm315, %v1963, 0.0
  %1966 = vadd.xlane.f32.xlu0 %v1965
  %v1967 = vpop.xlane.xlu0 %1966
  %v1968 = vsel %vm315, %v1964, 0.0
  %1969 = vadd.xlane.f32.xlu0 %v1968
  %v1970 = vpop.xlane.xlu0 %1969
  %v1971 = vmul.f32 %v1967, %v322
  %v1972 = vmul.f32 %v1970, %v322
  %v1973 = vadd.f32 %v1971, 1e-06
  %v1974 = vadd.f32 %v1972, 1e-06
  %v1975 = vrsqrt.pop %v1973
  %v1976 = vrsqrt.pop %v1974
  %v1977 = vmul.f32 %v1961, %v1975
  %v1978 = vmul.f32 %v1962, %v1976
  %v1980 = vlaneseq
  %v1981 = vshrl.u32 %v1980, 7
  %v1982 = vsub.s32 0, %v1981
  %v1983 = vrot.slane %v254, %v1982
  %v1985 = vmul.f32 %v1977, %v1983
  %v1986 = vmul.f32 %v1978, %v1983
  %v1988 = vlaneseq
  %v1989 = vshrl.u32 %v1988, 7
  %v1990 = vsub.s32 0, %v1989
  %v1991 = vrot.slane %v255, %v1990
  %v1993 = vadd.f32 %v1985, %v1991
  %v1994 = vadd.f32 %v1986, %v1991
  %v1996 = vsel %vm315, %v1993, 0
  %v1999 = vsel %vm315, %v1994, 0
  %2001 = vmatprep.subr.mxu0 0.0
  %2002 = vmatpush1.msra.mxu0 %v256
  %2003 = vmatprep.subr.mxu0 0.0
  %2004 = vmatpush1.msra.mxu0 %v257
  %2005 = vmatprep.subr.mxu0 0.0
  %2006 = vmatpush1.msra.mxu0 %v258
  %2007 = vmatprep.subr.mxu0 0.0
  %2008 = vmatpush1.msra.mxu0 %v259
  %2009 = vmatprep.subr.mxu0 0.0
  %2010 = vmatpush1.msra.mxu0 0.0
  %2011 = vmatprep.subr.mxu0 0.0
  %2012 = vmatpush1.msra.mxu0 0.0
  %2013 = vmatprep.subr.mxu0 0.0
  %2014 = vmatpush1.msra.mxu0 0.0
  %2015 = vmatprep.subr.mxu0 0.0
  %2016 = vmatpush1.msra.mxu0 0.0
  %2017 = vmatprep.subr.mxu0 0.0
  %2018 = vmatpush1.msra.mxu0 0.0
  %2019 = vmatprep.subr.mxu0 0.0
  %2020 = vmatpush1.msra.mxu0 0.0
  %2021 = vmatprep.subr.mxu0 0.0
  %2022 = vmatpush1.msra.mxu0 0.0
  %2023 = vmatprep.subr.mxu0 0.0
  %2024 = vmatpush1.msra.mxu0 0.0
  %2025 = vmatprep.subr.mxu0 0.0
  %2026 = vmatpush1.msra.mxu0 0.0
  %2027 = vmatprep.subr.mxu0 0.0
  %2028 = vmatpush1.msra.mxu0 0.0
  %2029 = vmatprep.subr.mxu0 0.0
  %2030 = vmatpush1.msra.mxu0 0.0
  %2031 = vmatprep.subr.mxu0 0.0
  %2032 = vmatpush1.msra.mxu0 0.0
  %2033 = vmatprep.subr.mxu0 0.0
  %2034 = vmatpush1.msra.mxu0 0.0
  %2035 = vmatprep.subr.mxu0 0.0
  %2036 = vmatpush1.msra.mxu0 0.0
  %2037 = vmatprep.subr.mxu0 0.0
  %2038 = vmatpush1.msra.mxu0 0.0
  %2039 = vmatprep.subr.mxu0 0.0
  %2040 = vmatpush1.msra.mxu0 0.0
  %2041 = vmatprep.subr.mxu0 0.0
  %2042 = vmatpush1.msra.mxu0 0.0
  %2043 = vmatprep.subr.mxu0 0.0
  %2044 = vmatpush1.msra.mxu0 0.0
  %2045 = vmatprep.subr.mxu0 0.0
  %2046 = vmatpush1.msra.mxu0 0.0
  %2047 = vmatprep.subr.mxu0 0.0
  %2048 = vmatpush1.msra.mxu0 0.0
  %2049 = vmatprep.subr.mxu0 0.0
  %2050 = vmatpush1.msra.mxu0 0.0
  %2051 = vmatprep.subr.mxu0 0.0
  %2052 = vmatpush1.msra.mxu0 0.0
  %2053 = vmatprep.subr.mxu0 0.0
  %2054 = vmatpush1.msra.mxu0 0.0
  %2055 = vmatprep.subr.mxu0 0.0
  %2056 = vmatpush1.msra.mxu0 0.0
  %2057 = vmatprep.subr.mxu0 0.0
  %2058 = vmatpush1.msra.mxu0 0.0
  %2059 = vmatprep.subr.mxu0 0.0
  %2060 = vmatpush1.msra.mxu0 0.0
  %2061 = vmatprep.subr.mxu0 0.0
  %2062 = vmatpush1.msra.mxu0 0.0
  %2063 = vmatprep.subr.mxu0 0.0
  %2064 = vmatpush1.msra.mxu0 0.0
  %2065 = vmatprep.mubr.f32.mxu0 0.0
  %2066 = vmatmul.mubr.f32.gmra.mrb[0].mxu0 %v1996
  %v2067 = vpop.f32.mrb[0].mxu0
  %v2068 = vadd.f32 0.0, %v2067
  %v2069 = vpop.f32.mrb[0].mxu0
  %2070 = vmatprep.mubr.f32.mxu0 0.0
  %2071 = vmatmul.mubr.f32.gmra.mrb[0].mxu0 %v1999
  %v2072 = vpop.f32.mrb[0].mxu0
  %v2073 = vadd.f32 0.0, %v2072
  %v2074 = vpop.f32.mrb[0].mxu0
  %2075 = vdwg.mxu0
  %2077 = vrot.lane.b32.xlu0 %v2068, 96
  %v2078 = vpop.permute.xlu0 %2077
  %vm2079 = vcmask 64512
  %v2080 = vsel %vm2079, %v2068, 0
  %v2082 = vsel %vm2079, %v2078, 0
  %2084 = vmatprep.subr.mxu0 0.0
  %2085 = vmatpush1.xpose.msra.mxu0 %v2082
  %2086 = vmatprep.subr.mxu0 0.0
  %2087 = vmatpush1.xpose.msra.mxu0 0.0
  %2088 = vmatprep.subr.mxu0 0.0
  %2089 = vmatpush1.xpose.msra.mxu0 0.0
  %2090 = vmatprep.subr.mxu0 0.0
  %2091 = vmatpush1.xpose.msra.mxu0 0.0
  %2092 = vmatprep.subr.mxu0 0.0
  %2093 = vmatpush1.xpose.msra.mxu0 0.0
  %2094 = vmatprep.subr.mxu0 0.0
  %2095 = vmatpush1.xpose.msra.mxu0 0.0
  %2096 = vmatprep.subr.mxu0 0.0
  %2097 = vmatpush1.xpose.msra.mxu0 0.0
  %2098 = vmatprep.subr.mxu0 0.0
  %2099 = vmatpush1.xpose.msra.mxu0 0.0
  %2100 = vmatprep.subr.mxu0 0.0
  %2101 = vmatpush1.xpose.msra.mxu0 0.0
  %2102 = vmatprep.subr.mxu0 0.0
  %2103 = vmatpush1.xpose.msra.mxu0 0.0
  %2104 = vmatprep.subr.mxu0 0.0
  %2105 = vmatpush1.xpose.msra.mxu0 0.0
  %2106 = vmatprep.subr.mxu0 0.0
  %2107 = vmatpush1.xpose.msra.mxu0 0.0
  %2108 = vmatprep.subr.mxu0 0.0
  %2109 = vmatpush1.xpose.msra.mxu0 0.0
  %2110 = vmatprep.subr.mxu0 0.0
  %2111 = vmatpush1.xpose.msra.mxu0 0.0
  %2112 = vmatprep.subr.mxu0 0.0
  %2113 = vmatpush1.xpose.msra.mxu0 0.0
  %2114 = vmatprep.subr.mxu0 0.0
  %2115 = vmatpush1.xpose.msra.mxu0 0.0
  %2116 = vmatprep.subr.mxu0 0.0
  %2117 = vmatpush1.xpose.msra.mxu0 0.0
  %2118 = vmatprep.subr.mxu0 0.0
  %2119 = vmatpush1.xpose.msra.mxu0 0.0
  %2120 = vmatprep.subr.mxu0 0.0
  %2121 = vmatpush1.xpose.msra.mxu0 0.0
  %2122 = vmatprep.subr.mxu0 0.0
  %2123 = vmatpush1.xpose.msra.mxu0 0.0
  %2124 = vmatprep.subr.mxu0 0.0
  %2125 = vmatpush1.xpose.msra.mxu0 0.0
  %2126 = vmatprep.subr.mxu0 0.0
  %2127 = vmatpush1.xpose.msra.mxu0 0.0
  %2128 = vmatprep.subr.mxu0 0.0
  %2129 = vmatpush1.xpose.msra.mxu0 0.0
  %2130 = vmatprep.subr.mxu0 0.0
  %2131 = vmatpush1.xpose.msra.mxu0 0.0
  %2132 = vmatprep.subr.mxu0 0.0
  %2133 = vmatpush1.xpose.msra.mxu0 0.0
  %2134 = vmatprep.subr.mxu0 0.0
  %2135 = vmatpush1.xpose.msra.mxu0 0.0
  %2136 = vmatprep.subr.mxu0 0.0
  %2137 = vmatpush1.xpose.msra.mxu0 0.0
  %2138 = vmatprep.subr.mxu0 0.0
  %2139 = vmatpush1.xpose.msra.mxu0 0.0
  %2140 = vmatprep.subr.mxu0 0.0
  %2141 = vmatpush1.xpose.msra.mxu0 0.0
  %2142 = vmatprep.subr.mxu0 0.0
  %2143 = vmatpush1.xpose.msra.mxu0 0.0
  %2144 = vmatprep.subr.mxu0 0.0
  %2145 = vmatpush1.xpose.msra.mxu0 0.0
  %2146 = vmatprep.subr.mxu0 0.0
  %2147 = vmatpush1.xpose.msra.mxu0 0.0
  %2148 = vmatprep.mubr.f32.mxu0 0.0
  %2149 = vmatmul.mubr.f32.gmra.mrb[0].mxu0 %v2080
  %v2150 = vpop.f32.mrb[0].mxu0
  %v2151 = vadd.f32 0.0, %v2150
  %v2152 = vpop.f32.mrb[0].mxu0
  %2153 = vdwg.mxu0
  %2155 = vrot.lane.b32.xlu0 %v2073, 96
  %v2156 = vpop.permute.xlu0 %2155
  %v2157 = vsel %vm2079, %v2073, 0
  %v2159 = vsel %vm2079, %v2156, 0
  %2161 = vmatprep.subr.mxu0 0.0
  %2162 = vmatpush1.xpose.msra.mxu0 %v2159
  %2163 = vmatprep.subr.mxu0 0.0
  %2164 = vmatpush1.xpose.msra.mxu0 0.0
  %2165 = vmatprep.subr.mxu0 0.0
  %2166 = vmatpush1.xpose.msra.mxu0 0.0
  %2167 = vmatprep.subr.mxu0 0.0
  %2168 = vmatpush1.xpose.msra.mxu0 0.0
  %2169 = vmatprep.subr.mxu0 0.0
  %2170 = vmatpush1.xpose.msra.mxu0 0.0
  %2171 = vmatprep.subr.mxu0 0.0
  %2172 = vmatpush1.xpose.msra.mxu0 0.0
  %2173 = vmatprep.subr.mxu0 0.0
  %2174 = vmatpush1.xpose.msra.mxu0 0.0
  %2175 = vmatprep.subr.mxu0 0.0
  %2176 = vmatpush1.xpose.msra.mxu0 0.0
  %2177 = vmatprep.subr.mxu0 0.0
  %2178 = vmatpush1.xpose.msra.mxu0 0.0
  %2179 = vmatprep.subr.mxu0 0.0
  %2180 = vmatpush1.xpose.msra.mxu0 0.0
  %2181 = vmatprep.subr.mxu0 0.0
  %2182 = vmatpush1.xpose.msra.mxu0 0.0
  %2183 = vmatprep.subr.mxu0 0.0
  %2184 = vmatpush1.xpose.msra.mxu0 0.0
  %2185 = vmatprep.subr.mxu0 0.0
  %2186 = vmatpush1.xpose.msra.mxu0 0.0
  %2187 = vmatprep.subr.mxu0 0.0
  %2188 = vmatpush1.xpose.msra.mxu0 0.0
  %2189 = vmatprep.subr.mxu0 0.0
  %2190 = vmatpush1.xpose.msra.mxu0 0.0
  %2191 = vmatprep.subr.mxu0 0.0
  %2192 = vmatpush1.xpose.msra.mxu0 0.0
  %2193 = vmatprep.subr.mxu0 0.0
  %2194 = vmatpush1.xpose.msra.mxu0 0.0
  %2195 = vmatprep.subr.mxu0 0.0
  %2196 = vmatpush1.xpose.msra.mxu0 0.0
  %2197 = vmatprep.subr.mxu0 0.0
  %2198 = vmatpush1.xpose.msra.mxu0 0.0
  %2199 = vmatprep.subr.mxu0 0.0
  %2200 = vmatpush1.xpose.msra.mxu0 0.0
  %2201 = vmatprep.subr.mxu0 0.0
  %2202 = vmatpush1.xpose.msra.mxu0 0.0
  %2203 = vmatprep.subr.mxu0 0.0
  %2204 = vmatpush1.xpose.msra.mxu0 0.0
  %2205 = vmatprep.subr.mxu0 0.0
  %2206 = vmatpush1.xpose.msra.mxu0 0.0
  %2207 = vmatprep.subr.mxu0 0.0
  %2208 = vmatpush1.xpose.msra.mxu0 0.0
  %2209 = vmatprep.subr.mxu0 0.0
  %2210 = vmatpush1.xpose.msra.mxu0 0.0
  %2211 = vmatprep.subr.mxu0 0.0
  %2212 = vmatpush1.xpose.msra.mxu0 0.0
  %2213 = vmatprep.subr.mxu0 0.0
  %2214 = vmatpush1.xpose.msra.mxu0 0.0
  %2215 = vmatprep.subr.mxu0 0.0
  %2216 = vmatpush1.xpose.msra.mxu0 0.0
  %2217 = vmatprep.subr.mxu0 0.0
  %2218 = vmatpush1.xpose.msra.mxu0 0.0
  %2219 = vmatprep.subr.mxu0 0.0
  %2220 = vmatpush1.xpose.msra.mxu0 0.0
  %2221 = vmatprep.subr.mxu0 0.0
  %2222 = vmatpush1.xpose.msra.mxu0 0.0
  %2223 = vmatprep.subr.mxu0 0.0
  %2224 = vmatpush1.xpose.msra.mxu0 0.0
  %2225 = vmatprep.mubr.f32.mxu0 0.0
  %2226 = vmatmul.mubr.f32.gmra.mrb[0].mxu0 %v2157
  %v2227 = vpop.f32.mrb[0].mxu0
  %v2228 = vadd.f32 0.0, %v2227
  %v2229 = vpop.f32.mrb[0].mxu0
  %2230 = vdwg.mxu0
  %v2231 = vmul.f32 %v2151, 0.35355338
  %v2232 = vmul.f32 %v2228, 0.35355338
  %v2233 = vsel %vm2079, %v2231, -inf
  %2234 = vmax.xlane.f32.xlu0 %v2233
  %v2235 = vpop.xlane.xlu0 %2234
  %v2236 = vsel %vm2079, %v2232, -inf
  %2237 = vmax.xlane.f32.xlu0 %v2236
  %v2238 = vpop.xlane.xlu0 %2237
  %v2239 = vsub.f32 %v2231, %v2235
  %v2240 = vsub.f32 %v2232, %v2238
  %v2241 = vmul.f32 %v2239, 1.442695
  %v2242 = vpow.pop %v2241
  %v2243 = vmul.f32 %v2240, 1.442695
  %v2244 = vpow.pop %v2243
  %v2245 = vsel %vm2079, %v2242, 0.0
  %2246 = vadd.xlane.f32.xlu0 %v2245
  %v2247 = vpop.xlane.xlu0 %2246
  %v2248 = vsel %vm2079, %v2244, 0.0
  %2249 = vadd.xlane.f32.xlu0 %v2248
  %v2250 = vpop.xlane.xlu0 %2249
  %v2251 = vrcp.pop %v2247
  %v2252 = vrcp.pop %v2250
  %v2253 = vmul.f32 %v2242, %v2251
  %v2254 = vmul.f32 %v2244, %v2252
  %2255 = vrot.lane.b32.xlu0 %v2068, 64
  %v2256 = vpop.permute.xlu0 %2255
  %v2259 = vsel %vm2079, %v2253, 0
  %2261 = vmatprep.subr.mxu0 0.0
  %2262 = vmatpush1.msra.mxu0 %v2256
  %2263 = vmatprep.subr.mxu0 0.0
  %2264 = vmatpush1.msra.mxu0 0.0
  %2265 = vmatprep.subr.mxu0 0.0
  %2266 = vmatpush1.msra.mxu0 0.0
  %2267 = vmatprep.subr.mxu0 0.0
  %2268 = vmatpush1.msra.mxu0 0.0
  %2269 = vmatprep.subr.mxu0 0.0
  %2270 = vmatpush1.msra.mxu0 0.0
  %2271 = vmatprep.subr.mxu0 0.0
  %2272 = vmatpush1.msra.mxu0 0.0
  %2273 = vmatprep.subr.mxu0 0.0
  %2274 = vmatpush1.msra.mxu0 0.0
  %2275 = vmatprep.subr.mxu0 0.0
  %2276 = vmatpush1.msra.mxu0 0.0
  %2277 = vmatprep.subr.mxu0 0.0
  %2278 = vmatpush1.msra.mxu0 0.0
  %2279 = vmatprep.subr.mxu0 0.0
  %2280 = vmatpush1.msra.mxu0 0.0
  %2281 = vmatprep.subr.mxu0 0.0
  %2282 = vmatpush1.msra.mxu0 0.0
  %2283 = vmatprep.subr.mxu0 0.0
  %2284 = vmatpush1.msra.mxu0 0.0
  %2285 = vmatprep.subr.mxu0 0.0
  %2286 = vmatpush1.msra.mxu0 0.0
  %2287 = vmatprep.subr.mxu0 0.0
  %2288 = vmatpush1.msra.mxu0 0.0
  %2289 = vmatprep.subr.mxu0 0.0
  %2290 = vmatpush1.msra.mxu0 0.0
  %2291 = vmatprep.subr.mxu0 0.0
  %2292 = vmatpush1.msra.mxu0 0.0
  %2293 = vmatprep.subr.mxu0 0.0
  %2294 = vmatpush1.msra.mxu0 0.0
  %2295 = vmatprep.subr.mxu0 0.0
  %2296 = vmatpush1.msra.mxu0 0.0
  %2297 = vmatprep.subr.mxu0 0.0
  %2298 = vmatpush1.msra.mxu0 0.0
  %2299 = vmatprep.subr.mxu0 0.0
  %2300 = vmatpush1.msra.mxu0 0.0
  %2301 = vmatprep.subr.mxu0 0.0
  %2302 = vmatpush1.msra.mxu0 0.0
  %2303 = vmatprep.subr.mxu0 0.0
  %2304 = vmatpush1.msra.mxu0 0.0
  %2305 = vmatprep.subr.mxu0 0.0
  %2306 = vmatpush1.msra.mxu0 0.0
  %2307 = vmatprep.subr.mxu0 0.0
  %2308 = vmatpush1.msra.mxu0 0.0
  %2309 = vmatprep.subr.mxu0 0.0
  %2310 = vmatpush1.msra.mxu0 0.0
  %2311 = vmatprep.subr.mxu0 0.0
  %2312 = vmatpush1.msra.mxu0 0.0
  %2313 = vmatprep.subr.mxu0 0.0
  %2314 = vmatpush1.msra.mxu0 0.0
  %2315 = vmatprep.subr.mxu0 0.0
  %2316 = vmatpush1.msra.mxu0 0.0
  %2317 = vmatprep.subr.mxu0 0.0
  %2318 = vmatpush1.msra.mxu0 0.0
  %2319 = vmatprep.subr.mxu0 0.0
  %2320 = vmatpush1.msra.mxu0 0.0
  %2321 = vmatprep.subr.mxu0 0.0
  %2322 = vmatpush1.msra.mxu0 0.0
  %2323 = vmatprep.subr.mxu0 0.0
  %2324 = vmatpush1.msra.mxu0 0.0
  %2325 = vmatprep.mubr.f32.mxu0 0.0
  %2326 = vmatmul.mubr.f32.gmra.mrb[0].mxu0 %v2259
  %v2327 = vpop.f32.mrb[0].mxu0
  %v2328 = vadd.f32 0.0, %v2327
  %v2329 = vpop.f32.mrb[0].mxu0
  %2330 = vdwg.mxu0
  %2331 = vrot.lane.b32.xlu0 %v2073, 64
  %v2332 = vpop.permute.xlu0 %2331
  %v2335 = vsel %vm2079, %v2254, 0
  %2337 = vmatprep.subr.mxu0 0.0
  %2338 = vmatpush1.msra.mxu0 %v2332
  %2339 = vmatprep.subr.mxu0 0.0
  %2340 = vmatpush1.msra.mxu0 0.0
  %2341 = vmatprep.subr.mxu0 0.0
  %2342 = vmatpush1.msra.mxu0 0.0
  %2343 = vmatprep.subr.mxu0 0.0
  %2344 = vmatpush1.msra.mxu0 0.0
  %2345 = vmatprep.subr.mxu0 0.0
  %2346 = vmatpush1.msra.mxu0 0.0
  %2347 = vmatprep.subr.mxu0 0.0
  %2348 = vmatpush1.msra.mxu0 0.0
  %2349 = vmatprep.subr.mxu0 0.0
  %2350 = vmatpush1.msra.mxu0 0.0
  %2351 = vmatprep.subr.mxu0 0.0
  %2352 = vmatpush1.msra.mxu0 0.0
  %2353 = vmatprep.subr.mxu0 0.0
  %2354 = vmatpush1.msra.mxu0 0.0
  %2355 = vmatprep.subr.mxu0 0.0
  %2356 = vmatpush1.msra.mxu0 0.0
  %2357 = vmatprep.subr.mxu0 0.0
  %2358 = vmatpush1.msra.mxu0 0.0
  %2359 = vmatprep.subr.mxu0 0.0
  %2360 = vmatpush1.msra.mxu0 0.0
  %2361 = vmatprep.subr.mxu0 0.0
  %2362 = vmatpush1.msra.mxu0 0.0
  %2363 = vmatprep.subr.mxu0 0.0
  %2364 = vmatpush1.msra.mxu0 0.0
  %2365 = vmatprep.subr.mxu0 0.0
  %2366 = vmatpush1.msra.mxu0 0.0
  %2367 = vmatprep.subr.mxu0 0.0
  %2368 = vmatpush1.msra.mxu0 0.0
  %2369 = vmatprep.subr.mxu0 0.0
  %2370 = vmatpush1.msra.mxu0 0.0
  %2371 = vmatprep.subr.mxu0 0.0
  %2372 = vmatpush1.msra.mxu0 0.0
  %2373 = vmatprep.subr.mxu0 0.0
  %2374 = vmatpush1.msra.mxu0 0.0
  %2375 = vmatprep.subr.mxu0 0.0
  %2376 = vmatpush1.msra.mxu0 0.0
  %2377 = vmatprep.subr.mxu0 0.0
  %2378 = vmatpush1.msra.mxu0 0.0
  %2379 = vmatprep.subr.mxu0 0.0
  %2380 = vmatpush1.msra.mxu0 0.0
  %2381 = vmatprep.subr.mxu0 0.0
  %2382 = vmatpush1.msra.mxu0 0.0
  %2383 = vmatprep.subr.mxu0 0.0
  %2384 = vmatpush1.msra.mxu0 0.0
  %2385 = vmatprep.subr.mxu0 0.0
  %2386 = vmatpush1.msra.mxu0 0.0
  %2387 = vmatprep.subr.mxu0 0.0
  %2388 = vmatpush1.msra.mxu0 0.0
  %2389 = vmatprep.subr.mxu0 0.0
  %2390 = vmatpush1.msra.mxu0 0.0
  %2391 = vmatprep.subr.mxu0 0.0
  %2392 = vmatpush1.msra.mxu0 0.0
  %2393 = vmatprep.subr.mxu0 0.0
  %2394 = vmatpush1.msra.mxu0 0.0
  %2395 = vmatprep.subr.mxu0 0.0
  %2396 = vmatpush1.msra.mxu0 0.0
  %2397 = vmatprep.subr.mxu0 0.0
  %2398 = vmatpush1.msra.mxu0 0.0
  %2399 = vmatprep.subr.mxu0 0.0
  %2400 = vmatpush1.msra.mxu0 0.0
  %2401 = vmatprep.mubr.f32.mxu0 0.0
  %2402 = vmatmul.mubr.f32.gmra.mrb[0].mxu0 %v2335
  %v2403 = vpop.f32.mrb[0].mxu0
  %v2404 = vadd.f32 0.0, %v2403
  %v2405 = vpop.f32.mrb[0].mxu0
  %2406 = vdwg.mxu0
  %2407 = vrot.lane.b32.xlu0 %v2068, 120
  %v2408 = vpop.permute.xlu0 %2407
  %2409 = vrot.lane.b32.xlu0 %v2068, 88
  %v2410 = vpop.permute.xlu0 %2409
  %v2411 = vsel %vm2079, %v2408, 0
  %v2413 = vsel %vm2079, %v2410, 0
  %2415 = vmatprep.subr.mxu0 0.0
  %2416 = vmatpush1.xpose.msra.mxu0 %v2413
  %2417 = vmatprep.subr.mxu0 0.0
  %2418 = vmatpush1.xpose.msra.mxu0 0.0
  %2419 = vmatprep.subr.mxu0 0.0
  %2420 = vmatpush1.xpose.msra.mxu0 0.0
  %2421 = vmatprep.subr.mxu0 0.0
  %2422 = vmatpush1.xpose.msra.mxu0 0.0
  %2423 = vmatprep.subr.mxu0 0.0
  %2424 = vmatpush1.xpose.msra.mxu0 0.0
  %2425 = vmatprep.subr.mxu0 0.0
  %2426 = vmatpush1.xpose.msra.mxu0 0.0
  %2427 = vmatprep.subr.mxu0 0.0
  %2428 = vmatpush1.xpose.msra.mxu0 0.0
  %2429 = vmatprep.subr.mxu0 0.0
  %2430 = vmatpush1.xpose.msra.mxu0 0.0
  %2431 = vmatprep.subr.mxu0 0.0
  %2432 = vmatpush1.xpose.msra.mxu0 0.0
  %2433 = vmatprep.subr.mxu0 0.0
  %2434 = vmatpush1.xpose.msra.mxu0 0.0
  %2435 = vmatprep.subr.mxu0 0.0
  %2436 = vmatpush1.xpose.msra.mxu0 0.0
  %2437 = vmatprep.subr.mxu0 0.0
  %2438 = vmatpush1.xpose.msra.mxu0 0.0
  %2439 = vmatprep.subr.mxu0 0.0
  %2440 = vmatpush1.xpose.msra.mxu0 0.0
  %2441 = vmatprep.subr.mxu0 0.0
  %2442 = vmatpush1.xpose.msra.mxu0 0.0
  %2443 = vmatprep.subr.mxu0 0.0
  %2444 = vmatpush1.xpose.msra.mxu0 0.0
  %2445 = vmatprep.subr.mxu0 0.0
  %2446 = vmatpush1.xpose.msra.mxu0 0.0
  %2447 = vmatprep.subr.mxu0 0.0
  %2448 = vmatpush1.xpose.msra.mxu0 0.0
  %2449 = vmatprep.subr.mxu0 0.0
  %2450 = vmatpush1.xpose.msra.mxu0 0.0
  %2451 = vmatprep.subr.mxu0 0.0
  %2452 = vmatpush1.xpose.msra.mxu0 0.0
  %2453 = vmatprep.subr.mxu0 0.0
  %2454 = vmatpush1.xpose.msra.mxu0 0.0
  %2455 = vmatprep.subr.mxu0 0.0
  %2456 = vmatpush1.xpose.msra.mxu0 0.0
  %2457 = vmatprep.subr.mxu0 0.0
  %2458 = vmatpush1.xpose.msra.mxu0 0.0
  %2459 = vmatprep.subr.mxu0 0.0
  %2460 = vmatpush1.xpose.msra.mxu0 0.0
  %2461 = vmatprep.subr.mxu0 0.0
  %2462 = vmatpush1.xpose.msra.mxu0 0.0
  %2463 = vmatprep.subr.mxu0 0.0
  %2464 = vmatpush1.xpose.msra.mxu0 0.0
  %2465 = vmatprep.subr.mxu0 0.0
  %2466 = vmatpush1.xpose.msra.mxu0 0.0
  %2467 = vmatprep.subr.mxu0 0.0
  %2468 = vmatpush1.xpose.msra.mxu0 0.0
  %2469 = vmatprep.subr.mxu0 0.0
  %2470 = vmatpush1.xpose.msra.mxu0 0.0
  %2471 = vmatprep.subr.mxu0 0.0
  %2472 = vmatpush1.xpose.msra.mxu0 0.0
  %2473 = vmatprep.subr.mxu0 0.0
  %2474 = vmatpush1.xpose.msra.mxu0 0.0
  %2475 = vmatprep.subr.mxu0 0.0
  %2476 = vmatpush1.xpose.msra.mxu0 0.0
  %2477 = vmatprep.subr.mxu0 0.0
  %2478 = vmatpush1.xpose.msra.mxu0 0.0
  %2479 = vmatprep.mubr.f32.mxu0 0.0
  %2480 = vmatmul.mubr.f32.gmra.mrb[0].mxu0 %v2411
  %v2481 = vpop.f32.mrb[0].mxu0
  %v2482 = vadd.f32 0.0, %v2481
  %v2483 = vpop.f32.mrb[0].mxu0
  %2484 = vdwg.mxu0
  %2485 = vrot.lane.b32.xlu0 %v2073, 120
  %v2486 = vpop.permute.xlu0 %2485
  %2487 = vrot.lane.b32.xlu0 %v2073, 88
  %v2488 = vpop.permute.xlu0 %2487
  %v2489 = vsel %vm2079, %v2486, 0
  %v2491 = vsel %vm2079, %v2488, 0
  %2493 = vmatprep.subr.mxu0 0.0
  %2494 = vmatpush1.xpose.msra.mxu0 %v2491
  %2495 = vmatprep.subr.mxu0 0.0
  %2496 = vmatpush1.xpose.msra.mxu0 0.0
  %2497 = vmatprep.subr.mxu0 0.0
  %2498 = vmatpush1.xpose.msra.mxu0 0.0
  %2499 = vmatprep.subr.mxu0 0.0
  %2500 = vmatpush1.xpose.msra.mxu0 0.0
  %2501 = vmatprep.subr.mxu0 0.0
  %2502 = vmatpush1.xpose.msra.mxu0 0.0
  %2503 = vmatprep.subr.mxu0 0.0
  %2504 = vmatpush1.xpose.msra.mxu0 0.0
  %2505 = vmatprep.subr.mxu0 0.0
  %2506 = vmatpush1.xpose.msra.mxu0 0.0
  %2507 = vmatprep.subr.mxu0 0.0
  %2508 = vmatpush1.xpose.msra.mxu0 0.0
  %2509 = vmatprep.subr.mxu0 0.0
  %2510 = vmatpush1.xpose.msra.mxu0 0.0
  %2511 = vmatprep.subr.mxu0 0.0
  %2512 = vmatpush1.xpose.msra.mxu0 0.0
  %2513 = vmatprep.subr.mxu0 0.0
  %2514 = vmatpush1.xpose.msra.mxu0 0.0
  %2515 = vmatprep.subr.mxu0 0.0
  %2516 = vmatpush1.xpose.msra.mxu0 0.0
  %2517 = vmatprep.subr.mxu0 0.0
  %2518 = vmatpush1.xpose.msra.mxu0 0.0
  %2519 = vmatprep.subr.mxu0 0.0
  %2520 = vmatpush1.xpose.msra.mxu0 0.0
  %2521 = vmatprep.subr.mxu0 0.0
  %2522 = vmatpush1.xpose.msra.mxu0 0.0
  %2523 = vmatprep.subr.mxu0 0.0
  %2524 = vmatpush1.xpose.msra.mxu0 0.0
  %2525 = vmatprep.subr.mxu0 0.0
  %2526 = vmatpush1.xpose.msra.mxu0 0.0
  %2527 = vmatprep.subr.mxu0 0.0
  %2528 = vmatpush1.xpose.msra.mxu0 0.0
  %2529 = vmatprep.subr.mxu0 0.0
  %2530 = vmatpush1.xpose.msra.mxu0 0.0
  %2531 = vmatprep.subr.mxu0 0.0
  %2532 = vmatpush1.xpose.msra.mxu0 0.0
  %2533 = vmatprep.subr.mxu0 0.0
  %2534 = vmatpush1.xpose.msra.mxu0 0.0
  %2535 = vmatprep.subr.mxu0 0.0
  %2536 = vmatpush1.xpose.msra.mxu0 0.0
  %2537 = vmatprep.subr.mxu0 0.0
  %2538 = vmatpush1.xpose.msra.mxu0 0.0
  %2539 = vmatprep.subr.mxu0 0.0
  %2540 = vmatpush1.xpose.msra.mxu0 0.0
  %2541 = vmatprep.subr.mxu0 0.0
  %2542 = vmatpush1.xpose.msra.mxu0 0.0
  %2543 = vmatprep.subr.mxu0 0.0
  %2544 = vmatpush1.xpose.msra.mxu0 0.0
  %2545 = vmatprep.subr.mxu0 0.0
  %2546 = vmatpush1.xpose.msra.mxu0 0.0
  %2547 = vmatprep.subr.mxu0 0.0
  %2548 = vmatpush1.xpose.msra.mxu0 0.0
  %2549 = vmatprep.subr.mxu0 0.0
  %2550 = vmatpush1.xpose.msra.mxu0 0.0
  %2551 = vmatprep.subr.mxu0 0.0
  %2552 = vmatpush1.xpose.msra.mxu0 0.0
  %2553 = vmatprep.subr.mxu0 0.0
  %2554 = vmatpush1.xpose.msra.mxu0 0.0
  %2555 = vmatprep.subr.mxu0 0.0
  %2556 = vmatpush1.xpose.msra.mxu0 0.0
  %2557 = vmatprep.mubr.f32.mxu0 0.0
  %2558 = vmatmul.mubr.f32.gmra.mrb[0].mxu0 %v2489
  %v2559 = vpop.f32.mrb[0].mxu0
  %v2560 = vadd.f32 0.0, %v2559
  %v2561 = vpop.f32.mrb[0].mxu0
  %2562 = vdwg.mxu0
  %v2563 = vmul.f32 %v2482, 0.35355338
  %v2564 = vmul.f32 %v2560, 0.35355338
  %v2565 = vsel %vm2079, %v2563, -inf
  %2566 = vmax.xlane.f32.xlu0 %v2565
  %v2567 = vpop.xlane.xlu0 %2566
  %v2568 = vsel %vm2079, %v2564, -inf
  %2569 = vmax.xlane.f32.xlu0 %v2568
  %v2570 = vpop.xlane.xlu0 %2569
  %v2571 = vsub.f32 %v2563, %v2567
  %v2572 = vsub.f32 %v2564, %v2570
  %v2573 = vmul.f32 %v2571, 1.442695
  %v2574 = vpow.pop %v2573
  %v2575 = vmul.f32 %v2572, 1.442695
  %v2576 = vpow.pop %v2575
  %v2577 = vsel %vm2079, %v2574, 0.0
  %2578 = vadd.xlane.f32.xlu0 %v2577
  %v2579 = vpop.xlane.xlu0 %2578
  %v2580 = vsel %vm2079, %v2576, 0.0
  %2581 = vadd.xlane.f32.xlu0 %v2580
  %v2582 = vpop.xlane.xlu0 %2581
  %v2583 = vrcp.pop %v2579
  %v2584 = vrcp.pop %v2582
  %v2585 = vmul.f32 %v2574, %v2583
  %v2586 = vmul.f32 %v2576, %v2584
  %2587 = vrot.lane.b32.xlu0 %v2068, 56
  %v2588 = vpop.permute.xlu0 %2587
  %v2591 = vsel %vm2079, %v2585, 0
  %2593 = vmatprep.subr.mxu0 0.0
  %2594 = vmatpush1.msra.mxu0 %v2588
  %2595 = vmatprep.subr.mxu0 0.0
  %2596 = vmatpush1.msra.mxu0 0.0
  %2597 = vmatprep.subr.mxu0 0.0
  %2598 = vmatpush1.msra.mxu0 0.0
  %2599 = vmatprep.subr.mxu0 0.0
  %2600 = vmatpush1.msra.mxu0 0.0
  %2601 = vmatprep.subr.mxu0 0.0
  %2602 = vmatpush1.msra.mxu0 0.0
  %2603 = vmatprep.subr.mxu0 0.0
  %2604 = vmatpush1.msra.mxu0 0.0
  %2605 = vmatprep.subr.mxu0 0.0
  %2606 = vmatpush1.msra.mxu0 0.0
  %2607 = vmatprep.subr.mxu0 0.0
  %2608 = vmatpush1.msra.mxu0 0.0
  %2609 = vmatprep.subr.mxu0 0.0
  %2610 = vmatpush1.msra.mxu0 0.0
  %2611 = vmatprep.subr.mxu0 0.0
  %2612 = vmatpush1.msra.mxu0 0.0
  %2613 = vmatprep.subr.mxu0 0.0
  %2614 = vmatpush1.msra.mxu0 0.0
  %2615 = vmatprep.subr.mxu0 0.0
  %2616 = vmatpush1.msra.mxu0 0.0
  %2617 = vmatprep.subr.mxu0 0.0
  %2618 = vmatpush1.msra.mxu0 0.0
  %2619 = vmatprep.subr.mxu0 0.0
  %2620 = vmatpush1.msra.mxu0 0.0
  %2621 = vmatprep.subr.mxu0 0.0
  %2622 = vmatpush1.msra.mxu0 0.0
  %2623 = vmatprep.subr.mxu0 0.0
  %2624 = vmatpush1.msra.mxu0 0.0
  %2625 = vmatprep.subr.mxu0 0.0
  %2626 = vmatpush1.msra.mxu0 0.0
  %2627 = vmatprep.subr.mxu0 0.0
  %2628 = vmatpush1.msra.mxu0 0.0
  %2629 = vmatprep.subr.mxu0 0.0
  %2630 = vmatpush1.msra.mxu0 0.0
  %2631 = vmatprep.subr.mxu0 0.0
  %2632 = vmatpush1.msra.mxu0 0.0
  %2633 = vmatprep.subr.mxu0 0.0
  %2634 = vmatpush1.msra.mxu0 0.0
  %2635 = vmatprep.subr.mxu0 0.0
  %2636 = vmatpush1.msra.mxu0 0.0
  %2637 = vmatprep.subr.mxu0 0.0
  %2638 = vmatpush1.msra.mxu0 0.0
  %2639 = vmatprep.subr.mxu0 0.0
  %2640 = vmatpush1.msra.mxu0 0.0
  %2641 = vmatprep.subr.mxu0 0.0
  %2642 = vmatpush1.msra.mxu0 0.0
  %2643 = vmatprep.subr.mxu0 0.0
  %2644 = vmatpush1.msra.mxu0 0.0
  %2645 = vmatprep.subr.mxu0 0.0
  %2646 = vmatpush1.msra.mxu0 0.0
  %2647 = vmatprep.subr.mxu0 0.0
  %2648 = vmatpush1.msra.mxu0 0.0
  %2649 = vmatprep.subr.mxu0 0.0
  %2650 = vmatpush1.msra.mxu0 0.0
  %2651 = vmatprep.subr.mxu0 0.0
  %2652 = vmatpush1.msra.mxu0 0.0
  %2653 = vmatprep.subr.mxu0 0.0
  %2654 = vmatpush1.msra.mxu0 0.0
  %2655 = vmatprep.subr.mxu0 0.0
  %2656 = vmatpush1.msra.mxu0 0.0
  %2657 = vmatprep.mubr.f32.mxu0 0.0
  %2658 = vmatmul.mubr.f32.gmra.mrb[0].mxu0 %v2591
  %v2659 = vpop.f32.mrb[0].mxu0
  %v2660 = vadd.f32 0.0, %v2659
  %v2661 = vpop.f32.mrb[0].mxu0
  %2662 = vdwg.mxu0
  %2663 = vrot.lane.b32.xlu0 %v2073, 56
  %v2664 = vpop.permute.xlu0 %2663
  %v2667 = vsel %vm2079, %v2586, 0
  %2669 = vmatprep.subr.mxu0 0.0
  %2670 = vmatpush1.msra.mxu0 %v2664
  %2671 = vmatprep.subr.mxu0 0.0
  %2672 = vmatpush1.msra.mxu0 0.0
  %2673 = vmatprep.subr.mxu0 0.0
  %2674 = vmatpush1.msra.mxu0 0.0
  %2675 = vmatprep.subr.mxu0 0.0
  %2676 = vmatpush1.msra.mxu0 0.0
  %2677 = vmatprep.subr.mxu0 0.0
  %2678 = vmatpush1.msra.mxu0 0.0
  %2679 = vmatprep.subr.mxu0 0.0
  %2680 = vmatpush1.msra.mxu0 0.0
  %2681 = vmatprep.subr.mxu0 0.0
  %2682 = vmatpush1.msra.mxu0 0.0
  %2683 = vmatprep.subr.mxu0 0.0
  %2684 = vmatpush1.msra.mxu0 0.0
  %2685 = vmatprep.subr.mxu0 0.0
  %2686 = vmatpush1.msra.mxu0 0.0
  %2687 = vmatprep.subr.mxu0 0.0
  %2688 = vmatpush1.msra.mxu0 0.0
  %2689 = vmatprep.subr.mxu0 0.0
  %2690 = vmatpush1.msra.mxu0 0.0
  %2691 = vmatprep.subr.mxu0 0.0
  %2692 = vmatpush1.msra.mxu0 0.0
  %2693 = vmatprep.subr.mxu0 0.0
  %2694 = vmatpush1.msra.mxu0 0.0
  %2695 = vmatprep.subr.mxu0 0.0
  %2696 = vmatpush1.msra.mxu0 0.0
  %2697 = vmatprep.subr.mxu0 0.0
  %2698 = vmatpush1.msra.mxu0 0.0
  %2699 = vmatprep.subr.mxu0 0.0
  %2700 = vmatpush1.msra.mxu0 0.0
  %2701 = vmatprep.subr.mxu0 0.0
  %2702 = vmatpush1.msra.mxu0 0.0
  %2703 = vmatprep.subr.mxu0 0.0
  %2704 = vmatpush1.msra.mxu0 0.0
  %2705 = vmatprep.subr.mxu0 0.0
  %2706 = vmatpush1.msra.mxu0 0.0
  %2707 = vmatprep.subr.mxu0 0.0
  %2708 = vmatpush1.msra.mxu0 0.0
  %2709 = vmatprep.subr.mxu0 0.0
  %2710 = vmatpush1.msra.mxu0 0.0
  %2711 = vmatprep.subr.mxu0 0.0
  %2712 = vmatpush1.msra.mxu0 0.0
  %2713 = vmatprep.subr.mxu0 0.0
  %2714 = vmatpush1.msra.mxu0 0.0
  %2715 = vmatprep.subr.mxu0 0.0
  %2716 = vmatpush1.msra.mxu0 0.0
  %2717 = vmatprep.subr.mxu0 0.0
  %2718 = vmatpush1.msra.mxu0 0.0
  %2719 = vmatprep.subr.mxu0 0.0
  %2720 = vmatpush1.msra.mxu0 0.0
  %2721 = vmatprep.subr.mxu0 0.0
  %2722 = vmatpush1.msra.mxu0 0.0
  %2723 = vmatprep.subr.mxu0 0.0
  %2724 = vmatpush1.msra.mxu0 0.0
  %2725 = vmatprep.subr.mxu0 0.0
  %2726 = vmatpush1.msra.mxu0 0.0
  %2727 = vmatprep.subr.mxu0 0.0
  %2728 = vmatpush1.msra.mxu0 0.0
  %2729 = vmatprep.subr.mxu0 0.0
  %2730 = vmatpush1.msra.mxu0 0.0
  %2731 = vmatprep.subr.mxu0 0.0
  %2732 = vmatpush1.msra.mxu0 0.0
  %2733 = vmatprep.mubr.f32.mxu0 0.0
  %2734 = vmatmul.mubr.f32.gmra.mrb[0].mxu0 %v2667
  %v2735 = vpop.f32.mrb[0].mxu0
  %v2736 = vadd.f32 0.0, %v2735
  %v2737 = vpop.f32.mrb[0].mxu0
  %2738 = vdwg.mxu0
  %2739 = vrot.lane.b32.xlu0 %v2068, 112
  %v2740 = vpop.permute.xlu0 %2739
  %2741 = vrot.lane.b32.xlu0 %v2068, 80
  %v2742 = vpop.permute.xlu0 %2741
  %v2743 = vsel %vm2079, %v2740, 0
  %v2745 = vsel %vm2079, %v2742, 0
  %2747 = vmatprep.subr.mxu0 0.0
  %2748 = vmatpush1.xpose.msra.mxu0 %v2745
  %2749 = vmatprep.subr.mxu0 0.0
  %2750 = vmatpush1.xpose.msra.mxu0 0.0
  %2751 = vmatprep.subr.mxu0 0.0
  %2752 = vmatpush1.xpose.msra.mxu0 0.0
  %2753 = vmatprep.subr.mxu0 0.0
  %2754 = vmatpush1.xpose.msra.mxu0 0.0
  %2755 = vmatprep.subr.mxu0 0.0
  %2756 = vmatpush1.xpose.msra.mxu0 0.0
  %2757 = vmatprep.subr.mxu0 0.0
  %2758 = vmatpush1.xpose.msra.mxu0 0.0
  %2759 = vmatprep.subr.mxu0 0.0
  %2760 = vmatpush1.xpose.msra.mxu0 0.0
  %2761 = vmatprep.subr.mxu0 0.0
  %2762 = vmatpush1.xpose.msra.mxu0 0.0
  %2763 = vmatprep.subr.mxu0 0.0
  %2764 = vmatpush1.xpose.msra.mxu0 0.0
  %2765 = vmatprep.subr.mxu0 0.0
  %2766 = vmatpush1.xpose.msra.mxu0 0.0
  %2767 = vmatprep.subr.mxu0 0.0
  %2768 = vmatpush1.xpose.msra.mxu0 0.0
  %2769 = vmatprep.subr.mxu0 0.0
  %2770 = vmatpush1.xpose.msra.mxu0 0.0
  %2771 = vmatprep.subr.mxu0 0.0
  %2772 = vmatpush1.xpose.msra.mxu0 0.0
  %2773 = vmatprep.subr.mxu0 0.0
  %2774 = vmatpush1.xpose.msra.mxu0 0.0
  %2775 = vmatprep.subr.mxu0 0.0
  %2776 = vmatpush1.xpose.msra.mxu0 0.0
  %2777 = vmatprep.subr.mxu0 0.0
  %2778 = vmatpush1.xpose.msra.mxu0 0.0
  %2779 = vmatprep.subr.mxu0 0.0
  %2780 = vmatpush1.xpose.msra.mxu0 0.0
  %2781 = vmatprep.subr.mxu0 0.0
  %2782 = vmatpush1.xpose.msra.mxu0 0.0
  %2783 = vmatprep.subr.mxu0 0.0
  %2784 = vmatpush1.xpose.msra.mxu0 0.0
  %2785 = vmatprep.subr.mxu0 0.0
  %2786 = vmatpush1.xpose.msra.mxu0 0.0
  %2787 = vmatprep.subr.mxu0 0.0
  %2788 = vmatpush1.xpose.msra.mxu0 0.0
  %2789 = vmatprep.subr.mxu0 0.0
  %2790 = vmatpush1.xpose.msra.mxu0 0.0
  %2791 = vmatprep.subr.mxu0 0.0
  %2792 = vmatpush1.xpose.msra.mxu0 0.0
  %2793 = vmatprep.subr.mxu0 0.0
  %2794 = vmatpush1.xpose.msra.mxu0 0.0
  %2795 = vmatprep.subr.mxu0 0.0
  %2796 = vmatpush1.xpose.msra.mxu0 0.0
  %2797 = vmatprep.subr.mxu0 0.0
  %2798 = vmatpush1.xpose.msra.mxu0 0.0
  %2799 = vmatprep.subr.mxu0 0.0
  %2800 = vmatpush1.xpose.msra.mxu0 0.0
  %2801 = vmatprep.subr.mxu0 0.0
  %2802 = vmatpush1.xpose.msra.mxu0 0.0
  %2803 = vmatprep.subr.mxu0 0.0
  %2804 = vmatpush1.xpose.msra.mxu0 0.0
  %2805 = vmatprep.subr.mxu0 0.0
  %2806 = vmatpush1.xpose.msra.mxu0 0.0
  %2807 = vmatprep.subr.mxu0 0.0
  %2808 = vmatpush1.xpose.msra.mxu0 0.0
  %2809 = vmatprep.subr.mxu0 0.0
  %2810 = vmatpush1.xpose.msra.mxu0 0.0
  %2811 = vmatprep.mubr.f32.mxu0 0.0
  %2812 = vmatmul.mubr.f32.gmra.mrb[0].mxu0 %v2743
  %v2813 = vpop.f32.mrb[0].mxu0
  %v2814 = vadd.f32 0.0, %v2813
  %v2815 = vpop.f32.mrb[0].mxu0
  %2816 = vdwg.mxu0
  %2817 = vrot.lane.b32.xlu0 %v2073, 112
  %v2818 = vpop.permute.xlu0 %2817
  %2819 = vrot.lane.b32.xlu0 %v2073, 80
  %v2820 = vpop.permute.xlu0 %2819
  %v2821 = vsel %vm2079, %v2818, 0
  %v2823 = vsel %vm2079, %v2820, 0
  %2825 = vmatprep.subr.mxu0 0.0
  %2826 = vmatpush1.xpose.msra.mxu0 %v2823
  %2827 = vmatprep.subr.mxu0 0.0
  %2828 = vmatpush1.xpose.msra.mxu0 0.0
  %2829 = vmatprep.subr.mxu0 0.0
  %2830 = vmatpush1.xpose.msra.mxu0 0.0
  %2831 = vmatprep.subr.mxu0 0.0
  %2832 = vmatpush1.xpose.msra.mxu0 0.0
  %2833 = vmatprep.subr.mxu0 0.0
  %2834 = vmatpush1.xpose.msra.mxu0 0.0
  %2835 = vmatprep.subr.mxu0 0.0
  %2836 = vmatpush1.xpose.msra.mxu0 0.0
  %2837 = vmatprep.subr.mxu0 0.0
  %2838 = vmatpush1.xpose.msra.mxu0 0.0
  %2839 = vmatprep.subr.mxu0 0.0
  %2840 = vmatpush1.xpose.msra.mxu0 0.0
  %2841 = vmatprep.subr.mxu0 0.0
  %2842 = vmatpush1.xpose.msra.mxu0 0.0
  %2843 = vmatprep.subr.mxu0 0.0
  %2844 = vmatpush1.xpose.msra.mxu0 0.0
  %2845 = vmatprep.subr.mxu0 0.0
  %2846 = vmatpush1.xpose.msra.mxu0 0.0
  %2847 = vmatprep.subr.mxu0 0.0
  %2848 = vmatpush1.xpose.msra.mxu0 0.0
  %2849 = vmatprep.subr.mxu0 0.0
  %2850 = vmatpush1.xpose.msra.mxu0 0.0
  %2851 = vmatprep.subr.mxu0 0.0
  %2852 = vmatpush1.xpose.msra.mxu0 0.0
  %2853 = vmatprep.subr.mxu0 0.0
  %2854 = vmatpush1.xpose.msra.mxu0 0.0
  %2855 = vmatprep.subr.mxu0 0.0
  %2856 = vmatpush1.xpose.msra.mxu0 0.0
  %2857 = vmatprep.subr.mxu0 0.0
  %2858 = vmatpush1.xpose.msra.mxu0 0.0
  %2859 = vmatprep.subr.mxu0 0.0
  %2860 = vmatpush1.xpose.msra.mxu0 0.0
  %2861 = vmatprep.subr.mxu0 0.0
  %2862 = vmatpush1.xpose.msra.mxu0 0.0
  %2863 = vmatprep.subr.mxu0 0.0
  %2864 = vmatpush1.xpose.msra.mxu0 0.0
  %2865 = vmatprep.subr.mxu0 0.0
  %2866 = vmatpush1.xpose.msra.mxu0 0.0
  %2867 = vmatprep.subr.mxu0 0.0
  %2868 = vmatpush1.xpose.msra.mxu0 0.0
  %2869 = vmatprep.subr.mxu0 0.0
  %2870 = vmatpush1.xpose.msra.mxu0 0.0
  %2871 = vmatprep.subr.mxu0 0.0
  %2872 = vmatpush1.xpose.msra.mxu0 0.0
  %2873 = vmatprep.subr.mxu0 0.0
  %2874 = vmatpush1.xpose.msra.mxu0 0.0
  %2875 = vmatprep.subr.mxu0 0.0
  %2876 = vmatpush1.xpose.msra.mxu0 0.0
  %2877 = vmatprep.subr.mxu0 0.0
  %2878 = vmatpush1.xpose.msra.mxu0 0.0
  %2879 = vmatprep.subr.mxu0 0.0
  %2880 = vmatpush1.xpose.msra.mxu0 0.0
  %2881 = vmatprep.subr.mxu0 0.0
  %2882 = vmatpush1.xpose.msra.mxu0 0.0
  %2883 = vmatprep.subr.mxu0 0.0
  %2884 = vmatpush1.xpose.msra.mxu0 0.0
  %2885 = vmatprep.subr.mxu0 0.0
  %2886 = vmatpush1.xpose.msra.mxu0 0.0
  %2887 = vmatprep.subr.mxu0 0.0
  %2888 = vmatpush1.xpose.msra.mxu0 0.0
  %2889 = vmatprep.mubr.f32.mxu0 0.0
  %2890 = vmatmul.mubr.f32.gmra.mrb[0].mxu0 %v2821
  %v2891 = vpop.f32.mrb[0].mxu0
  %v2892 = vadd.f32 0.0, %v2891
  %v2893 = vpop.f32.mrb[0].mxu0
  %2894 = vdwg.mxu0
  %v2895 = vmul.f32 %v2814, 0.35355338
  %v2896 = vmul.f32 %v2892, 0.35355338
  %v2897 = vsel %vm2079, %v2895, -inf
  %2898 = vmax.xlane.f32.xlu0 %v2897
  %v2899 = vpop.xlane.xlu0 %2898
  %v2900 = vsel %vm2079, %v2896, -inf
  %2901 = vmax.xlane.f32.xlu0 %v2900
  %v2902 = vpop.xlane.xlu0 %2901
  %v2903 = vsub.f32 %v2895, %v2899
  %v2904 = vsub.f32 %v2896, %v2902
  %v2905 = vmul.f32 %v2903, 1.442695
  %v2906 = vpow.pop %v2905
  %v2907 = vmul.f32 %v2904, 1.442695
  %v2908 = vpow.pop %v2907
  %v2909 = vsel %vm2079, %v2906, 0.0
  %2910 = vadd.xlane.f32.xlu0 %v2909
  %v2911 = vpop.xlane.xlu0 %2910
  %v2912 = vsel %vm2079, %v2908, 0.0
  %2913 = vadd.xlane.f32.xlu0 %v2912
  %v2914 = vpop.xlane.xlu0 %2913
  %v2915 = vrcp.pop %v2911
  %v2916 = vrcp.pop %v2914
  %v2917 = vmul.f32 %v2906, %v2915
  %v2918 = vmul.f32 %v2908, %v2916
  %2919 = vrot.lane.b32.xlu0 %v2068, 48
  %v2920 = vpop.permute.xlu0 %2919
  %v2923 = vsel %vm2079, %v2917, 0
  %2925 = vmatprep.subr.mxu0 0.0
  %2926 = vmatpush1.msra.mxu0 %v2920
  %2927 = vmatprep.subr.mxu0 0.0
  %2928 = vmatpush1.msra.mxu0 0.0
  %2929 = vmatprep.subr.mxu0 0.0
  %2930 = vmatpush1.msra.mxu0 0.0
  %2931 = vmatprep.subr.mxu0 0.0
  %2932 = vmatpush1.msra.mxu0 0.0
  %2933 = vmatprep.subr.mxu0 0.0
  %2934 = vmatpush1.msra.mxu0 0.0
  %2935 = vmatprep.subr.mxu0 0.0
  %2936 = vmatpush1.msra.mxu0 0.0
  %2937 = vmatprep.subr.mxu0 0.0
  %2938 = vmatpush1.msra.mxu0 0.0
  %2939 = vmatprep.subr.mxu0 0.0
  %2940 = vmatpush1.msra.mxu0 0.0
  %2941 = vmatprep.subr.mxu0 0.0
  %2942 = vmatpush1.msra.mxu0 0.0
  %2943 = vmatprep.subr.mxu0 0.0
  %2944 = vmatpush1.msra.mxu0 0.0
  %2945 = vmatprep.subr.mxu0 0.0
  %2946 = vmatpush1.msra.mxu0 0.0
  %2947 = vmatprep.subr.mxu0 0.0
  %2948 = vmatpush1.msra.mxu0 0.0
  %2949 = vmatprep.subr.mxu0 0.0
  %2950 = vmatpush1.msra.mxu0 0.0
  %2951 = vmatprep.subr.mxu0 0.0
  %2952 = vmatpush1.msra.mxu0 0.0
  %2953 = vmatprep.subr.mxu0 0.0
  %2954 = vmatpush1.msra.mxu0 0.0
  %2955 = vmatprep.subr.mxu0 0.0
  %2956 = vmatpush1.msra.mxu0 0.0
  %2957 = vmatprep.subr.mxu0 0.0
  %2958 = vmatpush1.msra.mxu0 0.0
  %2959 = vmatprep.subr.mxu0 0.0
  %2960 = vmatpush1.msra.mxu0 0.0
  %2961 = vmatprep.subr.mxu0 0.0
  %2962 = vmatpush1.msra.mxu0 0.0
  %2963 = vmatprep.subr.mxu0 0.0
  %2964 = vmatpush1.msra.mxu0 0.0
  %2965 = vmatprep.subr.mxu0 0.0
  %2966 = vmatpush1.msra.mxu0 0.0
  %2967 = vmatprep.subr.mxu0 0.0
  %2968 = vmatpush1.msra.mxu0 0.0
  %2969 = vmatprep.subr.mxu0 0.0
  %2970 = vmatpush1.msra.mxu0 0.0
  %2971 = vmatprep.subr.mxu0 0.0
  %2972 = vmatpush1.msra.mxu0 0.0
  %2973 = vmatprep.subr.mxu0 0.0
  %2974 = vmatpush1.msra.mxu0 0.0
  %2975 = vmatprep.subr.mxu0 0.0
  %2976 = vmatpush1.msra.mxu0 0.0
  %2977 = vmatprep.subr.mxu0 0.0
  %2978 = vmatpush1.msra.mxu0 0.0
  %2979 = vmatprep.subr.mxu0 0.0
  %2980 = vmatpush1.msra.mxu0 0.0
  %2981 = vmatprep.subr.mxu0 0.0
  %2982 = vmatpush1.msra.mxu0 0.0
  %2983 = vmatprep.subr.mxu0 0.0
  %2984 = vmatpush1.msra.mxu0 0.0
  %2985 = vmatprep.subr.mxu0 0.0
  %2986 = vmatpush1.msra.mxu0 0.0
  %2987 = vmatprep.subr.mxu0 0.0
  %2988 = vmatpush1.msra.mxu0 0.0
  %2989 = vmatprep.mubr.f32.mxu0 0.0
  %2990 = vmatmul.mubr.f32.gmra.mrb[0].mxu0 %v2923
  %v2991 = vpop.f32.mrb[0].mxu0
  %v2992 = vadd.f32 0.0, %v2991
  %v2993 = vpop.f32.mrb[0].mxu0
  %2994 = vdwg.mxu0
  %2995 = vrot.lane.b32.xlu0 %v2073, 48
  %v2996 = vpop.permute.xlu0 %2995
  %v2999 = vsel %vm2079, %v2918, 0
  %3001 = vmatprep.subr.mxu0 0.0
  %3002 = vmatpush1.msra.mxu0 %v2996
  %3003 = vmatprep.subr.mxu0 0.0
  %3004 = vmatpush1.msra.mxu0 0.0
  %3005 = vmatprep.subr.mxu0 0.0
  %3006 = vmatpush1.msra.mxu0 0.0
  %3007 = vmatprep.subr.mxu0 0.0
  %3008 = vmatpush1.msra.mxu0 0.0
  %3009 = vmatprep.subr.mxu0 0.0
  %3010 = vmatpush1.msra.mxu0 0.0
  %3011 = vmatprep.subr.mxu0 0.0
  %3012 = vmatpush1.msra.mxu0 0.0
  %3013 = vmatprep.subr.mxu0 0.0
  %3014 = vmatpush1.msra.mxu0 0.0
  %3015 = vmatprep.subr.mxu0 0.0
  %3016 = vmatpush1.msra.mxu0 0.0
  %3017 = vmatprep.subr.mxu0 0.0
  %3018 = vmatpush1.msra.mxu0 0.0
  %3019 = vmatprep.subr.mxu0 0.0
  %3020 = vmatpush1.msra.mxu0 0.0
  %3021 = vmatprep.subr.mxu0 0.0
  %3022 = vmatpush1.msra.mxu0 0.0
  %3023 = vmatprep.subr.mxu0 0.0
  %3024 = vmatpush1.msra.mxu0 0.0
  %3025 = vmatprep.subr.mxu0 0.0
  %3026 = vmatpush1.msra.mxu0 0.0
  %3027 = vmatprep.subr.mxu0 0.0
  %3028 = vmatpush1.msra.mxu0 0.0
  %3029 = vmatprep.subr.mxu0 0.0
  %3030 = vmatpush1.msra.mxu0 0.0
  %3031 = vmatprep.subr.mxu0 0.0
  %3032 = vmatpush1.msra.mxu0 0.0
  %3033 = vmatprep.subr.mxu0 0.0
  %3034 = vmatpush1.msra.mxu0 0.0
  %3035 = vmatprep.subr.mxu0 0.0
  %3036 = vmatpush1.msra.mxu0 0.0
  %3037 = vmatprep.subr.mxu0 0.0
  %3038 = vmatpush1.msra.mxu0 0.0
  %3039 = vmatprep.subr.mxu0 0.0
  %3040 = vmatpush1.msra.mxu0 0.0
  %3041 = vmatprep.subr.mxu0 0.0
  %3042 = vmatpush1.msra.mxu0 0.0
  %3043 = vmatprep.subr.mxu0 0.0
  %3044 = vmatpush1.msra.mxu0 0.0
  %3045 = vmatprep.subr.mxu0 0.0
  %3046 = vmatpush1.msra.mxu0 0.0
  %3047 = vmatprep.subr.mxu0 0.0
  %3048 = vmatpush1.msra.mxu0 0.0
  %3049 = vmatprep.subr.mxu0 0.0
  %3050 = vmatpush1.msra.mxu0 0.0
  %3051 = vmatprep.subr.mxu0 0.0
  %3052 = vmatpush1.msra.mxu0 0.0
  %3053 = vmatprep.subr.mxu0 0.0
  %3054 = vmatpush1.msra.mxu0 0.0
  %3055 = vmatprep.subr.mxu0 0.0
  %3056 = vmatpush1.msra.mxu0 0.0
  %3057 = vmatprep.subr.mxu0 0.0
  %3058 = vmatpush1.msra.mxu0 0.0
  %3059 = vmatprep.subr.mxu0 0.0
  %3060 = vmatpush1.msra.mxu0 0.0
  %3061 = vmatprep.subr.mxu0 0.0
  %3062 = vmatpush1.msra.mxu0 0.0
  %3063 = vmatprep.subr.mxu0 0.0
  %3064 = vmatpush1.msra.mxu0 0.0
  %3065 = vmatprep.mubr.f32.mxu0 0.0
  %3066 = vmatmul.mubr.f32.gmra.mrb[0].mxu0 %v2999
  %v3067 = vpop.f32.mrb[0].mxu0
  %v3068 = vadd.f32 0.0, %v3067
  %v3069 = vpop.f32.mrb[0].mxu0
  %3070 = vdwg.mxu0
  %3071 = vrot.lane.b32.xlu0 %v2068, 104
  %v3072 = vpop.permute.xlu0 %3071
  %3073 = vrot.lane.b32.xlu0 %v2068, 72
  %v3074 = vpop.permute.xlu0 %3073
  %v3075 = vsel %vm2079, %v3072, 0
  %v3077 = vsel %vm2079, %v3074, 0
  %3079 = vmatprep.subr.mxu0 0.0
  %3080 = vmatpush1.xpose.msra.mxu0 %v3077
  %3081 = vmatprep.subr.mxu0 0.0
  %3082 = vmatpush1.xpose.msra.mxu0 0.0
  %3083 = vmatprep.subr.mxu0 0.0
  %3084 = vmatpush1.xpose.msra.mxu0 0.0
  %3085 = vmatprep.subr.mxu0 0.0
  %3086 = vmatpush1.xpose.msra.mxu0 0.0
  %3087 = vmatprep.subr.mxu0 0.0
  %3088 = vmatpush1.xpose.msra.mxu0 0.0
  %3089 = vmatprep.subr.mxu0 0.0
  %3090 = vmatpush1.xpose.msra.mxu0 0.0
  %3091 = vmatprep.subr.mxu0 0.0
  %3092 = vmatpush1.xpose.msra.mxu0 0.0
  %3093 = vmatprep.subr.mxu0 0.0
  %3094 = vmatpush1.xpose.msra.mxu0 0.0
  %3095 = vmatprep.subr.mxu0 0.0
  %3096 = vmatpush1.xpose.msra.mxu0 0.0
  %3097 = vmatprep.subr.mxu0 0.0
  %3098 = vmatpush1.xpose.msra.mxu0 0.0
  %3099 = vmatprep.subr.mxu0 0.0
  %3100 = vmatpush1.xpose.msra.mxu0 0.0
  %3101 = vmatprep.subr.mxu0 0.0
  %3102 = vmatpush1.xpose.msra.mxu0 0.0
  %3103 = vmatprep.subr.mxu0 0.0
  %3104 = vmatpush1.xpose.msra.mxu0 0.0
  %3105 = vmatprep.subr.mxu0 0.0
  %3106 = vmatpush1.xpose.msra.mxu0 0.0
  %3107 = vmatprep.subr.mxu0 0.0
  %3108 = vmatpush1.xpose.msra.mxu0 0.0
  %3109 = vmatprep.subr.mxu0 0.0
  %3110 = vmatpush1.xpose.msra.mxu0 0.0
  %3111 = vmatprep.subr.mxu0 0.0
  %3112 = vmatpush1.xpose.msra.mxu0 0.0
  %3113 = vmatprep.subr.mxu0 0.0
  %3114 = vmatpush1.xpose.msra.mxu0 0.0
  %3115 = vmatprep.subr.mxu0 0.0
  %3116 = vmatpush1.xpose.msra.mxu0 0.0
  %3117 = vmatprep.subr.mxu0 0.0
  %3118 = vmatpush1.xpose.msra.mxu0 0.0
  %3119 = vmatprep.subr.mxu0 0.0
  %3120 = vmatpush1.xpose.msra.mxu0 0.0
  %3121 = vmatprep.subr.mxu0 0.0
  %3122 = vmatpush1.xpose.msra.mxu0 0.0
  %3123 = vmatprep.subr.mxu0 0.0
  %3124 = vmatpush1.xpose.msra.mxu0 0.0
  %3125 = vmatprep.subr.mxu0 0.0
  %3126 = vmatpush1.xpose.msra.mxu0 0.0
  %3127 = vmatprep.subr.mxu0 0.0
  %3128 = vmatpush1.xpose.msra.mxu0 0.0
  %3129 = vmatprep.subr.mxu0 0.0
  %3130 = vmatpush1.xpose.msra.mxu0 0.0
  %3131 = vmatprep.subr.mxu0 0.0
  %3132 = vmatpush1.xpose.msra.mxu0 0.0
  %3133 = vmatprep.subr.mxu0 0.0
  %3134 = vmatpush1.xpose.msra.mxu0 0.0
  %3135 = vmatprep.subr.mxu0 0.0
  %3136 = vmatpush1.xpose.msra.mxu0 0.0
  %3137 = vmatprep.subr.mxu0 0.0
  %3138 = vmatpush1.xpose.msra.mxu0 0.0
  %3139 = vmatprep.subr.mxu0 0.0
  %3140 = vmatpush1.xpose.msra.mxu0 0.0
  %3141 = vmatprep.subr.mxu0 0.0
  %3142 = vmatpush1.xpose.msra.mxu0 0.0
  %3143 = vmatprep.mubr.f32.mxu0 0.0
  %3144 = vmatmul.mubr.f32.gmra.mrb[0].mxu0 %v3075
  %v3145 = vpop.f32.mrb[0].mxu0
  %v3146 = vadd.f32 0.0, %v3145
  %v3147 = vpop.f32.mrb[0].mxu0
  %3148 = vdwg.mxu0
  %3149 = vrot.lane.b32.xlu0 %v2073, 104
  %v3150 = vpop.permute.xlu0 %3149
  %3151 = vrot.lane.b32.xlu0 %v2073, 72
  %v3152 = vpop.permute.xlu0 %3151
  %v3153 = vsel %vm2079, %v3150, 0
  %v3155 = vsel %vm2079, %v3152, 0
  %3157 = vmatprep.subr.mxu0 0.0
  %3158 = vmatpush1.xpose.msra.mxu0 %v3155
  %3159 = vmatprep.subr.mxu0 0.0
  %3160 = vmatpush1.xpose.msra.mxu0 0.0
  %3161 = vmatprep.subr.mxu0 0.0
  %3162 = vmatpush1.xpose.msra.mxu0 0.0
  %3163 = vmatprep.subr.mxu0 0.0
  %3164 = vmatpush1.xpose.msra.mxu0 0.0
  %3165 = vmatprep.subr.mxu0 0.0
  %3166 = vmatpush1.xpose.msra.mxu0 0.0
  %3167 = vmatprep.subr.mxu0 0.0
  %3168 = vmatpush1.xpose.msra.mxu0 0.0
  %3169 = vmatprep.subr.mxu0 0.0
  %3170 = vmatpush1.xpose.msra.mxu0 0.0
  %3171 = vmatprep.subr.mxu0 0.0
  %3172 = vmatpush1.xpose.msra.mxu0 0.0
  %3173 = vmatprep.subr.mxu0 0.0
  %3174 = vmatpush1.xpose.msra.mxu0 0.0
  %3175 = vmatprep.subr.mxu0 0.0
  %3176 = vmatpush1.xpose.msra.mxu0 0.0
  %3177 = vmatprep.subr.mxu0 0.0
  %3178 = vmatpush1.xpose.msra.mxu0 0.0
  %3179 = vmatprep.subr.mxu0 0.0
  %3180 = vmatpush1.xpose.msra.mxu0 0.0
  %3181 = vmatprep.subr.mxu0 0.0
  %3182 = vmatpush1.xpose.msra.mxu0 0.0
  %3183 = vmatprep.subr.mxu0 0.0
  %3184 = vmatpush1.xpose.msra.mxu0 0.0
  %3185 = vmatprep.subr.mxu0 0.0
  %3186 = vmatpush1.xpose.msra.mxu0 0.0
  %3187 = vmatprep.subr.mxu0 0.0
  %3188 = vmatpush1.xpose.msra.mxu0 0.0
  %3189 = vmatprep.subr.mxu0 0.0
  %3190 = vmatpush1.xpose.msra.mxu0 0.0
  %3191 = vmatprep.subr.mxu0 0.0
  %3192 = vmatpush1.xpose.msra.mxu0 0.0
  %3193 = vmatprep.subr.mxu0 0.0
  %3194 = vmatpush1.xpose.msra.mxu0 0.0
  %3195 = vmatprep.subr.mxu0 0.0
  %3196 = vmatpush1.xpose.msra.mxu0 0.0
  %3197 = vmatprep.subr.mxu0 0.0
  %3198 = vmatpush1.xpose.msra.mxu0 0.0
  %3199 = vmatprep.subr.mxu0 0.0
  %3200 = vmatpush1.xpose.msra.mxu0 0.0
  %3201 = vmatprep.subr.mxu0 0.0
  %3202 = vmatpush1.xpose.msra.mxu0 0.0
  %3203 = vmatprep.subr.mxu0 0.0
  %3204 = vmatpush1.xpose.msra.mxu0 0.0
  %3205 = vmatprep.subr.mxu0 0.0
  %3206 = vmatpush1.xpose.msra.mxu0 0.0
  %3207 = vmatprep.subr.mxu0 0.0
  %3208 = vmatpush1.xpose.msra.mxu0 0.0
  %3209 = vmatprep.subr.mxu0 0.0
  %3210 = vmatpush1.xpose.msra.mxu0 0.0
  %3211 = vmatprep.subr.mxu0 0.0
  %3212 = vmatpush1.xpose.msra.mxu0 0.0
  %3213 = vmatprep.subr.mxu0 0.0
  %3214 = vmatpush1.xpose.msra.mxu0 0.0
  %3215 = vmatprep.subr.mxu0 0.0
  %3216 = vmatpush1.xpose.msra.mxu0 0.0
  %3217 = vmatprep.subr.mxu0 0.0
  %3218 = vmatpush1.xpose.msra.mxu0 0.0
  %3219 = vmatprep.subr.mxu0 0.0
  %3220 = vmatpush1.xpose.msra.mxu0 0.0
  %3221 = vmatprep.mubr.f32.mxu0 0.0
  %3222 = vmatmul.mubr.f32.gmra.mrb[0].mxu0 %v3153
  %v3223 = vpop.f32.mrb[0].mxu0
  %v3224 = vadd.f32 0.0, %v3223
  %v3225 = vpop.f32.mrb[0].mxu0
  %3226 = vdwg.mxu0
  %v3227 = vmul.f32 %v3146, 0.35355338
  %v3228 = vmul.f32 %v3224, 0.35355338
  %v3229 = vsel %vm2079, %v3227, -inf
  %3230 = vmax.xlane.f32.xlu0 %v3229
  %v3231 = vpop.xlane.xlu0 %3230
  %v3232 = vsel %vm2079, %v3228, -inf
  %3233 = vmax.xlane.f32.xlu0 %v3232
  %v3234 = vpop.xlane.xlu0 %3233
  %v3235 = vsub.f32 %v3227, %v3231
  %v3236 = vsub.f32 %v3228, %v3234
  %v3237 = vmul.f32 %v3235, 1.442695
  %v3238 = vpow.pop %v3237
  %v3239 = vmul.f32 %v3236, 1.442695
  %v3240 = vpow.pop %v3239
  %v3241 = vsel %vm2079, %v3238, 0.0
  %3242 = vadd.xlane.f32.xlu0 %v3241
  %v3243 = vpop.xlane.xlu0 %3242
  %v3244 = vsel %vm2079, %v3240, 0.0
  %3245 = vadd.xlane.f32.xlu0 %v3244
  %v3246 = vpop.xlane.xlu0 %3245
  %v3247 = vrcp.pop %v3243
  %v3248 = vrcp.pop %v3246
  %v3249 = vmul.f32 %v3238, %v3247
  %v3250 = vmul.f32 %v3240, %v3248
  %3251 = vrot.lane.b32.xlu0 %v2068, 40
  %v3252 = vpop.permute.xlu0 %3251
  %v3255 = vsel %vm2079, %v3249, 0
  %3257 = vmatprep.subr.mxu0 0.0
  %3258 = vmatpush1.msra.mxu0 %v3252
  %3259 = vmatprep.subr.mxu0 0.0
  %3260 = vmatpush1.msra.mxu0 0.0
  %3261 = vmatprep.subr.mxu0 0.0
  %3262 = vmatpush1.msra.mxu0 0.0
  %3263 = vmatprep.subr.mxu0 0.0
  %3264 = vmatpush1.msra.mxu0 0.0
  %3265 = vmatprep.subr.mxu0 0.0
  %3266 = vmatpush1.msra.mxu0 0.0
  %3267 = vmatprep.subr.mxu0 0.0
  %3268 = vmatpush1.msra.mxu0 0.0
  %3269 = vmatprep.subr.mxu0 0.0
  %3270 = vmatpush1.msra.mxu0 0.0
  %3271 = vmatprep.subr.mxu0 0.0
  %3272 = vmatpush1.msra.mxu0 0.0
  %3273 = vmatprep.subr.mxu0 0.0
  %3274 = vmatpush1.msra.mxu0 0.0
  %3275 = vmatprep.subr.mxu0 0.0
  %3276 = vmatpush1.msra.mxu0 0.0
  %3277 = vmatprep.subr.mxu0 0.0
  %3278 = vmatpush1.msra.mxu0 0.0
  %3279 = vmatprep.subr.mxu0 0.0
  %3280 = vmatpush1.msra.mxu0 0.0
  %3281 = vmatprep.subr.mxu0 0.0
  %3282 = vmatpush1.msra.mxu0 0.0
  %3283 = vmatprep.subr.mxu0 0.0
  %3284 = vmatpush1.msra.mxu0 0.0
  %3285 = vmatprep.subr.mxu0 0.0
  %3286 = vmatpush1.msra.mxu0 0.0
  %3287 = vmatprep.subr.mxu0 0.0
  %3288 = vmatpush1.msra.mxu0 0.0
  %3289 = vmatprep.subr.mxu0 0.0
  %3290 = vmatpush1.msra.mxu0 0.0
  %3291 = vmatprep.subr.mxu0 0.0
  %3292 = vmatpush1.msra.mxu0 0.0
  %3293 = vmatprep.subr.mxu0 0.0
  %3294 = vmatpush1.msra.mxu0 0.0
  %3295 = vmatprep.subr.mxu0 0.0
  %3296 = vmatpush1.msra.mxu0 0.0
  %3297 = vmatprep.subr.mxu0 0.0
  %3298 = vmatpush1.msra.mxu0 0.0
  %3299 = vmatprep.subr.mxu0 0.0
  %3300 = vmatpush1.msra.mxu0 0.0
  %3301 = vmatprep.subr.mxu0 0.0
  %3302 = vmatpush1.msra.mxu0 0.0
  %3303 = vmatprep.subr.mxu0 0.0
  %3304 = vmatpush1.msra.mxu0 0.0
  %3305 = vmatprep.subr.mxu0 0.0
  %3306 = vmatpush1.msra.mxu0 0.0
  %3307 = vmatprep.subr.mxu0 0.0
  %3308 = vmatpush1.msra.mxu0 0.0
  %3309 = vmatprep.subr.mxu0 0.0
  %3310 = vmatpush1.msra.mxu0 0.0
  %3311 = vmatprep.subr.mxu0 0.0
  %3312 = vmatpush1.msra.mxu0 0.0
  %3313 = vmatprep.subr.mxu0 0.0
  %3314 = vmatpush1.msra.mxu0 0.0
  %3315 = vmatprep.subr.mxu0 0.0
  %3316 = vmatpush1.msra.mxu0 0.0
  %3317 = vmatprep.subr.mxu0 0.0
  %3318 = vmatpush1.msra.mxu0 0.0
  %3319 = vmatprep.subr.mxu0 0.0
  %3320 = vmatpush1.msra.mxu0 0.0
  %3321 = vmatprep.mubr.f32.mxu0 0.0
  %3322 = vmatmul.mubr.f32.gmra.mrb[0].mxu0 %v3255
  %v3323 = vpop.f32.mrb[0].mxu0
  %v3324 = vadd.f32 0.0, %v3323
  %v3325 = vpop.f32.mrb[0].mxu0
  %3326 = vdwg.mxu0
  %3327 = vrot.lane.b32.xlu0 %v2073, 40
  %v3328 = vpop.permute.xlu0 %3327
  %v3331 = vsel %vm2079, %v3250, 0
  %3333 = vmatprep.subr.mxu0 0.0
  %3334 = vmatpush1.msra.mxu0 %v3328
  %3335 = vmatprep.subr.mxu0 0.0
  %3336 = vmatpush1.msra.mxu0 0.0
  %3337 = vmatprep.subr.mxu0 0.0
  %3338 = vmatpush1.msra.mxu0 0.0
  %3339 = vmatprep.subr.mxu0 0.0
  %3340 = vmatpush1.msra.mxu0 0.0
  %3341 = vmatprep.subr.mxu0 0.0
  %3342 = vmatpush1.msra.mxu0 0.0
  %3343 = vmatprep.subr.mxu0 0.0
  %3344 = vmatpush1.msra.mxu0 0.0
  %3345 = vmatprep.subr.mxu0 0.0
  %3346 = vmatpush1.msra.mxu0 0.0
  %3347 = vmatprep.subr.mxu0 0.0
  %3348 = vmatpush1.msra.mxu0 0.0
  %3349 = vmatprep.subr.mxu0 0.0
  %3350 = vmatpush1.msra.mxu0 0.0
  %3351 = vmatprep.subr.mxu0 0.0
  %3352 = vmatpush1.msra.mxu0 0.0
  %3353 = vmatprep.subr.mxu0 0.0
  %3354 = vmatpush1.msra.mxu0 0.0
  %3355 = vmatprep.subr.mxu0 0.0
  %3356 = vmatpush1.msra.mxu0 0.0
  %3357 = vmatprep.subr.mxu0 0.0
  %3358 = vmatpush1.msra.mxu0 0.0
  %3359 = vmatprep.subr.mxu0 0.0
  %3360 = vmatpush1.msra.mxu0 0.0
  %3361 = vmatprep.subr.mxu0 0.0
  %3362 = vmatpush1.msra.mxu0 0.0
  %3363 = vmatprep.subr.mxu0 0.0
  %3364 = vmatpush1.msra.mxu0 0.0
  %3365 = vmatprep.subr.mxu0 0.0
  %3366 = vmatpush1.msra.mxu0 0.0
  %3367 = vmatprep.subr.mxu0 0.0
  %3368 = vmatpush1.msra.mxu0 0.0
  %3369 = vmatprep.subr.mxu0 0.0
  %3370 = vmatpush1.msra.mxu0 0.0
  %3371 = vmatprep.subr.mxu0 0.0
  %3372 = vmatpush1.msra.mxu0 0.0
  %3373 = vmatprep.subr.mxu0 0.0
  %3374 = vmatpush1.msra.mxu0 0.0
  %3375 = vmatprep.subr.mxu0 0.0
  %3376 = vmatpush1.msra.mxu0 0.0
  %3377 = vmatprep.subr.mxu0 0.0
  %3378 = vmatpush1.msra.mxu0 0.0
  %3379 = vmatprep.subr.mxu0 0.0
  %3380 = vmatpush1.msra.mxu0 0.0
  %3381 = vmatprep.subr.mxu0 0.0
  %3382 = vmatpush1.msra.mxu0 0.0
  %3383 = vmatprep.subr.mxu0 0.0
  %3384 = vmatpush1.msra.mxu0 0.0
  %3385 = vmatprep.subr.mxu0 0.0
  %3386 = vmatpush1.msra.mxu0 0.0
  %3387 = vmatprep.subr.mxu0 0.0
  %3388 = vmatpush1.msra.mxu0 0.0
  %3389 = vmatprep.subr.mxu0 0.0
  %3390 = vmatpush1.msra.mxu0 0.0
  %3391 = vmatprep.subr.mxu0 0.0
  %3392 = vmatpush1.msra.mxu0 0.0
  %3393 = vmatprep.subr.mxu0 0.0
  %3394 = vmatpush1.msra.mxu0 0.0
  %3395 = vmatprep.subr.mxu0 0.0
  %3396 = vmatpush1.msra.mxu0 0.0
  %3397 = vmatprep.mubr.f32.mxu0 0.0
  %3398 = vmatmul.mubr.f32.gmra.mrb[0].mxu0 %v3331
  %v3399 = vpop.f32.mrb[0].mxu0
  %v3400 = vadd.f32 0.0, %v3399
  %v3401 = vpop.f32.mrb[0].mxu0
  %3402 = vdwg.mxu0
  %3405 = vrot.lane.b32.xlu0 %v2660, 8
  %v3406 = vpop.permute.xlu0 %3405
  %3407 = vrot.lane.b32.xlu0 %v2736, 8
  %v3408 = vpop.permute.xlu0 %3407
  %3413 = vrot.lane.b32.xlu0 %v2992, 16
  %v3414 = vpop.permute.xlu0 %3413
  %3415 = vrot.lane.b32.xlu0 %v3068, 16
  %v3416 = vpop.permute.xlu0 %3415
  %3421 = vrot.lane.b32.xlu0 %v3324, 24
  %v3422 = vpop.permute.xlu0 %3421
  %3423 = vrot.lane.b32.xlu0 %v3400, 24
  %v3424 = vpop.permute.xlu0 %3423
  %v3427 = vsel %vm2079, %v2328, %v3406
  %v3428 = vsel %vm2079, %v2404, %v3408
  %vm3429 = vcmask 130048
  %v3430 = vsel %vm3429, %v3427, %v3414
  %v3431 = vsel %vm3429, %v3428, %v3416
  %vm3432 = vcmask 195584
  %v3433 = vsel %vm3432, %v3430, %v3422
  %v3434 = vsel %vm3432, %v3431, %v3424
  %v3436 = vlaneseq
  %v3437 = vshrl.u32 %v3436, 7
  %v3438 = vsub.s32 0, %v3437
  %v3439 = vrot.slane %v264, %v3438
  %v3442 = vsel %vm315, %v3433, 0
  %v3445 = vsel %vm315, %v3434, 0
  %3447 = vmatprep.subr.mxu0 0.0
  %3448 = vmatpush1.msra.mxu0 %v260
  %3449 = vmatprep.subr.mxu0 0.0
  %3450 = vmatpush1.msra.mxu0 %v261
  %3451 = vmatprep.subr.mxu0 0.0
  %3452 = vmatpush1.msra.mxu0 %v262
  %3453 = vmatprep.subr.mxu0 0.0
  %3454 = vmatpush1.msra.mxu0 %v263
  %3455 = vmatprep.subr.mxu0 0.0
  %3456 = vmatpush1.msra.mxu0 0.0
  %3457 = vmatprep.subr.mxu0 0.0
  %3458 = vmatpush1.msra.mxu0 0.0
  %3459 = vmatprep.subr.mxu0 0.0
  %3460 = vmatpush1.msra.mxu0 0.0
  %3461 = vmatprep.subr.mxu0 0.0
  %3462 = vmatpush1.msra.mxu0 0.0
  %3463 = vmatprep.subr.mxu0 0.0
  %3464 = vmatpush1.msra.mxu0 0.0
  %3465 = vmatprep.subr.mxu0 0.0
  %3466 = vmatpush1.msra.mxu0 0.0
  %3467 = vmatprep.subr.mxu0 0.0
  %3468 = vmatpush1.msra.mxu0 0.0
  %3469 = vmatprep.subr.mxu0 0.0
  %3470 = vmatpush1.msra.mxu0 0.0
  %3471 = vmatprep.subr.mxu0 0.0
  %3472 = vmatpush1.msra.mxu0 0.0
  %3473 = vmatprep.subr.mxu0 0.0
  %3474 = vmatpush1.msra.mxu0 0.0
  %3475 = vmatprep.subr.mxu0 0.0
  %3476 = vmatpush1.msra.mxu0 0.0
  %3477 = vmatprep.subr.mxu0 0.0
  %3478 = vmatpush1.msra.mxu0 0.0
  %3479 = vmatprep.subr.mxu0 0.0
  %3480 = vmatpush1.msra.mxu0 0.0
  %3481 = vmatprep.subr.mxu0 0.0
  %3482 = vmatpush1.msra.mxu0 0.0
  %3483 = vmatprep.subr.mxu0 0.0
  %3484 = vmatpush1.msra.mxu0 0.0
  %3485 = vmatprep.subr.mxu0 0.0
  %3486 = vmatpush1.msra.mxu0 0.0
  %3487 = vmatprep.subr.mxu0 0.0
  %3488 = vmatpush1.msra.mxu0 0.0
  %3489 = vmatprep.subr.mxu0 0.0
  %3490 = vmatpush1.msra.mxu0 0.0
  %3491 = vmatprep.subr.mxu0 0.0
  %3492 = vmatpush1.msra.mxu0 0.0
  %3493 = vmatprep.subr.mxu0 0.0
  %3494 = vmatpush1.msra.mxu0 0.0
  %3495 = vmatprep.subr.mxu0 0.0
  %3496 = vmatpush1.msra.mxu0 0.0
  %3497 = vmatprep.subr.mxu0 0.0
  %3498 = vmatpush1.msra.mxu0 0.0
  %3499 = vmatprep.subr.mxu0 0.0
  %3500 = vmatpush1.msra.mxu0 0.0
  %3501 = vmatprep.subr.mxu0 0.0
  %3502 = vmatpush1.msra.mxu0 0.0
  %3503 = vmatprep.subr.mxu0 0.0
  %3504 = vmatpush1.msra.mxu0 0.0
  %3505 = vmatprep.subr.mxu0 0.0
  %3506 = vmatpush1.msra.mxu0 0.0
  %3507 = vmatprep.subr.mxu0 0.0
  %3508 = vmatpush1.msra.mxu0 0.0
  %3509 = vmatprep.subr.mxu0 0.0
  %3510 = vmatpush1.msra.mxu0 0.0
  %3511 = vmatprep.mubr.f32.mxu0 0.0
  %3512 = vmatmul.mubr.f32.gmra.mrb[0].mxu0 %v3442
  %v3513 = vpop.f32.mrb[0].mxu0
  %v3514 = vadd.f32 %v3439, %v3513
  %v3515 = vpop.f32.mrb[0].mxu0
  %3516 = vmatprep.mubr.f32.mxu0 0.0
  %3517 = vmatmul.mubr.f32.gmra.mrb[0].mxu0 %v3445
  %v3518 = vpop.f32.mrb[0].mxu0
  %v3519 = vadd.f32 %v3439, %v3518
  %v3520 = vpop.f32.mrb[0].mxu0
  %3521 = vdwg.mxu0
  %v3522 = vadd.f32 %v3514, %v1945
  %v3523 = vadd.f32 %v3519, %v1950
  %v3524 = vsel %vm315, %v3522, 0.0
  %3525 = vadd.xlane.f32.xlu0 %v3524
  %v3526 = vpop.xlane.xlu0 %3525
  %v3527 = vsel %vm315, %v3523, 0.0
  %3528 = vadd.xlane.f32.xlu0 %v3527
  %v3529 = vpop.xlane.xlu0 %3528
  %v3530 = vmul.f32 %v3526, %v322
  %v3531 = vmul.f32 %v3529, %v322
  %v3532 = vsub.f32 %v3522, %v3530
  %v3533 = vsub.f32 %v3523, %v3531
  %v3534 = vmul.f32 %v3532, %v3532
  %v3535 = vmul.f32 %v3533, %v3533
  %v3536 = vsel %vm315, %v3534, 0.0
  %3537 = vadd.xlane.f32.xlu0 %v3536
  %v3538 = vpop.xlane.xlu0 %3537
  %v3539 = vsel %vm315, %v3535, 0.0
  %3540 = vadd.xlane.f32.xlu0 %v3539
  %v3541 = vpop.xlane.xlu0 %3540
  %v3542 = vmul.f32 %v3538, %v322
  %v3543 = vmul.f32 %v3541, %v322
  %v3544 = vadd.f32 %v3542, 1e-06
  %v3545 = vadd.f32 %v3543, 1e-06
  %v3546 = vrsqrt.pop %v3544
  %v3547 = vrsqrt.pop %v3545
  %v3548 = vmul.f32 %v3532, %v3546
  %v3549 = vmul.f32 %v3533, %v3547
  %v3551 = vlaneseq
  %v3552 = vshrl.u32 %v3551, 7
  %v3553 = vsub.s32 0, %v3552
  %v3554 = vrot.slane %v265, %v3553
  %v3556 = vmul.f32 %v3548, %v3554
  %v3557 = vmul.f32 %v3549, %v3554
  %v3559 = vlaneseq
  %v3560 = vshrl.u32 %v3559, 7
  %v3561 = vsub.s32 0, %v3560
  %v3562 = vrot.slane %v266, %v3561
  %v3564 = vadd.f32 %v3556, %v3562
  %v3565 = vadd.f32 %v3557, %v3562
  %v3567 = vlaneseq
  %v3568 = vshrl.u32 %v3567, 7
  %v3569 = vsub.s32 0, %v3568
  %v3570 = vrot.slane %v271, %v3569
  %v3573 = vsel %vm315, %v3564, 0
  %v3576 = vsel %vm315, %v3565, 0
  %3578 = vmatprep.subr.mxu0 0.0
  %3579 = vmatpush1.msra.mxu0 %v267
  %3580 = vmatprep.subr.mxu0 0.0
  %3581 = vmatpush1.msra.mxu0 %v268
  %3582 = vmatprep.subr.mxu0 0.0
  %3583 = vmatpush1.msra.mxu0 %v269
  %3584 = vmatprep.subr.mxu0 0.0
  %3585 = vmatpush1.msra.mxu0 %v270
  %3586 = vmatprep.subr.mxu0 0.0
  %3587 = vmatpush1.msra.mxu0 0.0
  %3588 = vmatprep.subr.mxu0 0.0
  %3589 = vmatpush1.msra.mxu0 0.0
  %3590 = vmatprep.subr.mxu0 0.0
  %3591 = vmatpush1.msra.mxu0 0.0
  %3592 = vmatprep.subr.mxu0 0.0
  %3593 = vmatpush1.msra.mxu0 0.0
  %3594 = vmatprep.subr.mxu0 0.0
  %3595 = vmatpush1.msra.mxu0 0.0
  %3596 = vmatprep.subr.mxu0 0.0
  %3597 = vmatpush1.msra.mxu0 0.0
  %3598 = vmatprep.subr.mxu0 0.0
  %3599 = vmatpush1.msra.mxu0 0.0
  %3600 = vmatprep.subr.mxu0 0.0
  %3601 = vmatpush1.msra.mxu0 0.0
  %3602 = vmatprep.subr.mxu0 0.0
  %3603 = vmatpush1.msra.mxu0 0.0
  %3604 = vmatprep.subr.mxu0 0.0
  %3605 = vmatpush1.msra.mxu0 0.0
  %3606 = vmatprep.subr.mxu0 0.0
  %3607 = vmatpush1.msra.mxu0 0.0
  %3608 = vmatprep.subr.mxu0 0.0
  %3609 = vmatpush1.msra.mxu0 0.0
  %3610 = vmatprep.subr.mxu0 0.0
  %3611 = vmatpush1.msra.mxu0 0.0
  %3612 = vmatprep.subr.mxu0 0.0
  %3613 = vmatpush1.msra.mxu0 0.0
  %3614 = vmatprep.subr.mxu0 0.0
  %3615 = vmatpush1.msra.mxu0 0.0
  %3616 = vmatprep.subr.mxu0 0.0
  %3617 = vmatpush1.msra.mxu0 0.0
  %3618 = vmatprep.subr.mxu0 0.0
  %3619 = vmatpush1.msra.mxu0 0.0
  %3620 = vmatprep.subr.mxu0 0.0
  %3621 = vmatpush1.msra.mxu0 0.0
  %3622 = vmatprep.subr.mxu0 0.0
  %3623 = vmatpush1.msra.mxu0 0.0
  %3624 = vmatprep.subr.mxu0 0.0
  %3625 = vmatpush1.msra.mxu0 0.0
  %3626 = vmatprep.subr.mxu0 0.0
  %3627 = vmatpush1.msra.mxu0 0.0
  %3628 = vmatprep.subr.mxu0 0.0
  %3629 = vmatpush1.msra.mxu0 0.0
  %3630 = vmatprep.subr.mxu0 0.0
  %3631 = vmatpush1.msra.mxu0 0.0
  %3632 = vmatprep.subr.mxu0 0.0
  %3633 = vmatpush1.msra.mxu0 0.0
  %3634 = vmatprep.subr.mxu0 0.0
  %3635 = vmatpush1.msra.mxu0 0.0
  %3636 = vmatprep.subr.mxu0 0.0
  %3637 = vmatpush1.msra.mxu0 0.0
  %3638 = vmatprep.subr.mxu0 0.0
  %3639 = vmatpush1.msra.mxu0 0.0
  %3640 = vmatprep.subr.mxu0 0.0
  %3641 = vmatpush1.msra.mxu0 0.0
  %3642 = vmatprep.mubr.f32.mxu0 0.0
  %3643 = vmatmul.mubr.f32.gmra.mrb[0].mxu0 %v3573
  %v3644 = vpop.f32.mrb[0].mxu0
  %v3645 = vadd.f32 %v3570, %v3644
  %v3646 = vpop.f32.mrb[0].mxu0
  %3647 = vmatprep.mubr.f32.mxu0 0.0
  %3648 = vmatmul.mubr.f32.gmra.mrb[0].mxu0 %v3576
  %v3649 = vpop.f32.mrb[0].mxu0
  %v3650 = vadd.f32 %v3570, %v3649
  %v3651 = vpop.f32.mrb[0].mxu0
  %3652 = vdwg.mxu0
  %v3653 = vmax.f32 %v3645, 0.0
  %v3654 = vmax.f32 %v3650, 0.0
  %v3656 = vlaneseq
  %v3657 = vshrl.u32 %v3656, 7
  %v3658 = vsub.s32 0, %v3657
  %v3659 = vrot.slane %v288, %v3658
  %3661 = vmatprep.subr.mxu0 0.0
  %3662 = vmatpush1.msra.mxu0 %v272
  %3663 = vmatprep.subr.mxu0 0.0
  %3664 = vmatpush1.msra.mxu0 %v273
  %3665 = vmatprep.subr.mxu0 0.0
  %3666 = vmatpush1.msra.mxu0 %v274
  %3667 = vmatprep.subr.mxu0 0.0
  %3668 = vmatpush1.msra.mxu0 %v275
  %3669 = vmatprep.subr.mxu0 0.0
  %3670 = vmatpush1.msra.mxu0 %v276
  %3671 = vmatprep.subr.mxu0 0.0
  %3672 = vmatpush1.msra.mxu0 %v277
  %3673 = vmatprep.subr.mxu0 0.0
  %3674 = vmatpush1.msra.mxu0 %v278
  %3675 = vmatprep.subr.mxu0 0.0
  %3676 = vmatpush1.msra.mxu0 %v279
  %3677 = vmatprep.subr.mxu0 0.0
  %3678 = vmatpush1.msra.mxu0 %v280
  %3679 = vmatprep.subr.mxu0 0.0
  %3680 = vmatpush1.msra.mxu0 %v281
  %3681 = vmatprep.subr.mxu0 0.0
  %3682 = vmatpush1.msra.mxu0 %v282
  %3683 = vmatprep.subr.mxu0 0.0
  %3684 = vmatpush1.msra.mxu0 %v283
  %3685 = vmatprep.subr.mxu0 0.0
  %3686 = vmatpush1.msra.mxu0 %v284
  %3687 = vmatprep.subr.mxu0 0.0
  %3688 = vmatpush1.msra.mxu0 %v285
  %3689 = vmatprep.subr.mxu0 0.0
  %3690 = vmatpush1.msra.mxu0 %v286
  %3691 = vmatprep.subr.mxu0 0.0
  %3692 = vmatpush1.msra.mxu0 %v287
  %3693 = vmatprep.subr.mxu0 0.0
  %3694 = vmatpush1.msra.mxu0 0.0
  %3695 = vmatprep.subr.mxu0 0.0
  %3696 = vmatpush1.msra.mxu0 0.0
  %3697 = vmatprep.subr.mxu0 0.0
  %3698 = vmatpush1.msra.mxu0 0.0
  %3699 = vmatprep.subr.mxu0 0.0
  %3700 = vmatpush1.msra.mxu0 0.0
  %3701 = vmatprep.subr.mxu0 0.0
  %3702 = vmatpush1.msra.mxu0 0.0
  %3703 = vmatprep.subr.mxu0 0.0
  %3704 = vmatpush1.msra.mxu0 0.0
  %3705 = vmatprep.subr.mxu0 0.0
  %3706 = vmatpush1.msra.mxu0 0.0
  %3707 = vmatprep.subr.mxu0 0.0
  %3708 = vmatpush1.msra.mxu0 0.0
  %3709 = vmatprep.subr.mxu0 0.0
  %3710 = vmatpush1.msra.mxu0 0.0
  %3711 = vmatprep.subr.mxu0 0.0
  %3712 = vmatpush1.msra.mxu0 0.0
  %3713 = vmatprep.subr.mxu0 0.0
  %3714 = vmatpush1.msra.mxu0 0.0
  %3715 = vmatprep.subr.mxu0 0.0
  %3716 = vmatpush1.msra.mxu0 0.0
  %3717 = vmatprep.subr.mxu0 0.0
  %3718 = vmatpush1.msra.mxu0 0.0
  %3719 = vmatprep.subr.mxu0 0.0
  %3720 = vmatpush1.msra.mxu0 0.0
  %3721 = vmatprep.subr.mxu0 0.0
  %3722 = vmatpush1.msra.mxu0 0.0
  %3723 = vmatprep.subr.mxu0 0.0
  %3724 = vmatpush1.msra.mxu0 0.0
  %3725 = vmatprep.mubr.f32.mxu0 0.0
  %3726 = vmatmul.mubr.f32.gmra.mrb[0].mxu0 %v3653
  %v3727 = vpop.f32.mrb[0].mxu0
  %v3728 = vadd.f32 %v3659, %v3727
  %v3729 = vpop.f32.mrb[0].mxu0
  %3730 = vmatprep.mubr.f32.mxu0 0.0
  %3731 = vmatmul.mubr.f32.gmra.mrb[0].mxu0 %v3654
  %v3732 = vpop.f32.mrb[0].mxu0
  %v3733 = vadd.f32 %v3659, %v3732
  %v3734 = vpop.f32.mrb[0].mxu0
  %3735 = vdwg.mxu0
  %v3736 = vadd.f32 %v3728, %v3522
  %v3737 = vadd.f32 %v3733, %v3523
  %3738 = vst.msk [vmem:[%s85] sm:$0xff] %vm315, %v3736
  %3739 = vst.msk [vmem:[%s85 + $0x8] sm:$0xff] %vm315, %v3737
  // Predicated region
  $region170: #{gnt_moe_forward.5} parent=0 // pred_check
    _
  $region171: #{gnt_moe_forward.5} parent=0 // pred_check_branch
    %3741 = sbr.rel (0) target = $region173
  $region172: #{gnt_moe_forward.5} parent=0 // pred_region
    _
  $region173: #{gnt_moe_forward.5} parent=0 // pred_fallthru
    _
  // Predicated region
  $region174: #{gnt_moe_forward.5} parent=0 // pred_check
    _
  $region175: #{gnt_moe_forward.5} parent=0 // pred_check_branch
    %3743 = sbr.rel (0) target = $region177
  $region176: #{gnt_moe_forward.5} parent=0 // pred_region
    _
  $region177: #{gnt_moe_forward.5} parent=0 // pred_fallthru
    _

// kernel: gnt_moe_forward.6
$region0: #{gnt_moe_forward.6}
  #allocation0 [shape = 'u32[]', space=smem, size = 0x4, offset = 0x4, fixed_abs, tag = 'smem constant byte address 0x4 - core index']
  #allocation1 [shape = 'u32[144,128]{1,0:T(1,128)}', space=vmem, size = 0x12000, scoped, tag = 'internal scratch']
  %s0 = inlined_call_operand.smem [shape: u32[39], index: -1, kind: input, shape index: {}]
  %s1 = sld [smem:[%s0]]
  %s2 = scalar_lea.smem %s0, 1
  %s3 = sld [smem:[%s2]]
  %s4 = scalar_lea.smem %s0, 2
  %s5 = sld [smem:[%s4]]
  %s6 = scalar_lea.smem %s0, 3
  %s7 = sld [smem:[%s6]]
  %s8 = scalar_lea.smem %s0, 4
  %s9 = sld [smem:[%s8]]
  %s10 = scalar_lea.smem %s0, 5
  %s11 = sld [smem:[%s10]]
  %s12 = scalar_lea.smem %s0, 6
  %s13 = sld [smem:[%s12]]
  %s14 = scalar_lea.smem %s0, 7
  %s15 = sld [smem:[%s14]]
  %s16 = scalar_lea.smem %s0, 8
  %s17 = sld [smem:[%s16]]
  %s18 = scalar_lea.smem %s0, 9
  %s19 = sld [smem:[%s18]]
  %s20 = scalar_lea.smem %s0, 10
  %s21 = sld [smem:[%s20]]
  %s22 = scalar_lea.smem %s0, 11
  %s23 = sld [smem:[%s22]]
  %s24 = scalar_lea.smem %s0, 12
  %s25 = sld [smem:[%s24]]
  %s26 = scalar_lea.smem %s0, 13
  %s27 = sld [smem:[%s26]]
  %s28 = scalar_lea.smem %s0, 14
  %s29 = sld [smem:[%s28]]
  %s30 = scalar_lea.smem %s0, 15
  %s31 = sld [smem:[%s30]]
  %s32 = scalar_lea.smem %s0, 16
  %s33 = sld [smem:[%s32]]
  %s34 = scalar_lea.smem %s0, 17
  %s35 = sld [smem:[%s34]]
  %s36 = scalar_lea.smem %s0, 18
  %s37 = sld [smem:[%s36]]
  %s38 = scalar_lea.smem %s0, 19
  %s39 = sld [smem:[%s38]]
  %s40 = scalar_lea.smem %s0, 20
  %s41 = sld [smem:[%s40]]
  %s42 = scalar_lea.smem %s0, 21
  %s43 = sld [smem:[%s42]]
  %s44 = scalar_lea.smem %s0, 22
  %s45 = sld [smem:[%s44]]
  %s46 = scalar_lea.smem %s0, 23
  %s47 = sld [smem:[%s46]]
  %s48 = scalar_lea.smem %s0, 24
  %s49 = sld [smem:[%s48]]
  %s50 = scalar_lea.smem %s0, 25
  %s51 = sld [smem:[%s50]]
  %s52 = scalar_lea.smem %s0, 26
  %s53 = sld [smem:[%s52]]
  %s54 = scalar_lea.smem %s0, 27
  %s55 = sld [smem:[%s54]]
  %s56 = scalar_lea.smem %s0, 28
  %s57 = sld [smem:[%s56]]
  %s58 = scalar_lea.smem %s0, 29
  %s59 = sld [smem:[%s58]]
  %s60 = scalar_lea.smem %s0, 30
  %s61 = sld [smem:[%s60]]
  %s62 = scalar_lea.smem %s0, 31
  %s63 = sld [smem:[%s62]]
  %s64 = scalar_lea.smem %s0, 32
  %s65 = sld [smem:[%s64]]
  %s66 = scalar_lea.smem %s0, 33
  %s67 = sld [smem:[%s66]]
  %s68 = scalar_lea.smem %s0, 34
  %s69 = sld [smem:[%s68]]
  %s70 = scalar_lea.smem %s0, 35
  %s71 = sld [smem:[%s70]]
  %s72 = scalar_lea.smem %s0, 36
  %s73 = sld [smem:[%s72]]
  %s74 = scalar_lea.smem %s0, 37
  %s75 = sld [smem:[%s74]]
  %s76 = scalar_lea.smem %s0, 38
  %s77 = sld [smem:[%s76]]
  %s78 = sld [smem:[#allocation0]]
  $region226: #{gnt_moe_forward.6} parent=0
    _
  %s80 = ssub.s32 1, %s78
  %s81 = scalar_select 0, %s80, %s78
  $region1: #{gnt_moe_forward.6} parent=0
    #allocation2 [shape = 'u8[512]{0}', space=vmem, size = 0x400, scoped, tag = 'input window, operand 4, single buffered']
    #allocation3 [shape = 's32[1]{0}', space=sflag, size = 0x4, scoped, tag = 'scoped memory for gnt_moe_forward.6']
    #allocation4 [shape = 'u8[512]{0}', space=vmem, size = 0x400, scoped, tag = 'input window, operand 5, single buffered']
    #allocation5 [shape = 's32[1]{0}', space=sflag, size = 0x4, scoped, tag = 'scoped memory for gnt_moe_forward.6']
    #allocation6 [shape = 'u8[512]{0}', space=vmem, size = 0x400, scoped, tag = 'input window, operand 10, single buffered']
    #allocation7 [shape = 'u8[512]{0}', space=vmem, size = 0x400, scoped, tag = 'input window, operand 12, single buffered']
    #allocation8 [shape = 's32[1]{0}', space=sflag, size = 0x4, scoped, tag = 'scoped memory for gnt_moe_forward.6']
    #allocation9 [shape = 'u8[512]{0}', space=vmem, size = 0x400, scoped, tag = 'input window, operand 14, single buffered']
    #allocation10 [shape = 'u8[512]{0}', space=vmem, size = 0x400, scoped, tag = 'input window, operand 16, single buffered']
    #allocation11 [shape = 's32[1]{0}', space=sflag, size = 0x4, scoped, tag = 'scoped memory for gnt_moe_forward.6']
    #allocation12 [shape = 'u8[512]{0}', space=vmem, size = 0x400, scoped, tag = 'input window, operand 18, single buffered']
    #allocation13 [shape = 'u8[512]{0}', space=vmem, size = 0x400, scoped, tag = 'input window, operand 19, single buffered']
    #allocation14 [shape = 's32[1]{0}', space=sflag, size = 0x4, scoped, tag = 'scoped memory for gnt_moe_forward.6']
    #allocation15 [shape = 'u8[512]{0}', space=vmem, size = 0x400, scoped, tag = 'input window, operand 20, single buffered']
    #allocation16 [shape = 'u8[512]{0}', space=vmem, size = 0x400, scoped, tag = 'input window, operand 27, single buffered']
    #allocation17 [shape = 's32[1]{0}', space=sflag, size = 0x4, scoped, tag = 'scoped memory for gnt_moe_forward.6']
    #allocation18 [shape = 'u8[512]{0}', space=vmem, size = 0x400, scoped, tag = 'input window, operand 28, single buffered']
    #allocation19 [shape = 'u8[512]{0}', space=vmem, size = 0x400, scoped, tag = 'input window, operand 31, single buffered']
    #allocation20 [shape = 's32[1]{0}', space=sflag, size = 0x4, scoped, tag = 'scoped memory for gnt_moe_forward.6']
    #allocation21 [shape = 'u8[512]{0}', space=vmem, size = 0x400, scoped, tag = 'input window, operand 32, single buffered']
    #allocation22 [shape = 'u8[512]{0}', space=vmem, size = 0x400, scoped, tag = 'input window, operand 33, single buffered']
    #allocation23 [shape = 's32[1]{0}', space=sflag, size = 0x4, scoped, tag = 'scoped memory for gnt_moe_forward.6']
    #allocation24 [shape = 'u8[512]{0}', space=vmem, size = 0x400, scoped, tag = 'input window, operand 35, single buffered']
    #allocation25 [shape = 'u8[512]{0}', space=vmem, size = 0x400, scoped, tag = 'input window, operand 37, single buffered']
    #allocation26 [shape = 's32[1]{0}', space=sflag, size = 0x4, scoped, tag = 'scoped memory for gnt_moe_forward.6']
    %82 = vsyncpa [#allocation3], 0
    %83 = vsyncpa [#allocation5], 0
    %84 = vsyncpa [#allocation8], 0
    %85 = vsyncpa [#allocation11], 0
    %86 = vsyncpa [#allocation14], 0
    %87 = vsyncpa [#allocation17], 0
    %88 = vsyncpa [#allocation20], 0
    %89 = vsyncpa [#allocation23], 0
    %90 = vsyncpa [#allocation26], 0
    // Predicated region
    $region2: #{gnt_moe_forward.6} parent=1 // pred_check
      _
    $region3: #{gnt_moe_forward.6} parent=1 // pred_check_branch
      %92 = sbr.rel (0) target = $region5
    $region4: #{gnt_moe_forward.6} parent=1 // pred_region
      _
    $region5: #{gnt_moe_forward.6} parent=1 // pred_fallthru
      _
    // Predicated region
    $region6: #{gnt_moe_forward.6} parent=1 // pred_check
      _
    $region7: #{gnt_moe_forward.6} parent=1 // pred_check_branch
      %94 = sbr.rel (0) target = $region9
    $region8: #{gnt_moe_forward.6} parent=1 // pred_region
      _
    $region9: #{gnt_moe_forward.6} parent=1 // pred_fallthru
      _
    // Predicated region
    $region10: #{gnt_moe_forward.6} parent=1 // pred_check
      _
    $region11: #{gnt_moe_forward.6} parent=1 // pred_check_branch
      %96 = sbr.rel (0) target = $region13
    $region12: #{gnt_moe_forward.6} parent=1 // pred_region
      _
    $region13: #{gnt_moe_forward.6} parent=1 // pred_fallthru
      _
    // Predicated region
    $region14: #{gnt_moe_forward.6} parent=1 // pred_check
      _
    $region15: #{gnt_moe_forward.6} parent=1 // pred_check_branch
      %98 = sbr.rel (0) target = $region17
    $region16: #{gnt_moe_forward.6} parent=1 // pred_region
      _
    $region17: #{gnt_moe_forward.6} parent=1 // pred_fallthru
      _
    // Predicated region
    $region18: #{gnt_moe_forward.6} parent=1 // pred_check
      _
    $region19: #{gnt_moe_forward.6} parent=1 // pred_check_branch
      %100 = sbr.rel (0) target = $region21
    $region20: #{gnt_moe_forward.6} parent=1 // pred_region
      %s102 = ssub.s32 16, 16
      %103 = vsyncadd [#allocation3], %s102
      %s105 = sshll.u32 [#allocation2], 4
      %s106 = int_to_ptr.vmem [resolvable:$true] %s105
      %108 = dma.hbm_to_vmem [thread:$0]  %s9, 16, %s106, [#allocation3]
    $region21: #{gnt_moe_forward.6} parent=1 // pred_fallthru
      _
    // Predicated region
    $region22: #{gnt_moe_forward.6} parent=1 // pred_check
      _
    $region23: #{gnt_moe_forward.6} parent=1 // pred_check_branch
      %110 = sbr.rel (0) target = $region25
    $region24: #{gnt_moe_forward.6} parent=1 // pred_region
      %s112 = ssub.s32 16, 16
      %113 = vsyncadd [#allocation5], %s112
      %s115 = sshll.u32 [#allocation4], 4
      %s116 = int_to_ptr.vmem [resolvable:$true] %s115
      %118 = dma.hbm_to_vmem [thread:$0]  %s11, 16, %s116, [#allocation5]
    $region25: #{gnt_moe_forward.6} parent=1 // pred_fallthru
      _
    // Predicated region
    $region26: #{gnt_moe_forward.6} parent=1 // pred_check
      _
    $region27: #{gnt_moe_forward.6} parent=1 // pred_check_branch
      %120 = sbr.rel (0) target = $region29
    $region28: #{gnt_moe_forward.6} parent=1 // pred_region
      _
    $region29: #{gnt_moe_forward.6} parent=1 // pred_fallthru
      _
    // Predicated region
    $region30: #{gnt_moe_forward.6} parent=1 // pred_check
      _
    $region31: #{gnt_moe_forward.6} parent=1 // pred_check_branch
      %122 = sbr.rel (0) target = $region33
    $region32: #{gnt_moe_forward.6} parent=1 // pred_region
      _
    $region33: #{gnt_moe_forward.6} parent=1 // pred_fallthru
      _
    // Predicated region
    $region34: #{gnt_moe_forward.6} parent=1 // pred_check
      _
    $region35: #{gnt_moe_forward.6} parent=1 // pred_check_branch
      %124 = sbr.rel (0) target = $region37
    $region36: #{gnt_moe_forward.6} parent=1 // pred_region
      _
    $region37: #{gnt_moe_forward.6} parent=1 // pred_fallthru
      _
    // Predicated region
    $region38: #{gnt_moe_forward.6} parent=1 // pred_check
      _
    $region39: #{gnt_moe_forward.6} parent=1 // pred_check_branch
      %126 = sbr.rel (0) target = $region41
    $region40: #{gnt_moe_forward.6} parent=1 // pred_region
      _
    $region41: #{gnt_moe_forward.6} parent=1 // pred_fallthru
      _
    // Predicated region
    $region42: #{gnt_moe_forward.6} parent=1 // pred_check
      _
    $region43: #{gnt_moe_forward.6} parent=1 // pred_check_branch
      %128 = sbr.rel (0) target = $region45
    $region44: #{gnt_moe_forward.6} parent=1 // pred_region
      %s130 = ssub.s32 16, 16
      %131 = vsyncadd [#allocation5], %s130
      %s133 = sshll.u32 [#allocation6], 4
      %s134 = int_to_ptr.vmem [resolvable:$true] %s133
      %136 = dma.hbm_to_vmem [thread:$0]  %s21, 16, %s134, [#allocation5]
    $region45: #{gnt_moe_forward.6} parent=1 // pred_fallthru
      _
    // Predicated region
    $region46: #{gnt_moe_forward.6} parent=1 // pred_check
      _
    $region47: #{gnt_moe_forward.6} parent=1 // pred_check_branch
      %138 = sbr.rel (0) target = $region49
    $region48: #{gnt_moe_forward.6} parent=1 // pred_region
      _
    $region49: #{gnt_moe_forward.6} parent=1 // pred_fallthru
      _
    // Predicated region
    $region50: #{gnt_moe_forward.6} parent=1 // pred_check
      _
    $region51: #{gnt_moe_forward.6} parent=1 // pred_check_branch
      %140 = sbr.rel (0) target = $region53
    $region52: #{gnt_moe_forward.6} parent=1 // pred_region
      %s142 = ssub.s32 16, 16
      %143 = vsyncadd [#allocation8], %s142
      %s145 = sshll.u32 [#allocation7], 4
      %s146 = int_to_ptr.vmem [resolvable:$true] %s145
      %148 = dma.hbm_to_vmem [thread:$0]  %s25, 16, %s146, [#allocation8]
    $region53: #{gnt_moe_forward.6} parent=1 // pred_fallthru
      _
    // Predicated region
    $region54: #{gnt_moe_forward.6} parent=1 // pred_check
      _
    $region55: #{gnt_moe_forward.6} parent=1 // pred_check_branch
      %150 = sbr.rel (0) target = $region57
    $region56: #{gnt_moe_forward.6} parent=1 // pred_region
      _
    $region57: #{gnt_moe_forward.6} parent=1 // pred_fallthru
      _
    // Predicated region
    $region58: #{gnt_moe_forward.6} parent=1 // pred_check
      _
    $region59: #{gnt_moe_forward.6} parent=1 // pred_check_branch
      %152 = sbr.rel (0) target = $region61
    $region60: #{gnt_moe_forward.6} parent=1 // pred_region
      %s154 = ssub.s32 16, 16
      %155 = vsyncadd [#allocation8], %s154
      %s157 = sshll.u32 [#allocation9], 4
      %s158 = int_to_ptr.vmem [resolvable:$true] %s157
      %160 = dma.hbm_to_vmem [thread:$0]  %s29, 16, %s158, [#allocation8]
    $region61: #{gnt_moe_forward.6} parent=1 // pred_fallthru
      _
    // Predicated region
    $region62: #{gnt_moe_forward.6} parent=1 // pred_check
      _
    $region63: #{gnt_moe_forward.6} parent=1 // pred_check_branch
      %162 = sbr.rel (0) target = $region65
    $region64: #{gnt_moe_forward.6} parent=1 // pred_region
      _
    $region65: #{gnt_moe_forward.6} parent=1 // pred_fallthru
      _
    // Predicated region
    $region66: #{gnt_moe_forward.6} parent=1 // pred_check
      _
    $region67: #{gnt_moe_forward.6} parent=1 // pred_check_branch
      %164 = sbr.rel (0) target = $region69
    $region68: #{gnt_moe_forward.6} parent=1 // pred_region
      %s166 = ssub.s32 16, 16
      %167 = vsyncadd [#allocation11], %s166
      %s169 = sshll.u32 [#allocation10], 4
      %s170 = int_to_ptr.vmem [resolvable:$true] %s169
      %172 = dma.hbm_to_vmem [thread:$0]  %s33, 16, %s170, [#allocation11]
    $region69: #{gnt_moe_forward.6} parent=1 // pred_fallthru
      _
    // Predicated region
    $region70: #{gnt_moe_forward.6} parent=1 // pred_check
      _
    $region71: #{gnt_moe_forward.6} parent=1 // pred_check_branch
      %174 = sbr.rel (0) target = $region73
    $region72: #{gnt_moe_forward.6} parent=1 // pred_region
      _
    $region73: #{gnt_moe_forward.6} parent=1 // pred_fallthru
      _
    // Predicated region
    $region74: #{gnt_moe_forward.6} parent=1 // pred_check
      _
    $region75: #{gnt_moe_forward.6} parent=1 // pred_check_branch
      %176 = sbr.rel (0) target = $region77
    $region76: #{gnt_moe_forward.6} parent=1 // pred_region
      %s178 = ssub.s32 16, 16
      %179 = vsyncadd [#allocation11], %s178
      %s181 = sshll.u32 [#allocation12], 4
      %s182 = int_to_ptr.vmem [resolvable:$true] %s181
      %184 = dma.hbm_to_vmem [thread:$0]  %s37, 16, %s182, [#allocation11]
    $region77: #{gnt_moe_forward.6} parent=1 // pred_fallthru
      _
    // Predicated region
    $region78: #{gnt_moe_forward.6} parent=1 // pred_check
      _
    $region79: #{gnt_moe_forward.6} parent=1 // pred_check_branch
      %186 = sbr.rel (0) target = $region81
    $region80: #{gnt_moe_forward.6} parent=1 // pred_region
      %s188 = ssub.s32 16, 16
      %189 = vsyncadd [#allocation14], %s188
      %s191 = sshll.u32 [#allocation13], 4
      %s192 = int_to_ptr.vmem [resolvable:$true] %s191
      %194 = dma.hbm_to_vmem [thread:$0]  %s39, 16, %s192, [#allocation14]
    $region81: #{gnt_moe_forward.6} parent=1 // pred_fallthru
      _
    // Predicated region
    $region82: #{gnt_moe_forward.6} parent=1 // pred_check
      _
    $region83: #{gnt_moe_forward.6} parent=1 // pred_check_branch
      %196 = sbr.rel (0) target = $region85
    $region84: #{gnt_moe_forward.6} parent=1 // pred_region
      %s198 = ssub.s32 16, 16
      %199 = vsyncadd [#allocation14], %s198
      %s201 = sshll.u32 [#allocation15], 4
      %s202 = int_to_ptr.vmem [resolvable:$true] %s201
      %204 = dma.hbm_to_vmem [thread:$0]  %s41, 16, %s202, [#allocation14]
    $region85: #{gnt_moe_forward.6} parent=1 // pred_fallthru
      _
    // Predicated region
    $region86: #{gnt_moe_forward.6} parent=1 // pred_check
      _
    $region87: #{gnt_moe_forward.6} parent=1 // pred_check_branch
      %206 = sbr.rel (0) target = $region89
    $region88: #{gnt_moe_forward.6} parent=1 // pred_region
      _
    $region89: #{gnt_moe_forward.6} parent=1 // pred_fallthru
      _
    // Predicated region
    $region90: #{gnt_moe_forward.6} parent=1 // pred_check
      _
    $region91: #{gnt_moe_forward.6} parent=1 // pred_check_branch
      %208 = sbr.rel (0) target = $region93
    $region92: #{gnt_moe_forward.6} parent=1 // pred_region
      _
    $region93: #{gnt_moe_forward.6} parent=1 // pred_fallthru
      _
    // Predicated region
    $region94: #{gnt_moe_forward.6} parent=1 // pred_check
      _
    $region95: #{gnt_moe_forward.6} parent=1 // pred_check_branch
      %210 = sbr.rel (0) target = $region97
    $region96: #{gnt_moe_forward.6} parent=1 // pred_region
      _
    $region97: #{gnt_moe_forward.6} parent=1 // pred_fallthru
      _
    // Predicated region
    $region98: #{gnt_moe_forward.6} parent=1 // pred_check
      _
    $region99: #{gnt_moe_forward.6} parent=1 // pred_check_branch
      %212 = sbr.rel (0) target = $region101
    $region100: #{gnt_moe_forward.6} parent=1 // pred_region
      _
    $region101: #{gnt_moe_forward.6} parent=1 // pred_fallthru
      _
    // Predicated region
    $region102: #{gnt_moe_forward.6} parent=1 // pred_check
      _
    $region103: #{gnt_moe_forward.6} parent=1 // pred_check_branch
      %214 = sbr.rel (0) target = $region105
    $region104: #{gnt_moe_forward.6} parent=1 // pred_region
      _
    $region105: #{gnt_moe_forward.6} parent=1 // pred_fallthru
      _
    // Predicated region
    $region106: #{gnt_moe_forward.6} parent=1 // pred_check
      _
    $region107: #{gnt_moe_forward.6} parent=1 // pred_check_branch
      %216 = sbr.rel (0) target = $region109
    $region108: #{gnt_moe_forward.6} parent=1 // pred_region
      _
    $region109: #{gnt_moe_forward.6} parent=1 // pred_fallthru
      _
    // Predicated region
    $region110: #{gnt_moe_forward.6} parent=1 // pred_check
      _
    $region111: #{gnt_moe_forward.6} parent=1 // pred_check_branch
      %218 = sbr.rel (0) target = $region113
    $region112: #{gnt_moe_forward.6} parent=1 // pred_region
      %s220 = ssub.s32 16, 16
      %221 = vsyncadd [#allocation17], %s220
      %s223 = sshll.u32 [#allocation16], 4
      %s224 = int_to_ptr.vmem [resolvable:$true] %s223
      %226 = dma.hbm_to_vmem [thread:$0]  %s55, 16, %s224, [#allocation17]
    $region113: #{gnt_moe_forward.6} parent=1 // pred_fallthru
      _
    // Predicated region
    $region114: #{gnt_moe_forward.6} parent=1 // pred_check
      _
    $region115: #{gnt_moe_forward.6} parent=1 // pred_check_branch
      %228 = sbr.rel (0) target = $region117
    $region116: #{gnt_moe_forward.6} parent=1 // pred_region
      %s230 = ssub.s32 16, 16
      %231 = vsyncadd [#allocation17], %s230
      %s233 = sshll.u32 [#allocation18], 4
      %s234 = int_to_ptr.vmem [resolvable:$true] %s233
      %236 = dma.hbm_to_vmem [thread:$0]  %s57, 16, %s234, [#allocation17]
    $region117: #{gnt_moe_forward.6} parent=1 // pred_fallthru
      _
    // Predicated region
    $region118: #{gnt_moe_forward.6} parent=1 // pred_check
      _
    $region119: #{gnt_moe_forward.6} parent=1 // pred_check_branch
      %238 = sbr.rel (0) target = $region121
    $region120: #{gnt_moe_forward.6} parent=1 // pred_region
      _
    $region121: #{gnt_moe_forward.6} parent=1 // pred_fallthru
      _
    // Predicated region
    $region122: #{gnt_moe_forward.6} parent=1 // pred_check
      _
    $region123: #{gnt_moe_forward.6} parent=1 // pred_check_branch
      %240 = sbr.rel (0) target = $region125
    $region124: #{gnt_moe_forward.6} parent=1 // pred_region
      _
    $region125: #{gnt_moe_forward.6} parent=1 // pred_fallthru
      _
    // Predicated region
    $region126: #{gnt_moe_forward.6} parent=1 // pred_check
      _
    $region127: #{gnt_moe_forward.6} parent=1 // pred_check_branch
      %242 = sbr.rel (0) target = $region129
    $region128: #{gnt_moe_forward.6} parent=1 // pred_region
      %s244 = ssub.s32 16, 16
      %245 = vsyncadd [#allocation20], %s244
      %s247 = sshll.u32 [#allocation19], 4
      %s248 = int_to_ptr.vmem [resolvable:$true] %s247
      %250 = dma.hbm_to_vmem [thread:$0]  %s63, 16, %s248, [#allocation20]
    $region129: #{gnt_moe_forward.6} parent=1 // pred_fallthru
      _
    // Predicated region
    $region130: #{gnt_moe_forward.6} parent=1 // pred_check
      _
    $region131: #{gnt_moe_forward.6} parent=1 // pred_check_branch
      %252 = sbr.rel (0) target = $region133
    $region132: #{gnt_moe_forward.6} parent=1 // pred_region
      %s254 = ssub.s32 16, 16
      %255 = vsyncadd [#allocation20], %s254
      %s257 = sshll.u32 [#allocation21], 4
      %s258 = int_to_ptr.vmem [resolvable:$true] %s257
      %260 = dma.hbm_to_vmem [thread:$0]  %s65, 16, %s258, [#allocation20]
    $region133: #{gnt_moe_forward.6} parent=1 // pred_fallthru
      _
    // Predicated region
    $region134: #{gnt_moe_forward.6} parent=1 // pred_check
      _
    $region135: #{gnt_moe_forward.6} parent=1 // pred_check_branch
      %262 = sbr.rel (0) target = $region137
    $region136: #{gnt_moe_forward.6} parent=1 // pred_region
      %s264 = ssub.s32 16, 16
      %265 = vsyncadd [#allocation23], %s264
      %s267 = sshll.u32 [#allocation22], 4
      %s268 = int_to_ptr.vmem [resolvable:$true] %s267
      %270 = dma.hbm_to_vmem [thread:$0]  %s67, 16, %s268, [#allocation23]
    $region137: #{gnt_moe_forward.6} parent=1 // pred_fallthru
      _
    // Predicated region
    $region138: #{gnt_moe_forward.6} parent=1 // pred_check
      _
    $region139: #{gnt_moe_forward.6} parent=1 // pred_check_branch
      %272 = sbr.rel (0) target = $region141
    $region140: #{gnt_moe_forward.6} parent=1 // pred_region
      _
    $region141: #{gnt_moe_forward.6} parent=1 // pred_fallthru
      _
    // Predicated region
    $region142: #{gnt_moe_forward.6} parent=1 // pred_check
      _
    $region143: #{gnt_moe_forward.6} parent=1 // pred_check_branch
      %274 = sbr.rel (0) target = $region145
    $region144: #{gnt_moe_forward.6} parent=1 // pred_region
      %s276 = ssub.s32 16, 16
      %277 = vsyncadd [#allocation23], %s276
      %s279 = sshll.u32 [#allocation24], 4
      %s280 = int_to_ptr.vmem [resolvable:$true] %s279
      %282 = dma.hbm_to_vmem [thread:$0]  %s71, 16, %s280, [#allocation23]
    $region145: #{gnt_moe_forward.6} parent=1 // pred_fallthru
      _
    // Predicated region
    $region146: #{gnt_moe_forward.6} parent=1 // pred_check
      _
    $region147: #{gnt_moe_forward.6} parent=1 // pred_check_branch
      %284 = sbr.rel (0) target = $region149
    $region148: #{gnt_moe_forward.6} parent=1 // pred_region
      _
    $region149: #{gnt_moe_forward.6} parent=1 // pred_fallthru
      _
    // Predicated region
    $region150: #{gnt_moe_forward.6} parent=1 // pred_check
      _
    $region151: #{gnt_moe_forward.6} parent=1 // pred_check_branch
      %286 = sbr.rel (0) target = $region153
    $region152: #{gnt_moe_forward.6} parent=1 // pred_region
      %s288 = ssub.s32 16, 16
      %289 = vsyncadd [#allocation26], %s288
      %s291 = sshll.u32 [#allocation25], 4
      %s292 = int_to_ptr.vmem [resolvable:$true] %s291
      %294 = dma.hbm_to_vmem [thread:$0]  %s75, 16, %s292, [#allocation26]
    $region153: #{gnt_moe_forward.6} parent=1 // pred_fallthru
      _
    // Predicated region
    $region154: #{gnt_moe_forward.6} parent=1 // pred_check
      _
    $region155: #{gnt_moe_forward.6} parent=1 // pred_check_branch
      %296 = sbr.rel (0) target = $region157
    $region156: #{gnt_moe_forward.6} parent=1 // pred_region
      %297 = dma.done [#allocation3], 16
    $region157: #{gnt_moe_forward.6} parent=1 // pred_fallthru
      _
    // Predicated region
    $region158: #{gnt_moe_forward.6} parent=1 // pred_check
      _
    $region159: #{gnt_moe_forward.6} parent=1 // pred_check_branch
      %299 = sbr.rel (0) target = $region161
    $region160: #{gnt_moe_forward.6} parent=1 // pred_region
      %300 = dma.done [#allocation5], 16
    $region161: #{gnt_moe_forward.6} parent=1 // pred_fallthru
      _
    // Predicated region
    $region162: #{gnt_moe_forward.6} parent=1 // pred_check
      _
    $region163: #{gnt_moe_forward.6} parent=1 // pred_check_branch
      %302 = sbr.rel (0) target = $region165
    $region164: #{gnt_moe_forward.6} parent=1 // pred_region
      %303 = dma.done [#allocation5], 16
    $region165: #{gnt_moe_forward.6} parent=1 // pred_fallthru
      _
    // Predicated region
    $region166: #{gnt_moe_forward.6} parent=1 // pred_check
      _
    $region167: #{gnt_moe_forward.6} parent=1 // pred_check_branch
      %305 = sbr.rel (0) target = $region169
    $region168: #{gnt_moe_forward.6} parent=1 // pred_region
      %306 = dma.done [#allocation8], 16
    $region169: #{gnt_moe_forward.6} parent=1 // pred_fallthru
      _
    // Predicated region
    $region170: #{gnt_moe_forward.6} parent=1 // pred_check
      _
    $region171: #{gnt_moe_forward.6} parent=1 // pred_check_branch
      %308 = sbr.rel (0) target = $region173
    $region172: #{gnt_moe_forward.6} parent=1 // pred_region
      %309 = dma.done [#allocation8], 16
    $region173: #{gnt_moe_forward.6} parent=1 // pred_fallthru
      _
    // Predicated region
    $region174: #{gnt_moe_forward.6} parent=1 // pred_check
      _
    $region175: #{gnt_moe_forward.6} parent=1 // pred_check_branch
      %311 = sbr.rel (0) target = $region177
    $region176: #{gnt_moe_forward.6} parent=1 // pred_region
      %312 = dma.done [#allocation11], 16
    $region177: #{gnt_moe_forward.6} parent=1 // pred_fallthru
      _
    // Predicated region
    $region178: #{gnt_moe_forward.6} parent=1 // pred_check
      _
    $region179: #{gnt_moe_forward.6} parent=1 // pred_check_branch
      %314 = sbr.rel (0) target = $region181
    $region180: #{gnt_moe_forward.6} parent=1 // pred_region
      %315 = dma.done [#allocation11], 16
    $region181: #{gnt_moe_forward.6} parent=1 // pred_fallthru
      _
    // Predicated region
    $region182: #{gnt_moe_forward.6} parent=1 // pred_check
      _
    $region183: #{gnt_moe_forward.6} parent=1 // pred_check_branch
      %317 = sbr.rel (0) target = $region185
    $region184: #{gnt_moe_forward.6} parent=1 // pred_region
      %318 = dma.done [#allocation14], 16
    $region185: #{gnt_moe_forward.6} parent=1 // pred_fallthru
      _
    // Predicated region
    $region186: #{gnt_moe_forward.6} parent=1 // pred_check
      _
    $region187: #{gnt_moe_forward.6} parent=1 // pred_check_branch
      %320 = sbr.rel (0) target = $region189
    $region188: #{gnt_moe_forward.6} parent=1 // pred_region
      %321 = dma.done [#allocation14], 16
    $region189: #{gnt_moe_forward.6} parent=1 // pred_fallthru
      _
    // Predicated region
    $region190: #{gnt_moe_forward.6} parent=1 // pred_check
      _
    $region191: #{gnt_moe_forward.6} parent=1 // pred_check_branch
      %323 = sbr.rel (0) target = $region193
    $region192: #{gnt_moe_forward.6} parent=1 // pred_region
      %324 = dma.done [#allocation17], 16
    $region193: #{gnt_moe_forward.6} parent=1 // pred_fallthru
      _
    // Predicated region
    $region194: #{gnt_moe_forward.6} parent=1 // pred_check
      _
    $region195: #{gnt_moe_forward.6} parent=1 // pred_check_branch
      %326 = sbr.rel (0) target = $region197
    $region196: #{gnt_moe_forward.6} parent=1 // pred_region
      %327 = dma.done [#allocation17], 16
    $region197: #{gnt_moe_forward.6} parent=1 // pred_fallthru
      _
    // Predicated region
    $region198: #{gnt_moe_forward.6} parent=1 // pred_check
      _
    $region199: #{gnt_moe_forward.6} parent=1 // pred_check_branch
      %329 = sbr.rel (0) target = $region201
    $region200: #{gnt_moe_forward.6} parent=1 // pred_region
      %330 = dma.done [#allocation20], 16
    $region201: #{gnt_moe_forward.6} parent=1 // pred_fallthru
      _
    // Predicated region
    $region202: #{gnt_moe_forward.6} parent=1 // pred_check
      _
    $region203: #{gnt_moe_forward.6} parent=1 // pred_check_branch
      %332 = sbr.rel (0) target = $region205
    $region204: #{gnt_moe_forward.6} parent=1 // pred_region
      %333 = dma.done [#allocation20], 16
    $region205: #{gnt_moe_forward.6} parent=1 // pred_fallthru
      _
    // Predicated region
    $region206: #{gnt_moe_forward.6} parent=1 // pred_check
      _
    $region207: #{gnt_moe_forward.6} parent=1 // pred_check_branch
      %335 = sbr.rel (0) target = $region209
    $region208: #{gnt_moe_forward.6} parent=1 // pred_region
      %336 = dma.done [#allocation23], 16
    $region209: #{gnt_moe_forward.6} parent=1 // pred_fallthru
      _
    // Predicated region
    $region210: #{gnt_moe_forward.6} parent=1 // pred_check
      _
    $region211: #{gnt_moe_forward.6} parent=1 // pred_check_branch
      %338 = sbr.rel (0) target = $region213
    $region212: #{gnt_moe_forward.6} parent=1 // pred_region
      %339 = dma.done [#allocation23], 16
    $region213: #{gnt_moe_forward.6} parent=1 // pred_fallthru
      _
    // Predicated region
    $region214: #{gnt_moe_forward.6} parent=1 // pred_check
      _
    $region215: #{gnt_moe_forward.6} parent=1 // pred_check_branch
      %341 = sbr.rel (0) target = $region217
    $region216: #{gnt_moe_forward.6} parent=1 // pred_region
      %342 = dma.done [#allocation26], 16
    $region217: #{gnt_moe_forward.6} parent=1 // pred_fallthru
      _
    %v343 = vld [vmem:[#allocation2] sm:$0x1]
    %v344 = vld [vmem:[#allocation4] sm:$0x1]
    %v345 = vld [vmem:[%s13] sm:$0xff]
    %v346 = vld [vmem:[%s13 + $0x8] sm:$0xff]
    %v347 = vld [vmem:[%s13 + $0x10] sm:$0xff]
    %v348 = vld [vmem:[%s13 + $0x18] sm:$0xff]
    %v349 = vld [vmem:[%s15] sm:$0xff]
    %v350 = vld [vmem:[%s15 + $0x8] sm:$0xff]
    %v351 = vld [vmem:[%s15 + $0x10] sm:$0xff]
    %v352 = vld [vmem:[%s15 + $0x18] sm:$0xff]
    %v353 = vld [vmem:[%s17] sm:$0xff]
    %v354 = vld [vmem:[%s17 + $0x8] sm:$0xff]
    %v355 = vld [vmem:[%s17 + $0x10] sm:$0xff]
    %v356 = vld [vmem:[%s17 + $0x18] sm:$0xff]
    %v357 = vld [vmem:[%s19] sm:$0xf]
    %v358 = vld [vmem:[#allocation6] sm:$0x1]
    %v359 = vld [vmem:[%s23] sm:$0xf]
    %v360 = vld [vmem:[#allocation7] sm:$0x1]
    %v361 = vld [vmem:[%s27] sm:$0xff]
    %v362 = vld [vmem:[%s27 + $0x8] sm:$0xff]
    %v363 = vld [vmem:[%s27 + $0x10] sm:$0xff]
    %v364 = vld [vmem:[%s27 + $0x18] sm:$0xff]
    %v365 = vld [vmem:[#allocation9] sm:$0x1]
    %v366 = vld [vmem:[%s31] sm:$0xf]
    %v367 = vld [vmem:[#allocation10] sm:$0x1]
    %v368 = vld [vmem:[%s35] sm:$0xff]
    %v369 = vld [vmem:[%s35 + $0x8] sm:$0xff]
    %v370 = vld [vmem:[%s35 + $0x10] sm:$0xff]
    %v371 = vld [vmem:[%s35 + $0x18] sm:$0xff]
    %v372 = vld [vmem:[#allocation12] sm:$0x1]
    %v373 = vld [vmem:[#allocation13] sm:$0x1]
    %v374 = vld [vmem:[#allocation15] sm:$0x1]
    %v375 = vld [vmem:[%s43] sm:$0xff]
    %v376 = vld [vmem:[%s43 + $0x8] sm:$0xff]
    %v377 = vld [vmem:[%s43 + $0x10] sm:$0xff]
    %v378 = vld [vmem:[%s43 + $0x18] sm:$0xff]
    %v379 = vld [vmem:[%s45] sm:$0xff]
    %v380 = vld [vmem:[%s47] sm:$0xff]
    %v381 = vld [vmem:[%s47 + $0x8] sm:$0xff]
    %v382 = vld [vmem:[%s47 + $0x10] sm:$0xff]
    %v383 = vld [vmem:[%s47 + $0x18] sm:$0xff]
    %v384 = vld [vmem:[%s47 + $0x20] sm:$0xff]
    %v385 = vld [vmem:[%s47 + $0x28] sm:$0xff]
    %v386 = vld [vmem:[%s47 + $0x30] sm:$0xff]
    %v387 = vld [vmem:[%s47 + $0x38] sm:$0xff]
    %v388 = vld [vmem:[%s49] sm:$0x3]
    %v389 = vld [vmem:[%s51] sm:$0xff]
    %v390 = vld [vmem:[%s51 + $0x8] sm:$0xff]
    %v391 = vld [vmem:[%s51 + $0x10] sm:$0xff]
    %v392 = vld [vmem:[%s51 + $0x18] sm:$0xff]
    %v393 = vld [vmem:[%s51 + $0x20] sm:$0xff]
    %v394 = vld [vmem:[%s51 + $0x28] sm:$0xff]
    %v395 = vld [vmem:[%s51 + $0x30] sm:$0xff]
    %v396 = vld [vmem:[%s51 + $0x38] sm:$0xff]
    %v397 = vld [vmem:[%s51 + $0x40] sm:$0xff]
    %v398 = vld [vmem:[%s51 + $0x48] sm:$0xff]
    %v399 = vld [vmem:[%s51 + $0x50] sm:$0xff]
    %v400 = vld [vmem:[%s51 + $0x58] sm:$0xff]
    %v401 = vld [vmem:[%s51 + $0x60] sm:$0xff]
    %v402 = vld [vmem:[%s51 + $0x68] sm:$0xff]
    %v403 = vld [vmem:[%s51 + $0x70] sm:$0xff]
    %v404 = vld [vmem:[%s51 + $0x78] sm:$0xff]
    %v405 = vld [vmem:[%s51 + $0x80] sm:$0xff]
    %v406 = vld [vmem:[%s51 + $0x88] sm:$0xff]
    %v407 = vld [vmem:[%s51 + $0x90] sm:$0xff]
    %v408 = vld [vmem:[%s51 + $0x98] sm:$0xff]
    %v409 = vld [vmem:[%s51 + $0xa0] sm:$0xff]
    %v410 = vld [vmem:[%s51 + $0xa8] sm:$0xff]
    %v411 = vld [vmem:[%s51 + $0xb0] sm:$0xff]
    %v412 = vld [vmem:[%s51 + $0xb8] sm:$0xff]
    %v413 = vld [vmem:[%s51 + $0xc0] sm:$0xff]
    %v414 = vld [vmem:[%s51 + $0xc8] sm:$0xff]
    %v415 = vld [vmem:[%s51 + $0xd0] sm:$0xff]
    %v416 = vld [vmem:[%s51 + $0xd8] sm:$0xff]
    %v417 = vld [vmem:[%s51 + $0xe0] sm:$0xff]
    %v418 = vld [vmem:[%s51 + $0xe8] sm:$0xff]
    %v419 = vld [vmem:[%s51 + $0xf0] sm:$0xff]
    %v420 = vld [vmem:[%s51 + $0xf8] sm:$0xff]
    %v421 = vld [vmem:[%s53] sm:$0xf]
    %v422 = vld [vmem:[#allocation16] sm:$0x1]
    %v423 = vld [vmem:[#allocation18] sm:$0x1]
    %v424 = vld [vmem:[%s59] sm:$0xff]
    %v425 = vld [vmem:[%s59 + $0x8] sm:$0xff]
    %v426 = vld [vmem:[%s59 + $0x10] sm:$0xff]
    %v427 = vld [vmem:[%s59 + $0x18] sm:$0xff]
    %v428 = vld [vmem:[%s61] sm:$0xff]
    %v429 = vld [vmem:[%s61 + $0x8] sm:$0xff]
    %v430 = vld [vmem:[%s61 + $0x10] sm:$0xff]
    %v431 = vld [vmem:[%s61 + $0x18] sm:$0xff]
    %v432 = vld [vmem:[#allocation19] sm:$0x1]
    %v433 = vld [vmem:[#allocation21] sm:$0x1]
    %v434 = vld [vmem:[#allocation22] sm:$0x1]
    %v435 = vld [vmem:[%s69] sm:$0xff]
    %v436 = vld [vmem:[%s69 + $0x8] sm:$0xff]
    %v437 = vld [vmem:[%s69 + $0x10] sm:$0xff]
    %v438 = vld [vmem:[%s69 + $0x18] sm:$0xff]
    %v439 = vld [vmem:[#allocation24] sm:$0x1]
    %v440 = vld [vmem:[%s73] sm:$0xff]
    %v441 = vld [vmem:[%s73 + $0x8] sm:$0xff]
    %v442 = vld [vmem:[%s73 + $0x10] sm:$0xff]
    %v443 = vld [vmem:[%s73 + $0x18] sm:$0xff]
    %v444 = vld [vmem:[%s73 + $0x20] sm:$0xff]
    %v445 = vld [vmem:[%s73 + $0x28] sm:$0xff]
    %v446 = vld [vmem:[%s73 + $0x30] sm:$0xff]
    %v447 = vld [vmem:[%s73 + $0x38] sm:$0xff]
    %v448 = vld [vmem:[%s73 + $0x40] sm:$0xff]
    %v449 = vld [vmem:[%s73 + $0x48] sm:$0xff]
    %v450 = vld [vmem:[%s73 + $0x50] sm:$0xff]
    %v451 = vld [vmem:[%s73 + $0x58] sm:$0xff]
    %v452 = vld [vmem:[%s73 + $0x60] sm:$0xff]
    %v453 = vld [vmem:[%s73 + $0x68] sm:$0xff]
    %v454 = vld [vmem:[%s73 + $0x70] sm:$0xff]
    %v455 = vld [vmem:[%s73 + $0x78] sm:$0xff]
    %v456 = vld [vmem:[#allocation25] sm:$0x1]
    %v457 = vld [vmem:[%s1] sm:$0xff]
    %v458 = vld [vmem:[%s1 + $0x8] sm:$0xff]
    %v459 = vld [vmem:[%s3] sm:$0xff]
    %v460 = vld [vmem:[%s3 + $0x8] sm:$0xff]
    %v461 = vld [vmem:[%s3 + $0x10] sm:$0xff]
    %v462 = vld [vmem:[%s3 + $0x18] sm:$0xff]
    %v463 = vld [vmem:[%s3 + $0x20] sm:$0xff]
    %v464 = vld [vmem:[%s3 + $0x28] sm:$0xff]
    %v465 = vld [vmem:[%s3 + $0x30] sm:$0xff]
    %v466 = vld [vmem:[%s3 + $0x38] sm:$0xff]
    %v467 = vld [vmem:[%s5] sm:$0xff]
    %v468 = vld [vmem:[%s5 + $0x8] sm:$0xff]
    %v469 = vld [vmem:[%s5 + $0x10] sm:$0xff]
    %v470 = vld [vmem:[%s5 + $0x18] sm:$0xff]
    %v471 = vld [vmem:[%s5 + $0x20] sm:$0xff]
    %v472 = vld [vmem:[%s5 + $0x28] sm:$0xff]
    %v473 = vld [vmem:[%s5 + $0x30] sm:$0xff]
    %v474 = vld [vmem:[%s5 + $0x38] sm:$0xff]
    %v475 = vld [vmem:[%s7] sm:$0xff]
    %v476 = vld [vmem:[%s7 + $0x8] sm:$0xff]
    %v477 = vld [vmem:[%s7 + $0x10] sm:$0xff]
    %v478 = vld [vmem:[%s7 + $0x18] sm:$0xff]
    %v479 = vld [vmem:[%s7 + $0x20] sm:$0xff]
    %v480 = vld [vmem:[%s7 + $0x28] sm:$0xff]
    %v481 = vld [vmem:[%s7 + $0x30] sm:$0xff]
    %v482 = vld [vmem:[%s7 + $0x38] sm:$0xff]
    %vm483 = vcmask 261120
    %v484 = vsel %vm483, %v457, 0.0
    %485 = vadd.xlane.f32.xlu0 %v484
    %v486 = vpop.xlane.xlu0 %485
    %v487 = vsel %vm483, %v458, 0.0
    %488 = vadd.xlane.f32.xlu0 %v487
    %v489 = vpop.xlane.xlu0 %488
    %v490 = vrcp.pop 32.0
    %v491 = vmul.f32 %v486, %v490
    %v492 = vmul.f32 %v489, %v490
    %v493 = vsub.f32 %v457, %v491
    %v494 = vsub.f32 %v458, %v492
    %v495 = vmul.f32 %v493, %v493
    %v496 = vmul.f32 %v494, %v494
    %v497 = vsel %vm483, %v495, 0.0
    %498 = vadd.xlane.f32.xlu0 %v497
    %v499 = vpop.xlane.xlu0 %498
    %v500 = vsel %vm483, %v496, 0.0
    %501 = vadd.xlane.f32.xlu0 %v500
    %v502 = vpop.xlane.xlu0 %501
    %v503 = vmul.f32 %v499, %v490
    %v504 = vmul.f32 %v502, %v490
    %v505 = vadd.f32 %v503, 1e-06
    %v506 = vadd.f32 %v504, 1e-06
    %v507 = vrsqrt.pop %v505
    %v508 = vrsqrt.pop %v506
    %v509 = vmul.f32 %v493, %v507
    %v510 = vmul.f32 %v494, %v508
    %v512 = vlaneseq
    %v513 = vshrl.u32 %v512, 7
    %v514 = vsub.s32 0, %v513
    %v515 = vrot.slane %v343, %v514
    %v517 = vmul.f32 %v509, %v515
    %v518 = vmul.f32 %v510, %v515
    %v520 = vlaneseq
    %v521 = vshrl.u32 %v520, 7
    %v522 = vsub.s32 0, %v521
    %v523 = vrot.slane %v344, %v522
    %v525 = vadd.f32 %v517, %v523
    %v526 = vadd.f32 %v518, %v523
    %v528 = vsel %vm483, %v525, 0
    %v531 = vsel %vm483, %v526, 0
    %533 = vmatprep.subr.mxu0 0.0
    %534 = vmatpush1.msra.mxu0 %v345
    %535 = vmatprep.subr.mxu0 0.0
    %536 = vmatpush1.msra.mxu0 %v346
    %537 = vmatprep.subr.mxu0 0.0
    %538 = vmatpush1.msra.mxu0 %v347
    %539 = vmatprep.subr.mxu0 0.0
    %540 = vmatpush1.msra.mxu0 %v348
    %541 = vmatprep.subr.mxu0 0.0
    %542 = vmatpush1.msra.mxu0 0.0
    %543 = vmatprep.subr.mxu0 0.0
    %544 = vmatpush1.msra.mxu0 0.0
    %545 = vmatprep.subr.mxu0 0.0
    %546 = vmatpush1.msra.mxu0 0.0
    %547 = vmatprep.subr.mxu0 0.0
    %548 = vmatpush1.msra.mxu0 0.0
    %549 = vmatprep.subr.mxu0 0.0
    %550 = vmatpush1.msra.mxu0 0.0
    %551 = vmatprep.subr.mxu0 0.0
    %552 = vmatpush1.msra.mxu0 0.0
    %553 = vmatprep.subr.mxu0 0.0
    %554 = vmatpush1.msra.mxu0 0.0
    %555 = vmatprep.subr.mxu0 0.0
    %556 = vmatpush1.msra.mxu0 0.0
    %557 = vmatprep.subr.mxu0 0.0
    %558 = vmatpush1.msra.mxu0 0.0
    %559 = vmatprep.subr.mxu0 0.0
    %560 = vmatpush1.msra.mxu0 0.0
    %561 = vmatprep.subr.mxu0 0.0
    %562 = vmatpush1.msra.mxu0 0.0
    %563 = vmatprep.subr.mxu0 0.0
    %564 = vmatpush1.msra.mxu0 0.0
    %565 = vmatprep.subr.mxu0 0.0
    %566 = vmatpush1.msra.mxu0 0.0
    %567 = vmatprep.subr.mxu0 0.0
    %568 = vmatpush1.msra.mxu0 0.0
    %569 = vmatprep.subr.mxu0 0.0
    %570 = vmatpush1.msra.mxu0 0.0
    %571 = vmatprep.subr.mxu0 0.0
    %572 = vmatpush1.msra.mxu0 0.0
    %573 = vmatprep.subr.mxu0 0.0
    %574 = vmatpush1.msra.mxu0 0.0
    %575 = vmatprep.subr.mxu0 0.0
    %576 = vmatpush1.msra.mxu0 0.0
    %577 = vmatprep.subr.mxu0 0.0
    %578 = vmatpush1.msra.mxu0 0.0
    %579 = vmatprep.subr.mxu0 0.0
    %580 = vmatpush1.msra.mxu0 0.0
    %581 = vmatprep.subr.mxu0 0.0
    %582 = vmatpush1.msra.mxu0 0.0
    %583 = vmatprep.subr.mxu0 0.0
    %584 = vmatpush1.msra.mxu0 0.0
    %585 = vmatprep.subr.mxu0 0.0
    %586 = vmatpush1.msra.mxu0 0.0
    %587 = vmatprep.subr.mxu0 0.0
    %588 = vmatpush1.msra.mxu0 0.0
    %589 = vmatprep.subr.mxu0 0.0
    %590 = vmatpush1.msra.mxu0 0.0
    %591 = vmatprep.subr.mxu0 0.0
    %592 = vmatpush1.msra.mxu0 0.0
    %593 = vmatprep.subr.mxu0 0.0
    %594 = vmatpush1.msra.mxu0 0.0
    %595 = vmatprep.subr.mxu0 0.0
    %596 = vmatpush1.msra.mxu0 0.0
    %597 = vmatprep.mubr.f32.mxu0 0.0
    %598 = vmatmul.mubr.f32.gmra.mrb[0].mxu0 %v528
    %v599 = vpop.f32.mrb[0].mxu0
    %v600 = vadd.f32 0.0, %v599
    %v601 = vpop.f32.mrb[0].mxu0
    %602 = vmatprep.mubr.f32.mxu0 0.0
    %603 = vmatmul.mubr.f32.gmra.mrb[0].mxu0 %v531
    %v604 = vpop.f32.mrb[0].mxu0
    %v605 = vadd.f32 0.0, %v604
    %v606 = vpop.f32.mrb[0].mxu0
    %607 = vdwg.mxu0
    %v609 = vsel %vm483, %v459, 0
    %v612 = vsel %vm483, %v460, 0
    %v615 = vsel %vm483, %v461, 0
    %v618 = vsel %vm483, %v462, 0
    %v621 = vsel %vm483, %v463, 0
    %v624 = vsel %vm483, %v464, 0
    %v627 = vsel %vm483, %v465, 0
    %v630 = vsel %vm483, %v466, 0
    %632 = vmatprep.subr.mxu0 0.0
    %633 = vmatpush1.msra.mxu0 %v349
    %634 = vmatprep.subr.mxu0 0.0
    %635 = vmatpush1.msra.mxu0 %v350
    %636 = vmatprep.subr.mxu0 0.0
    %637 = vmatpush1.msra.mxu0 %v351
    %638 = vmatprep.subr.mxu0 0.0
    %639 = vmatpush1.msra.mxu0 %v352
    %640 = vmatprep.subr.mxu0 0.0
    %641 = vmatpush1.msra.mxu0 0.0
    %642 = vmatprep.subr.mxu0 0.0
    %643 = vmatpush1.msra.mxu0 0.0
    %644 = vmatprep.subr.mxu0 0.0
    %645 = vmatpush1.msra.mxu0 0.0
    %646 = vmatprep.subr.mxu0 0.0
    %647 = vmatpush1.msra.mxu0 0.0
    %648 = vmatprep.subr.mxu0 0.0
    %649 = vmatpush1.msra.mxu0 0.0
    %650 = vmatprep.subr.mxu0 0.0
    %651 = vmatpush1.msra.mxu0 0.0
    %652 = vmatprep.subr.mxu0 0.0
    %653 = vmatpush1.msra.mxu0 0.0
    %654 = vmatprep.subr.mxu0 0.0
    %655 = vmatpush1.msra.mxu0 0.0
    %656 = vmatprep.subr.mxu0 0.0
    %657 = vmatpush1.msra.mxu0 0.0
    %658 = vmatprep.subr.mxu0 0.0
    %659 = vmatpush1.msra.mxu0 0.0
    %660 = vmatprep.subr.mxu0 0.0
    %661 = vmatpush1.msra.mxu0 0.0
    %662 = vmatprep.subr.mxu0 0.0
    %663 = vmatpush1.msra.mxu0 0.0
    %664 = vmatprep.subr.mxu0 0.0
    %665 = vmatpush1.msra.mxu0 0.0
    %666 = vmatprep.subr.mxu0 0.0
    %667 = vmatpush1.msra.mxu0 0.0
    %668 = vmatprep.subr.mxu0 0.0
    %669 = vmatpush1.msra.mxu0 0.0
    %670 = vmatprep.subr.mxu0 0.0
    %671 = vmatpush1.msra.mxu0 0.0
    %672 = vmatprep.subr.mxu0 0.0
    %673 = vmatpush1.msra.mxu0 0.0
    %674 = vmatprep.subr.mxu0 0.0
    %675 = vmatpush1.msra.mxu0 0.0
    %676 = vmatprep.subr.mxu0 0.0
    %677 = vmatpush1.msra.mxu0 0.0
    %678 = vmatprep.subr.mxu0 0.0
    %679 = vmatpush1.msra.mxu0 0.0
    %680 = vmatprep.subr.mxu0 0.0
    %681 = vmatpush1.msra.mxu0 0.0
    %682 = vmatprep.subr.mxu0 0.0
    %683 = vmatpush1.msra.mxu0 0.0
    %684 = vmatprep.subr.mxu0 0.0
    %685 = vmatpush1.msra.mxu0 0.0
    %686 = vmatprep.subr.mxu0 0.0
    %687 = vmatpush1.msra.mxu0 0.0
    %688 = vmatprep.subr.mxu0 0.0
    %689 = vmatpush1.msra.mxu0 0.0
    %690 = vmatprep.subr.mxu0 0.0
    %691 = vmatpush1.msra.mxu0 0.0
    %692 = vmatprep.subr.mxu0 0.0
    %693 = vmatpush1.msra.mxu0 0.0
    %694 = vmatprep.subr.mxu0 0.0
    %695 = vmatpush1.msra.mxu0 0.0
    %696 = vmatprep.mubr.f32.mxu0 0.0
    %697 = vmatmul.mubr.f32.gmra.mrb[0].mxu0 %v609
    %v698 = vpop.f32.mrb[0].mxu0
    %v699 = vadd.f32 0.0, %v698
    %v700 = vpop.f32.mrb[0].mxu0
    %701 = vmatprep.mubr.f32.mxu0 0.0
    %702 = vmatmul.mubr.f32.gmra.mrb[0].mxu0 %v612
    %v703 = vpop.f32.mrb[0].mxu0
    %v704 = vadd.f32 0.0, %v703
    %v705 = vpop.f32.mrb[0].mxu0
    %706 = vmatprep.mubr.f32.mxu0 0.0
    %707 = vmatmul.mubr.f32.gmra.mrb[0].mxu0 %v615
    %v708 = vpop.f32.mrb[0].mxu0
    %v709 = vadd.f32 0.0, %v708
    %v710 = vpop.f32.mrb[0].mxu0
    %711 = vmatprep.mubr.f32.mxu0 0.0
    %712 = vmatmul.mubr.f32.gmra.mrb[0].mxu0 %v618
    %v713 = vpop.f32.mrb[0].mxu0
    %v714 = vadd.f32 0.0, %v713
    %v715 = vpop.f32.mrb[0].mxu0
    %716 = vmatprep.mubr.f32.mxu0 0.0
    %717 = vmatmul.mubr.f32.gmra.mrb[0].mxu0 %v621
    %v718 = vpop.f32.mrb[0].mxu0
    %v719 = vadd.f32 0.0, %v718
    %v720 = vpop.f32.mrb[0].mxu0
    %721 = vmatprep.mubr.f32.mxu0 0.0
    %722 = vmatmul.mubr.f32.gmra.mrb[0].mxu0 %v624
    %v723 = vpop.f32.mrb[0].mxu0
    %v724 = vadd.f32 0.0, %v723
    %v725 = vpop.f32.mrb[0].mxu0
    %726 = vmatprep.mubr.f32.mxu0 0.0
    %727 = vmatmul.mubr.f32.gmra.mrb[0].mxu0 %v627
    %v728 = vpop.f32.mrb[0].mxu0
    %v729 = vadd.f32 0.0, %v728
    %v730 = vpop.f32.mrb[0].mxu0
    %731 = vmatprep.mubr.f32.mxu0 0.0
    %732 = vmatmul.mubr.f32.gmra.mrb[0].mxu0 %v630
    %v733 = vpop.f32.mrb[0].mxu0
    %v734 = vadd.f32 0.0, %v733
    %v735 = vpop.f32.mrb[0].mxu0
    %736 = vdwg.mxu0
    %v738 = vlaneseq
    %v739 = vshrl.u32 %v738, 7
    %v740 = vsub.s32 0, %v739
    %v741 = vrot.slane %v358, %v740
    %vm743 = vcmask 31744
    %v745 = vsel %vm743, %v467, 0
    %v748 = vsel %vm743, %v468, 0
    %v751 = vsel %vm743, %v469, 0
    %v754 = vsel %vm743, %v470, 0
    %v757 = vsel %vm743, %v471, 0
    %v760 = vsel %vm743, %v472, 0
    %v763 = vsel %vm743, %v473, 0
    %v766 = vsel %vm743, %v474, 0
    %vm768 = vcmask 1043456
    %v770 = vsel %vm768, %v357, 0
    %772 = vmatprep.subr.mxu0 0.0
    %773 = vmatpush1.msra.mxu0 %v770
    %774 = vmatprep.subr.mxu0 0.0
    %775 = vmatpush1.msra.mxu0 0.0
    %776 = vmatprep.subr.mxu0 0.0
    %777 = vmatpush1.msra.mxu0 0.0
    %778 = vmatprep.subr.mxu0 0.0
    %779 = vmatpush1.msra.mxu0 0.0
    %780 = vmatprep.subr.mxu0 0.0
    %781 = vmatpush1.msra.mxu0 0.0
    %782 = vmatprep.subr.mxu0 0.0
    %783 = vmatpush1.msra.mxu0 0.0
    %784 = vmatprep.subr.mxu0 0.0
    %785 = vmatpush1.msra.mxu0 0.0
    %786 = vmatprep.subr.mxu0 0.0
    %787 = vmatpush1.msra.mxu0 0.0
    %788 = vmatprep.subr.mxu0 0.0
    %789 = vmatpush1.msra.mxu0 0.0
    %790 = vmatprep.subr.mxu0 0.0
    %791 = vmatpush1.msra.mxu0 0.0
    %792 = vmatprep.subr.mxu0 0.0
    %793 = vmatpush1.msra.mxu0 0.0
    %794 = vmatprep.subr.mxu0 0.0
    %795 = vmatpush1.msra.mxu0 0.0
    %796 = vmatprep.subr.mxu0 0.0
    %797 = vmatpush1.msra.mxu0 0.0
    %798 = vmatprep.subr.mxu0 0.0
    %799 = vmatpush1.msra.mxu0 0.0
    %800 = vmatprep.subr.mxu0 0.0
    %801 = vmatpush1.msra.mxu0 0.0
    %802 = vmatprep.subr.mxu0 0.0
    %803 = vmatpush1.msra.mxu0 0.0
    %804 = vmatprep.subr.mxu0 0.0
    %805 = vmatpush1.msra.mxu0 0.0
    %806 = vmatprep.subr.mxu0 0.0
    %807 = vmatpush1.msra.mxu0 0.0
    %808 = vmatprep.subr.mxu0 0.0
    %809 = vmatpush1.msra.mxu0 0.0
    %810 = vmatprep.subr.mxu0 0.0
    %811 = vmatpush1.msra.mxu0 0.0
    %812 = vmatprep.subr.mxu0 0.0
    %813 = vmatpush1.msra.mxu0 0.0
    %814 = vmatprep.subr.mxu0 0.0
    %815 = vmatpush1.msra.mxu0 0.0
    %816 = vmatprep.subr.mxu0 0.0
    %817 = vmatpush1.msra.mxu0 0.0
    %818 = vmatprep.subr.mxu0 0.0
    %819 = vmatpush1.msra.mxu0 0.0
    %820 = vmatprep.subr.mxu0 0.0
    %821 = vmatpush1.msra.mxu0 0.0
    %822 = vmatprep.subr.mxu0 0.0
    %823 = vmatpush1.msra.mxu0 0.0
    %824 = vmatprep.subr.mxu0 0.0
    %825 = vmatpush1.msra.mxu0 0.0
    %826 = vmatprep.subr.mxu0 0.0
    %827 = vmatpush1.msra.mxu0 0.0
    %828 = vmatprep.subr.mxu0 0.0
    %829 = vmatpush1.msra.mxu0 0.0
    %830 = vmatprep.subr.mxu0 0.0
    %831 = vmatpush1.msra.mxu0 0.0
    %832 = vmatprep.subr.mxu0 0.0
    %833 = vmatpush1.msra.mxu0 0.0
    %834 = vmatprep.subr.mxu0 0.0
    %835 = vmatpush1.msra.mxu0 0.0
    %836 = vmatprep.mubr.f32.mxu0 0.0
    %837 = vmatmul.mubr.f32.gmra.mrb[0].mxu0 %v745
    %v838 = vpop.f32.mrb[0].mxu0
    %v839 = vadd.f32 %v741, %v838
    %v840 = vpop.f32.mrb[0].mxu0
    %841 = vmatprep.mubr.f32.mxu0 0.0
    %842 = vmatmul.mubr.f32.gmra.mrb[0].mxu0 %v748
    %v843 = vpop.f32.mrb[0].mxu0
    %v844 = vadd.f32 %v741, %v843
    %v845 = vpop.f32.mrb[0].mxu0
    %846 = vmatprep.mubr.f32.mxu0 0.0
    %847 = vmatmul.mubr.f32.gmra.mrb[0].mxu0 %v751
    %v848 = vpop.f32.mrb[0].mxu0
    %v849 = vadd.f32 %v741, %v848
    %v850 = vpop.f32.mrb[0].mxu0
    %851 = vmatprep.mubr.f32.mxu0 0.0
    %852 = vmatmul.mubr.f32.gmra.mrb[0].mxu0 %v754
    %v853 = vpop.f32.mrb[0].mxu0
    %v854 = vadd.f32 %v741, %v853
    %v855 = vpop.f32.mrb[0].mxu0
    %856 = vmatprep.mubr.f32.mxu0 0.0
    %857 = vmatmul.mubr.f32.gmra.mrb[0].mxu0 %v757
    %v858 = vpop.f32.mrb[0].mxu0
    %v859 = vadd.f32 %v741, %v858
    %v860 = vpop.f32.mrb[0].mxu0
    %861 = vmatprep.mubr.f32.mxu0 0.0
    %862 = vmatmul.mubr.f32.gmra.mrb[0].mxu0 %v760
    %v863 = vpop.f32.mrb[0].mxu0
    %v864 = vadd.f32 %v741, %v863
    %v865 = vpop.f32.mrb[0].mxu0
    %866 = vmatprep.mubr.f32.mxu0 0.0
    %867 = vmatmul.mubr.f32.gmra.mrb[0].mxu0 %v763
    %v868 = vpop.f32.mrb[0].mxu0
    %v869 = vadd.f32 %v741, %v868
    %v870 = vpop.f32.mrb[0].mxu0
    %871 = vmatprep.mubr.f32.mxu0 0.0
    %872 = vmatmul.mubr.f32.gmra.mrb[0].mxu0 %v766
    %v873 = vpop.f32.mrb[0].mxu0
    %v874 = vadd.f32 %v741, %v873
    %v875 = vpop.f32.mrb[0].mxu0
    %876 = vdwg.mxu0
    %v877 = vmax.f32 %v839, 0.0
    %v878 = vmax.f32 %v844, 0.0
    %v879 = vmax.f32 %v849, 0.0
    %v880 = vmax.f32 %v854, 0.0
    %v881 = vmax.f32 %v859, 0.0
    %v882 = vmax.f32 %v864, 0.0
    %v883 = vmax.f32 %v869, 0.0
    %v884 = vmax.f32 %v874, 0.0
    %v886 = vlaneseq
    %v887 = vshrl.u32 %v886, 7
    %v888 = vsub.s32 0, %v887
    %v889 = vrot.slane %v360, %v888
    %v892 = vsel %vm743, %v877, 0
    %v895 = vsel %vm743, %v878, 0
    %v898 = vsel %vm743, %v879, 0
    %v901 = vsel %vm743, %v880, 0
    %v904 = vsel %vm743, %v881, 0
    %v907 = vsel %vm743, %v882, 0
    %v910 = vsel %vm743, %v883, 0
    %v913 = vsel %vm743, %v884, 0
    %v916 = vsel %vm768, %v359, 0
    %918 = vmatprep.subr.mxu0 0.0
    %919 = vmatpush1.msra.mxu0 %v916
    %920 = vmatprep.subr.mxu0 0.0
    %921 = vmatpush1.msra.mxu0 0.0
    %922 = vmatprep.subr.mxu0 0.0
    %923 = vmatpush1.msra.mxu0 0.0
    %924 = vmatprep.subr.mxu0 0.0
    %925 = vmatpush1.msra.mxu0 0.0
    %926 = vmatprep.subr.mxu0 0.0
    %927 = vmatpush1.msra.mxu0 0.0
    %928 = vmatprep.subr.mxu0 0.0
    %929 = vmatpush1.msra.mxu0 0.0
    %930 = vmatprep.subr.mxu0 0.0
    %931 = vmatpush1.msra.mxu0 0.0
    %932 = vmatprep.subr.mxu0 0.0
    %933 = vmatpush1.msra.mxu0 0.0
    %934 = vmatprep.subr.mxu0 0.0
    %935 = vmatpush1.msra.mxu0 0.0
    %936 = vmatprep.subr.mxu0 0.0
    %937 = vmatpush1.msra.mxu0 0.0
    %938 = vmatprep.subr.mxu0 0.0
    %939 = vmatpush1.msra.mxu0 0.0
    %940 = vmatprep.subr.mxu0 0.0
    %941 = vmatpush1.msra.mxu0 0.0
    %942 = vmatprep.subr.mxu0 0.0
    %943 = vmatpush1.msra.mxu0 0.0
    %944 = vmatprep.subr.mxu0 0.0
    %945 = vmatpush1.msra.mxu0 0.0
    %946 = vmatprep.subr.mxu0 0.0
    %947 = vmatpush1.msra.mxu0 0.0
    %948 = vmatprep.subr.mxu0 0.0
    %949 = vmatpush1.msra.mxu0 0.0
    %950 = vmatprep.subr.mxu0 0.0
    %951 = vmatpush1.msra.mxu0 0.0
    %952 = vmatprep.subr.mxu0 0.0
    %953 = vmatpush1.msra.mxu0 0.0
    %954 = vmatprep.subr.mxu0 0.0
    %955 = vmatpush1.msra.mxu0 0.0
    %956 = vmatprep.subr.mxu0 0.0
    %957 = vmatpush1.msra.mxu0 0.0
    %958 = vmatprep.subr.mxu0 0.0
    %959 = vmatpush1.msra.mxu0 0.0
    %960 = vmatprep.subr.mxu0 0.0
    %961 = vmatpush1.msra.mxu0 0.0
    %962 = vmatprep.subr.mxu0 0.0
    %963 = vmatpush1.msra.mxu0 0.0
    %964 = vmatprep.subr.mxu0 0.0
    %965 = vmatpush1.msra.mxu0 0.0
    %966 = vmatprep.subr.mxu0 0.0
    %967 = vmatpush1.msra.mxu0 0.0
    %968 = vmatprep.subr.mxu0 0.0
    %969 = vmatpush1.msra.mxu0 0.0
    %970 = vmatprep.subr.mxu0 0.0
    %971 = vmatpush1.msra.mxu0 0.0
    %972 = vmatprep.subr.mxu0 0.0
    %973 = vmatpush1.msra.mxu0 0.0
    %974 = vmatprep.subr.mxu0 0.0
    %975 = vmatpush1.msra.mxu0 0.0
    %976 = vmatprep.subr.mxu0 0.0
    %977 = vmatpush1.msra.mxu0 0.0
    %978 = vmatprep.subr.mxu0 0.0
    %979 = vmatpush1.msra.mxu0 0.0
    %980 = vmatprep.subr.mxu0 0.0
    %981 = vmatpush1.msra.mxu0 0.0
    %982 = vmatprep.mubr.f32.mxu0 0.0
    %983 = vmatmul.mubr.f32.gmra.mrb[0].mxu0 %v892
    %v984 = vpop.f32.mrb[0].mxu0
    %v985 = vadd.f32 %v889, %v984
    %v986 = vpop.f32.mrb[0].mxu0
    %987 = vmatprep.mubr.f32.mxu0 0.0
    %988 = vmatmul.mubr.f32.gmra.mrb[0].mxu0 %v895
    %v989 = vpop.f32.mrb[0].mxu0
    %v990 = vadd.f32 %v889, %v989
    %v991 = vpop.f32.mrb[0].mxu0
    %992 = vmatprep.mubr.f32.mxu0 0.0
    %993 = vmatmul.mubr.f32.gmra.mrb[0].mxu0 %v898
    %v994 = vpop.f32.mrb[0].mxu0
    %v995 = vadd.f32 %v889, %v994
    %v996 = vpop.f32.mrb[0].mxu0
    %997 = vmatprep.mubr.f32.mxu0 0.0
    %998 = vmatmul.mubr.f32.gmra.mrb[0].mxu0 %v901
    %v999 = vpop.f32.mrb[0].mxu0
    %v1000 = vadd.f32 %v889, %v999
    %v1001 = vpop.f32.mrb[0].mxu0
    %1002 = vmatprep.mubr.f32.mxu0 0.0
    %1003 = vmatmul.mubr.f32.gmra.mrb[0].mxu0 %v904
    %v1004 = vpop.f32.mrb[0].mxu0
    %v1005 = vadd.f32 %v889, %v1004
    %v1006 = vpop.f32.mrb[0].mxu0
    %1007 = vmatprep.mubr.f32.mxu0 0.0
    %1008 = vmatmul.mubr.f32.gmra.mrb[0].mxu0 %v907
    %v1009 = vpop.f32.mrb[0].mxu0
    %v1010 = vadd.f32 %v889, %v1009
    %v1011 = vpop.f32.mrb[0].mxu0
    %1012 = vmatprep.mubr.f32.mxu0 0.0
    %1013 = vmatmul.mubr.f32.gmra.mrb[0].mxu0 %v910
    %v1014 = vpop.f32.mrb[0].mxu0
    %v1015 = vadd.f32 %v889, %v1014
    %v1016 = vpop.f32.mrb[0].mxu0
    %1017 = vmatprep.mubr.f32.mxu0 0.0
    %1018 = vmatmul.mubr.f32.gmra.mrb[0].mxu0 %v913
    %v1019 = vpop.f32.mrb[0].mxu0
    %v1020 = vadd.f32 %v889, %v1019
    %v1021 = vpop.f32.mrb[0].mxu0
    %1022 = vdwg.mxu0
    %v1023 = vadd.f32 %v699, %v985
    %v1024 = vadd.f32 %v704, %v990
    %v1025 = vadd.f32 %v709, %v995
    %v1026 = vadd.f32 %v714, %v1000
    %v1027 = vadd.f32 %v719, %v1005
    %v1028 = vadd.f32 %v724, %v1010
    %v1029 = vadd.f32 %v729, %v1015
    %v1030 = vadd.f32 %v734, %v1020
    %v1031 = vsub.f32 %v1023, %v600
    %v1032 = vsub.f32 %v1024, %v605
    %v1033 = vsub.f32 %v1025, %v600
    %v1034 = vsub.f32 %v1026, %v605
    %v1035 = vsub.f32 %v1027, %v600
    %v1036 = vsub.f32 %v1028, %v605
    %v1037 = vsub.f32 %v1029, %v600
    %v1038 = vsub.f32 %v1030, %v605
    %v1040 = vlaneseq
    %v1041 = vshrl.u32 %v1040, 7
    %v1042 = vsub.s32 0, %v1041
    %v1043 = vrot.slane %v365, %v1042
    %v1046 = vsel %vm483, %v1031, 0
    %v1049 = vsel %vm483, %v1032, 0
    %v1052 = vsel %vm483, %v1033, 0
    %v1055 = vsel %vm483, %v1034, 0
    %v1058 = vsel %vm483, %v1035, 0
    %v1061 = vsel %vm483, %v1036, 0
    %v1064 = vsel %vm483, %v1037, 0
    %v1067 = vsel %vm483, %v1038, 0
    %1069 = vmatprep.subr.mxu0 0.0
    %1070 = vmatpush1.msra.mxu0 %v361
    %1071 = vmatprep.subr.mxu0 0.0
    %1072 = vmatpush1.msra.mxu0 %v362
    %1073 = vmatprep.subr.mxu0 0.0
    %1074 = vmatpush1.msra.mxu0 %v363
    %1075 = vmatprep.subr.mxu0 0.0
    %1076 = vmatpush1.msra.mxu0 %v364
    %1077 = vmatprep.subr.mxu0 0.0
    %1078 = vmatpush1.msra.mxu0 0.0
    %1079 = vmatprep.subr.mxu0 0.0
    %1080 = vmatpush1.msra.mxu0 0.0
    %1081 = vmatprep.subr.mxu0 0.0
    %1082 = vmatpush1.msra.mxu0 0.0
    %1083 = vmatprep.subr.mxu0 0.0
    %1084 = vmatpush1.msra.mxu0 0.0
    %1085 = vmatprep.subr.mxu0 0.0
    %1086 = vmatpush1.msra.mxu0 0.0
    %1087 = vmatprep.subr.mxu0 0.0
    %1088 = vmatpush1.msra.mxu0 0.0
    %1089 = vmatprep.subr.mxu0 0.0
    %1090 = vmatpush1.msra.mxu0 0.0
    %1091 = vmatprep.subr.mxu0 0.0
    %1092 = vmatpush1.msra.mxu0 0.0
    %1093 = vmatprep.subr.mxu0 0.0
    %1094 = vmatpush1.msra.mxu0 0.0
    %1095 = vmatprep.subr.mxu0 0.0
    %1096 = vmatpush1.msra.mxu0 0.0
    %1097 = vmatprep.subr.mxu0 0.0
    %1098 = vmatpush1.msra.mxu0 0.0
    %1099 = vmatprep.subr.mxu0 0.0
    %1100 = vmatpush1.msra.mxu0 0.0
    %1101 = vmatprep.subr.mxu0 0.0
    %1102 = vmatpush1.msra.mxu0 0.0
    %1103 = vmatprep.subr.mxu0 0.0
    %1104 = vmatpush1.msra.mxu0 0.0
    %1105 = vmatprep.subr.mxu0 0.0
    %1106 = vmatpush1.msra.mxu0 0.0
    %1107 = vmatprep.subr.mxu0 0.0
    %1108 = vmatpush1.msra.mxu0 0.0
    %1109 = vmatprep.subr.mxu0 0.0
    %1110 = vmatpush1.msra.mxu0 0.0
    %1111 = vmatprep.subr.mxu0 0.0
    %1112 = vmatpush1.msra.mxu0 0.0
    %1113 = vmatprep.subr.mxu0 0.0
    %1114 = vmatpush1.msra.mxu0 0.0
    %1115 = vmatprep.subr.mxu0 0.0
    %1116 = vmatpush1.msra.mxu0 0.0
    %1117 = vmatprep.subr.mxu0 0.0
    %1118 = vmatpush1.msra.mxu0 0.0
    %1119 = vmatprep.subr.mxu0 0.0
    %1120 = vmatpush1.msra.mxu0 0.0
    %1121 = vmatprep.subr.mxu0 0.0
    %1122 = vmatpush1.msra.mxu0 0.0
    %1123 = vmatprep.subr.mxu0 0.0
    %1124 = vmatpush1.msra.mxu0 0.0
    %1125 = vmatprep.subr.mxu0 0.0
    %1126 = vmatpush1.msra.mxu0 0.0
    %1127 = vmatprep.subr.mxu0 0.0
    %1128 = vmatpush1.msra.mxu0 0.0
    %1129 = vmatprep.subr.mxu0 0.0
    %1130 = vmatpush1.msra.mxu0 0.0
    %1131 = vmatprep.subr.mxu0 0.0
    %1132 = vmatpush1.msra.mxu0 0.0
    %1133 = vmatprep.mubr.f32.mxu0 0.0
    %1134 = vmatmul.mubr.f32.gmra.mrb[0].mxu0 %v1046
    %v1135 = vpop.f32.mrb[0].mxu0
    %v1136 = vadd.f32 %v1043, %v1135
    %v1137 = vpop.f32.mrb[0].mxu0
    %1138 = vmatprep.mubr.f32.mxu0 0.0
    %1139 = vmatmul.mubr.f32.gmra.mrb[0].mxu0 %v1049
    %v1140 = vpop.f32.mrb[0].mxu0
    %v1141 = vadd.f32 %v1043, %v1140
    %v1142 = vpop.f32.mrb[0].mxu0
    %1143 = vmatprep.mubr.f32.mxu0 0.0
    %1144 = vmatmul.mubr.f32.gmra.mrb[0].mxu0 %v1052
    %v1145 = vpop.f32.mrb[0].mxu0
    %v1146 = vadd.f32 %v1043, %v1145
    %v1147 = vpop.f32.mrb[0].mxu0
    %1148 = vmatprep.mubr.f32.mxu0 0.0
    %1149 = vmatmul.mubr.f32.gmra.mrb[0].mxu0 %v1055
    %v1150 = vpop.f32.mrb[0].mxu0
    %v1151 = vadd.f32 %v1043, %v1150
    %v1152 = vpop.f32.mrb[0].mxu0
    %1153 = vmatprep.mubr.f32.mxu0 0.0
    %1154 = vmatmul.mubr.f32.gmra.mrb[0].mxu0 %v1058
    %v1155 = vpop.f32.mrb[0].mxu0
    %v1156 = vadd.f32 %v1043, %v1155
    %v1157 = vpop.f32.mrb[0].mxu0
    %1158 = vmatprep.mubr.f32.mxu0 0.0
    %1159 = vmatmul.mubr.f32.gmra.mrb[0].mxu0 %v1061
    %v1160 = vpop.f32.mrb[0].mxu0
    %v1161 = vadd.f32 %v1043, %v1160
    %v1162 = vpop.f32.mrb[0].mxu0
    %1163 = vmatprep.mubr.f32.mxu0 0.0
    %1164 = vmatmul.mubr.f32.gmra.mrb[0].mxu0 %v1064
    %v1165 = vpop.f32.mrb[0].mxu0
    %v1166 = vadd.f32 %v1043, %v1165
    %v1167 = vpop.f32.mrb[0].mxu0
    %1168 = vmatprep.mubr.f32.mxu0 0.0
    %1169 = vmatmul.mubr.f32.gmra.mrb[0].mxu0 %v1067
    %v1170 = vpop.f32.mrb[0].mxu0
    %v1171 = vadd.f32 %v1043, %v1170
    %v1172 = vpop.f32.mrb[0].mxu0
    %1173 = vdwg.mxu0
    %v1174 = vmax.f32 %v1136, 0.0
    %v1175 = vmax.f32 %v1141, 0.0
    %v1176 = vmax.f32 %v1146, 0.0
    %v1177 = vmax.f32 %v1151, 0.0
    %v1178 = vmax.f32 %v1156, 0.0
    %v1179 = vmax.f32 %v1161, 0.0
    %v1180 = vmax.f32 %v1166, 0.0
    %v1181 = vmax.f32 %v1171, 0.0
    %v1183 = vlaneseq
    %v1184 = vshrl.u32 %v1183, 7
    %v1185 = vsub.s32 0, %v1184
    %v1186 = vrot.slane %v367, %v1185
    %v1189 = vsel %vm743, %v1174, 0
    %v1192 = vsel %vm743, %v1175, 0
    %v1195 = vsel %vm743, %v1176, 0
    %v1198 = vsel %vm743, %v1177, 0
    %v1201 = vsel %vm743, %v1178, 0
    %v1204 = vsel %vm743, %v1179, 0
    %v1207 = vsel %vm743, %v1180, 0
    %v1210 = vsel %vm743, %v1181, 0
    %v1213 = vsel %vm768, %v366, 0
    %1215 = vmatprep.subr.mxu0 0.0
    %1216 = vmatpush1.msra.mxu0 %v1213
    %1217 = vmatprep.subr.mxu0 0.0
    %1218 = vmatpush1.msra.mxu0 0.0
    %1219 = vmatprep.subr.mxu0 0.0
    %1220 = vmatpush1.msra.mxu0 0.0
    %1221 = vmatprep.subr.mxu0 0.0
    %1222 = vmatpush1.msra.mxu0 0.0
    %1223 = vmatprep.subr.mxu0 0.0
    %1224 = vmatpush1.msra.mxu0 0.0
    %1225 = vmatprep.subr.mxu0 0.0
    %1226 = vmatpush1.msra.mxu0 0.0
    %1227 = vmatprep.subr.mxu0 0.0
    %1228 = vmatpush1.msra.mxu0 0.0
    %1229 = vmatprep.subr.mxu0 0.0
    %1230 = vmatpush1.msra.mxu0 0.0
    %1231 = vmatprep.subr.mxu0 0.0
    %1232 = vmatpush1.msra.mxu0 0.0
    %1233 = vmatprep.subr.mxu0 0.0
    %1234 = vmatpush1.msra.mxu0 0.0
    %1235 = vmatprep.subr.mxu0 0.0
    %1236 = vmatpush1.msra.mxu0 0.0
    %1237 = vmatprep.subr.mxu0 0.0
    %1238 = vmatpush1.msra.mxu0 0.0
    %1239 = vmatprep.subr.mxu0 0.0
    %1240 = vmatpush1.msra.mxu0 0.0
    %1241 = vmatprep.subr.mxu0 0.0
    %1242 = vmatpush1.msra.mxu0 0.0
    %1243 = vmatprep.subr.mxu0 0.0
    %1244 = vmatpush1.msra.mxu0 0.0
    %1245 = vmatprep.subr.mxu0 0.0
    %1246 = vmatpush1.msra.mxu0 0.0
    %1247 = vmatprep.subr.mxu0 0.0
    %1248 = vmatpush1.msra.mxu0 0.0
    %1249 = vmatprep.subr.mxu0 0.0
    %1250 = vmatpush1.msra.mxu0 0.0
    %1251 = vmatprep.subr.mxu0 0.0
    %1252 = vmatpush1.msra.mxu0 0.0
    %1253 = vmatprep.subr.mxu0 0.0
    %1254 = vmatpush1.msra.mxu0 0.0
    %1255 = vmatprep.subr.mxu0 0.0
    %1256 = vmatpush1.msra.mxu0 0.0
    %1257 = vmatprep.subr.mxu0 0.0
    %1258 = vmatpush1.msra.mxu0 0.0
    %1259 = vmatprep.subr.mxu0 0.0
    %1260 = vmatpush1.msra.mxu0 0.0
    %1261 = vmatprep.subr.mxu0 0.0
    %1262 = vmatpush1.msra.mxu0 0.0
    %1263 = vmatprep.subr.mxu0 0.0
    %1264 = vmatpush1.msra.mxu0 0.0
    %1265 = vmatprep.subr.mxu0 0.0
    %1266 = vmatpush1.msra.mxu0 0.0
    %1267 = vmatprep.subr.mxu0 0.0
    %1268 = vmatpush1.msra.mxu0 0.0
    %1269 = vmatprep.subr.mxu0 0.0
    %1270 = vmatpush1.msra.mxu0 0.0
    %1271 = vmatprep.subr.mxu0 0.0
    %1272 = vmatpush1.msra.mxu0 0.0
    %1273 = vmatprep.subr.mxu0 0.0
    %1274 = vmatpush1.msra.mxu0 0.0
    %1275 = vmatprep.subr.mxu0 0.0
    %1276 = vmatpush1.msra.mxu0 0.0
    %1277 = vmatprep.subr.mxu0 0.0
    %1278 = vmatpush1.msra.mxu0 0.0
    %1279 = vmatprep.mubr.f32.mxu0 0.0
    %1280 = vmatmul.mubr.f32.gmra.mrb[0].mxu0 %v1189
    %v1281 = vpop.f32.mrb[0].mxu0
    %v1282 = vadd.f32 %v1186, %v1281
    %v1283 = vpop.f32.mrb[0].mxu0
    %1284 = vmatprep.mubr.f32.mxu0 0.0
    %1285 = vmatmul.mubr.f32.gmra.mrb[0].mxu0 %v1192
    %v1286 = vpop.f32.mrb[0].mxu0
    %v1287 = vadd.f32 %v1186, %v1286
    %v1288 = vpop.f32.mrb[0].mxu0
    %1289 = vmatprep.mubr.f32.mxu0 0.0
    %1290 = vmatmul.mubr.f32.gmra.mrb[0].mxu0 %v1195
    %v1291 = vpop.f32.mrb[0].mxu0
    %v1292 = vadd.f32 %v1186, %v1291
    %v1293 = vpop.f32.mrb[0].mxu0
    %1294 = vmatprep.mubr.f32.mxu0 0.0
    %1295 = vmatmul.mubr.f32.gmra.mrb[0].mxu0 %v1198
    %v1296 = vpop.f32.mrb[0].mxu0
    %v1297 = vadd.f32 %v1186, %v1296
    %v1298 = vpop.f32.mrb[0].mxu0
    %1299 = vmatprep.mubr.f32.mxu0 0.0
    %1300 = vmatmul.mubr.f32.gmra.mrb[0].mxu0 %v1201
    %v1301 = vpop.f32.mrb[0].mxu0
    %v1302 = vadd.f32 %v1186, %v1301
    %v1303 = vpop.f32.mrb[0].mxu0
    %1304 = vmatprep.mubr.f32.mxu0 0.0
    %1305 = vmatmul.mubr.f32.gmra.mrb[0].mxu0 %v1204
    %v1306 = vpop.f32.mrb[0].mxu0
    %v1307 = vadd.f32 %v1186, %v1306
    %v1308 = vpop.f32.mrb[0].mxu0
    %1309 = vmatprep.mubr.f32.mxu0 0.0
    %1310 = vmatmul.mubr.f32.gmra.mrb[0].mxu0 %v1207
    %v1311 = vpop.f32.mrb[0].mxu0
    %v1312 = vadd.f32 %v1186, %v1311
    %v1313 = vpop.f32.mrb[0].mxu0
    %1314 = vmatprep.mubr.f32.mxu0 0.0
    %1315 = vmatmul.mubr.f32.gmra.mrb[0].mxu0 %v1210
    %v1316 = vpop.f32.mrb[0].mxu0
    %v1317 = vadd.f32 %v1186, %v1316
    %v1318 = vpop.f32.mrb[0].mxu0
    %1319 = vdwg.mxu0
    %vm1320 = vcmp.eq.f32.partialorder %v475, 0.0
    %vm1321 = vcmp.eq.f32.partialorder %v476, 0.0
    %vm1322 = vcmp.eq.f32.partialorder %v477, 0.0
    %vm1323 = vcmp.eq.f32.partialorder %v478, 0.0
    %vm1324 = vcmp.eq.f32.partialorder %v479, 0.0
    %vm1325 = vcmp.eq.f32.partialorder %v480, 0.0
    %vm1326 = vcmp.eq.f32.partialorder %v481, 0.0
    %vm1327 = vcmp.eq.f32.partialorder %v482, 0.0
    %v1328 = vsel %vm1320, 1, 0
    %v1329 = vsel %vm1321, 1, 0
    %v1330 = vsel %vm1322, 1, 0
    %v1331 = vsel %vm1323, 1, 0
    %v1332 = vsel %vm1324, 1, 0
    %v1333 = vsel %vm1325, 1, 0
    %v1334 = vsel %vm1326, 1, 0
    %v1335 = vsel %vm1327, 1, 0
    %1336 = vset.pattern.permute.xlu0 0
    %1337 = vperm.xlu0 %1336, %v1328
    %v1338 = vpop.permute.xlu0 %1337
    %1339 = vset.pattern.permute.xlu0 0
    %1340 = vperm.xlu0 %1339, %v1329
    %v1341 = vpop.permute.xlu0 %1340
    %1342 = vset.pattern.permute.xlu0 0
    %1343 = vperm.xlu0 %1342, %v1330
    %v1344 = vpop.permute.xlu0 %1343
    %1345 = vset.pattern.permute.xlu0 0
    %1346 = vperm.xlu0 %1345, %v1331
    %v1347 = vpop.permute.xlu0 %1346
    %1348 = vset.pattern.permute.xlu0 0
    %1349 = vperm.xlu0 %1348, %v1332
    %v1350 = vpop.permute.xlu0 %1349
    %1351 = vset.pattern.permute.xlu0 0
    %1352 = vperm.xlu0 %1351, %v1333
    %v1353 = vpop.permute.xlu0 %1352
    %1354 = vset.pattern.permute.xlu0 0
    %1355 = vperm.xlu0 %1354, %v1334
    %v1356 = vpop.permute.xlu0 %1355
    %1357 = vset.pattern.permute.xlu0 0
    %1358 = vperm.xlu0 %1357, %v1335
    %v1359 = vpop.permute.xlu0 %1358
    %vm1360 = vcmp.eq.s32.totalorder %v1338, 1
    %vm1361 = vcmp.eq.s32.totalorder %v1341, 1
    %vm1362 = vcmp.eq.s32.totalorder %v1344, 1
    %vm1363 = vcmp.eq.s32.totalorder %v1347, 1
    %vm1364 = vcmp.eq.s32.totalorder %v1350, 1
    %vm1365 = vcmp.eq.s32.totalorder %v1353, 1
    %vm1366 = vcmp.eq.s32.totalorder %v1356, 1
    %vm1367 = vcmp.eq.s32.totalorder %v1359, 1
    %v1368 = vsel %vm1360, -1e+09, %v1282
    %v1369 = vsel %vm1361, -1e+09, %v1287
    %v1370 = vsel %vm1362, -1e+09, %v1292
    %v1371 = vsel %vm1363, -1e+09, %v1297
    %v1372 = vsel %vm1364, -1e+09, %v1302
    %v1373 = vsel %vm1365, -1e+09, %v1307
    %v1374 = vsel %vm1366, -1e+09, %v1312
    %v1375 = vsel %vm1367, -1e+09, %v1317
    %v1377 = vsel %vm483, %v699, 0
    %v1380 = vsel %vm483, %v704, 0
    %v1383 = vsel %vm483, %v709, 0
    %v1386 = vsel %vm483, %v714, 0
    %v1389 = vsel %vm483, %v719, 0
    %v1392 = vsel %vm483, %v724, 0
    %v1395 = vsel %vm483, %v729, 0
    %v1398 = vsel %vm483, %v734, 0
    %1400 = vmatprep.subr.mxu0 0.0
    %1401 = vmatpush1.msra.mxu0 %v353
    %1402 = vmatprep.subr.mxu0 0.0
    %1403 = vmatpush1.msra.mxu0 %v354
    %1404 = vmatprep.subr.mxu0 0.0
    %1405 = vmatpush1.msra.mxu0 %v355
    %1406 = vmatprep.subr.mxu0 0.0
    %1407 = vmatpush1.msra.mxu0 %v356
    %1408 = vmatprep.subr.mxu0 0.0
    %1409 = vmatpush1.msra.mxu0 0.0
    %1410 = vmatprep.subr.mxu0 0.0
    %1411 = vmatpush1.msra.mxu0 0.0
    %1412 = vmatprep.subr.mxu0 0.0
    %1413 = vmatpush1.msra.mxu0 0.0
    %1414 = vmatprep.subr.mxu0 0.0
    %1415 = vmatpush1.msra.mxu0 0.0
    %1416 = vmatprep.subr.mxu0 0.0
    %1417 = vmatpush1.msra.mxu0 0.0
    %1418 = vmatprep.subr.mxu0 0.0
    %1419 = vmatpush1.msra.mxu0 0.0
    %1420 = vmatprep.subr.mxu0 0.0
    %1421 = vmatpush1.msra.mxu0 0.0
    %1422 = vmatprep.subr.mxu0 0.0
    %1423 = vmatpush1.msra.mxu0 0.0
    %1424 = vmatprep.subr.mxu0 0.0
    %1425 = vmatpush1.msra.mxu0 0.0
    %1426 = vmatprep.subr.mxu0 0.0
    %1427 = vmatpush1.msra.mxu0 0.0
    %1428 = vmatprep.subr.mxu0 0.0
    %1429 = vmatpush1.msra.mxu0 0.0
    %1430 = vmatprep.subr.mxu0 0.0
    %1431 = vmatpush1.msra.mxu0 0.0
    %1432 = vmatprep.subr.mxu0 0.0
    %1433 = vmatpush1.msra.mxu0 0.0
    %1434 = vmatprep.subr.mxu0 0.0
    %1435 = vmatpush1.msra.mxu0 0.0
    %1436 = vmatprep.subr.mxu0 0.0
    %1437 = vmatpush1.msra.mxu0 0.0
    %1438 = vmatprep.subr.mxu0 0.0
    %1439 = vmatpush1.msra.mxu0 0.0
    %1440 = vmatprep.subr.mxu0 0.0
    %1441 = vmatpush1.msra.mxu0 0.0
    %1442 = vmatprep.subr.mxu0 0.0
    %1443 = vmatpush1.msra.mxu0 0.0
    %1444 = vmatprep.subr.mxu0 0.0
    %1445 = vmatpush1.msra.mxu0 0.0
    %1446 = vmatprep.subr.mxu0 0.0
    %1447 = vmatpush1.msra.mxu0 0.0
    %1448 = vmatprep.subr.mxu0 0.0
    %1449 = vmatpush1.msra.mxu0 0.0
    %1450 = vmatprep.subr.mxu0 0.0
    %1451 = vmatpush1.msra.mxu0 0.0
    %1452 = vmatprep.subr.mxu0 0.0
    %1453 = vmatpush1.msra.mxu0 0.0
    %1454 = vmatprep.subr.mxu0 0.0
    %1455 = vmatpush1.msra.mxu0 0.0
    %1456 = vmatprep.subr.mxu0 0.0
    %1457 = vmatpush1.msra.mxu0 0.0
    %1458 = vmatprep.subr.mxu0 0.0
    %1459 = vmatpush1.msra.mxu0 0.0
    %1460 = vmatprep.subr.mxu0 0.0
    %1461 = vmatpush1.msra.mxu0 0.0
    %1462 = vmatprep.subr.mxu0 0.0
    %1463 = vmatpush1.msra.mxu0 0.0
    %1464 = vmatprep.mubr.f32.mxu0 0.0
    %1465 = vmatmul.mubr.f32.gmra.mrb[0].mxu0 %v1377
    %v1466 = vpop.f32.mrb[0].mxu0
    %v1467 = vadd.f32 %v985, %v1466
    %v1468 = vpop.f32.mrb[0].mxu0
    %1469 = vmatprep.mubr.f32.mxu0 0.0
    %1470 = vmatmul.mubr.f32.gmra.mrb[0].mxu0 %v1380
    %v1471 = vpop.f32.mrb[0].mxu0
    %v1472 = vadd.f32 %v990, %v1471
    %v1473 = vpop.f32.mrb[0].mxu0
    %1474 = vmatprep.mubr.f32.mxu0 0.0
    %1475 = vmatmul.mubr.f32.gmra.mrb[0].mxu0 %v1383
    %v1476 = vpop.f32.mrb[0].mxu0
    %v1477 = vadd.f32 %v995, %v1476
    %v1478 = vpop.f32.mrb[0].mxu0
    %1479 = vmatprep.mubr.f32.mxu0 0.0
    %1480 = vmatmul.mubr.f32.gmra.mrb[0].mxu0 %v1386
    %v1481 = vpop.f32.mrb[0].mxu0
    %v1482 = vadd.f32 %v1000, %v1481
    %v1483 = vpop.f32.mrb[0].mxu0
    %1484 = vmatprep.mubr.f32.mxu0 0.0
    %1485 = vmatmul.mubr.f32.gmra.mrb[0].mxu0 %v1389
    %v1486 = vpop.f32.mrb[0].mxu0
    %v1487 = vadd.f32 %v1005, %v1486
    %v1488 = vpop.f32.mrb[0].mxu0
    %1489 = vmatprep.mubr.f32.mxu0 0.0
    %1490 = vmatmul.mubr.f32.gmra.mrb[0].mxu0 %v1392
    %v1491 = vpop.f32.mrb[0].mxu0
    %v1492 = vadd.f32 %v1010, %v1491
    %v1493 = vpop.f32.mrb[0].mxu0
    %1494 = vmatprep.mubr.f32.mxu0 0.0
    %1495 = vmatmul.mubr.f32.gmra.mrb[0].mxu0 %v1395
    %v1496 = vpop.f32.mrb[0].mxu0
    %v1497 = vadd.f32 %v1015, %v1496
    %v1498 = vpop.f32.mrb[0].mxu0
    %1499 = vmatprep.mubr.f32.mxu0 0.0
    %1500 = vmatmul.mubr.f32.gmra.mrb[0].mxu0 %v1398
    %v1501 = vpop.f32.mrb[0].mxu0
    %v1502 = vadd.f32 %v1020, %v1501
    %v1503 = vpop.f32.mrb[0].mxu0
    %1504 = vdwg.mxu0
    %v1505 = vmax.f32 %v1368, %v1370
    %v1506 = vmax.f32 %v1369, %v1371
    %v1507 = vmax.f32 %v1505, %v1372
    %v1508 = vmax.f32 %v1506, %v1373
    %v1509 = vmax.f32 %v1507, %v1374
    %v1510 = vmax.f32 %v1508, %v1375
    %v1511 = vsub.f32 %v1368, %v1509
    %v1512 = vsub.f32 %v1369, %v1510
    %v1513 = vmul.f32 %v1511, 1.442695
    %v1514 = vpow.pop %v1513
    %v1515 = vmul.f32 %v1512, 1.442695
    %v1516 = vpow.pop %v1515
    %v1517 = vadd.f32 %v1514, 0.0
    %v1518 = vadd.f32 %v1516, 0.0
    %v1519 = vmul.f32 %v1467, %v1514
    %v1520 = vmul.f32 %v1472, %v1516
    %v1521 = vadd.f32 %v1519, 0.0
    %v1522 = vadd.f32 %v1520, 0.0
    %v1523 = vsub.f32 %v1370, %v1509
    %v1524 = vsub.f32 %v1371, %v1510
    %v1525 = vmul.f32 %v1523, 1.442695
    %v1526 = vpow.pop %v1525
    %v1527 = vmul.f32 %v1524, 1.442695
    %v1528 = vpow.pop %v1527
    %v1529 = vadd.f32 %v1517, %v1526
    %v1530 = vadd.f32 %v1518, %v1528
    %v1531 = vmul.f32 %v1477, %v1526
    %v1532 = vmul.f32 %v1482, %v1528
    %v1533 = vadd.f32 %v1521, %v1531
    %v1534 = vadd.f32 %v1522, %v1532
    %v1535 = vsub.f32 %v1372, %v1509
    %v1536 = vsub.f32 %v1373, %v1510
    %v1537 = vmul.f32 %v1535, 1.442695
    %v1538 = vpow.pop %v1537
    %v1539 = vmul.f32 %v1536, 1.442695
    %v1540 = vpow.pop %v1539
    %v1541 = vadd.f32 %v1529, %v1538
    %v1542 = vadd.f32 %v1530, %v1540
    %v1543 = vmul.f32 %v1487, %v1538
    %v1544 = vmul.f32 %v1492, %v1540
    %v1545 = vadd.f32 %v1533, %v1543
    %v1546 = vadd.f32 %v1534, %v1544
    %v1547 = vsub.f32 %v1374, %v1509
    %v1548 = vsub.f32 %v1375, %v1510
    %v1549 = vmul.f32 %v1547, 1.442695
    %v1550 = vpow.pop %v1549
    %v1551 = vmul.f32 %v1548, 1.442695
    %v1552 = vpow.pop %v1551
    %v1553 = vadd.f32 %v1541, %v1550
    %v1554 = vadd.f32 %v1542, %v1552
    %v1555 = vmul.f32 %v1497, %v1550
    %v1556 = vmul.f32 %v1502, %v1552
    %v1557 = vadd.f32 %v1545, %v1555
    %v1558 = vadd.f32 %v1546, %v1556
    %v1559 = vrcp.pop %v1553
    %v1560 = vrcp.pop %v1554
    %v1561 = vmul.f32 %v1557, %v1559
    %v1562 = vmul.f32 %v1558, %v1560
    %v1564 = vlaneseq
    %v1565 = vshrl.u32 %v1564, 7
    %v1566 = vsub.s32 0, %v1565
    %v1567 = vrot.slane %v372, %v1566
    %v1570 = vsel %vm483, %v1561, 0
    %v1573 = vsel %vm483, %v1562, 0
    %1575 = vmatprep.subr.mxu0 0.0
    %1576 = vmatpush1.msra.mxu0 %v368
    %1577 = vmatprep.subr.mxu0 0.0
    %1578 = vmatpush1.msra.mxu0 %v369
    %1579 = vmatprep.subr.mxu0 0.0
    %1580 = vmatpush1.msra.mxu0 %v370
    %1581 = vmatprep.subr.mxu0 0.0
    %1582 = vmatpush1.msra.mxu0 %v371
    %1583 = vmatprep.subr.mxu0 0.0
    %1584 = vmatpush1.msra.mxu0 0.0
    %1585 = vmatprep.subr.mxu0 0.0
    %1586 = vmatpush1.msra.mxu0 0.0
    %1587 = vmatprep.subr.mxu0 0.0
    %1588 = vmatpush1.msra.mxu0 0.0
    %1589 = vmatprep.subr.mxu0 0.0
    %1590 = vmatpush1.msra.mxu0 0.0
    %1591 = vmatprep.subr.mxu0 0.0
    %1592 = vmatpush1.msra.mxu0 0.0
    %1593 = vmatprep.subr.mxu0 0.0
    %1594 = vmatpush1.msra.mxu0 0.0
    %1595 = vmatprep.subr.mxu0 0.0
    %1596 = vmatpush1.msra.mxu0 0.0
    %1597 = vmatprep.subr.mxu0 0.0
    %1598 = vmatpush1.msra.mxu0 0.0
    %1599 = vmatprep.subr.mxu0 0.0
    %1600 = vmatpush1.msra.mxu0 0.0
    %1601 = vmatprep.subr.mxu0 0.0
    %1602 = vmatpush1.msra.mxu0 0.0
    %1603 = vmatprep.subr.mxu0 0.0
    %1604 = vmatpush1.msra.mxu0 0.0
    %1605 = vmatprep.subr.mxu0 0.0
    %1606 = vmatpush1.msra.mxu0 0.0
    %1607 = vmatprep.subr.mxu0 0.0
    %1608 = vmatpush1.msra.mxu0 0.0
    %1609 = vmatprep.subr.mxu0 0.0
    %1610 = vmatpush1.msra.mxu0 0.0
    %1611 = vmatprep.subr.mxu0 0.0
    %1612 = vmatpush1.msra.mxu0 0.0
    %1613 = vmatprep.subr.mxu0 0.0
    %1614 = vmatpush1.msra.mxu0 0.0
    %1615 = vmatprep.subr.mxu0 0.0
    %1616 = vmatpush1.msra.mxu0 0.0
    %1617 = vmatprep.subr.mxu0 0.0
    %1618 = vmatpush1.msra.mxu0 0.0
    %1619 = vmatprep.subr.mxu0 0.0
    %1620 = vmatpush1.msra.mxu0 0.0
    %1621 = vmatprep.subr.mxu0 0.0
    %1622 = vmatpush1.msra.mxu0 0.0
    %1623 = vmatprep.subr.mxu0 0.0
    %1624 = vmatpush1.msra.mxu0 0.0
    %1625 = vmatprep.subr.mxu0 0.0
    %1626 = vmatpush1.msra.mxu0 0.0
    %1627 = vmatprep.subr.mxu0 0.0
    %1628 = vmatpush1.msra.mxu0 0.0
    %1629 = vmatprep.subr.mxu0 0.0
    %1630 = vmatpush1.msra.mxu0 0.0
    %1631 = vmatprep.subr.mxu0 0.0
    %1632 = vmatpush1.msra.mxu0 0.0
    %1633 = vmatprep.subr.mxu0 0.0
    %1634 = vmatpush1.msra.mxu0 0.0
    %1635 = vmatprep.subr.mxu0 0.0
    %1636 = vmatpush1.msra.mxu0 0.0
    %1637 = vmatprep.subr.mxu0 0.0
    %1638 = vmatpush1.msra.mxu0 0.0
    %1639 = vmatprep.mubr.f32.mxu0 0.0
    %1640 = vmatmul.mubr.f32.gmra.mrb[0].mxu0 %v1570
    %v1641 = vpop.f32.mrb[0].mxu0
    %v1642 = vadd.f32 %v1567, %v1641
    %v1643 = vpop.f32.mrb[0].mxu0
    %1644 = vmatprep.mubr.f32.mxu0 0.0
    %1645 = vmatmul.mubr.f32.gmra.mrb[0].mxu0 %v1573
    %v1646 = vpop.f32.mrb[0].mxu0
    %v1647 = vadd.f32 %v1567, %v1646
    %v1648 = vpop.f32.mrb[0].mxu0
    %1649 = vdwg.mxu0
    %v1650 = vadd.f32 %v1642, %v457
    %v1651 = vadd.f32 %v1647, %v458
    %v1652 = vsel %vm483, %v1650, 0.0
    %1653 = vadd.xlane.f32.xlu0 %v1652
    %v1654 = vpop.xlane.xlu0 %1653
    %v1655 = vsel %vm483, %v1651, 0.0
    %1656 = vadd.xlane.f32.xlu0 %v1655
    %v1657 = vpop.xlane.xlu0 %1656
    %v1658 = vmul.f32 %v1654, %v490
    %v1659 = vmul.f32 %v1657, %v490
    %v1660 = vsub.f32 %v1650, %v1658
    %v1661 = vsub.f32 %v1651, %v1659
    %v1662 = vmul.f32 %v1660, %v1660
    %v1663 = vmul.f32 %v1661, %v1661
    %v1664 = vsel %vm483, %v1662, 0.0
    %1665 = vadd.xlane.f32.xlu0 %v1664
    %v1666 = vpop.xlane.xlu0 %1665
    %v1667 = vsel %vm483, %v1663, 0.0
    %1668 = vadd.xlane.f32.xlu0 %v1667
    %v1669 = vpop.xlane.xlu0 %1668
    %v1670 = vmul.f32 %v1666, %v490
    %v1671 = vmul.f32 %v1669, %v490
    %v1672 = vadd.f32 %v1670, 1e-06
    %v1673 = vadd.f32 %v1671, 1e-06
    %v1674 = vrsqrt.pop %v1672
    %v1675 = vrsqrt.pop %v1673
    %v1676 = vmul.f32 %v1660, %v1674
    %v1677 = vmul.f32 %v1661, %v1675
    %v1679 = vlaneseq
    %v1680 = vshrl.u32 %v1679, 7
    %v1681 = vsub.s32 0, %v1680
    %v1682 = vrot.slane %v373, %v1681
    %v1684 = vmul.f32 %v1676, %v1682
    %v1685 = vmul.f32 %v1677, %v1682
    %v1687 = vlaneseq
    %v1688 = vshrl.u32 %v1687, 7
    %v1689 = vsub.s32 0, %v1688
    %v1690 = vrot.slane %v374, %v1689
    %v1692 = vadd.f32 %v1684, %v1690
    %v1693 = vadd.f32 %v1685, %v1690
    %v1695 = vsel %vm483, %v1692, 0
    %v1698 = vsel %vm483, %v1693, 0
    %1700 = vmatprep.subr.mxu0 0.0
    %1701 = vmatpush1.msra.mxu0 %v375
    %1702 = vmatprep.subr.mxu0 0.0
    %1703 = vmatpush1.msra.mxu0 %v376
    %1704 = vmatprep.subr.mxu0 0.0
    %1705 = vmatpush1.msra.mxu0 %v377
    %1706 = vmatprep.subr.mxu0 0.0
    %1707 = vmatpush1.msra.mxu0 %v378
    %1708 = vmatprep.subr.mxu0 0.0
    %1709 = vmatpush1.msra.mxu0 0.0
    %1710 = vmatprep.subr.mxu0 0.0
    %1711 = vmatpush1.msra.mxu0 0.0
    %1712 = vmatprep.subr.mxu0 0.0
    %1713 = vmatpush1.msra.mxu0 0.0
    %1714 = vmatprep.subr.mxu0 0.0
    %1715 = vmatpush1.msra.mxu0 0.0
    %1716 = vmatprep.subr.mxu0 0.0
    %1717 = vmatpush1.msra.mxu0 0.0
    %1718 = vmatprep.subr.mxu0 0.0
    %1719 = vmatpush1.msra.mxu0 0.0
    %1720 = vmatprep.subr.mxu0 0.0
    %1721 = vmatpush1.msra.mxu0 0.0
    %1722 = vmatprep.subr.mxu0 0.0
    %1723 = vmatpush1.msra.mxu0 0.0
    %1724 = vmatprep.subr.mxu0 0.0
    %1725 = vmatpush1.msra.mxu0 0.0
    %1726 = vmatprep.subr.mxu0 0.0
    %1727 = vmatpush1.msra.mxu0 0.0
    %1728 = vmatprep.subr.mxu0 0.0
    %1729 = vmatpush1.msra.mxu0 0.0
    %1730 = vmatprep.subr.mxu0 0.0
    %1731 = vmatpush1.msra.mxu0 0.0
    %1732 = vmatprep.subr.mxu0 0.0
    %1733 = vmatpush1.msra.mxu0 0.0
    %1734 = vmatprep.subr.mxu0 0.0
    %1735 = vmatpush1.msra.mxu0 0.0
    %1736 = vmatprep.subr.mxu0 0.0
    %1737 = vmatpush1.msra.mxu0 0.0
    %1738 = vmatprep.subr.mxu0 0.0
    %1739 = vmatpush1.msra.mxu0 0.0
    %1740 = vmatprep.subr.mxu0 0.0
    %1741 = vmatpush1.msra.mxu0 0.0
    %1742 = vmatprep.subr.mxu0 0.0
    %1743 = vmatpush1.msra.mxu0 0.0
    %1744 = vmatprep.subr.mxu0 0.0
    %1745 = vmatpush1.msra.mxu0 0.0
    %1746 = vmatprep.subr.mxu0 0.0
    %1747 = vmatpush1.msra.mxu0 0.0
    %1748 = vmatprep.subr.mxu0 0.0
    %1749 = vmatpush1.msra.mxu0 0.0
    %1750 = vmatprep.subr.mxu0 0.0
    %1751 = vmatpush1.msra.mxu0 0.0
    %1752 = vmatprep.subr.mxu0 0.0
    %1753 = vmatpush1.msra.mxu0 0.0
    %1754 = vmatprep.subr.mxu0 0.0
    %1755 = vmatpush1.msra.mxu0 0.0
    %1756 = vmatprep.subr.mxu0 0.0
    %1757 = vmatpush1.msra.mxu0 0.0
    %1758 = vmatprep.subr.mxu0 0.0
    %1759 = vmatpush1.msra.mxu0 0.0
    %1760 = vmatprep.subr.mxu0 0.0
    %1761 = vmatpush1.msra.mxu0 0.0
    %1762 = vmatprep.subr.mxu0 0.0
    %1763 = vmatpush1.msra.mxu0 0.0
    %1764 = vmatprep.mubr.f32.mxu0 0.0
    %1765 = vmatmul.mubr.f32.gmra.mrb[0].mxu0 %v1695
    %v1766 = vpop.f32.mrb[0].mxu0
    %v1767 = vadd.f32 0.0, %v1766
    %v1768 = vpop.f32.mrb[0].mxu0
    %1769 = vmatprep.mubr.f32.mxu0 0.0
    %1770 = vmatmul.mubr.f32.gmra.mrb[0].mxu0 %v1698
    %v1771 = vpop.f32.mrb[0].mxu0
    %v1772 = vadd.f32 0.0, %v1771
    %v1773 = vpop.f32.mrb[0].mxu0
    %1774 = vdwg.mxu0
    %v1775 = vsel %vm743, %v1767, -inf
    %1776 = vmax.xlane.f32.xlu0 %v1775
    %v1777 = vpop.xlane.xlu0 %1776
    %v1778 = vsel %vm743, %v1772, -inf
    %1779 = vmax.xlane.f32.xlu0 %v1778
    %v1780 = vpop.xlane.xlu0 %1779
    %vm1781 = vcmp.ge.f32.partialorder %v1767, %v1777
    %vm1782 = vcmp.ge.f32.partialorder %v1772, %v1780
    %v1783 = vsel %vm1781, -inf, %v1767
    %v1784 = vsel %vm1782, -inf, %v1772
    %v1785 = vsel %vm743, %v1783, -inf
    %1786 = vmax.xlane.f32.xlu0 %v1785
    %v1787 = vpop.xlane.xlu0 %1786
    %v1788 = vsel %vm743, %v1784, -inf
    %1789 = vmax.xlane.f32.xlu0 %v1788
    %v1790 = vpop.xlane.xlu0 %1789
    %vm1791 = vcmp.ge.f32.partialorder %v1767, %v1787
    %vm1792 = vcmp.ge.f32.partialorder %v1772, %v1790
    %v1793 = vsub.f32 %v1767, %v1777
    %v1794 = vsub.f32 %v1772, %v1780
    %v1795 = vmul.f32 %v1793, 1.442695
    %v1796 = vpow.pop %v1795
    %v1797 = vmul.f32 %v1794, 1.442695
    %v1798 = vpow.pop %v1797
    %v1799 = vsel %vm1791, %v1796, 0.0
    %v1800 = vsel %vm1792, %v1798, 0.0
    %v1801 = vsel %vm743, %v1799, 0.0
    %1802 = vadd.xlane.f32.xlu0 %v1801
    %v1803 = vpop.xlane.xlu0 %1802
    %v1804 = vsel %vm743, %v1800, 0.0
    %1805 = vadd.xlane.f32.xlu0 %v1804
    %v1806 = vpop.xlane.xlu0 %1805
    %v1807 = vrcp.pop %v1803
    %v1808 = vmul.f32 %v1799, %v1807
    %v1809 = vrcp.pop %v1806
    %v1810 = vmul.f32 %v1800, %v1809
    %v1812 = vlaneseq
    %v1813 = vshrl.u32 %v1812, 7
    %v1814 = vsub.s32 0, %v1813
    %v1815 = vrot.slane %v388, %v1814
    %v1816 = vlaneseq
    %v1817 = vshrl.u32 %v1816, 7
    %v1818 = vsub.s32 1, %v1817
    %v1819 = vrot.slane %v388, %v1818
    %1822 = vmatprep.subr.mxu0 %v381
    %1823 = vmatpush1.msra.mxu0 %v380
    %1824 = vmatprep.subr.mxu0 %v383
    %1825 = vmatpush1.msra.mxu0 %v382
    %1826 = vmatprep.subr.mxu0 %v385
    %1827 = vmatpush1.msra.mxu0 %v384
    %1828 = vmatprep.subr.mxu0 %v387
    %1829 = vmatpush1.msra.mxu0 %v386
    %1830 = vmatprep.subr.mxu0 0.0
    %1831 = vmatpush1.msra.mxu0 0.0
    %1832 = vmatprep.subr.mxu0 0.0
    %1833 = vmatpush1.msra.mxu0 0.0
    %1834 = vmatprep.subr.mxu0 0.0
    %1835 = vmatpush1.msra.mxu0 0.0
    %1836 = vmatprep.subr.mxu0 0.0
    %1837 = vmatpush1.msra.mxu0 0.0
    %1838 = vmatprep.subr.mxu0 0.0
    %1839 = vmatpush1.msra.mxu0 0.0
    %1840 = vmatprep.subr.mxu0 0.0
    %1841 = vmatpush1.msra.mxu0 0.0
    %1842 = vmatprep.subr.mxu0 0.0
    %1843 = vmatpush1.msra.mxu0 0.0
    %1844 = vmatprep.subr.mxu0 0.0
    %1845 = vmatpush1.msra.mxu0 0.0
    %1846 = vmatprep.subr.mxu0 0.0
    %1847 = vmatpush1.msra.mxu0 0.0
    %1848 = vmatprep.subr.mxu0 0.0
    %1849 = vmatpush1.msra.mxu0 0.0
    %1850 = vmatprep.subr.mxu0 0.0
    %1851 = vmatpush1.msra.mxu0 0.0
    %1852 = vmatprep.subr.mxu0 0.0
    %1853 = vmatpush1.msra.mxu0 0.0
    %1854 = vmatprep.subr.mxu0 0.0
    %1855 = vmatpush1.msra.mxu0 0.0
    %1856 = vmatprep.subr.mxu0 0.0
    %1857 = vmatpush1.msra.mxu0 0.0
    %1858 = vmatprep.subr.mxu0 0.0
    %1859 = vmatpush1.msra.mxu0 0.0
    %1860 = vmatprep.subr.mxu0 0.0
    %1861 = vmatpush1.msra.mxu0 0.0
    %1862 = vmatprep.subr.mxu0 0.0
    %1863 = vmatpush1.msra.mxu0 0.0
    %1864 = vmatprep.subr.mxu0 0.0
    %1865 = vmatpush1.msra.mxu0 0.0
    %1866 = vmatprep.subr.mxu0 0.0
    %1867 = vmatpush1.msra.mxu0 0.0
    %1868 = vmatprep.subr.mxu0 0.0
    %1869 = vmatpush1.msra.mxu0 0.0
    %1870 = vmatprep.subr.mxu0 0.0
    %1871 = vmatpush1.msra.mxu0 0.0
    %1872 = vmatprep.subr.mxu0 0.0
    %1873 = vmatpush1.msra.mxu0 0.0
    %1874 = vmatprep.subr.mxu0 0.0
    %1875 = vmatpush1.msra.mxu0 0.0
    %1876 = vmatprep.subr.mxu0 0.0
    %1877 = vmatpush1.msra.mxu0 0.0
    %1878 = vmatprep.subr.mxu0 0.0
    %1879 = vmatpush1.msra.mxu0 0.0
    %1880 = vmatprep.subr.mxu0 0.0
    %1881 = vmatpush1.msra.mxu0 0.0
    %1882 = vmatprep.subr.mxu0 0.0
    %1883 = vmatpush1.msra.mxu0 0.0
    %1884 = vmatprep.subr.mxu0 0.0
    %1885 = vmatpush1.msra.mxu0 0.0
    %1886 = vmatprep.mubr.f32.mxu0 0.0
    %1887 = vmatmul.mubr.f32.gmra.mrb[0].mxu0 %v1695
    %v1888 = vpop.f32.mrb[0].mxu0
    %v1889 = vadd.f32 %v1815, %v1888
    %v1890 = vpop.f32.mrb[0].mxu0
    %v1891 = vadd.f32 %v1819, %v1890
    %1892 = vmatprep.mubr.f32.mxu0 0.0
    %1893 = vmatmul.mubr.f32.gmra.mrb[0].mxu0 %v1698
    %v1894 = vpop.f32.mrb[0].mxu0
    %v1895 = vadd.f32 %v1815, %v1894
    %v1896 = vpop.f32.mrb[0].mxu0
    %v1897 = vadd.f32 %v1819, %v1896
    %1898 = vdwg.mxu0
    %v1899 = vmul.f32 %v1889, 0.5
    %v1900 = vmul.f32 %v1891, 0.5
    %v1901 = vmul.f32 %v1895, 0.5
    %v1902 = vmul.f32 %v1897, 0.5
    %v1903 = vmul.f32 %v1889, 0.70710677
    %v1904 = vmul.f32 %v1891, 0.70710677
    %v1905 = vmul.f32 %v1895, 0.70710677
    %v1906 = vmul.f32 %v1897, 0.70710677
    %v1907 = verf.f32.pop %v1903
    %v1908 = verf.f32.pop %v1904
    %v1909 = verf.f32.pop %v1905
    %v1910 = verf.f32.pop %v1906
    %v1911 = vadd.f32 %v1907, 1.0
    %v1912 = vadd.f32 %v1908, 1.0
    %v1913 = vadd.f32 %v1909, 1.0
    %v1914 = vadd.f32 %v1910, 1.0
    %v1915 = vmul.f32 %v1899, %v1911
    %v1916 = vmul.f32 %v1900, %v1912
    %v1917 = vmul.f32 %v1901, %v1913
    %v1918 = vmul.f32 %v1902, %v1914
    %v1920 = vcombine.high %v379, %v379
    %v1922 = vsel %vm743, %v1808, 0
    %v1925 = vsel %vm743, %v1810, 0
    %v1927 = vsel %vm768, %v379, 0
    %v1929 = vsel %vm768, %v1920, 0
    %1931 = vmatprep.subr.mxu0 %v1929
    %1932 = vmatpush1.msra.mxu0 %v1927
    %1933 = vmatprep.subr.mxu0 0.0
    %1934 = vmatpush1.msra.mxu0 0.0
    %1935 = vmatprep.subr.mxu0 0.0
    %1936 = vmatpush1.msra.mxu0 0.0
    %1937 = vmatprep.subr.mxu0 0.0
    %1938 = vmatpush1.msra.mxu0 0.0
    %1939 = vmatprep.subr.mxu0 0.0
    %1940 = vmatpush1.msra.mxu0 0.0
    %1941 = vmatprep.subr.mxu0 0.0
    %1942 = vmatpush1.msra.mxu0 0.0
    %1943 = vmatprep.subr.mxu0 0.0
    %1944 = vmatpush1.msra.mxu0 0.0
    %1945 = vmatprep.subr.mxu0 0.0
    %1946 = vmatpush1.msra.mxu0 0.0
    %1947 = vmatprep.subr.mxu0 0.0
    %1948 = vmatpush1.msra.mxu0 0.0
    %1949 = vmatprep.subr.mxu0 0.0
    %1950 = vmatpush1.msra.mxu0 0.0
    %1951 = vmatprep.subr.mxu0 0.0
    %1952 = vmatpush1.msra.mxu0 0.0
    %1953 = vmatprep.subr.mxu0 0.0
    %1954 = vmatpush1.msra.mxu0 0.0
    %1955 = vmatprep.subr.mxu0 0.0
    %1956 = vmatpush1.msra.mxu0 0.0
    %1957 = vmatprep.subr.mxu0 0.0
    %1958 = vmatpush1.msra.mxu0 0.0
    %1959 = vmatprep.subr.mxu0 0.0
    %1960 = vmatpush1.msra.mxu0 0.0
    %1961 = vmatprep.subr.mxu0 0.0
    %1962 = vmatpush1.msra.mxu0 0.0
    %1963 = vmatprep.subr.mxu0 0.0
    %1964 = vmatpush1.msra.mxu0 0.0
    %1965 = vmatprep.subr.mxu0 0.0
    %1966 = vmatpush1.msra.mxu0 0.0
    %1967 = vmatprep.subr.mxu0 0.0
    %1968 = vmatpush1.msra.mxu0 0.0
    %1969 = vmatprep.subr.mxu0 0.0
    %1970 = vmatpush1.msra.mxu0 0.0
    %1971 = vmatprep.subr.mxu0 0.0
    %1972 = vmatpush1.msra.mxu0 0.0
    %1973 = vmatprep.subr.mxu0 0.0
    %1974 = vmatpush1.msra.mxu0 0.0
    %1975 = vmatprep.subr.mxu0 0.0
    %1976 = vmatpush1.msra.mxu0 0.0
    %1977 = vmatprep.subr.mxu0 0.0
    %1978 = vmatpush1.msra.mxu0 0.0
    %1979 = vmatprep.subr.mxu0 0.0
    %1980 = vmatpush1.msra.mxu0 0.0
    %1981 = vmatprep.subr.mxu0 0.0
    %1982 = vmatpush1.msra.mxu0 0.0
    %1983 = vmatprep.subr.mxu0 0.0
    %1984 = vmatpush1.msra.mxu0 0.0
    %1985 = vmatprep.subr.mxu0 0.0
    %1986 = vmatpush1.msra.mxu0 0.0
    %1987 = vmatprep.subr.mxu0 0.0
    %1988 = vmatpush1.msra.mxu0 0.0
    %1989 = vmatprep.subr.mxu0 0.0
    %1990 = vmatpush1.msra.mxu0 0.0
    %1991 = vmatprep.subr.mxu0 0.0
    %1992 = vmatpush1.msra.mxu0 0.0
    %1993 = vmatprep.subr.mxu0 0.0
    %1994 = vmatpush1.msra.mxu0 0.0
    %1995 = vmatprep.mubr.f32.mxu0 0.0
    %1996 = vmatmul.mubr.f32.gmra.mrb[0].mxu0 %v1922
    %v1997 = vpop.f32.mrb[0].mxu0
    %v1998 = vadd.f32 0.0, %v1997
    %v1999 = vpop.f32.mrb[0].mxu0
    %v2000 = vadd.f32 0.0, %v1999
    %2001 = vmatprep.mubr.f32.mxu0 0.0
    %2002 = vmatmul.mubr.f32.gmra.mrb[0].mxu0 %v1925
    %v2003 = vpop.f32.mrb[0].mxu0
    %v2004 = vadd.f32 0.0, %v2003
    %v2005 = vpop.f32.mrb[0].mxu0
    %v2006 = vadd.f32 0.0, %v2005
    %2007 = vdwg.mxu0
    %v2008 = vmul.f32 %v1915, %v1998
    %v2009 = vmul.f32 %v1916, %v2000
    %v2010 = vmul.f32 %v1917, %v2004
    %v2011 = vmul.f32 %v1918, %v2006
    %v2013 = vsel %vm768, %v421, 0
    %2015 = vmatprep.subr.mxu0 0.0
    %2016 = vmatpush1.msra.mxu0 %v2013
    %2017 = vmatprep.subr.mxu0 0.0
    %2018 = vmatpush1.msra.mxu0 0.0
    %2019 = vmatprep.subr.mxu0 0.0
    %2020 = vmatpush1.msra.mxu0 0.0
    %2021 = vmatprep.subr.mxu0 0.0
    %2022 = vmatpush1.msra.mxu0 0.0
    %2023 = vmatprep.subr.mxu0 0.0
    %2024 = vmatpush1.msra.mxu0 0.0
    %2025 = vmatprep.subr.mxu0 0.0
    %2026 = vmatpush1.msra.mxu0 0.0
    %2027 = vmatprep.subr.mxu0 0.0
    %2028 = vmatpush1.msra.mxu0 0.0
    %2029 = vmatprep.subr.mxu0 0.0
    %2030 = vmatpush1.msra.mxu0 0.0
    %2031 = vmatprep.subr.mxu0 0.0
    %2032 = vmatpush1.msra.mxu0 0.0
    %2033 = vmatprep.subr.mxu0 0.0
    %2034 = vmatpush1.msra.mxu0 0.0
    %2035 = vmatprep.subr.mxu0 0.0
    %2036 = vmatpush1.msra.mxu0 0.0
    %2037 = vmatprep.subr.mxu0 0.0
    %2038 = vmatpush1.msra.mxu0 0.0
    %2039 = vmatprep.subr.mxu0 0.0
    %2040 = vmatpush1.msra.mxu0 0.0
    %2041 = vmatprep.subr.mxu0 0.0
    %2042 = vmatpush1.msra.mxu0 0.0
    %2043 = vmatprep.subr.mxu0 0.0
    %2044 = vmatpush1.msra.mxu0 0.0
    %2045 = vmatprep.subr.mxu0 0.0
    %2046 = vmatpush1.msra.mxu0 0.0
    %2047 = vmatprep.subr.mxu0 0.0
    %2048 = vmatpush1.msra.mxu0 0.0
    %2049 = vmatprep.subr.mxu0 0.0
    %2050 = vmatpush1.msra.mxu0 0.0
    %2051 = vmatprep.subr.mxu0 0.0
    %2052 = vmatpush1.msra.mxu0 0.0
    %2053 = vmatprep.subr.mxu0 0.0
    %2054 = vmatpush1.msra.mxu0 0.0
    %2055 = vmatprep.subr.mxu0 0.0
    %2056 = vmatpush1.msra.mxu0 0.0
    %2057 = vmatprep.subr.mxu0 0.0
    %2058 = vmatpush1.msra.mxu0 0.0
    %2059 = vmatprep.subr.mxu0 0.0
    %2060 = vmatpush1.msra.mxu0 0.0
    %2061 = vmatprep.subr.mxu0 0.0
    %2062 = vmatpush1.msra.mxu0 0.0
    %2063 = vmatprep.subr.mxu0 0.0
    %2064 = vmatpush1.msra.mxu0 0.0
    %2065 = vmatprep.subr.mxu0 0.0
    %2066 = vmatpush1.msra.mxu0 0.0
    %2067 = vmatprep.subr.mxu0 0.0
    %2068 = vmatpush1.msra.mxu0 0.0
    %2069 = vmatprep.subr.mxu0 0.0
    %2070 = vmatpush1.msra.mxu0 0.0
    %2071 = vmatprep.subr.mxu0 0.0
    %2072 = vmatpush1.msra.mxu0 0.0
    %2073 = vmatprep.subr.mxu0 0.0
    %2074 = vmatpush1.msra.mxu0 0.0
    %2075 = vmatprep.subr.mxu0 0.0
    %2076 = vmatpush1.msra.mxu0 0.0
    %2077 = vmatprep.subr.mxu0 0.0
    %2078 = vmatpush1.msra.mxu0 0.0
    %2079 = vmatprep.mubr.f32.mxu0 0.0
    %2080 = vmatmul.mubr.f32.gmra.mrb[0].mxu0 %v1922
    %v2081 = vpop.f32.mrb[0].mxu0
    %v2082 = vadd.f32 0.0, %v2081
    %v2083 = vpop.f32.mrb[0].mxu0
    %2084 = vmatprep.mubr.f32.mxu0 0.0
    %2085 = vmatmul.mubr.f32.gmra.mrb[0].mxu0 %v1925
    %v2086 = vpop.f32.mrb[0].mxu0
    %v2087 = vadd.f32 0.0, %v2086
    %v2088 = vpop.f32.mrb[0].mxu0
    %2089 = vdwg.mxu0
    %2090 = vmatprep.subr.mxu0 0.0
    %2091 = vmatpush1.msra.mxu0 %v389
    %2092 = vmatprep.subr.mxu0 0.0
    %2093 = vmatpush1.msra.mxu0 %v390
    %2094 = vmatprep.subr.mxu0 0.0
    %2095 = vmatpush1.msra.mxu0 %v391
    %2096 = vmatprep.subr.mxu0 0.0
    %2097 = vmatpush1.msra.mxu0 %v392
    %2098 = vmatprep.subr.mxu0 0.0
    %2099 = vmatpush1.msra.mxu0 %v393
    %2100 = vmatprep.subr.mxu0 0.0
    %2101 = vmatpush1.msra.mxu0 %v394
    %2102 = vmatprep.subr.mxu0 0.0
    %2103 = vmatpush1.msra.mxu0 %v395
    %2104 = vmatprep.subr.mxu0 0.0
    %2105 = vmatpush1.msra.mxu0 %v396
    %2106 = vmatprep.subr.mxu0 0.0
    %2107 = vmatpush1.msra.mxu0 %v397
    %2108 = vmatprep.subr.mxu0 0.0
    %2109 = vmatpush1.msra.mxu0 %v398
    %2110 = vmatprep.subr.mxu0 0.0
    %2111 = vmatpush1.msra.mxu0 %v399
    %2112 = vmatprep.subr.mxu0 0.0
    %2113 = vmatpush1.msra.mxu0 %v400
    %2114 = vmatprep.subr.mxu0 0.0
    %2115 = vmatpush1.msra.mxu0 %v401
    %2116 = vmatprep.subr.mxu0 0.0
    %2117 = vmatpush1.msra.mxu0 %v402
    %2118 = vmatprep.subr.mxu0 0.0
    %2119 = vmatpush1.msra.mxu0 %v403
    %2120 = vmatprep.subr.mxu0 0.0
    %2121 = vmatpush1.msra.mxu0 %v404
    %2122 = vmatprep.subr.mxu0 0.0
    %2123 = vmatpush1.msra.mxu0 %v405
    %2124 = vmatprep.subr.mxu0 0.0
    %2125 = vmatpush1.msra.mxu0 %v406
    %2126 = vmatprep.subr.mxu0 0.0
    %2127 = vmatpush1.msra.mxu0 %v407
    %2128 = vmatprep.subr.mxu0 0.0
    %2129 = vmatpush1.msra.mxu0 %v408
    %2130 = vmatprep.subr.mxu0 0.0
    %2131 = vmatpush1.msra.mxu0 %v409
    %2132 = vmatprep.subr.mxu0 0.0
    %2133 = vmatpush1.msra.mxu0 %v410
    %2134 = vmatprep.subr.mxu0 0.0
    %2135 = vmatpush1.msra.mxu0 %v411
    %2136 = vmatprep.subr.mxu0 0.0
    %2137 = vmatpush1.msra.mxu0 %v412
    %2138 = vmatprep.subr.mxu0 0.0
    %2139 = vmatpush1.msra.mxu0 %v413
    %2140 = vmatprep.subr.mxu0 0.0
    %2141 = vmatpush1.msra.mxu0 %v414
    %2142 = vmatprep.subr.mxu0 0.0
    %2143 = vmatpush1.msra.mxu0 %v415
    %2144 = vmatprep.subr.mxu0 0.0
    %2145 = vmatpush1.msra.mxu0 %v416
    %2146 = vmatprep.subr.mxu0 0.0
    %2147 = vmatpush1.msra.mxu0 %v417
    %2148 = vmatprep.subr.mxu0 0.0
    %2149 = vmatpush1.msra.mxu0 %v418
    %2150 = vmatprep.subr.mxu0 0.0
    %2151 = vmatpush1.msra.mxu0 %v419
    %2152 = vmatprep.subr.mxu0 0.0
    %2153 = vmatpush1.msra.mxu0 %v420
    %2154 = vmatprep.mubr.f32.mxu0 %v2009
    %2155 = vmatmul.mubr.f32.gmra.mrb[0].mxu0 %v2008
    %v2156 = vpop.f32.mrb[0].mxu0
    %v2157 = vadd.f32 %v2082, %v2156
    %v2158 = vpop.f32.mrb[0].mxu0
    %2159 = vmatprep.mubr.f32.mxu0 %v2011
    %2160 = vmatmul.mubr.f32.gmra.mrb[0].mxu0 %v2010
    %v2161 = vpop.f32.mrb[0].mxu0
    %v2162 = vadd.f32 %v2087, %v2161
    %v2163 = vpop.f32.mrb[0].mxu0
    %2164 = vdwg.mxu0
    %v2165 = vadd.f32 %v2157, %v1650
    %v2166 = vadd.f32 %v2162, %v1651
    %v2167 = vsel %vm483, %v2165, 0.0
    %2168 = vadd.xlane.f32.xlu0 %v2167
    %v2169 = vpop.xlane.xlu0 %2168
    %v2170 = vsel %vm483, %v2166, 0.0
    %2171 = vadd.xlane.f32.xlu0 %v2170
    %v2172 = vpop.xlane.xlu0 %2171
    %v2173 = vmul.f32 %v2169, %v490
    %v2174 = vmul.f32 %v2172, %v490
    %v2175 = vsub.f32 %v2165, %v2173
    %v2176 = vsub.f32 %v2166, %v2174
    %v2177 = vmul.f32 %v2175, %v2175
    %v2178 = vmul.f32 %v2176, %v2176
    %v2179 = vsel %vm483, %v2177, 0.0
    %2180 = vadd.xlane.f32.xlu0 %v2179
    %v2181 = vpop.xlane.xlu0 %2180
    %v2182 = vsel %vm483, %v2178, 0.0
    %2183 = vadd.xlane.f32.xlu0 %v2182
    %v2184 = vpop.xlane.xlu0 %2183
    %v2185 = vmul.f32 %v2181, %v490
    %v2186 = vmul.f32 %v2184, %v490
    %v2187 = vadd.f32 %v2185, 1e-06
    %v2188 = vadd.f32 %v2186, 1e-06
    %v2189 = vrsqrt.pop %v2187
    %v2190 = vrsqrt.pop %v2188
    %v2191 = vmul.f32 %v2175, %v2189
    %v2192 = vmul.f32 %v2176, %v2190
    %v2194 = vlaneseq
    %v2195 = vshrl.u32 %v2194, 7
    %v2196 = vsub.s32 0, %v2195
    %v2197 = vrot.slane %v422, %v2196
    %v2199 = vmul.f32 %v2191, %v2197
    %v2200 = vmul.f32 %v2192, %v2197
    %v2202 = vlaneseq
    %v2203 = vshrl.u32 %v2202, 7
    %v2204 = vsub.s32 0, %v2203
    %v2205 = vrot.slane %v423, %v2204
    %v2207 = vadd.f32 %v2199, %v2205
    %v2208 = vadd.f32 %v2200, %v2205
    %v2210 = vsel %vm483, %v2207, 0
    %v2213 = vsel %vm483, %v2208, 0
    %2215 = vmatprep.subr.mxu0 0.0
    %2216 = vmatpush1.msra.mxu0 %v424
    %2217 = vmatprep.subr.mxu0 0.0
    %2218 = vmatpush1.msra.mxu0 %v425
    %2219 = vmatprep.subr.mxu0 0.0
    %2220 = vmatpush1.msra.mxu0 %v426
    %2221 = vmatprep.subr.mxu0 0.0
    %2222 = vmatpush1.msra.mxu0 %v427
    %2223 = vmatprep.subr.mxu0 0.0
    %2224 = vmatpush1.msra.mxu0 0.0
    %2225 = vmatprep.subr.mxu0 0.0
    %2226 = vmatpush1.msra.mxu0 0.0
    %2227 = vmatprep.subr.mxu0 0.0
    %2228 = vmatpush1.msra.mxu0 0.0
    %2229 = vmatprep.subr.mxu0 0.0
    %2230 = vmatpush1.msra.mxu0 0.0
    %2231 = vmatprep.subr.mxu0 0.0
    %2232 = vmatpush1.msra.mxu0 0.0
    %2233 = vmatprep.subr.mxu0 0.0
    %2234 = vmatpush1.msra.mxu0 0.0
    %2235 = vmatprep.subr.mxu0 0.0
    %2236 = vmatpush1.msra.mxu0 0.0
    %2237 = vmatprep.subr.mxu0 0.0
    %2238 = vmatpush1.msra.mxu0 0.0
    %2239 = vmatprep.subr.mxu0 0.0
    %2240 = vmatpush1.msra.mxu0 0.0
    %2241 = vmatprep.subr.mxu0 0.0
    %2242 = vmatpush1.msra.mxu0 0.0
    %2243 = vmatprep.subr.mxu0 0.0
    %2244 = vmatpush1.msra.mxu0 0.0
    %2245 = vmatprep.subr.mxu0 0.0
    %2246 = vmatpush1.msra.mxu0 0.0
    %2247 = vmatprep.subr.mxu0 0.0
    %2248 = vmatpush1.msra.mxu0 0.0
    %2249 = vmatprep.subr.mxu0 0.0
    %2250 = vmatpush1.msra.mxu0 0.0
    %2251 = vmatprep.subr.mxu0 0.0
    %2252 = vmatpush1.msra.mxu0 0.0
    %2253 = vmatprep.subr.mxu0 0.0
    %2254 = vmatpush1.msra.mxu0 0.0
    %2255 = vmatprep.subr.mxu0 0.0
    %2256 = vmatpush1.msra.mxu0 0.0
    %2257 = vmatprep.subr.mxu0 0.0
    %2258 = vmatpush1.msra.mxu0 0.0
    %2259 = vmatprep.subr.mxu0 0.0
    %2260 = vmatpush1.msra.mxu0 0.0
    %2261 = vmatprep.subr.mxu0 0.0
    %2262 = vmatpush1.msra.mxu0 0.0
    %2263 = vmatprep.subr.mxu0 0.0
    %2264 = vmatpush1.msra.mxu0 0.0
    %2265 = vmatprep.subr.mxu0 0.0
    %2266 = vmatpush1.msra.mxu0 0.0
    %2267 = vmatprep.subr.mxu0 0.0
    %2268 = vmatpush1.msra.mxu0 0.0
    %2269 = vmatprep.subr.mxu0 0.0
    %2270 = vmatpush1.msra.mxu0 0.0
    %2271 = vmatprep.subr.mxu0 0.0
    %2272 = vmatpush1.msra.mxu0 0.0
    %2273 = vmatprep.subr.mxu0 0.0
    %2274 = vmatpush1.msra.mxu0 0.0
    %2275 = vmatprep.subr.mxu0 0.0
    %2276 = vmatpush1.msra.mxu0 0.0
    %2277 = vmatprep.subr.mxu0 0.0
    %2278 = vmatpush1.msra.mxu0 0.0
    %2279 = vmatprep.mubr.f32.mxu0 0.0
    %2280 = vmatmul.mubr.f32.gmra.mrb[0].mxu0 %v2210
    %v2281 = vpop.f32.mrb[0].mxu0
    %v2282 = vadd.f32 0.0, %v2281
    %v2283 = vpop.f32.mrb[0].mxu0
    %2284 = vmatprep.mubr.f32.mxu0 0.0
    %2285 = vmatmul.mubr.f32.gmra.mrb[0].mxu0 %v2213
    %v2286 = vpop.f32.mrb[0].mxu0
    %v2287 = vadd.f32 0.0, %v2286
    %v2288 = vpop.f32.mrb[0].mxu0
    %2289 = vdwg.mxu0
    %2291 = vrot.lane.b32.xlu0 %v2282, 96
    %v2292 = vpop.permute.xlu0 %2291
    %vm2293 = vcmask 64512
    %v2294 = vsel %vm2293, %v2282, 0
    %v2296 = vsel %vm2293, %v2292, 0
    %2298 = vmatprep.subr.mxu0 0.0
    %2299 = vmatpush1.xpose.msra.mxu0 %v2296
    %2300 = vmatprep.subr.mxu0 0.0
    %2301 = vmatpush1.xpose.msra.mxu0 0.0
    %2302 = vmatprep.subr.mxu0 0.0
    %2303 = vmatpush1.xpose.msra.mxu0 0.0
    %2304 = vmatprep.subr.mxu0 0.0
    %2305 = vmatpush1.xpose.msra.mxu0 0.0
    %2306 = vmatprep.subr.mxu0 0.0
    %2307 = vmatpush1.xpose.msra.mxu0 0.0
    %2308 = vmatprep.subr.mxu0 0.0
    %2309 = vmatpush1.xpose.msra.mxu0 0.0
    %2310 = vmatprep.subr.mxu0 0.0
    %2311 = vmatpush1.xpose.msra.mxu0 0.0
    %2312 = vmatprep.subr.mxu0 0.0
    %2313 = vmatpush1.xpose.msra.mxu0 0.0
    %2314 = vmatprep.subr.mxu0 0.0
    %2315 = vmatpush1.xpose.msra.mxu0 0.0
    %2316 = vmatprep.subr.mxu0 0.0
    %2317 = vmatpush1.xpose.msra.mxu0 0.0
    %2318 = vmatprep.subr.mxu0 0.0
    %2319 = vmatpush1.xpose.msra.mxu0 0.0
    %2320 = vmatprep.subr.mxu0 0.0
    %2321 = vmatpush1.xpose.msra.mxu0 0.0
    %2322 = vmatprep.subr.mxu0 0.0
    %2323 = vmatpush1.xpose.msra.mxu0 0.0
    %2324 = vmatprep.subr.mxu0 0.0
    %2325 = vmatpush1.xpose.msra.mxu0 0.0
    %2326 = vmatprep.subr.mxu0 0.0
    %2327 = vmatpush1.xpose.msra.mxu0 0.0
    %2328 = vmatprep.subr.mxu0 0.0
    %2329 = vmatpush1.xpose.msra.mxu0 0.0
    %2330 = vmatprep.subr.mxu0 0.0
    %2331 = vmatpush1.xpose.msra.mxu0 0.0
    %2332 = vmatprep.subr.mxu0 0.0
    %2333 = vmatpush1.xpose.msra.mxu0 0.0
    %2334 = vmatprep.subr.mxu0 0.0
    %2335 = vmatpush1.xpose.msra.mxu0 0.0
    %2336 = vmatprep.subr.mxu0 0.0
    %2337 = vmatpush1.xpose.msra.mxu0 0.0
    %2338 = vmatprep.subr.mxu0 0.0
    %2339 = vmatpush1.xpose.msra.mxu0 0.0
    %2340 = vmatprep.subr.mxu0 0.0
    %2341 = vmatpush1.xpose.msra.mxu0 0.0
    %2342 = vmatprep.subr.mxu0 0.0
    %2343 = vmatpush1.xpose.msra.mxu0 0.0
    %2344 = vmatprep.subr.mxu0 0.0
    %2345 = vmatpush1.xpose.msra.mxu0 0.0
    %2346 = vmatprep.subr.mxu0 0.0
    %2347 = vmatpush1.xpose.msra.mxu0 0.0
    %2348 = vmatprep.subr.mxu0 0.0
    %2349 = vmatpush1.xpose.msra.mxu0 0.0
    %2350 = vmatprep.subr.mxu0 0.0
    %2351 = vmatpush1.xpose.msra.mxu0 0.0
    %2352 = vmatprep.subr.mxu0 0.0
    %2353 = vmatpush1.xpose.msra.mxu0 0.0
    %2354 = vmatprep.subr.mxu0 0.0
    %2355 = vmatpush1.xpose.msra.mxu0 0.0
    %2356 = vmatprep.subr.mxu0 0.0
    %2357 = vmatpush1.xpose.msra.mxu0 0.0
    %2358 = vmatprep.subr.mxu0 0.0
    %2359 = vmatpush1.xpose.msra.mxu0 0.0
    %2360 = vmatprep.subr.mxu0 0.0
    %2361 = vmatpush1.xpose.msra.mxu0 0.0
    %2362 = vmatprep.mubr.f32.mxu0 0.0
    %2363 = vmatmul.mubr.f32.gmra.mrb[0].mxu0 %v2294
    %v2364 = vpop.f32.mrb[0].mxu0
    %v2365 = vadd.f32 0.0, %v2364
    %v2366 = vpop.f32.mrb[0].mxu0
    %2367 = vdwg.mxu0
    %2369 = vrot.lane.b32.xlu0 %v2287, 96
    %v2370 = vpop.permute.xlu0 %2369
    %v2371 = vsel %vm2293, %v2287, 0
    %v2373 = vsel %vm2293, %v2370, 0
    %2375 = vmatprep.subr.mxu0 0.0
    %2376 = vmatpush1.xpose.msra.mxu0 %v2373
    %2377 = vmatprep.subr.mxu0 0.0
    %2378 = vmatpush1.xpose.msra.mxu0 0.0
    %2379 = vmatprep.subr.mxu0 0.0
    %2380 = vmatpush1.xpose.msra.mxu0 0.0
    %2381 = vmatprep.subr.mxu0 0.0
    %2382 = vmatpush1.xpose.msra.mxu0 0.0
    %2383 = vmatprep.subr.mxu0 0.0
    %2384 = vmatpush1.xpose.msra.mxu0 0.0
    %2385 = vmatprep.subr.mxu0 0.0
    %2386 = vmatpush1.xpose.msra.mxu0 0.0
    %2387 = vmatprep.subr.mxu0 0.0
    %2388 = vmatpush1.xpose.msra.mxu0 0.0
    %2389 = vmatprep.subr.mxu0 0.0
    %2390 = vmatpush1.xpose.msra.mxu0 0.0
    %2391 = vmatprep.subr.mxu0 0.0
    %2392 = vmatpush1.xpose.msra.mxu0 0.0
    %2393 = vmatprep.subr.mxu0 0.0
    %2394 = vmatpush1.xpose.msra.mxu0 0.0
    %2395 = vmatprep.subr.mxu0 0.0
    %2396 = vmatpush1.xpose.msra.mxu0 0.0
    %2397 = vmatprep.subr.mxu0 0.0
    %2398 = vmatpush1.xpose.msra.mxu0 0.0
    %2399 = vmatprep.subr.mxu0 0.0
    %2400 = vmatpush1.xpose.msra.mxu0 0.0
    %2401 = vmatprep.subr.mxu0 0.0
    %2402 = vmatpush1.xpose.msra.mxu0 0.0
    %2403 = vmatprep.subr.mxu0 0.0
    %2404 = vmatpush1.xpose.msra.mxu0 0.0
    %2405 = vmatprep.subr.mxu0 0.0
    %2406 = vmatpush1.xpose.msra.mxu0 0.0
    %2407 = vmatprep.subr.mxu0 0.0
    %2408 = vmatpush1.xpose.msra.mxu0 0.0
    %2409 = vmatprep.subr.mxu0 0.0
    %2410 = vmatpush1.xpose.msra.mxu0 0.0
    %2411 = vmatprep.subr.mxu0 0.0
    %2412 = vmatpush1.xpose.msra.mxu0 0.0
    %2413 = vmatprep.subr.mxu0 0.0
    %2414 = vmatpush1.xpose.msra.mxu0 0.0
    %2415 = vmatprep.subr.mxu0 0.0
    %2416 = vmatpush1.xpose.msra.mxu0 0.0
    %2417 = vmatprep.subr.mxu0 0.0
    %2418 = vmatpush1.xpose.msra.mxu0 0.0
    %2419 = vmatprep.subr.mxu0 0.0
    %2420 = vmatpush1.xpose.msra.mxu0 0.0
    %2421 = vmatprep.subr.mxu0 0.0
    %2422 = vmatpush1.xpose.msra.mxu0 0.0
    %2423 = vmatprep.subr.mxu0 0.0
    %2424 = vmatpush1.xpose.msra.mxu0 0.0
    %2425 = vmatprep.subr.mxu0 0.0
    %2426 = vmatpush1.xpose.msra.mxu0 0.0
    %2427 = vmatprep.subr.mxu0 0.0
    %2428 = vmatpush1.xpose.msra.mxu0 0.0
    %2429 = vmatprep.subr.mxu0 0.0
    %2430 = vmatpush1.xpose.msra.mxu0 0.0
    %2431 = vmatprep.subr.mxu0 0.0
    %2432 = vmatpush1.xpose.msra.mxu0 0.0
    %2433 = vmatprep.subr.mxu0 0.0
    %2434 = vmatpush1.xpose.msra.mxu0 0.0
    %2435 = vmatprep.subr.mxu0 0.0
    %2436 = vmatpush1.xpose.msra.mxu0 0.0
    %2437 = vmatprep.subr.mxu0 0.0
    %2438 = vmatpush1.xpose.msra.mxu0 0.0
    %2439 = vmatprep.mubr.f32.mxu0 0.0
    %2440 = vmatmul.mubr.f32.gmra.mrb[0].mxu0 %v2371
    %v2441 = vpop.f32.mrb[0].mxu0
    %v2442 = vadd.f32 0.0, %v2441
    %v2443 = vpop.f32.mrb[0].mxu0
    %2444 = vdwg.mxu0
    %v2445 = vmul.f32 %v2365, 0.35355338
    %v2446 = vmul.f32 %v2442, 0.35355338
    %v2447 = vsel %vm2293, %v2445, -inf
    %2448 = vmax.xlane.f32.xlu0 %v2447
    %v2449 = vpop.xlane.xlu0 %2448
    %v2450 = vsel %vm2293, %v2446, -inf
    %2451 = vmax.xlane.f32.xlu0 %v2450
    %v2452 = vpop.xlane.xlu0 %2451
    %v2453 = vsub.f32 %v2445, %v2449
    %v2454 = vsub.f32 %v2446, %v2452
    %v2455 = vmul.f32 %v2453, 1.442695
    %v2456 = vpow.pop %v2455
    %v2457 = vmul.f32 %v2454, 1.442695
    %v2458 = vpow.pop %v2457
    %v2459 = vsel %vm2293, %v2456, 0.0
    %2460 = vadd.xlane.f32.xlu0 %v2459
    %v2461 = vpop.xlane.xlu0 %2460
    %v2462 = vsel %vm2293, %v2458, 0.0
    %2463 = vadd.xlane.f32.xlu0 %v2462
    %v2464 = vpop.xlane.xlu0 %2463
    %v2465 = vrcp.pop %v2461
    %v2466 = vrcp.pop %v2464
    %v2467 = vmul.f32 %v2456, %v2465
    %v2468 = vmul.f32 %v2458, %v2466
    %2469 = vrot.lane.b32.xlu0 %v2282, 64
    %v2470 = vpop.permute.xlu0 %2469
    %v2473 = vsel %vm2293, %v2467, 0
    %2475 = vmatprep.subr.mxu0 0.0
    %2476 = vmatpush1.msra.mxu0 %v2470
    %2477 = vmatprep.subr.mxu0 0.0
    %2478 = vmatpush1.msra.mxu0 0.0
    %2479 = vmatprep.subr.mxu0 0.0
    %2480 = vmatpush1.msra.mxu0 0.0
    %2481 = vmatprep.subr.mxu0 0.0
    %2482 = vmatpush1.msra.mxu0 0.0
    %2483 = vmatprep.subr.mxu0 0.0
    %2484 = vmatpush1.msra.mxu0 0.0
    %2485 = vmatprep.subr.mxu0 0.0
    %2486 = vmatpush1.msra.mxu0 0.0
    %2487 = vmatprep.subr.mxu0 0.0
    %2488 = vmatpush1.msra.mxu0 0.0
    %2489 = vmatprep.subr.mxu0 0.0
    %2490 = vmatpush1.msra.mxu0 0.0
    %2491 = vmatprep.subr.mxu0 0.0
    %2492 = vmatpush1.msra.mxu0 0.0
    %2493 = vmatprep.subr.mxu0 0.0
    %2494 = vmatpush1.msra.mxu0 0.0
    %2495 = vmatprep.subr.mxu0 0.0
    %2496 = vmatpush1.msra.mxu0 0.0
    %2497 = vmatprep.subr.mxu0 0.0
    %2498 = vmatpush1.msra.mxu0 0.0
    %2499 = vmatprep.subr.mxu0 0.0
    %2500 = vmatpush1.msra.mxu0 0.0
    %2501 = vmatprep.subr.mxu0 0.0
    %2502 = vmatpush1.msra.mxu0 0.0
    %2503 = vmatprep.subr.mxu0 0.0
    %2504 = vmatpush1.msra.mxu0 0.0
    %2505 = vmatprep.subr.mxu0 0.0
    %2506 = vmatpush1.msra.mxu0 0.0
    %2507 = vmatprep.subr.mxu0 0.0
    %2508 = vmatpush1.msra.mxu0 0.0
    %2509 = vmatprep.subr.mxu0 0.0
    %2510 = vmatpush1.msra.mxu0 0.0
    %2511 = vmatprep.subr.mxu0 0.0
    %2512 = vmatpush1.msra.mxu0 0.0
    %2513 = vmatprep.subr.mxu0 0.0
    %2514 = vmatpush1.msra.mxu0 0.0
    %2515 = vmatprep.subr.mxu0 0.0
    %2516 = vmatpush1.msra.mxu0 0.0
    %2517 = vmatprep.subr.mxu0 0.0
    %2518 = vmatpush1.msra.mxu0 0.0
    %2519 = vmatprep.subr.mxu0 0.0
    %2520 = vmatpush1.msra.mxu0 0.0
    %2521 = vmatprep.subr.mxu0 0.0
    %2522 = vmatpush1.msra.mxu0 0.0
    %2523 = vmatprep.subr.mxu0 0.0
    %2524 = vmatpush1.msra.mxu0 0.0
    %2525 = vmatprep.subr.mxu0 0.0
    %2526 = vmatpush1.msra.mxu0 0.0
    %2527 = vmatprep.subr.mxu0 0.0
    %2528 = vmatpush1.msra.mxu0 0.0
    %2529 = vmatprep.subr.mxu0 0.0
    %2530 = vmatpush1.msra.mxu0 0.0
    %2531 = vmatprep.subr.mxu0 0.0
    %2532 = vmatpush1.msra.mxu0 0.0
    %2533 = vmatprep.subr.mxu0 0.0
    %2534 = vmatpush1.msra.mxu0 0.0
    %2535 = vmatprep.subr.mxu0 0.0
    %2536 = vmatpush1.msra.mxu0 0.0
    %2537 = vmatprep.subr.mxu0 0.0
    %2538 = vmatpush1.msra.mxu0 0.0
    %2539 = vmatprep.mubr.f32.mxu0 0.0
    %2540 = vmatmul.mubr.f32.gmra.mrb[0].mxu0 %v2473
    %v2541 = vpop.f32.mrb[0].mxu0
    %v2542 = vadd.f32 0.0, %v2541
    %v2543 = vpop.f32.mrb[0].mxu0
    %2544 = vdwg.mxu0
    %2545 = vrot.lane.b32.xlu0 %v2287, 64
    %v2546 = vpop.permute.xlu0 %2545
    %v2549 = vsel %vm2293, %v2468, 0
    %2551 = vmatprep.subr.mxu0 0.0
    %2552 = vmatpush1.msra.mxu0 %v2546
    %2553 = vmatprep.subr.mxu0 0.0
    %2554 = vmatpush1.msra.mxu0 0.0
    %2555 = vmatprep.subr.mxu0 0.0
    %2556 = vmatpush1.msra.mxu0 0.0
    %2557 = vmatprep.subr.mxu0 0.0
    %2558 = vmatpush1.msra.mxu0 0.0
    %2559 = vmatprep.subr.mxu0 0.0
    %2560 = vmatpush1.msra.mxu0 0.0
    %2561 = vmatprep.subr.mxu0 0.0
    %2562 = vmatpush1.msra.mxu0 0.0
    %2563 = vmatprep.subr.mxu0 0.0
    %2564 = vmatpush1.msra.mxu0 0.0
    %2565 = vmatprep.subr.mxu0 0.0
    %2566 = vmatpush1.msra.mxu0 0.0
    %2567 = vmatprep.subr.mxu0 0.0
    %2568 = vmatpush1.msra.mxu0 0.0
    %2569 = vmatprep.subr.mxu0 0.0
    %2570 = vmatpush1.msra.mxu0 0.0
    %2571 = vmatprep.subr.mxu0 0.0
    %2572 = vmatpush1.msra.mxu0 0.0
    %2573 = vmatprep.subr.mxu0 0.0
    %2574 = vmatpush1.msra.mxu0 0.0
    %2575 = vmatprep.subr.mxu0 0.0
    %2576 = vmatpush1.msra.mxu0 0.0
    %2577 = vmatprep.subr.mxu0 0.0
    %2578 = vmatpush1.msra.mxu0 0.0
    %2579 = vmatprep.subr.mxu0 0.0
    %2580 = vmatpush1.msra.mxu0 0.0
    %2581 = vmatprep.subr.mxu0 0.0
    %2582 = vmatpush1.msra.mxu0 0.0
    %2583 = vmatprep.subr.mxu0 0.0
    %2584 = vmatpush1.msra.mxu0 0.0
    %2585 = vmatprep.subr.mxu0 0.0
    %2586 = vmatpush1.msra.mxu0 0.0
    %2587 = vmatprep.subr.mxu0 0.0
    %2588 = vmatpush1.msra.mxu0 0.0
    %2589 = vmatprep.subr.mxu0 0.0
    %2590 = vmatpush1.msra.mxu0 0.0
    %2591 = vmatprep.subr.mxu0 0.0
    %2592 = vmatpush1.msra.mxu0 0.0
    %2593 = vmatprep.subr.mxu0 0.0
    %2594 = vmatpush1.msra.mxu0 0.0
    %2595 = vmatprep.subr.mxu0 0.0
    %2596 = vmatpush1.msra.mxu0 0.0
    %2597 = vmatprep.subr.mxu0 0.0
    %2598 = vmatpush1.msra.mxu0 0.0
    %2599 = vmatprep.subr.mxu0 0.0
    %2600 = vmatpush1.msra.mxu0 0.0
    %2601 = vmatprep.subr.mxu0 0.0
    %2602 = vmatpush1.msra.mxu0 0.0
    %2603 = vmatprep.subr.mxu0 0.0
    %2604 = vmatpush1.msra.mxu0 0.0
    %2605 = vmatprep.subr.mxu0 0.0
    %2606 = vmatpush1.msra.mxu0 0.0
    %2607 = vmatprep.subr.mxu0 0.0
    %2608 = vmatpush1.msra.mxu0 0.0
    %2609 = vmatprep.subr.mxu0 0.0
    %2610 = vmatpush1.msra.mxu0 0.0
    %2611 = vmatprep.subr.mxu0 0.0
    %2612 = vmatpush1.msra.mxu0 0.0
    %2613 = vmatprep.subr.mxu0 0.0
    %2614 = vmatpush1.msra.mxu0 0.0
    %2615 = vmatprep.mubr.f32.mxu0 0.0
    %2616 = vmatmul.mubr.f32.gmra.mrb[0].mxu0 %v2549
    %v2617 = vpop.f32.mrb[0].mxu0
    %v2618 = vadd.f32 0.0, %v2617
    %v2619 = vpop.f32.mrb[0].mxu0
    %2620 = vdwg.mxu0
    %2621 = vrot.lane.b32.xlu0 %v2282, 120
    %v2622 = vpop.permute.xlu0 %2621
    %2623 = vrot.lane.b32.xlu0 %v2282, 88
    %v2624 = vpop.permute.xlu0 %2623
    %v2625 = vsel %vm2293, %v2622, 0
    %v2627 = vsel %vm2293, %v2624, 0
    %2629 = vmatprep.subr.mxu0 0.0
    %2630 = vmatpush1.xpose.msra.mxu0 %v2627
    %2631 = vmatprep.subr.mxu0 0.0
    %2632 = vmatpush1.xpose.msra.mxu0 0.0
    %2633 = vmatprep.subr.mxu0 0.0
    %2634 = vmatpush1.xpose.msra.mxu0 0.0
    %2635 = vmatprep.subr.mxu0 0.0
    %2636 = vmatpush1.xpose.msra.mxu0 0.0
    %2637 = vmatprep.subr.mxu0 0.0
    %2638 = vmatpush1.xpose.msra.mxu0 0.0
    %2639 = vmatprep.subr.mxu0 0.0
    %2640 = vmatpush1.xpose.msra.mxu0 0.0
    %2641 = vmatprep.subr.mxu0 0.0
    %2642 = vmatpush1.xpose.msra.mxu0 0.0
    %2643 = vmatprep.subr.mxu0 0.0
    %2644 = vmatpush1.xpose.msra.mxu0 0.0
    %2645 = vmatprep.subr.mxu0 0.0
    %2646 = vmatpush1.xpose.msra.mxu0 0.0
    %2647 = vmatprep.subr.mxu0 0.0
    %2648 = vmatpush1.xpose.msra.mxu0 0.0
    %2649 = vmatprep.subr.mxu0 0.0
    %2650 = vmatpush1.xpose.msra.mxu0 0.0
    %2651 = vmatprep.subr.mxu0 0.0
    %2652 = vmatpush1.xpose.msra.mxu0 0.0
    %2653 = vmatprep.subr.mxu0 0.0
    %2654 = vmatpush1.xpose.msra.mxu0 0.0
    %2655 = vmatprep.subr.mxu0 0.0
    %2656 = vmatpush1.xpose.msra.mxu0 0.0
    %2657 = vmatprep.subr.mxu0 0.0
    %2658 = vmatpush1.xpose.msra.mxu0 0.0
    %2659 = vmatprep.subr.mxu0 0.0
    %2660 = vmatpush1.xpose.msra.mxu0 0.0
    %2661 = vmatprep.subr.mxu0 0.0
    %2662 = vmatpush1.xpose.msra.mxu0 0.0
    %2663 = vmatprep.subr.mxu0 0.0
    %2664 = vmatpush1.xpose.msra.mxu0 0.0
    %2665 = vmatprep.subr.mxu0 0.0
    %2666 = vmatpush1.xpose.msra.mxu0 0.0
    %2667 = vmatprep.subr.mxu0 0.0
    %2668 = vmatpush1.xpose.msra.mxu0 0.0
    %2669 = vmatprep.subr.mxu0 0.0
    %2670 = vmatpush1.xpose.msra.mxu0 0.0
    %2671 = vmatprep.subr.mxu0 0.0
    %2672 = vmatpush1.xpose.msra.mxu0 0.0
    %2673 = vmatprep.subr.mxu0 0.0
    %2674 = vmatpush1.xpose.msra.mxu0 0.0
    %2675 = vmatprep.subr.mxu0 0.0
    %2676 = vmatpush1.xpose.msra.mxu0 0.0
    %2677 = vmatprep.subr.mxu0 0.0
    %2678 = vmatpush1.xpose.msra.mxu0 0.0
    %2679 = vmatprep.subr.mxu0 0.0
    %2680 = vmatpush1.xpose.msra.mxu0 0.0
    %2681 = vmatprep.subr.mxu0 0.0
    %2682 = vmatpush1.xpose.msra.mxu0 0.0
    %2683 = vmatprep.subr.mxu0 0.0
    %2684 = vmatpush1.xpose.msra.mxu0 0.0
    %2685 = vmatprep.subr.mxu0 0.0
    %2686 = vmatpush1.xpose.msra.mxu0 0.0
    %2687 = vmatprep.subr.mxu0 0.0
    %2688 = vmatpush1.xpose.msra.mxu0 0.0
    %2689 = vmatprep.subr.mxu0 0.0
    %2690 = vmatpush1.xpose.msra.mxu0 0.0
    %2691 = vmatprep.subr.mxu0 0.0
    %2692 = vmatpush1.xpose.msra.mxu0 0.0
    %2693 = vmatprep.mubr.f32.mxu0 0.0
    %2694 = vmatmul.mubr.f32.gmra.mrb[0].mxu0 %v2625
    %v2695 = vpop.f32.mrb[0].mxu0
    %v2696 = vadd.f32 0.0, %v2695
    %v2697 = vpop.f32.mrb[0].mxu0
    %2698 = vdwg.mxu0
    %2699 = vrot.lane.b32.xlu0 %v2287, 120
    %v2700 = vpop.permute.xlu0 %2699
    %2701 = vrot.lane.b32.xlu0 %v2287, 88
    %v2702 = vpop.permute.xlu0 %2701
    %v2703 = vsel %vm2293, %v2700, 0
    %v2705 = vsel %vm2293, %v2702, 0
    %2707 = vmatprep.subr.mxu0 0.0
    %2708 = vmatpush1.xpose.msra.mxu0 %v2705
    %2709 = vmatprep.subr.mxu0 0.0
    %2710 = vmatpush1.xpose.msra.mxu0 0.0
    %2711 = vmatprep.subr.mxu0 0.0
    %2712 = vmatpush1.xpose.msra.mxu0 0.0
    %2713 = vmatprep.subr.mxu0 0.0
    %2714 = vmatpush1.xpose.msra.mxu0 0.0
    %2715 = vmatprep.subr.mxu0 0.0
    %2716 = vmatpush1.xpose.msra.mxu0 0.0
    %2717 = vmatprep.subr.mxu0 0.0
    %2718 = vmatpush1.xpose.msra.mxu0 0.0
    %2719 = vmatprep.subr.mxu0 0.0
    %2720 = vmatpush1.xpose.msra.mxu0 0.0
    %2721 = vmatprep.subr.mxu0 0.0
    %2722 = vmatpush1.xpose.msra.mxu0 0.0
    %2723 = vmatprep.subr.mxu0 0.0
    %2724 = vmatpush1.xpose.msra.mxu0 0.0
    %2725 = vmatprep.subr.mxu0 0.0
    %2726 = vmatpush1.xpose.msra.mxu0 0.0
    %2727 = vmatprep.subr.mxu0 0.0
    %2728 = vmatpush1.xpose.msra.mxu0 0.0
    %2729 = vmatprep.subr.mxu0 0.0
    %2730 = vmatpush1.xpose.msra.mxu0 0.0
    %2731 = vmatprep.subr.mxu0 0.0
    %2732 = vmatpush1.xpose.msra.mxu0 0.0
    %2733 = vmatprep.subr.mxu0 0.0
    %2734 = vmatpush1.xpose.msra.mxu0 0.0
    %2735 = vmatprep.subr.mxu0 0.0
    %2736 = vmatpush1.xpose.msra.mxu0 0.0
    %2737 = vmatprep.subr.mxu0 0.0
    %2738 = vmatpush1.xpose.msra.mxu0 0.0
    %2739 = vmatprep.subr.mxu0 0.0
    %2740 = vmatpush1.xpose.msra.mxu0 0.0
    %2741 = vmatprep.subr.mxu0 0.0
    %2742 = vmatpush1.xpose.msra.mxu0 0.0
    %2743 = vmatprep.subr.mxu0 0.0
    %2744 = vmatpush1.xpose.msra.mxu0 0.0
    %2745 = vmatprep.subr.mxu0 0.0
    %2746 = vmatpush1.xpose.msra.mxu0 0.0
    %2747 = vmatprep.subr.mxu0 0.0
    %2748 = vmatpush1.xpose.msra.mxu0 0.0
    %2749 = vmatprep.subr.mxu0 0.0
    %2750 = vmatpush1.xpose.msra.mxu0 0.0
    %2751 = vmatprep.subr.mxu0 0.0
    %2752 = vmatpush1.xpose.msra.mxu0 0.0
    %2753 = vmatprep.subr.mxu0 0.0
    %2754 = vmatpush1.xpose.msra.mxu0 0.0
    %2755 = vmatprep.subr.mxu0 0.0
    %2756 = vmatpush1.xpose.msra.mxu0 0.0
    %2757 = vmatprep.subr.mxu0 0.0
    %2758 = vmatpush1.xpose.msra.mxu0 0.0
    %2759 = vmatprep.subr.mxu0 0.0
    %2760 = vmatpush1.xpose.msra.mxu0 0.0
    %2761 = vmatprep.subr.mxu0 0.0
    %2762 = vmatpush1.xpose.msra.mxu0 0.0
    %2763 = vmatprep.subr.mxu0 0.0
    %2764 = vmatpush1.xpose.msra.mxu0 0.0
    %2765 = vmatprep.subr.mxu0 0.0
    %2766 = vmatpush1.xpose.msra.mxu0 0.0
    %2767 = vmatprep.subr.mxu0 0.0
    %2768 = vmatpush1.xpose.msra.mxu0 0.0
    %2769 = vmatprep.subr.mxu0 0.0
    %2770 = vmatpush1.xpose.msra.mxu0 0.0
    %2771 = vmatprep.mubr.f32.mxu0 0.0
    %2772 = vmatmul.mubr.f32.gmra.mrb[0].mxu0 %v2703
    %v2773 = vpop.f32.mrb[0].mxu0
    %v2774 = vadd.f32 0.0, %v2773
    %v2775 = vpop.f32.mrb[0].mxu0
    %2776 = vdwg.mxu0
    %v2777 = vmul.f32 %v2696, 0.35355338
    %v2778 = vmul.f32 %v2774, 0.35355338
    %v2779 = vsel %vm2293, %v2777, -inf
    %2780 = vmax.xlane.f32.xlu0 %v2779
    %v2781 = vpop.xlane.xlu0 %2780
    %v2782 = vsel %vm2293, %v2778, -inf
    %2783 = vmax.xlane.f32.xlu0 %v2782
    %v2784 = vpop.xlane.xlu0 %2783
    %v2785 = vsub.f32 %v2777, %v2781
    %v2786 = vsub.f32 %v2778, %v2784
    %v2787 = vmul.f32 %v2785, 1.442695
    %v2788 = vpow.pop %v2787
    %v2789 = vmul.f32 %v2786, 1.442695
    %v2790 = vpow.pop %v2789
    %v2791 = vsel %vm2293, %v2788, 0.0
    %2792 = vadd.xlane.f32.xlu0 %v2791
    %v2793 = vpop.xlane.xlu0 %2792
    %v2794 = vsel %vm2293, %v2790, 0.0
    %2795 = vadd.xlane.f32.xlu0 %v2794
    %v2796 = vpop.xlane.xlu0 %2795
    %v2797 = vrcp.pop %v2793
    %v2798 = vrcp.pop %v2796
    %v2799 = vmul.f32 %v2788, %v2797
    %v2800 = vmul.f32 %v2790, %v2798
    %2801 = vrot.lane.b32.xlu0 %v2282, 56
    %v2802 = vpop.permute.xlu0 %2801
    %v2805 = vsel %vm2293, %v2799, 0
    %2807 = vmatprep.subr.mxu0 0.0
    %2808 = vmatpush1.msra.mxu0 %v2802
    %2809 = vmatprep.subr.mxu0 0.0
    %2810 = vmatpush1.msra.mxu0 0.0
    %2811 = vmatprep.subr.mxu0 0.0
    %2812 = vmatpush1.msra.mxu0 0.0
    %2813 = vmatprep.subr.mxu0 0.0
    %2814 = vmatpush1.msra.mxu0 0.0
    %2815 = vmatprep.subr.mxu0 0.0
    %2816 = vmatpush1.msra.mxu0 0.0
    %2817 = vmatprep.subr.mxu0 0.0
    %2818 = vmatpush1.msra.mxu0 0.0
    %2819 = vmatprep.subr.mxu0 0.0
    %2820 = vmatpush1.msra.mxu0 0.0
    %2821 = vmatprep.subr.mxu0 0.0
    %2822 = vmatpush1.msra.mxu0 0.0
    %2823 = vmatprep.subr.mxu0 0.0
    %2824 = vmatpush1.msra.mxu0 0.0
    %2825 = vmatprep.subr.mxu0 0.0
    %2826 = vmatpush1.msra.mxu0 0.0
    %2827 = vmatprep.subr.mxu0 0.0
    %2828 = vmatpush1.msra.mxu0 0.0
    %2829 = vmatprep.subr.mxu0 0.0
    %2830 = vmatpush1.msra.mxu0 0.0
    %2831 = vmatprep.subr.mxu0 0.0
    %2832 = vmatpush1.msra.mxu0 0.0
    %2833 = vmatprep.subr.mxu0 0.0
    %2834 = vmatpush1.msra.mxu0 0.0
    %2835 = vmatprep.subr.mxu0 0.0
    %2836 = vmatpush1.msra.mxu0 0.0
    %2837 = vmatprep.subr.mxu0 0.0
    %2838 = vmatpush1.msra.mxu0 0.0
    %2839 = vmatprep.subr.mxu0 0.0
    %2840 = vmatpush1.msra.mxu0 0.0
    %2841 = vmatprep.subr.mxu0 0.0
    %2842 = vmatpush1.msra.mxu0 0.0
    %2843 = vmatprep.subr.mxu0 0.0
    %2844 = vmatpush1.msra.mxu0 0.0
    %2845 = vmatprep.subr.mxu0 0.0
    %2846 = vmatpush1.msra.mxu0 0.0
    %2847 = vmatprep.subr.mxu0 0.0
    %2848 = vmatpush1.msra.mxu0 0.0
    %2849 = vmatprep.subr.mxu0 0.0
    %2850 = vmatpush1.msra.mxu0 0.0
    %2851 = vmatprep.subr.mxu0 0.0
    %2852 = vmatpush1.msra.mxu0 0.0
    %2853 = vmatprep.subr.mxu0 0.0
    %2854 = vmatpush1.msra.mxu0 0.0
    %2855 = vmatprep.subr.mxu0 0.0
    %2856 = vmatpush1.msra.mxu0 0.0
    %2857 = vmatprep.subr.mxu0 0.0
    %2858 = vmatpush1.msra.mxu0 0.0
    %2859 = vmatprep.subr.mxu0 0.0
    %2860 = vmatpush1.msra.mxu0 0.0
    %2861 = vmatprep.subr.mxu0 0.0
    %2862 = vmatpush1.msra.mxu0 0.0
    %2863 = vmatprep.subr.mxu0 0.0
    %2864 = vmatpush1.msra.mxu0 0.0
    %2865 = vmatprep.subr.mxu0 0.0
    %2866 = vmatpush1.msra.mxu0 0.0
    %2867 = vmatprep.subr.mxu0 0.0
    %2868 = vmatpush1.msra.mxu0 0.0
    %2869 = vmatprep.subr.mxu0 0.0
    %2870 = vmatpush1.msra.mxu0 0.0
    %2871 = vmatprep.mubr.f32.mxu0 0.0
    %2872 = vmatmul.mubr.f32.gmra.mrb[0].mxu0 %v2805
    %v2873 = vpop.f32.mrb[0].mxu0
    %v2874 = vadd.f32 0.0, %v2873
    %v2875 = vpop.f32.mrb[0].mxu0
    %2876 = vdwg.mxu0
    %2877 = vrot.lane.b32.xlu0 %v2287, 56
    %v2878 = vpop.permute.xlu0 %2877
    %v2881 = vsel %vm2293, %v2800, 0
    %2883 = vmatprep.subr.mxu0 0.0
    %2884 = vmatpush1.msra.mxu0 %v2878
    %2885 = vmatprep.subr.mxu0 0.0
    %2886 = vmatpush1.msra.mxu0 0.0
    %2887 = vmatprep.subr.mxu0 0.0
    %2888 = vmatpush1.msra.mxu0 0.0
    %2889 = vmatprep.subr.mxu0 0.0
    %2890 = vmatpush1.msra.mxu0 0.0
    %2891 = vmatprep.subr.mxu0 0.0
    %2892 = vmatpush1.msra.mxu0 0.0
    %2893 = vmatprep.subr.mxu0 0.0
    %2894 = vmatpush1.msra.mxu0 0.0
    %2895 = vmatprep.subr.mxu0 0.0
    %2896 = vmatpush1.msra.mxu0 0.0
    %2897 = vmatprep.subr.mxu0 0.0
    %2898 = vmatpush1.msra.mxu0 0.0
    %2899 = vmatprep.subr.mxu0 0.0
    %2900 = vmatpush1.msra.mxu0 0.0
    %2901 = vmatprep.subr.mxu0 0.0
    %2902 = vmatpush1.msra.mxu0 0.0
    %2903 = vmatprep.subr.mxu0 0.0
    %2904 = vmatpush1.msra.mxu0 0.0
    %2905 = vmatprep.subr.mxu0 0.0
    %2906 = vmatpush1.msra.mxu0 0.0
    %2907 = vmatprep.subr.mxu0 0.0
    %2908 = vmatpush1.msra.mxu0 0.0
    %2909 = vmatprep.subr.mxu0 0.0
    %2910 = vmatpush1.msra.mxu0 0.0
    %2911 = vmatprep.subr.mxu0 0.0
    %2912 = vmatpush1.msra.mxu0 0.0
    %2913 = vmatprep.subr.mxu0 0.0
    %2914 = vmatpush1.msra.mxu0 0.0
    %2915 = vmatprep.subr.mxu0 0.0
    %2916 = vmatpush1.msra.mxu0 0.0
    %2917 = vmatprep.subr.mxu0 0.0
    %2918 = vmatpush1.msra.mxu0 0.0
    %2919 = vmatprep.subr.mxu0 0.0
    %2920 = vmatpush1.msra.mxu0 0.0
    %2921 = vmatprep.subr.mxu0 0.0
    %2922 = vmatpush1.msra.mxu0 0.0
    %2923 = vmatprep.subr.mxu0 0.0
    %2924 = vmatpush1.msra.mxu0 0.0
    %2925 = vmatprep.subr.mxu0 0.0
    %2926 = vmatpush1.msra.mxu0 0.0
    %2927 = vmatprep.subr.mxu0 0.0
    %2928 = vmatpush1.msra.mxu0 0.0
    %2929 = vmatprep.subr.mxu0 0.0
    %2930 = vmatpush1.msra.mxu0 0.0
    %2931 = vmatprep.subr.mxu0 0.0
    %2932 = vmatpush1.msra.mxu0 0.0
    %2933 = vmatprep.subr.mxu0 0.0
    %2934 = vmatpush1.msra.mxu0 0.0
    %2935 = vmatprep.subr.mxu0 0.0
    %2936 = vmatpush1.msra.mxu0 0.0
    %2937 = vmatprep.subr.mxu0 0.0
    %2938 = vmatpush1.msra.mxu0 0.0
    %2939 = vmatprep.subr.mxu0 0.0
    %2940 = vmatpush1.msra.mxu0 0.0
    %2941 = vmatprep.subr.mxu0 0.0
    %2942 = vmatpush1.msra.mxu0 0.0
    %2943 = vmatprep.subr.mxu0 0.0
    %2944 = vmatpush1.msra.mxu0 0.0
    %2945 = vmatprep.subr.mxu0 0.0
    %2946 = vmatpush1.msra.mxu0 0.0
    %2947 = vmatprep.mubr.f32.mxu0 0.0
    %2948 = vmatmul.mubr.f32.gmra.mrb[0].mxu0 %v2881
    %v2949 = vpop.f32.mrb[0].mxu0
    %v2950 = vadd.f32 0.0, %v2949
    %v2951 = vpop.f32.mrb[0].mxu0
    %2952 = vdwg.mxu0
    %2953 = vrot.lane.b32.xlu0 %v2282, 112
    %v2954 = vpop.permute.xlu0 %2953
    %2955 = vrot.lane.b32.xlu0 %v2282, 80
    %v2956 = vpop.permute.xlu0 %2955
    %v2957 = vsel %vm2293, %v2954, 0
    %v2959 = vsel %vm2293, %v2956, 0
    %2961 = vmatprep.subr.mxu0 0.0
    %2962 = vmatpush1.xpose.msra.mxu0 %v2959
    %2963 = vmatprep.subr.mxu0 0.0
    %2964 = vmatpush1.xpose.msra.mxu0 0.0
    %2965 = vmatprep.subr.mxu0 0.0
    %2966 = vmatpush1.xpose.msra.mxu0 0.0
    %2967 = vmatprep.subr.mxu0 0.0
    %2968 = vmatpush1.xpose.msra.mxu0 0.0
    %2969 = vmatprep.subr.mxu0 0.0
    %2970 = vmatpush1.xpose.msra.mxu0 0.0
    %2971 = vmatprep.subr.mxu0 0.0
    %2972 = vmatpush1.xpose.msra.mxu0 0.0
    %2973 = vmatprep.subr.mxu0 0.0
    %2974 = vmatpush1.xpose.msra.mxu0 0.0
    %2975 = vmatprep.subr.mxu0 0.0
    %2976 = vmatpush1.xpose.msra.mxu0 0.0
    %2977 = vmatprep.subr.mxu0 0.0
    %2978 = vmatpush1.xpose.msra.mxu0 0.0
    %2979 = vmatprep.subr.mxu0 0.0
    %2980 = vmatpush1.xpose.msra.mxu0 0.0
    %2981 = vmatprep.subr.mxu0 0.0
    %2982 = vmatpush1.xpose.msra.mxu0 0.0
    %2983 = vmatprep.subr.mxu0 0.0
    %2984 = vmatpush1.xpose.msra.mxu0 0.0
    %2985 = vmatprep.subr.mxu0 0.0
    %2986 = vmatpush1.xpose.msra.mxu0 0.0
    %2987 = vmatprep.subr.mxu0 0.0
    %2988 = vmatpush1.xpose.msra.mxu0 0.0
    %2989 = vmatprep.subr.mxu0 0.0
    %2990 = vmatpush1.xpose.msra.mxu0 0.0
    %2991 = vmatprep.subr.mxu0 0.0
    %2992 = vmatpush1.xpose.msra.mxu0 0.0
    %2993 = vmatprep.subr.mxu0 0.0
    %2994 = vmatpush1.xpose.msra.mxu0 0.0
    %2995 = vmatprep.subr.mxu0 0.0
    %2996 = vmatpush1.xpose.msra.mxu0 0.0
    %2997 = vmatprep.subr.mxu0 0.0
    %2998 = vmatpush1.xpose.msra.mxu0 0.0
    %2999 = vmatprep.subr.mxu0 0.0
    %3000 = vmatpush1.xpose.msra.mxu0 0.0
    %3001 = vmatprep.subr.mxu0 0.0
    %3002 = vmatpush1.xpose.msra.mxu0 0.0
    %3003 = vmatprep.subr.mxu0 0.0
    %3004 = vmatpush1.xpose.msra.mxu0 0.0
    %3005 = vmatprep.subr.mxu0 0.0
    %3006 = vmatpush1.xpose.msra.mxu0 0.0
    %3007 = vmatprep.subr.mxu0 0.0
    %3008 = vmatpush1.xpose.msra.mxu0 0.0
    %3009 = vmatprep.subr.mxu0 0.0
    %3010 = vmatpush1.xpose.msra.mxu0 0.0
    %3011 = vmatprep.subr.mxu0 0.0
    %3012 = vmatpush1.xpose.msra.mxu0 0.0
    %3013 = vmatprep.subr.mxu0 0.0
    %3014 = vmatpush1.xpose.msra.mxu0 0.0
    %3015 = vmatprep.subr.mxu0 0.0
    %3016 = vmatpush1.xpose.msra.mxu0 0.0
    %3017 = vmatprep.subr.mxu0 0.0
    %3018 = vmatpush1.xpose.msra.mxu0 0.0
    %3019 = vmatprep.subr.mxu0 0.0
    %3020 = vmatpush1.xpose.msra.mxu0 0.0
    %3021 = vmatprep.subr.mxu0 0.0
    %3022 = vmatpush1.xpose.msra.mxu0 0.0
    %3023 = vmatprep.subr.mxu0 0.0
    %3024 = vmatpush1.xpose.msra.mxu0 0.0
    %3025 = vmatprep.mubr.f32.mxu0 0.0
    %3026 = vmatmul.mubr.f32.gmra.mrb[0].mxu0 %v2957
    %v3027 = vpop.f32.mrb[0].mxu0
    %v3028 = vadd.f32 0.0, %v3027
    %v3029 = vpop.f32.mrb[0].mxu0
    %3030 = vdwg.mxu0
    %3031 = vrot.lane.b32.xlu0 %v2287, 112
    %v3032 = vpop.permute.xlu0 %3031
    %3033 = vrot.lane.b32.xlu0 %v2287, 80
    %v3034 = vpop.permute.xlu0 %3033
    %v3035 = vsel %vm2293, %v3032, 0
    %v3037 = vsel %vm2293, %v3034, 0
    %3039 = vmatprep.subr.mxu0 0.0
    %3040 = vmatpush1.xpose.msra.mxu0 %v3037
    %3041 = vmatprep.subr.mxu0 0.0
    %3042 = vmatpush1.xpose.msra.mxu0 0.0
    %3043 = vmatprep.subr.mxu0 0.0
    %3044 = vmatpush1.xpose.msra.mxu0 0.0
    %3045 = vmatprep.subr.mxu0 0.0
    %3046 = vmatpush1.xpose.msra.mxu0 0.0
    %3047 = vmatprep.subr.mxu0 0.0
    %3048 = vmatpush1.xpose.msra.mxu0 0.0
    %3049 = vmatprep.subr.mxu0 0.0
    %3050 = vmatpush1.xpose.msra.mxu0 0.0
    %3051 = vmatprep.subr.mxu0 0.0
    %3052 = vmatpush1.xpose.msra.mxu0 0.0
    %3053 = vmatprep.subr.mxu0 0.0
    %3054 = vmatpush1.xpose.msra.mxu0 0.0
    %3055 = vmatprep.subr.mxu0 0.0
    %3056 = vmatpush1.xpose.msra.mxu0 0.0
    %3057 = vmatprep.subr.mxu0 0.0
    %3058 = vmatpush1.xpose.msra.mxu0 0.0
    %3059 = vmatprep.subr.mxu0 0.0
    %3060 = vmatpush1.xpose.msra.mxu0 0.0
    %3061 = vmatprep.subr.mxu0 0.0
    %3062 = vmatpush1.xpose.msra.mxu0 0.0
    %3063 = vmatprep.subr.mxu0 0.0
    %3064 = vmatpush1.xpose.msra.mxu0 0.0
    %3065 = vmatprep.subr.mxu0 0.0
    %3066 = vmatpush1.xpose.msra.mxu0 0.0
    %3067 = vmatprep.subr.mxu0 0.0
    %3068 = vmatpush1.xpose.msra.mxu0 0.0
    %3069 = vmatprep.subr.mxu0 0.0
    %3070 = vmatpush1.xpose.msra.mxu0 0.0
    %3071 = vmatprep.subr.mxu0 0.0
    %3072 = vmatpush1.xpose.msra.mxu0 0.0
    %3073 = vmatprep.subr.mxu0 0.0
    %3074 = vmatpush1.xpose.msra.mxu0 0.0
    %3075 = vmatprep.subr.mxu0 0.0
    %3076 = vmatpush1.xpose.msra.mxu0 0.0
    %3077 = vmatprep.subr.mxu0 0.0
    %3078 = vmatpush1.xpose.msra.mxu0 0.0
    %3079 = vmatprep.subr.mxu0 0.0
    %3080 = vmatpush1.xpose.msra.mxu0 0.0
    %3081 = vmatprep.subr.mxu0 0.0
    %3082 = vmatpush1.xpose.msra.mxu0 0.0
    %3083 = vmatprep.subr.mxu0 0.0
    %3084 = vmatpush1.xpose.msra.mxu0 0.0
    %3085 = vmatprep.subr.mxu0 0.0
    %3086 = vmatpush1.xpose.msra.mxu0 0.0
    %3087 = vmatprep.subr.mxu0 0.0
    %3088 = vmatpush1.xpose.msra.mxu0 0.0
    %3089 = vmatprep.subr.mxu0 0.0
    %3090 = vmatpush1.xpose.msra.mxu0 0.0
    %3091 = vmatprep.subr.mxu0 0.0
    %3092 = vmatpush1.xpose.msra.mxu0 0.0
    %3093 = vmatprep.subr.mxu0 0.0
    %3094 = vmatpush1.xpose.msra.mxu0 0.0
    %3095 = vmatprep.subr.mxu0 0.0
    %3096 = vmatpush1.xpose.msra.mxu0 0.0
    %3097 = vmatprep.subr.mxu0 0.0
    %3098 = vmatpush1.xpose.msra.mxu0 0.0
    %3099 = vmatprep.subr.mxu0 0.0
    %3100 = vmatpush1.xpose.msra.mxu0 0.0
    %3101 = vmatprep.subr.mxu0 0.0
    %3102 = vmatpush1.xpose.msra.mxu0 0.0
    %3103 = vmatprep.mubr.f32.mxu0 0.0
    %3104 = vmatmul.mubr.f32.gmra.mrb[0].mxu0 %v3035
    %v3105 = vpop.f32.mrb[0].mxu0
    %v3106 = vadd.f32 0.0, %v3105
    %v3107 = vpop.f32.mrb[0].mxu0
    %3108 = vdwg.mxu0
    %v3109 = vmul.f32 %v3028, 0.35355338
    %v3110 = vmul.f32 %v3106, 0.35355338
    %v3111 = vsel %vm2293, %v3109, -inf
    %3112 = vmax.xlane.f32.xlu0 %v3111
    %v3113 = vpop.xlane.xlu0 %3112
    %v3114 = vsel %vm2293, %v3110, -inf
    %3115 = vmax.xlane.f32.xlu0 %v3114
    %v3116 = vpop.xlane.xlu0 %3115
    %v3117 = vsub.f32 %v3109, %v3113
    %v3118 = vsub.f32 %v3110, %v3116
    %v3119 = vmul.f32 %v3117, 1.442695
    %v3120 = vpow.pop %v3119
    %v3121 = vmul.f32 %v3118, 1.442695
    %v3122 = vpow.pop %v3121
    %v3123 = vsel %vm2293, %v3120, 0.0
    %3124 = vadd.xlane.f32.xlu0 %v3123
    %v3125 = vpop.xlane.xlu0 %3124
    %v3126 = vsel %vm2293, %v3122, 0.0
    %3127 = vadd.xlane.f32.xlu0 %v3126
    %v3128 = vpop.xlane.xlu0 %3127
    %v3129 = vrcp.pop %v3125
    %v3130 = vrcp.pop %v3128
    %v3131 = vmul.f32 %v3120, %v3129
    %v3132 = vmul.f32 %v3122, %v3130
    %3133 = vrot.lane.b32.xlu0 %v2282, 48
    %v3134 = vpop.permute.xlu0 %3133
    %v3137 = vsel %vm2293, %v3131, 0
    %3139 = vmatprep.subr.mxu0 0.0
    %3140 = vmatpush1.msra.mxu0 %v3134
    %3141 = vmatprep.subr.mxu0 0.0
    %3142 = vmatpush1.msra.mxu0 0.0
    %3143 = vmatprep.subr.mxu0 0.0
    %3144 = vmatpush1.msra.mxu0 0.0
    %3145 = vmatprep.subr.mxu0 0.0
    %3146 = vmatpush1.msra.mxu0 0.0
    %3147 = vmatprep.subr.mxu0 0.0
    %3148 = vmatpush1.msra.mxu0 0.0
    %3149 = vmatprep.subr.mxu0 0.0
    %3150 = vmatpush1.msra.mxu0 0.0
    %3151 = vmatprep.subr.mxu0 0.0
    %3152 = vmatpush1.msra.mxu0 0.0
    %3153 = vmatprep.subr.mxu0 0.0
    %3154 = vmatpush1.msra.mxu0 0.0
    %3155 = vmatprep.subr.mxu0 0.0
    %3156 = vmatpush1.msra.mxu0 0.0
    %3157 = vmatprep.subr.mxu0 0.0
    %3158 = vmatpush1.msra.mxu0 0.0
    %3159 = vmatprep.subr.mxu0 0.0
    %3160 = vmatpush1.msra.mxu0 0.0
    %3161 = vmatprep.subr.mxu0 0.0
    %3162 = vmatpush1.msra.mxu0 0.0
    %3163 = vmatprep.subr.mxu0 0.0
    %3164 = vmatpush1.msra.mxu0 0.0
    %3165 = vmatprep.subr.mxu0 0.0
    %3166 = vmatpush1.msra.mxu0 0.0
    %3167 = vmatprep.subr.mxu0 0.0
    %3168 = vmatpush1.msra.mxu0 0.0
    %3169 = vmatprep.subr.mxu0 0.0
    %3170 = vmatpush1.msra.mxu0 0.0
    %3171 = vmatprep.subr.mxu0 0.0
    %3172 = vmatpush1.msra.mxu0 0.0
    %3173 = vmatprep.subr.mxu0 0.0
    %3174 = vmatpush1.msra.mxu0 0.0
    %3175 = vmatprep.subr.mxu0 0.0
    %3176 = vmatpush1.msra.mxu0 0.0
    %3177 = vmatprep.subr.mxu0 0.0
    %3178 = vmatpush1.msra.mxu0 0.0
    %3179 = vmatprep.subr.mxu0 0.0
    %3180 = vmatpush1.msra.mxu0 0.0
    %3181 = vmatprep.subr.mxu0 0.0
    %3182 = vmatpush1.msra.mxu0 0.0
    %3183 = vmatprep.subr.mxu0 0.0
    %3184 = vmatpush1.msra.mxu0 0.0
    %3185 = vmatprep.subr.mxu0 0.0
    %3186 = vmatpush1.msra.mxu0 0.0
    %3187 = vmatprep.subr.mxu0 0.0
    %3188 = vmatpush1.msra.mxu0 0.0
    %3189 = vmatprep.subr.mxu0 0.0
    %3190 = vmatpush1.msra.mxu0 0.0
    %3191 = vmatprep.subr.mxu0 0.0
    %3192 = vmatpush1.msra.mxu0 0.0
    %3193 = vmatprep.subr.mxu0 0.0
    %3194 = vmatpush1.msra.mxu0 0.0
    %3195 = vmatprep.subr.mxu0 0.0
    %3196 = vmatpush1.msra.mxu0 0.0
    %3197 = vmatprep.subr.mxu0 0.0
    %3198 = vmatpush1.msra.mxu0 0.0
    %3199 = vmatprep.subr.mxu0 0.0
    %3200 = vmatpush1.msra.mxu0 0.0
    %3201 = vmatprep.subr.mxu0 0.0
    %3202 = vmatpush1.msra.mxu0 0.0
    %3203 = vmatprep.mubr.f32.mxu0 0.0
    %3204 = vmatmul.mubr.f32.gmra.mrb[0].mxu0 %v3137
    %v3205 = vpop.f32.mrb[0].mxu0
    %v3206 = vadd.f32 0.0, %v3205
    %v3207 = vpop.f32.mrb[0].mxu0
    %3208 = vdwg.mxu0
    %3209 = vrot.lane.b32.xlu0 %v2287, 48
    %v3210 = vpop.permute.xlu0 %3209
    %v3213 = vsel %vm2293, %v3132, 0
    %3215 = vmatprep.subr.mxu0 0.0
    %3216 = vmatpush1.msra.mxu0 %v3210
    %3217 = vmatprep.subr.mxu0 0.0
    %3218 = vmatpush1.msra.mxu0 0.0
    %3219 = vmatprep.subr.mxu0 0.0
    %3220 = vmatpush1.msra.mxu0 0.0
    %3221 = vmatprep.subr.mxu0 0.0
    %3222 = vmatpush1.msra.mxu0 0.0
    %3223 = vmatprep.subr.mxu0 0.0
    %3224 = vmatpush1.msra.mxu0 0.0
    %3225 = vmatprep.subr.mxu0 0.0
    %3226 = vmatpush1.msra.mxu0 0.0
    %3227 = vmatprep.subr.mxu0 0.0
    %3228 = vmatpush1.msra.mxu0 0.0
    %3229 = vmatprep.subr.mxu0 0.0
    %3230 = vmatpush1.msra.mxu0 0.0
    %3231 = vmatprep.subr.mxu0 0.0
    %3232 = vmatpush1.msra.mxu0 0.0
    %3233 = vmatprep.subr.mxu0 0.0
    %3234 = vmatpush1.msra.mxu0 0.0
    %3235 = vmatprep.subr.mxu0 0.0
    %3236 = vmatpush1.msra.mxu0 0.0
    %3237 = vmatprep.subr.mxu0 0.0
    %3238 = vmatpush1.msra.mxu0 0.0
    %3239 = vmatprep.subr.mxu0 0.0
    %3240 = vmatpush1.msra.mxu0 0.0
    %3241 = vmatprep.subr.mxu0 0.0
    %3242 = vmatpush1.msra.mxu0 0.0
    %3243 = vmatprep.subr.mxu0 0.0
    %3244 = vmatpush1.msra.mxu0 0.0
    %3245 = vmatprep.subr.mxu0 0.0
    %3246 = vmatpush1.msra.mxu0 0.0
    %3247 = vmatprep.subr.mxu0 0.0
    %3248 = vmatpush1.msra.mxu0 0.0
    %3249 = vmatprep.subr.mxu0 0.0
    %3250 = vmatpush1.msra.mxu0 0.0
    %3251 = vmatprep.subr.mxu0 0.0
    %3252 = vmatpush1.msra.mxu0 0.0
    %3253 = vmatprep.subr.mxu0 0.0
    %3254 = vmatpush1.msra.mxu0 0.0
    %3255 = vmatprep.subr.mxu0 0.0
    %3256 = vmatpush1.msra.mxu0 0.0
    %3257 = vmatprep.subr.mxu0 0.0
    %3258 = vmatpush1.msra.mxu0 0.0
    %3259 = vmatprep.subr.mxu0 0.0
    %3260 = vmatpush1.msra.mxu0 0.0
    %3261 = vmatprep.subr.mxu0 0.0
    %3262 = vmatpush1.msra.mxu0 0.0
    %3263 = vmatprep.subr.mxu0 0.0
    %3264 = vmatpush1.msra.mxu0 0.0
    %3265 = vmatprep.subr.mxu0 0.0
    %3266 = vmatpush1.msra.mxu0 0.0
    %3267 = vmatprep.subr.mxu0 0.0
    %3268 = vmatpush1.msra.mxu0 0.0
    %3269 = vmatprep.subr.mxu0 0.0
    %3270 = vmatpush1.msra.mxu0 0.0
    %3271 = vmatprep.subr.mxu0 0.0
    %3272 = vmatpush1.msra.mxu0 0.0
    %3273 = vmatprep.subr.mxu0 0.0
    %3274 = vmatpush1.msra.mxu0 0.0
    %3275 = vmatprep.subr.mxu0 0.0
    %3276 = vmatpush1.msra.mxu0 0.0
    %3277 = vmatprep.subr.mxu0 0.0
    %3278 = vmatpush1.msra.mxu0 0.0
    %3279 = vmatprep.mubr.f32.mxu0 0.0
    %3280 = vmatmul.mubr.f32.gmra.mrb[0].mxu0 %v3213
    %v3281 = vpop.f32.mrb[0].mxu0
    %v3282 = vadd.f32 0.0, %v3281
    %v3283 = vpop.f32.mrb[0].mxu0
    %3284 = vdwg.mxu0
    %3285 = vrot.lane.b32.xlu0 %v2282, 104
    %v3286 = vpop.permute.xlu0 %3285
    %3287 = vrot.lane.b32.xlu0 %v2282, 72
    %v3288 = vpop.permute.xlu0 %3287
    %v3289 = vsel %vm2293, %v3286, 0
    %v3291 = vsel %vm2293, %v3288, 0
    %3293 = vmatprep.subr.mxu0 0.0
    %3294 = vmatpush1.xpose.msra.mxu0 %v3291
    %3295 = vmatprep.subr.mxu0 0.0
    %3296 = vmatpush1.xpose.msra.mxu0 0.0
    %3297 = vmatprep.subr.mxu0 0.0
    %3298 = vmatpush1.xpose.msra.mxu0 0.0
    %3299 = vmatprep.subr.mxu0 0.0
    %3300 = vmatpush1.xpose.msra.mxu0 0.0
    %3301 = vmatprep.subr.mxu0 0.0
    %3302 = vmatpush1.xpose.msra.mxu0 0.0
    %3303 = vmatprep.subr.mxu0 0.0
    %3304 = vmatpush1.xpose.msra.mxu0 0.0
    %3305 = vmatprep.subr.mxu0 0.0
    %3306 = vmatpush1.xpose.msra.mxu0 0.0
    %3307 = vmatprep.subr.mxu0 0.0
    %3308 = vmatpush1.xpose.msra.mxu0 0.0
    %3309 = vmatprep.subr.mxu0 0.0
    %3310 = vmatpush1.xpose.msra.mxu0 0.0
    %3311 = vmatprep.subr.mxu0 0.0
    %3312 = vmatpush1.xpose.msra.mxu0 0.0
    %3313 = vmatprep.subr.mxu0 0.0
    %3314 = vmatpush1.xpose.msra.mxu0 0.0
    %3315 = vmatprep.subr.mxu0 0.0
    %3316 = vmatpush1.xpose.msra.mxu0 0.0
    %3317 = vmatprep.subr.mxu0 0.0
    %3318 = vmatpush1.xpose.msra.mxu0 0.0
    %3319 = vmatprep.subr.mxu0 0.0
    %3320 = vmatpush1.xpose.msra.mxu0 0.0
    %3321 = vmatprep.subr.mxu0 0.0
    %3322 = vmatpush1.xpose.msra.mxu0 0.0
    %3323 = vmatprep.subr.mxu0 0.0
    %3324 = vmatpush1.xpose.msra.mxu0 0.0
    %3325 = vmatprep.subr.mxu0 0.0
    %3326 = vmatpush1.xpose.msra.mxu0 0.0
    %3327 = vmatprep.subr.mxu0 0.0
    %3328 = vmatpush1.xpose.msra.mxu0 0.0
    %3329 = vmatprep.subr.mxu0 0.0
    %3330 = vmatpush1.xpose.msra.mxu0 0.0
    %3331 = vmatprep.subr.mxu0 0.0
    %3332 = vmatpush1.xpose.msra.mxu0 0.0
    %3333 = vmatprep.subr.mxu0 0.0
    %3334 = vmatpush1.xpose.msra.mxu0 0.0
    %3335 = vmatprep.subr.mxu0 0.0
    %3336 = vmatpush1.xpose.msra.mxu0 0.0
    %3337 = vmatprep.subr.mxu0 0.0
    %3338 = vmatpush1.xpose.msra.mxu0 0.0
    %3339 = vmatprep.subr.mxu0 0.0
    %3340 = vmatpush1.xpose.msra.mxu0 0.0
    %3341 = vmatprep.subr.mxu0 0.0
    %3342 = vmatpush1.xpose.msra.mxu0 0.0
    %3343 = vmatprep.subr.mxu0 0.0
    %3344 = vmatpush1.xpose.msra.mxu0 0.0
    %3345 = vmatprep.subr.mxu0 0.0
    %3346 = vmatpush1.xpose.msra.mxu0 0.0
    %3347 = vmatprep.subr.mxu0 0.0
    %3348 = vmatpush1.xpose.msra.mxu0 0.0
    %3349 = vmatprep.subr.mxu0 0.0
    %3350 = vmatpush1.xpose.msra.mxu0 0.0
    %3351 = vmatprep.subr.mxu0 0.0
    %3352 = vmatpush1.xpose.msra.mxu0 0.0
    %3353 = vmatprep.subr.mxu0 0.0
    %3354 = vmatpush1.xpose.msra.mxu0 0.0
    %3355 = vmatprep.subr.mxu0 0.0
    %3356 = vmatpush1.xpose.msra.mxu0 0.0
    %3357 = vmatprep.mubr.f32.mxu0 0.0
    %3358 = vmatmul.mubr.f32.gmra.mrb[0].mxu0 %v3289
    %v3359 = vpop.f32.mrb[0].mxu0
    %v3360 = vadd.f32 0.0, %v3359
    %v3361 = vpop.f32.mrb[0].mxu0
    %3362 = vdwg.mxu0
    %3363 = vrot.lane.b32.xlu0 %v2287, 104
    %v3364 = vpop.permute.xlu0 %3363
    %3365 = vrot.lane.b32.xlu0 %v2287, 72
    %v3366 = vpop.permute.xlu0 %3365
    %v3367 = vsel %vm2293, %v3364, 0
    %v3369 = vsel %vm2293, %v3366, 0
    %3371 = vmatprep.subr.mxu0 0.0
    %3372 = vmatpush1.xpose.msra.mxu0 %v3369
    %3373 = vmatprep.subr.mxu0 0.0
    %3374 = vmatpush1.xpose.msra.mxu0 0.0
    %3375 = vmatprep.subr.mxu0 0.0
    %3376 = vmatpush1.xpose.msra.mxu0 0.0
    %3377 = vmatprep.subr.mxu0 0.0
    %3378 = vmatpush1.xpose.msra.mxu0 0.0
    %3379 = vmatprep.subr.mxu0 0.0
    %3380 = vmatpush1.xpose.msra.mxu0 0.0
    %3381 = vmatprep.subr.mxu0 0.0
    %3382 = vmatpush1.xpose.msra.mxu0 0.0
    %3383 = vmatprep.subr.mxu0 0.0
    %3384 = vmatpush1.xpose.msra.mxu0 0.0
    %3385 = vmatprep.subr.mxu0 0.0
    %3386 = vmatpush1.xpose.msra.mxu0 0.0
    %3387 = vmatprep.subr.mxu0 0.0
    %3388 = vmatpush1.xpose.msra.mxu0 0.0
    %3389 = vmatprep.subr.mxu0 0.0
    %3390 = vmatpush1.xpose.msra.mxu0 0.0
    %3391 = vmatprep.subr.mxu0 0.0
    %3392 = vmatpush1.xpose.msra.mxu0 0.0
    %3393 = vmatprep.subr.mxu0 0.0
    %3394 = vmatpush1.xpose.msra.mxu0 0.0
    %3395 = vmatprep.subr.mxu0 0.0
    %3396 = vmatpush1.xpose.msra.mxu0 0.0
    %3397 = vmatprep.subr.mxu0 0.0
    %3398 = vmatpush1.xpose.msra.mxu0 0.0
    %3399 = vmatprep.subr.mxu0 0.0
    %3400 = vmatpush1.xpose.msra.mxu0 0.0
    %3401 = vmatprep.subr.mxu0 0.0
    %3402 = vmatpush1.xpose.msra.mxu0 0.0
    %3403 = vmatprep.subr.mxu0 0.0
    %3404 = vmatpush1.xpose.msra.mxu0 0.0
    %3405 = vmatprep.subr.mxu0 0.0
    %3406 = vmatpush1.xpose.msra.mxu0 0.0
    %3407 = vmatprep.subr.mxu0 0.0
    %3408 = vmatpush1.xpose.msra.mxu0 0.0
    %3409 = vmatprep.subr.mxu0 0.0
    %3410 = vmatpush1.xpose.msra.mxu0 0.0
    %3411 = vmatprep.subr.mxu0 0.0
    %3412 = vmatpush1.xpose.msra.mxu0 0.0
    %3413 = vmatprep.subr.mxu0 0.0
    %3414 = vmatpush1.xpose.msra.mxu0 0.0
    %3415 = vmatprep.subr.mxu0 0.0
    %3416 = vmatpush1.xpose.msra.mxu0 0.0
    %3417 = vmatprep.subr.mxu0 0.0
    %3418 = vmatpush1.xpose.msra.mxu0 0.0
    %3419 = vmatprep.subr.mxu0 0.0
    %3420 = vmatpush1.xpose.msra.mxu0 0.0
    %3421 = vmatprep.subr.mxu0 0.0
    %3422 = vmatpush1.xpose.msra.mxu0 0.0
    %3423 = vmatprep.subr.mxu0 0.0
    %3424 = vmatpush1.xpose.msra.mxu0 0.0
    %3425 = vmatprep.subr.mxu0 0.0
    %3426 = vmatpush1.xpose.msra.mxu0 0.0
    %3427 = vmatprep.subr.mxu0 0.0
    %3428 = vmatpush1.xpose.msra.mxu0 0.0
    %3429 = vmatprep.subr.mxu0 0.0
    %3430 = vmatpush1.xpose.msra.mxu0 0.0
    %3431 = vmatprep.subr.mxu0 0.0
    %3432 = vmatpush1.xpose.msra.mxu0 0.0
    %3433 = vmatprep.subr.mxu0 0.0
    %3434 = vmatpush1.xpose.msra.mxu0 0.0
    %3435 = vmatprep.mubr.f32.mxu0 0.0
    %3436 = vmatmul.mubr.f32.gmra.mrb[0].mxu0 %v3367
    %v3437 = vpop.f32.mrb[0].mxu0
    %v3438 = vadd.f32 0.0, %v3437
    %v3439 = vpop.f32.mrb[0].mxu0
    %3440 = vdwg.mxu0
    %v3441 = vmul.f32 %v3360, 0.35355338
    %v3442 = vmul.f32 %v3438, 0.35355338
    %v3443 = vsel %vm2293, %v3441, -inf
    %3444 = vmax.xlane.f32.xlu0 %v3443
    %v3445 = vpop.xlane.xlu0 %3444
    %v3446 = vsel %vm2293, %v3442, -inf
    %3447 = vmax.xlane.f32.xlu0 %v3446
    %v3448 = vpop.xlane.xlu0 %3447
    %v3449 = vsub.f32 %v3441, %v3445
    %v3450 = vsub.f32 %v3442, %v3448
    %v3451 = vmul.f32 %v3449, 1.442695
    %v3452 = vpow.pop %v3451
    %v3453 = vmul.f32 %v3450, 1.442695
    %v3454 = vpow.pop %v3453
    %v3455 = vsel %vm2293, %v3452, 0.0
    %3456 = vadd.xlane.f32.xlu0 %v3455
    %v3457 = vpop.xlane.xlu0 %3456
    %v3458 = vsel %vm2293, %v3454, 0.0
    %3459 = vadd.xlane.f32.xlu0 %v3458
    %v3460 = vpop.xlane.xlu0 %3459
    %v3461 = vrcp.pop %v3457
    %v3462 = vrcp.pop %v3460
    %v3463 = vmul.f32 %v3452, %v3461
    %v3464 = vmul.f32 %v3454, %v3462
    %3465 = vrot.lane.b32.xlu0 %v2282, 40
    %v3466 = vpop.permute.xlu0 %3465
    %v3469 = vsel %vm2293, %v3463, 0
    %3471 = vmatprep.subr.mxu0 0.0
    %3472 = vmatpush1.msra.mxu0 %v3466
    %3473 = vmatprep.subr.mxu0 0.0
    %3474 = vmatpush1.msra.mxu0 0.0
    %3475 = vmatprep.subr.mxu0 0.0
    %3476 = vmatpush1.msra.mxu0 0.0
    %3477 = vmatprep.subr.mxu0 0.0
    %3478 = vmatpush1.msra.mxu0 0.0
    %3479 = vmatprep.subr.mxu0 0.0
    %3480 = vmatpush1.msra.mxu0 0.0
    %3481 = vmatprep.subr.mxu0 0.0
    %3482 = vmatpush1.msra.mxu0 0.0
    %3483 = vmatprep.subr.mxu0 0.0
    %3484 = vmatpush1.msra.mxu0 0.0
    %3485 = vmatprep.subr.mxu0 0.0
    %3486 = vmatpush1.msra.mxu0 0.0
    %3487 = vmatprep.subr.mxu0 0.0
    %3488 = vmatpush1.msra.mxu0 0.0
    %3489 = vmatprep.subr.mxu0 0.0
    %3490 = vmatpush1.msra.mxu0 0.0
    %3491 = vmatprep.subr.mxu0 0.0
    %3492 = vmatpush1.msra.mxu0 0.0
    %3493 = vmatprep.subr.mxu0 0.0
    %3494 = vmatpush1.msra.mxu0 0.0
    %3495 = vmatprep.subr.mxu0 0.0
    %3496 = vmatpush1.msra.mxu0 0.0
    %3497 = vmatprep.subr.mxu0 0.0
    %3498 = vmatpush1.msra.mxu0 0.0
    %3499 = vmatprep.subr.mxu0 0.0
    %3500 = vmatpush1.msra.mxu0 0.0
    %3501 = vmatprep.subr.mxu0 0.0
    %3502 = vmatpush1.msra.mxu0 0.0
    %3503 = vmatprep.subr.mxu0 0.0
    %3504 = vmatpush1.msra.mxu0 0.0
    %3505 = vmatprep.subr.mxu0 0.0
    %3506 = vmatpush1.msra.mxu0 0.0
    %3507 = vmatprep.subr.mxu0 0.0
    %3508 = vmatpush1.msra.mxu0 0.0
    %3509 = vmatprep.subr.mxu0 0.0
    %3510 = vmatpush1.msra.mxu0 0.0
    %3511 = vmatprep.subr.mxu0 0.0
    %3512 = vmatpush1.msra.mxu0 0.0
    %3513 = vmatprep.subr.mxu0 0.0
    %3514 = vmatpush1.msra.mxu0 0.0
    %3515 = vmatprep.subr.mxu0 0.0
    %3516 = vmatpush1.msra.mxu0 0.0
    %3517 = vmatprep.subr.mxu0 0.0
    %3518 = vmatpush1.msra.mxu0 0.0
    %3519 = vmatprep.subr.mxu0 0.0
    %3520 = vmatpush1.msra.mxu0 0.0
    %3521 = vmatprep.subr.mxu0 0.0
    %3522 = vmatpush1.msra.mxu0 0.0
    %3523 = vmatprep.subr.mxu0 0.0
    %3524 = vmatpush1.msra.mxu0 0.0
    %3525 = vmatprep.subr.mxu0 0.0
    %3526 = vmatpush1.msra.mxu0 0.0
    %3527 = vmatprep.subr.mxu0 0.0
    %3528 = vmatpush1.msra.mxu0 0.0
    %3529 = vmatprep.subr.mxu0 0.0
    %3530 = vmatpush1.msra.mxu0 0.0
    %3531 = vmatprep.subr.mxu0 0.0
    %3532 = vmatpush1.msra.mxu0 0.0
    %3533 = vmatprep.subr.mxu0 0.0
    %3534 = vmatpush1.msra.mxu0 0.0
    %3535 = vmatprep.mubr.f32.mxu0 0.0
    %3536 = vmatmul.mubr.f32.gmra.mrb[0].mxu0 %v3469
    %v3537 = vpop.f32.mrb[0].mxu0
    %v3538 = vadd.f32 0.0, %v3537
    %v3539 = vpop.f32.mrb[0].mxu0
    %3540 = vdwg.mxu0
    %3541 = vrot.lane.b32.xlu0 %v2287, 40
    %v3542 = vpop.permute.xlu0 %3541
    %v3545 = vsel %vm2293, %v3464, 0
    %3547 = vmatprep.subr.mxu0 0.0
    %3548 = vmatpush1.msra.mxu0 %v3542
    %3549 = vmatprep.subr.mxu0 0.0
    %3550 = vmatpush1.msra.mxu0 0.0
    %3551 = vmatprep.subr.mxu0 0.0
    %3552 = vmatpush1.msra.mxu0 0.0
    %3553 = vmatprep.subr.mxu0 0.0
    %3554 = vmatpush1.msra.mxu0 0.0
    %3555 = vmatprep.subr.mxu0 0.0
    %3556 = vmatpush1.msra.mxu0 0.0
    %3557 = vmatprep.subr.mxu0 0.0
    %3558 = vmatpush1.msra.mxu0 0.0
    %3559 = vmatprep.subr.mxu0 0.0
    %3560 = vmatpush1.msra.mxu0 0.0
    %3561 = vmatprep.subr.mxu0 0.0
    %3562 = vmatpush1.msra.mxu0 0.0
    %3563 = vmatprep.subr.mxu0 0.0
    %3564 = vmatpush1.msra.mxu0 0.0
    %3565 = vmatprep.subr.mxu0 0.0
    %3566 = vmatpush1.msra.mxu0 0.0
    %3567 = vmatprep.subr.mxu0 0.0
    %3568 = vmatpush1.msra.mxu0 0.0
    %3569 = vmatprep.subr.mxu0 0.0
    %3570 = vmatpush1.msra.mxu0 0.0
    %3571 = vmatprep.subr.mxu0 0.0
    %3572 = vmatpush1.msra.mxu0 0.0
    %3573 = vmatprep.subr.mxu0 0.0
    %3574 = vmatpush1.msra.mxu0 0.0
    %3575 = vmatprep.subr.mxu0 0.0
    %3576 = vmatpush1.msra.mxu0 0.0
    %3577 = vmatprep.subr.mxu0 0.0
    %3578 = vmatpush1.msra.mxu0 0.0
    %3579 = vmatprep.subr.mxu0 0.0
    %3580 = vmatpush1.msra.mxu0 0.0
    %3581 = vmatprep.subr.mxu0 0.0
    %3582 = vmatpush1.msra.mxu0 0.0
    %3583 = vmatprep.subr.mxu0 0.0
    %3584 = vmatpush1.msra.mxu0 0.0
    %3585 = vmatprep.subr.mxu0 0.0
    %3586 = vmatpush1.msra.mxu0 0.0
    %3587 = vmatprep.subr.mxu0 0.0
    %3588 = vmatpush1.msra.mxu0 0.0
    %3589 = vmatprep.subr.mxu0 0.0
    %3590 = vmatpush1.msra.mxu0 0.0
    %3591 = vmatprep.subr.mxu0 0.0
    %3592 = vmatpush1.msra.mxu0 0.0
    %3593 = vmatprep.subr.mxu0 0.0
    %3594 = vmatpush1.msra.mxu0 0.0
    %3595 = vmatprep.subr.mxu0 0.0
    %3596 = vmatpush1.msra.mxu0 0.0
    %3597 = vmatprep.subr.mxu0 0.0
    %3598 = vmatpush1.msra.mxu0 0.0
    %3599 = vmatprep.subr.mxu0 0.0
    %3600 = vmatpush1.msra.mxu0 0.0
    %3601 = vmatprep.subr.mxu0 0.0
    %3602 = vmatpush1.msra.mxu0 0.0
    %3603 = vmatprep.subr.mxu0 0.0
    %3604 = vmatpush1.msra.mxu0 0.0
    %3605 = vmatprep.subr.mxu0 0.0
    %3606 = vmatpush1.msra.mxu0 0.0
    %3607 = vmatprep.subr.mxu0 0.0
    %3608 = vmatpush1.msra.mxu0 0.0
    %3609 = vmatprep.subr.mxu0 0.0
    %3610 = vmatpush1.msra.mxu0 0.0
    %3611 = vmatprep.mubr.f32.mxu0 0.0
    %3612 = vmatmul.mubr.f32.gmra.mrb[0].mxu0 %v3545
    %v3613 = vpop.f32.mrb[0].mxu0
    %v3614 = vadd.f32 0.0, %v3613
    %v3615 = vpop.f32.mrb[0].mxu0
    %3616 = vdwg.mxu0
    %3619 = vrot.lane.b32.xlu0 %v2874, 8
    %v3620 = vpop.permute.xlu0 %3619
    %3621 = vrot.lane.b32.xlu0 %v2950, 8
    %v3622 = vpop.permute.xlu0 %3621
    %3627 = vrot.lane.b32.xlu0 %v3206, 16
    %v3628 = vpop.permute.xlu0 %3627
    %3629 = vrot.lane.b32.xlu0 %v3282, 16
    %v3630 = vpop.permute.xlu0 %3629
    %3635 = vrot.lane.b32.xlu0 %v3538, 24
    %v3636 = vpop.permute.xlu0 %3635
    %3637 = vrot.lane.b32.xlu0 %v3614, 24
    %v3638 = vpop.permute.xlu0 %3637
    %v3641 = vsel %vm2293, %v2542, %v3620
    %v3642 = vsel %vm2293, %v2618, %v3622
    %vm3643 = vcmask 130048
    %v3644 = vsel %vm3643, %v3641, %v3628
    %v3645 = vsel %vm3643, %v3642, %v3630
    %vm3646 = vcmask 195584
    %v3647 = vsel %vm3646, %v3644, %v3636
    %v3648 = vsel %vm3646, %v3645, %v3638
    %v3650 = vlaneseq
    %v3651 = vshrl.u32 %v3650, 7
    %v3652 = vsub.s32 0, %v3651
    %v3653 = vrot.slane %v432, %v3652
    %v3656 = vsel %vm483, %v3647, 0
    %v3659 = vsel %vm483, %v3648, 0
    %3661 = vmatprep.subr.mxu0 0.0
    %3662 = vmatpush1.msra.mxu0 %v428
    %3663 = vmatprep.subr.mxu0 0.0
    %3664 = vmatpush1.msra.mxu0 %v429
    %3665 = vmatprep.subr.mxu0 0.0
    %3666 = vmatpush1.msra.mxu0 %v430
    %3667 = vmatprep.subr.mxu0 0.0
    %3668 = vmatpush1.msra.mxu0 %v431
    %3669 = vmatprep.subr.mxu0 0.0
    %3670 = vmatpush1.msra.mxu0 0.0
    %3671 = vmatprep.subr.mxu0 0.0
    %3672 = vmatpush1.msra.mxu0 0.0
    %3673 = vmatprep.subr.mxu0 0.0
    %3674 = vmatpush1.msra.mxu0 0.0
    %3675 = vmatprep.subr.mxu0 0.0
    %3676 = vmatpush1.msra.mxu0 0.0
    %3677 = vmatprep.subr.mxu0 0.0
    %3678 = vmatpush1.msra.mxu0 0.0
    %3679 = vmatprep.subr.mxu0 0.0
    %3680 = vmatpush1.msra.mxu0 0.0
    %3681 = vmatprep.subr.mxu0 0.0
    %3682 = vmatpush1.msra.mxu0 0.0
    %3683 = vmatprep.subr.mxu0 0.0
    %3684 = vmatpush1.msra.mxu0 0.0
    %3685 = vmatprep.subr.mxu0 0.0
    %3686 = vmatpush1.msra.mxu0 0.0
    %3687 = vmatprep.subr.mxu0 0.0
    %3688 = vmatpush1.msra.mxu0 0.0
    %3689 = vmatprep.subr.mxu0 0.0
    %3690 = vmatpush1.msra.mxu0 0.0
    %3691 = vmatprep.subr.mxu0 0.0
    %3692 = vmatpush1.msra.mxu0 0.0
    %3693 = vmatprep.subr.mxu0 0.0
    %3694 = vmatpush1.msra.mxu0 0.0
    %3695 = vmatprep.subr.mxu0 0.0
    %3696 = vmatpush1.msra.mxu0 0.0
    %3697 = vmatprep.subr.mxu0 0.0
    %3698 = vmatpush1.msra.mxu0 0.0
    %3699 = vmatprep.subr.mxu0 0.0
    %3700 = vmatpush1.msra.mxu0 0.0
    %3701 = vmatprep.subr.mxu0 0.0
    %3702 = vmatpush1.msra.mxu0 0.0
    %3703 = vmatprep.subr.mxu0 0.0
    %3704 = vmatpush1.msra.mxu0 0.0
    %3705 = vmatprep.subr.mxu0 0.0
    %3706 = vmatpush1.msra.mxu0 0.0
    %3707 = vmatprep.subr.mxu0 0.0
    %3708 = vmatpush1.msra.mxu0 0.0
    %3709 = vmatprep.subr.mxu0 0.0
    %3710 = vmatpush1.msra.mxu0 0.0
    %3711 = vmatprep.subr.mxu0 0.0
    %3712 = vmatpush1.msra.mxu0 0.0
    %3713 = vmatprep.subr.mxu0 0.0
    %3714 = vmatpush1.msra.mxu0 0.0
    %3715 = vmatprep.subr.mxu0 0.0
    %3716 = vmatpush1.msra.mxu0 0.0
    %3717 = vmatprep.subr.mxu0 0.0
    %3718 = vmatpush1.msra.mxu0 0.0
    %3719 = vmatprep.subr.mxu0 0.0
    %3720 = vmatpush1.msra.mxu0 0.0
    %3721 = vmatprep.subr.mxu0 0.0
    %3722 = vmatpush1.msra.mxu0 0.0
    %3723 = vmatprep.subr.mxu0 0.0
    %3724 = vmatpush1.msra.mxu0 0.0
    %3725 = vmatprep.mubr.f32.mxu0 0.0
    %3726 = vmatmul.mubr.f32.gmra.mrb[0].mxu0 %v3656
    %v3727 = vpop.f32.mrb[0].mxu0
    %v3728 = vadd.f32 %v3653, %v3727
    %v3729 = vpop.f32.mrb[0].mxu0
    %3730 = vmatprep.mubr.f32.mxu0 0.0
    %3731 = vmatmul.mubr.f32.gmra.mrb[0].mxu0 %v3659
    %v3732 = vpop.f32.mrb[0].mxu0
    %v3733 = vadd.f32 %v3653, %v3732
    %v3734 = vpop.f32.mrb[0].mxu0
    %3735 = vdwg.mxu0
    %v3736 = vadd.f32 %v3728, %v2165
    %v3737 = vadd.f32 %v3733, %v2166
    %v3738 = vsel %vm483, %v3736, 0.0
    %3739 = vadd.xlane.f32.xlu0 %v3738
    %v3740 = vpop.xlane.xlu0 %3739
    %v3741 = vsel %vm483, %v3737, 0.0
    %3742 = vadd.xlane.f32.xlu0 %v3741
    %v3743 = vpop.xlane.xlu0 %3742
    %v3744 = vmul.f32 %v3740, %v490
    %v3745 = vmul.f32 %v3743, %v490
    %v3746 = vsub.f32 %v3736, %v3744
    %v3747 = vsub.f32 %v3737, %v3745
    %v3748 = vmul.f32 %v3746, %v3746
    %v3749 = vmul.f32 %v3747, %v3747
    %v3750 = vsel %vm483, %v3748, 0.0
    %3751 = vadd.xlane.f32.xlu0 %v3750
    %v3752 = vpop.xlane.xlu0 %3751
    %v3753 = vsel %vm483, %v3749, 0.0
    %3754 = vadd.xlane.f32.xlu0 %v3753
    %v3755 = vpop.xlane.xlu0 %3754
    %v3756 = vmul.f32 %v3752, %v490
    %v3757 = vmul.f32 %v3755, %v490
    %v3758 = vadd.f32 %v3756, 1e-06
    %v3759 = vadd.f32 %v3757, 1e-06
    %v3760 = vrsqrt.pop %v3758
    %v3761 = vrsqrt.pop %v3759
    %v3762 = vmul.f32 %v3746, %v3760
    %v3763 = vmul.f32 %v3747, %v3761
    %v3765 = vlaneseq
    %v3766 = vshrl.u32 %v3765, 7
    %v3767 = vsub.s32 0, %v3766
    %v3768 = vrot.slane %v433, %v3767
    %v3770 = vmul.f32 %v3762, %v3768
    %v3771 = vmul.f32 %v3763, %v3768
    %v3773 = vlaneseq
    %v3774 = vshrl.u32 %v3773, 7
    %v3775 = vsub.s32 0, %v3774
    %v3776 = vrot.slane %v434, %v3775
    %v3778 = vadd.f32 %v3770, %v3776
    %v3779 = vadd.f32 %v3771, %v3776
    %v3781 = vlaneseq
    %v3782 = vshrl.u32 %v3781, 7
    %v3783 = vsub.s32 0, %v3782
    %v3784 = vrot.slane %v439, %v3783
    %v3787 = vsel %vm483, %v3778, 0
    %v3790 = vsel %vm483, %v3779, 0
    %3792 = vmatprep.subr.mxu0 0.0
    %3793 = vmatpush1.msra.mxu0 %v435
    %3794 = vmatprep.subr.mxu0 0.0
    %3795 = vmatpush1.msra.mxu0 %v436
    %3796 = vmatprep.subr.mxu0 0.0
    %3797 = vmatpush1.msra.mxu0 %v437
    %3798 = vmatprep.subr.mxu0 0.0
    %3799 = vmatpush1.msra.mxu0 %v438
    %3800 = vmatprep.subr.mxu0 0.0
    %3801 = vmatpush1.msra.mxu0 0.0
    %3802 = vmatprep.subr.mxu0 0.0
    %3803 = vmatpush1.msra.mxu0 0.0
    %3804 = vmatprep.subr.mxu0 0.0
    %3805 = vmatpush1.msra.mxu0 0.0
    %3806 = vmatprep.subr.mxu0 0.0
    %3807 = vmatpush1.msra.mxu0 0.0
    %3808 = vmatprep.subr.mxu0 0.0
    %3809 = vmatpush1.msra.mxu0 0.0
    %3810 = vmatprep.subr.mxu0 0.0
    %3811 = vmatpush1.msra.mxu0 0.0
    %3812 = vmatprep.subr.mxu0 0.0
    %3813 = vmatpush1.msra.mxu0 0.0
    %3814 = vmatprep.subr.mxu0 0.0
    %3815 = vmatpush1.msra.mxu0 0.0
    %3816 = vmatprep.subr.mxu0 0.0
    %3817 = vmatpush1.msra.mxu0 0.0
    %3818 = vmatprep.subr.mxu0 0.0
    %3819 = vmatpush1.msra.mxu0 0.0
    %3820 = vmatprep.subr.mxu0 0.0
    %3821 = vmatpush1.msra.mxu0 0.0
    %3822 = vmatprep.subr.mxu0 0.0
    %3823 = vmatpush1.msra.mxu0 0.0
    %3824 = vmatprep.subr.mxu0 0.0
    %3825 = vmatpush1.msra.mxu0 0.0
    %3826 = vmatprep.subr.mxu0 0.0
    %3827 = vmatpush1.msra.mxu0 0.0
    %3828 = vmatprep.subr.mxu0 0.0
    %3829 = vmatpush1.msra.mxu0 0.0
    %3830 = vmatprep.subr.mxu0 0.0
    %3831 = vmatpush1.msra.mxu0 0.0
    %3832 = vmatprep.subr.mxu0 0.0
    %3833 = vmatpush1.msra.mxu0 0.0
    %3834 = vmatprep.subr.mxu0 0.0
    %3835 = vmatpush1.msra.mxu0 0.0
    %3836 = vmatprep.subr.mxu0 0.0
    %3837 = vmatpush1.msra.mxu0 0.0
    %3838 = vmatprep.subr.mxu0 0.0
    %3839 = vmatpush1.msra.mxu0 0.0
    %3840 = vmatprep.subr.mxu0 0.0
    %3841 = vmatpush1.msra.mxu0 0.0
    %3842 = vmatprep.subr.mxu0 0.0
    %3843 = vmatpush1.msra.mxu0 0.0
    %3844 = vmatprep.subr.mxu0 0.0
    %3845 = vmatpush1.msra.mxu0 0.0
    %3846 = vmatprep.subr.mxu0 0.0
    %3847 = vmatpush1.msra.mxu0 0.0
    %3848 = vmatprep.subr.mxu0 0.0
    %3849 = vmatpush1.msra.mxu0 0.0
    %3850 = vmatprep.subr.mxu0 0.0
    %3851 = vmatpush1.msra.mxu0 0.0
    %3852 = vmatprep.subr.mxu0 0.0
    %3853 = vmatpush1.msra.mxu0 0.0
    %3854 = vmatprep.subr.mxu0 0.0
    %3855 = vmatpush1.msra.mxu0 0.0
    %3856 = vmatprep.mubr.f32.mxu0 0.0
    %3857 = vmatmul.mubr.f32.gmra.mrb[0].mxu0 %v3787
    %v3858 = vpop.f32.mrb[0].mxu0
    %v3859 = vadd.f32 %v3784, %v3858
    %v3860 = vpop.f32.mrb[0].mxu0
    %3861 = vmatprep.mubr.f32.mxu0 0.0
    %3862 = vmatmul.mubr.f32.gmra.mrb[0].mxu0 %v3790
    %v3863 = vpop.f32.mrb[0].mxu0
    %v3864 = vadd.f32 %v3784, %v3863
    %v3865 = vpop.f32.mrb[0].mxu0
    %3866 = vdwg.mxu0
    %v3867 = vmax.f32 %v3859, 0.0
    %v3868 = vmax.f32 %v3864, 0.0
    %v3870 = vlaneseq
    %v3871 = vshrl.u32 %v3870, 7
    %v3872 = vsub.s32 0, %v3871
    %v3873 = vrot.slane %v456, %v3872
    %3875 = vmatprep.subr.mxu0 0.0
    %3876 = vmatpush1.msra.mxu0 %v440
    %3877 = vmatprep.subr.mxu0 0.0
    %3878 = vmatpush1.msra.mxu0 %v441
    %3879 = vmatprep.subr.mxu0 0.0
    %3880 = vmatpush1.msra.mxu0 %v442
    %3881 = vmatprep.subr.mxu0 0.0
    %3882 = vmatpush1.msra.mxu0 %v443
    %3883 = vmatprep.subr.mxu0 0.0
    %3884 = vmatpush1.msra.mxu0 %v444
    %3885 = vmatprep.subr.mxu0 0.0
    %3886 = vmatpush1.msra.mxu0 %v445
    %3887 = vmatprep.subr.mxu0 0.0
    %3888 = vmatpush1.msra.mxu0 %v446
    %3889 = vmatprep.subr.mxu0 0.0
    %3890 = vmatpush1.msra.mxu0 %v447
    %3891 = vmatprep.subr.mxu0 0.0
    %3892 = vmatpush1.msra.mxu0 %v448
    %3893 = vmatprep.subr.mxu0 0.0
    %3894 = vmatpush1.msra.mxu0 %v449
    %3895 = vmatprep.subr.mxu0 0.0
    %3896 = vmatpush1.msra.mxu0 %v450
    %3897 = vmatprep.subr.mxu0 0.0
    %3898 = vmatpush1.msra.mxu0 %v451
    %3899 = vmatprep.subr.mxu0 0.0
    %3900 = vmatpush1.msra.mxu0 %v452
    %3901 = vmatprep.subr.mxu0 0.0
    %3902 = vmatpush1.msra.mxu0 %v453
    %3903 = vmatprep.subr.mxu0 0.0
    %3904 = vmatpush1.msra.mxu0 %v454
    %3905 = vmatprep.subr.mxu0 0.0
    %3906 = vmatpush1.msra.mxu0 %v455
    %3907 = vmatprep.subr.mxu0 0.0
    %3908 = vmatpush1.msra.mxu0 0.0
    %3909 = vmatprep.subr.mxu0 0.0
    %3910 = vmatpush1.msra.mxu0 0.0
    %3911 = vmatprep.subr.mxu0 0.0
    %3912 = vmatpush1.msra.mxu0 0.0
    %3913 = vmatprep.subr.mxu0 0.0
    %3914 = vmatpush1.msra.mxu0 0.0
    %3915 = vmatprep.subr.mxu0 0.0
    %3916 = vmatpush1.msra.mxu0 0.0
    %3917 = vmatprep.subr.mxu0 0.0
    %3918 = vmatpush1.msra.mxu0 0.0
    %3919 = vmatprep.subr.mxu0 0.0
    %3920 = vmatpush1.msra.mxu0 0.0
    %3921 = vmatprep.subr.mxu0 0.0
    %3922 = vmatpush1.msra.mxu0 0.0
    %3923 = vmatprep.subr.mxu0 0.0
    %3924 = vmatpush1.msra.mxu0 0.0
    %3925 = vmatprep.subr.mxu0 0.0
    %3926 = vmatpush1.msra.mxu0 0.0
    %3927 = vmatprep.subr.mxu0 0.0
    %3928 = vmatpush1.msra.mxu0 0.0
    %3929 = vmatprep.subr.mxu0 0.0
    %3930 = vmatpush1.msra.mxu0 0.0
    %3931 = vmatprep.subr.mxu0 0.0
    %3932 = vmatpush1.msra.mxu0 0.0
    %3933 = vmatprep.subr.mxu0 0.0
    %3934 = vmatpush1.msra.mxu0 0.0
    %3935 = vmatprep.subr.mxu0 0.0
    %3936 = vmatpush1.msra.mxu0 0.0
    %3937 = vmatprep.subr.mxu0 0.0
    %3938 = vmatpush1.msra.mxu0 0.0
    %3939 = vmatprep.mubr.f32.mxu0 0.0
    %3940 = vmatmul.mubr.f32.gmra.mrb[0].mxu0 %v3867
    %v3941 = vpop.f32.mrb[0].mxu0
    %v3942 = vadd.f32 %v3873, %v3941
    %v3943 = vpop.f32.mrb[0].mxu0
    %3944 = vmatprep.mubr.f32.mxu0 0.0
    %3945 = vmatmul.mubr.f32.gmra.mrb[0].mxu0 %v3868
    %v3946 = vpop.f32.mrb[0].mxu0
    %v3947 = vadd.f32 %v3873, %v3946
    %v3948 = vpop.f32.mrb[0].mxu0
    %3949 = vdwg.mxu0
    %v3950 = vadd.f32 %v3942, %v3736
    %v3951 = vadd.f32 %v3947, %v3737
    %3952 = vst.msk [vmem:[%s77] sm:$0xff] %vm483, %v3950
    %3953 = vst.msk [vmem:[%s77 + $0x8] sm:$0xff] %vm483, %v3951
    // Predicated region
    $region218: #{gnt_moe_forward.6} parent=1 // pred_check
      _
    $region219: #{gnt_moe_forward.6} parent=1 // pred_check_branch
      %3955 = sbr.rel (0) target = $region221
    $region220: #{gnt_moe_forward.6} parent=1 // pred_region
      _
    $region221: #{gnt_moe_forward.6} parent=1 // pred_fallthru
      _
    // Predicated region
    $region222: #{gnt_moe_forward.6} parent=1 // pred_check
      _
    $region223: #{gnt_moe_forward.6} parent=1 // pred_check_branch
      %3957 = sbr.rel (0) target = $region225
    $region224: #{gnt_moe_forward.6} parent=1 // pred_region
      _
    $region225: #{gnt_moe_forward.6} parent=1 // pred_fallthru
      _
    %3958 = vsyncpa [#allocation3], 1
    %3959 = vsyncpa [#allocation5], 1
    %3960 = vsyncpa [#allocation8], 1
    %3961 = vsyncpa [#allocation11], 1
    %3962 = vsyncpa [#allocation14], 1
    %3963 = vsyncpa [#allocation17], 1
    %3964 = vsyncpa [#allocation20], 1
    %3965 = vsyncpa [#allocation23], 1
    %3966 = vsyncpa [#allocation26], 1

</llo_original>
